<compile_context>
chip_gen: v6e
topology: v6e:2x2x1
jax: 0.10.0
libtpu: 0.0.40
codegen_flags: <defaults>
</compile_context>

<pallas_src>
import functools
import math

import jax
import jax.numpy as jnp
from jax.experimental import pallas as pl
from jax.experimental.pallas import tpu as pltpu

LANE = 128  # feature/node padding granularity. 128 exactly fills v5e's 4x128x128 MXU;
            # bump to 256 for production hid_size >= 256 on v6e/v7x (2x256x256 MXU).


def _round_up(n, m):
    return ((n + m - 1) // m) * m


def _pick_row_tile(n_pad):
    """Largest adjacency row-tile that divides n_pad and keeps the double-buffered
    bf16 tiles <= 8 MiB of VMEM (safe even on v7x's 64 MiB part)."""
    for t in (512, 256, 128):
        if n_pad % t == 0 and 2 * t * n_pad * 2 <= 8 * 1024 * 1024:
            return t
    return 128


def _pick_vmem_limit():
    """~3/4 of physical VMEM, capped at 100 MiB: ~96-100 MiB on v5e/v6e (128 MiB),
    ~48 MiB on v7x (64 MiB). Conservative fallback if the query is unavailable."""
    try:
        cap = int(pltpu.get_tpu_info().vmem_capacity_bytes)
    except Exception:
        cap = 64 * 1024 * 1024
    return int(max(32 * 1024 * 1024, min(100 * 1024 * 1024, (cap * 3) // 4)))


# ----------------------------------------------------------------------------- kernel

def _maxk(x, k, feat_mask):
    """MaxK activation: keep the k largest entries per row (valid lanes only), zero the rest.

    The k-th largest value is found by iteratively masking out the current row max
    (k-1 times, fully unrolled; k is static). Ties at the k-th value are all kept
    (assumed measure-zero for continuous inputs). `feat_mask` is hoisted by the caller.
    """
    neg_inf = jnp.float32(-jnp.inf)
    work = jnp.where(feat_mask, x, neg_inf)
    for _ in range(k - 1):
        row_max = jnp.max(work, axis=-1, keepdims=True)
        work = jnp.where(work >= row_max, neg_inf, work)
    kth = jnp.max(work, axis=-1, keepdims=True)        # k-th largest value per row
    keep = jnp.logical_and(feat_mask, x >= kth)
    return jnp.where(keep, x, jnp.float32(0.0))


def _gin_fused_kernel(eps_ref, adj_ref, x_ref, w_in_ref, b_in_ref,
                      w_hid_ref, b_hid_ref, w_out_ref, b_out_ref,
                      o_ref,
                      abuf_ref, sem_ref, agg_ref,
                      *, num_layers, k, hid_valid, row_tile, n_row_tiles):
    """Whole-network GIN forward; activations/weights stay in VMEM, adjacency streams from HBM."""
    n_pad = x_ref.shape[0]
    hid_pad = w_in_ref.shape[1]

    def adj_tile_copy(rt, slot):
        start = pl.multiple_of(rt * row_tile, row_tile)
        return pltpu.make_async_copy(adj_ref.at[pl.ds(start, row_tile)],
                                     abuf_ref.at[slot], sem_ref.at[slot])

    # ---- x = relu(lin_in(x)) ---- (f32 matmul: keeps pre-MaxK values faithful so the hard
    # top-k selection does not flip versus the f32 PyTorch reference)
    h = jnp.dot(x_ref[...], w_in_ref[...], preferred_element_type=jnp.float32)
    h = jnp.maximum(h + b_in_ref[...], 0.0)

    # Feature-lane validity mask, hoisted out of the layer loop (JAX does not CSE
    # broadcast_in_dim; building it inside _maxk would emit one iota+cmp per layer).
    col = jax.lax.broadcasted_iota(jnp.int32, (n_pad, hid_pad), dimension=1)
    feat_mask = col < hid_valid

    # ---- hidden layers: Linear -> MaxK -> (dropout = identity) -> GINConv sum-agg ----
    for i in range(num_layers):                          # static unroll over layers
        # Prefetch adjacency row-tile 0 for this layer so its DMA overlaps Linear + MaxK.
        adj_tile_copy(0, 0).start()

        z = jnp.dot(h, w_hid_ref[i], preferred_element_type=jnp.float32) + b_hid_ref[i]
        z = _maxk(z, k, feat_mask)
        # feat_drop is identity at inference time
        z_bf = z.astype(jnp.bfloat16)                    # bf16 only after the top-k selection

        # agg[row_tile] = A[row_tile, :] @ z, adjacency double-buffered from HBM.
        @pl.loop(0, n_row_tiles)
        def _(rt):
            slot = rt & 1
            adj_tile_copy(rt, slot).wait()

            @pl.when(rt + 1 < n_row_tiles)
            def _():
                adj_tile_copy(rt + 1, 1 - slot).start()

            start = pl.multiple_of(rt * row_tile, row_tile)
            agg_ref[pl.ds(start, row_tile), :] = jnp.dot(
                abuf_ref[slot], z_bf, preferred_element_type=jnp.float32)

        eps = eps_ref[i]                                 # learn_eps=True, init 0.0
        h = (1.0 + eps) * z + agg_ref[...]               # f32 residual add

    # ---- x = lin_out(x) ---- (lane-dense padded f32 output slab)
    out = jnp.dot(h, w_out_ref[...], preferred_element_type=jnp.float32)
    o_ref[...] = (out + b_out_ref[...]).astype(o_ref.dtype)


# ----------------------------------------------------------------------------- wrapper

def gin_forward(adj, x, params, *, num_hid_layers, maxk, hid_size, out_size):
    n, in_size = x.shape
    assert maxk <= hid_size, "MaxK requires k <= hid_size (otherwise every entry is kept)"
    n_pad = _round_up(n, LANE)
    in_pad = params["w_in"].shape[0]
    hid_pad = params["w_in"].shape[1]
    out_pad = params["w_out"].shape[1]

    row_tile = _pick_row_tile(n_pad)
    n_row_tiles = n_pad // row_tile

    # zero-pad features; padded nodes/lanes cannot leak into real rows because A's padded
    # rows/cols and the padded weight rows/cols are all zero.
    x_p = jnp.zeros((n_pad, in_pad), jnp.float32).at[:n, :in_size].set(x)
    # adjacency lives in HBM as bf16 (exact for 0/1 entries; NOT for weighted adjacency)
    adj_p = jnp.zeros((n_pad, n_pad), jnp.bfloat16).at[:n, :n].set(adj.astype(jnp.bfloat16))

    flops = (2 * n_pad * in_pad * hid_pad
             + num_hid_layers * (2 * n_pad * hid_pad * hid_pad + 2 * n_pad * n_pad * hid_pad)
             + 2 * n_pad * hid_pad * out_pad)
    bytes_accessed = int(
        2 * adj_p.size * num_hid_layers            # bf16 adjacency, streamed once per layer
        + 4 * (x_p.size + params["w_in"].size + params["b_in"].size
               + params["w_hid"].size + params["b_hid"].size
               + params["w_out"].size + params["b_out"].size
               + n_pad * out_pad))

    vmem = pl.BlockSpec(memory_space=pltpu.MemorySpace.VMEM)
    out = pl.pallas_call(
        functools.partial(_gin_fused_kernel, num_layers=num_hid_layers, k=int(maxk),
                          hid_valid=int(hid_size), row_tile=row_tile,
                          n_row_tiles=n_row_tiles),
        out_shape=jax.ShapeDtypeStruct((n_pad, out_pad), jnp.float32),
        in_specs=[
            pl.BlockSpec(memory_space=pltpu.MemorySpace.SMEM),   # eps per layer (scalars)
            pl.BlockSpec(memory_space=pl.ANY),                   # adjacency stays in HBM
            vmem,                # x
            vmem, vmem,          # w_in, b_in
            vmem, vmem,          # w_hid (stacked), b_hid (stacked)
            vmem, vmem,          # w_out, b_out
        ],
        out_specs=pl.BlockSpec(memory_space=pltpu.MemorySpace.VMEM),
        scratch_shapes=[
            pltpu.VMEM((2, row_tile, n_pad), jnp.bfloat16),      # double-buffered A tiles
            pltpu.SemaphoreType.DMA((2,)),
            pltpu.VMEM((n_pad, hid_pad), jnp.float32),           # aggregation accumulator
        ],
        compiler_params=pltpu.CompilerParams(vmem_limit_bytes=_pick_vmem_limit()),
        cost_estimate=pl.CostEstimate(flops=int(flops), transcendentals=0,
                                      bytes_accessed=bytes_accessed),
    )(params["eps"], adj_p, x_p,
      params["w_in"], params["b_in"],
      params["w_hid"], params["b_hid"],
      params["w_out"], params["b_out"])

    return out[:n, :out_size]


# ----------------------------------------------------------------------------- reference

def gin_reference(adj, x, params, *, num_hid_layers, maxk, hid_size, out_size):
    """Pure-JAX reference mirroring the kernel's dtype choices (f32 linears, bf16 A@z)."""
    n, in_size = x.shape
    w_in = params["w_in"][:in_size, :hid_size]
    b_in = params["b_in"][0, :hid_size]
    w_out = params["w_out"][:hid_size, :out_size]
    b_out = params["b_out"][0, :out_size]
    adj_bf = adj.astype(jnp.bfloat16)

    h = jnp.maximum(x @ w_in + b_in, 0.0)
    for i in range(num_hid_layers):
        w = params["w_hid"][i][:hid_size, :hid_size]
        b = params["b_hid"][i][0, :hid_size]
        z = h @ w + b
        kth = jax.lax.top_k(z, maxk)[0][:, -1:]
        z = jnp.where(z >= kth, z, 0.0)
        agg = jnp.dot(adj_bf, z.astype(jnp.bfloat16), preferred_element_type=jnp.float32)
        h = (1.0 + params["eps"][i]) * z + agg
    return h @ w_out + b_out


# ----------------------------------------------------------------------------- params

def _xavier_uniform_padded(key, fan_out, fan_in, in_pad, out_pad):
    # PyTorch stores Linear weight as [out, in]; transpose to [in, out] for x @ W and
    # zero-pad both axes to lane-dense sizes.
    bound = math.sqrt(6.0 / (fan_in + fan_out))
    w = jax.random.uniform(key, (fan_out, fan_in), jnp.float32, -bound, bound)
    return jnp.zeros((in_pad, out_pad), jnp.float32).at[:fan_in, :fan_out].set(jnp.transpose(w))


def _bias_padded(key, fan_in, fan_out, out_pad):
    bound = 1.0 / math.sqrt(fan_in)
    b = jax.random.uniform(key, (fan_out,), jnp.float32, -bound, bound)
    return jnp.zeros((1, out_pad), jnp.float32).at[0, :fan_out].set(b)


def init_gin_params(key, in_size, hid_size, num_hid_layers, out_size):
    in_pad = _round_up(in_size, LANE)
    hid_pad = _round_up(hid_size, LANE)
    out_pad = _round_up(out_size, LANE)

    keys = jax.random.split(key, 4 + 2 * num_hid_layers)
    w_hid = [_xavier_uniform_padded(keys[4 + 2 * i], hid_size, hid_size, hid_pad, hid_pad)
             for i in range(num_hid_layers)]
    b_hid = [_bias_padded(keys[5 + 2 * i], hid_size, hid_size, hid_pad)
             for i in range(num_hid_layers)]
    return {
        "w_in": _xavier_uniform_padded(keys[0], hid_size, in_size, in_pad, hid_pad),
        "b_in": _bias_padded(keys[1], in_size, hid_size, hid_pad),
        "w_out": _xavier_uniform_padded(keys[2], out_size, hid_size, hid_pad, out_pad),
        "b_out": _bias_padded(keys[3], hid_size, out_size, out_pad),
        "w_hid": jnp.stack(w_hid),                       # [L, hid_pad, hid_pad]
        "b_hid": jnp.stack(b_hid),                       # [L, 1, hid_pad]
        "eps": jnp.zeros((num_hid_layers,), jnp.float32),  # GINConv learn_eps, init 0.0
    }


# ----------------------------------------------------------------------------- main

if __name__ == "__main__":
    N = 300         # number of graph nodes (pads to 384 -> exercises 3 streamed A row tiles)
    IN_SIZE = 10
    HID_SIZE = 64
    NUM_HID_LAYERS = 2
    OUT_SIZE = 7
    MAXK = 8        # top-k kept by the MaxK nonlinearity

    key = jax.random.PRNGKey(0)
    k_x, k_adj, k_params = jax.random.split(key, 3)

    # node features [N, IN_SIZE]
    x = jax.random.normal(k_x, (N, IN_SIZE), jnp.float32)

    # random undirected graph as dense adjacency (no self loops), float32
    upper = (jax.random.uniform(k_adj, (N, N)) < 0.05).astype(jnp.float32)
    adj = jnp.triu(upper, k=1)
    adj = adj + adj.T

    params = init_gin_params(k_params, IN_SIZE, HID_SIZE, NUM_HID_LAYERS, OUT_SIZE)

    out = gin_forward(adj, x, params, num_hid_layers=NUM_HID_LAYERS, maxk=MAXK,
                      hid_size=HID_SIZE, out_size=OUT_SIZE)
    out = jax.block_until_ready(out)
    assert out.shape == (N, OUT_SIZE)
    assert bool(jnp.all(jnp.isfinite(out)))

    # Robust self-check vs the pure-JAX reference (median abs error: immune to the rare
    # top-k boundary flip that f32-matmul rounding differences could cause in a few rows).
    ref = gin_reference(adj, x, params, num_hid_layers=NUM_HID_LAYERS, maxk=MAXK,
                        hid_size=HID_SIZE, out_size=OUT_SIZE)
    med_err = float(jnp.median(jnp.abs(out - ref)))
    assert med_err < 5e-2, f"median |out - ref| too large: {med_err}"

    print("KERNEL_OK")
</pallas_src>

<mosaic_0001>
module attributes {stable_mosaic.version = 11 : i64} {
  func.func @_gin_fused_kernel(%arg0: memref<2xf32, #tpu.memory_space<smem>>, %arg1: memref<384x384xbf16, #tpu.memory_space<any>>, %arg2: memref<384x128xf32, #tpu.memory_space<vmem>>, %arg3: memref<128x128xf32, #tpu.memory_space<vmem>>, %arg4: memref<1x128xf32, #tpu.memory_space<vmem>>, %arg5: memref<2x128x128xf32, #tpu.memory_space<vmem>>, %arg6: memref<2x1x128xf32, #tpu.memory_space<vmem>>, %arg7: memref<128x128xf32, #tpu.memory_space<vmem>>, %arg8: memref<1x128xf32, #tpu.memory_space<vmem>>, %arg9: memref<384x128xf32, #tpu.memory_space<vmem>>, %arg10: memref<2x128x384xbf16, #tpu.memory_space<vmem>>, %arg11: memref<2x!tpu.dma_semaphore, #tpu.memory_space<semaphore_mem>>, %arg12: memref<384x128xf32, #tpu.memory_space<vmem>>) attributes {dimension_semantics = [], scalar_prefetch = 0 : i64, scratch_operands = 3 : i64, tpu.core_type = #tpu.core_type<tc>} {
    %c0 = arith.constant 0 : index
    %c0_0 = arith.constant 0 : index
    %0 = vector.load %arg2[%c0, %c0_0] : memref<384x128xf32, #tpu.memory_space<vmem>>, vector<384x128xf32>
    %c0_1 = arith.constant 0 : index
    %c0_2 = arith.constant 0 : index
    %1 = vector.load %arg3[%c0_1, %c0_2] : memref<128x128xf32, #tpu.memory_space<vmem>>, vector<128x128xf32>
    %cst = arith.constant dense<0.000000e+00> : vector<384x128xf32>
    %2 = tpu.matmul %0, %1, %cst {dimension_numbers = #tpu.dot_dimension_numbers<[1], [0], [0], [1], [0, 0, 1, 1], [], []>} : vector<384x128xf32>, vector<128x128xf32>, vector<384x128xf32> -> vector<384x128xf32>
    %c0_3 = arith.constant 0 : index
    %c0_4 = arith.constant 0 : index
    %3 = vector.load %arg4[%c0_3, %c0_4] : memref<1x128xf32, #tpu.memory_space<vmem>>, vector<1x128xf32>
    %4 = vector.broadcast %3 : vector<1x128xf32> to vector<384x128xf32>
    %5 = arith.addf %2, %4 : vector<384x128xf32>
    %cst_5 = arith.constant 0.000000e+00 : f32
    %6 = vector.broadcast %cst_5 : f32 to vector<384x128xf32>
    %7 = arith.maximumf %5, %6 : vector<384x128xf32>
    %8 = tpu.iota {dimensions = array<i32: 1>} : vector<384x128xi32>
    %c64_i32 = arith.constant 64 : i32
    %9 = vector.broadcast %c64_i32 : i32 to vector<384x128xi32>
    %10 = arith.cmpi slt, %8, %9 : vector<384x128xi32>
    %c0_i32 = arith.constant 0 : i32
    %11 = tpu.assume_multiple %c0_i32, 128 : i32
    %c0_i32_6 = arith.constant 0 : i32
    %c0_i32_7 = arith.constant 0 : i32
    %c0_i32_8 = arith.constant 0 : i32
    %12 = tpu.memref_slice %arg1[%11, %c0_i32_8] : memref<384x384xbf16, #tpu.memory_space<any>> -> memref<128x384xbf16, #tpu.memory_space<any>>
    %c0_i32_9 = arith.constant 0 : i32
    %c0_i32_10 = arith.constant 0 : i32
    %13 = tpu.memref_slice %arg10[%c0_i32_6, %c0_i32_9, %c0_i32_10] : memref<2x128x384xbf16, #tpu.memory_space<vmem>> -> memref<1x128x384xbf16, #tpu.memory_space<vmem>>
    %14 = tpu.memref_squeeze %13 : memref<1x128x384xbf16, #tpu.memory_space<vmem>> -> memref<128x384xbf16, #tpu.memory_space<vmem>>
    %15 = tpu.memref_slice %arg11[%c0_i32_7] : memref<2x!tpu.dma_semaphore, #tpu.memory_space<semaphore_mem>> -> memref<1x!tpu.dma_semaphore, #tpu.memory_space<semaphore_mem>>
    %16 = tpu.memref_squeeze %15 : memref<1x!tpu.dma_semaphore, #tpu.memory_space<semaphore_mem>> -> memref<!tpu.dma_semaphore, #tpu.memory_space<semaphore_mem>>
    tpu.enqueue_dma source(%12 : memref<128x384xbf16, #tpu.memory_space<any>>) target(%14 : memref<128x384xbf16, #tpu.memory_space<vmem>>) target_semaphore(%16 : memref<!tpu.dma_semaphore, #tpu.memory_space<semaphore_mem>>)
    %c0_11 = arith.constant 0 : index
    %c0_12 = arith.constant 0 : index
    %c0_13 = arith.constant 0 : index
    %17 = vector.load %arg5[%c0_11, %c0_12, %c0_13] : memref<2x128x128xf32, #tpu.memory_space<vmem>>, vector<1x128x128xf32>
    %18 = vector.shape_cast %17 : vector<1x128x128xf32> to vector<128x128xf32>
    %cst_14 = arith.constant dense<0.000000e+00> : vector<384x128xf32>
    %19 = tpu.matmul %7, %18, %cst_14 {dimension_numbers = #tpu.dot_dimension_numbers<[1], [0], [0], [1], [0, 0, 1, 1], [], []>} : vector<384x128xf32>, vector<128x128xf32>, vector<384x128xf32> -> vector<384x128xf32>
    %c0_15 = arith.constant 0 : index
    %c0_16 = arith.constant 0 : index
    %c0_17 = arith.constant 0 : index
    %20 = vector.load %arg6[%c0_15, %c0_16, %c0_17] : memref<2x1x128xf32, #tpu.memory_space<vmem>>, vector<1x1x128xf32>
    %21 = vector.shape_cast %20 : vector<1x1x128xf32> to vector<1x128xf32>
    %22 = vector.broadcast %21 : vector<1x128xf32> to vector<384x128xf32>
    %23 = arith.addf %19, %22 : vector<384x128xf32>
    %cst_18 = arith.constant 0xFF800000 : f32
    %24 = vector.broadcast %cst_18 : f32 to vector<384x128xf32>
    %25 = arith.select %10, %23, %24 : vector<384x128xi1>, vector<384x128xf32>
    %cst_19 = arith.constant dense<0xFF800000> : vector<384xf32>
    %26 = vector.multi_reduction <maximumf>, %25, %cst_19 [1] : vector<384x128xf32> to vector<384xf32>
    %27 = vector.shape_cast %26 : vector<384xf32> to vector<384x1xf32>
    %28 = vector.broadcast %27 : vector<384x1xf32> to vector<384x128xf32>
    %29 = arith.cmpf oge, %25, %28 : vector<384x128xf32>
    %cst_20 = arith.constant 0xFF800000 : f32
    %30 = vector.broadcast %cst_20 : f32 to vector<384x128xf32>
    %31 = arith.select %29, %30, %25 : vector<384x128xi1>, vector<384x128xf32>
    %cst_21 = arith.constant dense<0xFF800000> : vector<384xf32>
    %32 = vector.multi_reduction <maximumf>, %31, %cst_21 [1] : vector<384x128xf32> to vector<384xf32>
    %33 = vector.shape_cast %32 : vector<384xf32> to vector<384x1xf32>
    %34 = vector.broadcast %33 : vector<384x1xf32> to vector<384x128xf32>
    %35 = arith.cmpf oge, %31, %34 : vector<384x128xf32>
    %cst_22 = arith.constant 0xFF800000 : f32
    %36 = vector.broadcast %cst_22 : f32 to vector<384x128xf32>
    %37 = arith.select %35, %36, %31 : vector<384x128xi1>, vector<384x128xf32>
    %cst_23 = arith.constant dense<0xFF800000> : vector<384xf32>
    %38 = vector.multi_reduction <maximumf>, %37, %cst_23 [1] : vector<384x128xf32> to vector<384xf32>
    %39 = vector.shape_cast %38 : vector<384xf32> to vector<384x1xf32>
    %40 = vector.broadcast %39 : vector<384x1xf32> to vector<384x128xf32>
    %41 = arith.cmpf oge, %37, %40 : vector<384x128xf32>
    %cst_24 = arith.constant 0xFF800000 : f32
    %42 = vector.broadcast %cst_24 : f32 to vector<384x128xf32>
    %43 = arith.select %41, %42, %37 : vector<384x128xi1>, vector<384x128xf32>
    %cst_25 = arith.constant dense<0xFF800000> : vector<384xf32>
    %44 = vector.multi_reduction <maximumf>, %43, %cst_25 [1] : vector<384x128xf32> to vector<384xf32>
    %45 = vector.shape_cast %44 : vector<384xf32> to vector<384x1xf32>
    %46 = vector.broadcast %45 : vector<384x1xf32> to vector<384x128xf32>
    %47 = arith.cmpf oge, %43, %46 : vector<384x128xf32>
    %cst_26 = arith.constant 0xFF800000 : f32
    %48 = vector.broadcast %cst_26 : f32 to vector<384x128xf32>
    %49 = arith.select %47, %48, %43 : vector<384x128xi1>, vector<384x128xf32>
    %cst_27 = arith.constant dense<0xFF800000> : vector<384xf32>
    %50 = vector.multi_reduction <maximumf>, %49, %cst_27 [1] : vector<384x128xf32> to vector<384xf32>
    %51 = vector.shape_cast %50 : vector<384xf32> to vector<384x1xf32>
    %52 = vector.broadcast %51 : vector<384x1xf32> to vector<384x128xf32>
    %53 = arith.cmpf oge, %49, %52 : vector<384x128xf32>
    %cst_28 = arith.constant 0xFF800000 : f32
    %54 = vector.broadcast %cst_28 : f32 to vector<384x128xf32>
    %55 = arith.select %53, %54, %49 : vector<384x128xi1>, vector<384x128xf32>
    %cst_29 = arith.constant dense<0xFF800000> : vector<384xf32>
    %56 = vector.multi_reduction <maximumf>, %55, %cst_29 [1] : vector<384x128xf32> to vector<384xf32>
    %57 = vector.shape_cast %56 : vector<384xf32> to vector<384x1xf32>
    %58 = vector.broadcast %57 : vector<384x1xf32> to vector<384x128xf32>
    %59 = arith.cmpf oge, %55, %58 : vector<384x128xf32>
    %cst_30 = arith.constant 0xFF800000 : f32
    %60 = vector.broadcast %cst_30 : f32 to vector<384x128xf32>
    %61 = arith.select %59, %60, %55 : vector<384x128xi1>, vector<384x128xf32>
    %cst_31 = arith.constant dense<0xFF800000> : vector<384xf32>
    %62 = vector.multi_reduction <maximumf>, %61, %cst_31 [1] : vector<384x128xf32> to vector<384xf32>
    %63 = vector.shape_cast %62 : vector<384xf32> to vector<384x1xf32>
    %64 = vector.broadcast %63 : vector<384x1xf32> to vector<384x128xf32>
    %65 = arith.cmpf oge, %61, %64 : vector<384x128xf32>
    %cst_32 = arith.constant 0xFF800000 : f32
    %66 = vector.broadcast %cst_32 : f32 to vector<384x128xf32>
    %67 = arith.select %65, %66, %61 : vector<384x128xi1>, vector<384x128xf32>
    %cst_33 = arith.constant dense<0xFF800000> : vector<384xf32>
    %68 = vector.multi_reduction <maximumf>, %67, %cst_33 [1] : vector<384x128xf32> to vector<384xf32>
    %69 = vector.shape_cast %68 : vector<384xf32> to vector<384x1xf32>
    %70 = vector.broadcast %69 : vector<384x1xf32> to vector<384x128xf32>
    %71 = arith.cmpf oge, %23, %70 : vector<384x128xf32>
    %72 = arith.andi %10, %71 : vector<384x128xi1>
    %cst_34 = arith.constant 0.000000e+00 : f32
    %73 = vector.broadcast %cst_34 : f32 to vector<384x128xf32>
    %74 = arith.select %72, %23, %73 : vector<384x128xi1>, vector<384x128xf32>
    %75 = arith.truncf %74 : vector<384x128xf32> to vector<384x128xbf16>
    %c0_i32_35 = arith.constant 0 : i32
    %c3_i32 = arith.constant 3 : i32
    %76 = arith.addi %c0_i32_35, %c3_i32 : i32
    %c1_i32 = arith.constant 1 : i32
    scf.for %arg13 = %c0_i32_35 to %76 step %c1_i32  : i32 {
      %c1_i32_85 = arith.constant 1 : i32
      %161 = arith.muli %arg13, %c1_i32_85 : i32
      %c0_i32_86 = arith.constant 0 : i32
      %162 = arith.addi %c0_i32_86, %161 : i32
      %c1_i32_87 = arith.constant 1 : i32
      %163 = arith.andi %162, %c1_i32_87 : i32
      %c128_i32 = arith.constant 128 : i32
      %164 = arith.muli %162, %c128_i32 : i32
      %165 = tpu.assume_multiple %164, 128 : i32
      %c0_i32_88 = arith.constant 0 : i32
      %166 = tpu.memref_slice %arg1[%165, %c0_i32_88] : memref<384x384xbf16, #tpu.memory_space<any>> -> memref<128x384xbf16, #tpu.memory_space<any>>
      %c0_i32_89 = arith.constant 0 : i32
      %c0_i32_90 = arith.constant 0 : i32
      %167 = tpu.memref_slice %arg10[%163, %c0_i32_89, %c0_i32_90] : memref<2x128x384xbf16, #tpu.memory_space<vmem>> -> memref<1x128x384xbf16, #tpu.memory_space<vmem>>
      %168 = tpu.memref_squeeze %167 : memref<1x128x384xbf16, #tpu.memory_space<vmem>> -> memref<128x384xbf16, #tpu.memory_space<vmem>>
      %169 = tpu.memref_slice %arg11[%163] : memref<2x!tpu.dma_semaphore, #tpu.memory_space<semaphore_mem>> -> memref<1x!tpu.dma_semaphore, #tpu.memory_space<semaphore_mem>>
      %170 = tpu.memref_squeeze %169 : memref<1x!tpu.dma_semaphore, #tpu.memory_space<semaphore_mem>> -> memref<!tpu.dma_semaphore, #tpu.memory_space<semaphore_mem>>
      tpu.wait_dma2 semaphore(%170 : memref<!tpu.dma_semaphore, #tpu.memory_space<semaphore_mem>>) src(%166 : memref<128x384xbf16, #tpu.memory_space<any>>) dst(%168 : memref<128x384xbf16, #tpu.memory_space<vmem>>)
      %c1_i32_91 = arith.constant 1 : i32
      %171 = arith.addi %162, %c1_i32_91 : i32
      %c3_i32_92 = arith.constant 3 : i32
      %172 = arith.cmpi slt, %171, %c3_i32_92 : i32
      %173 = arith.extui %172 : i1 to i32
      %c0_i32_93 = arith.constant 0 : i32
      %174 = arith.cmpi ne, %173, %c0_i32_93 : i32
      scf.if %174 {
        %c1_i32_99 = arith.constant 1 : i32
        %183 = arith.addi %162, %c1_i32_99 : i32
        %c1_i32_100 = arith.constant 1 : i32
        %184 = arith.subi %c1_i32_100, %163 : i32
        %c128_i32_101 = arith.constant 128 : i32
        %185 = arith.muli %183, %c128_i32_101 : i32
        %186 = tpu.assume_multiple %185, 128 : i32
        %c0_i32_102 = arith.constant 0 : i32
        %187 = tpu.memref_slice %arg1[%186, %c0_i32_102] : memref<384x384xbf16, #tpu.memory_space<any>> -> memref<128x384xbf16, #tpu.memory_space<any>>
        %c0_i32_103 = arith.constant 0 : i32
        %c0_i32_104 = arith.constant 0 : i32
        %188 = tpu.memref_slice %arg10[%184, %c0_i32_103, %c0_i32_104] : memref<2x128x384xbf16, #tpu.memory_space<vmem>> -> memref<1x128x384xbf16, #tpu.memory_space<vmem>>
        %189 = tpu.memref_squeeze %188 : memref<1x128x384xbf16, #tpu.memory_space<vmem>> -> memref<128x384xbf16, #tpu.memory_space<vmem>>
        %190 = tpu.memref_slice %arg11[%184] : memref<2x!tpu.dma_semaphore, #tpu.memory_space<semaphore_mem>> -> memref<1x!tpu.dma_semaphore, #tpu.memory_space<semaphore_mem>>
        %191 = tpu.memref_squeeze %190 : memref<1x!tpu.dma_semaphore, #tpu.memory_space<semaphore_mem>> -> memref<!tpu.dma_semaphore, #tpu.memory_space<semaphore_mem>>
        tpu.enqueue_dma source(%187 : memref<128x384xbf16, #tpu.memory_space<any>>) target(%189 : memref<128x384xbf16, #tpu.memory_space<vmem>>) target_semaphore(%191 : memref<!tpu.dma_semaphore, #tpu.memory_space<semaphore_mem>>)
      } else {
      }
      %c128_i32_94 = arith.constant 128 : i32
      %175 = arith.muli %162, %c128_i32_94 : i32
      %176 = tpu.assume_multiple %175, 128 : i32
      %177 = arith.index_cast %163 : i32 to index
      %c0_95 = arith.constant 0 : index
      %c0_96 = arith.constant 0 : index
      %178 = vector.load %arg10[%177, %c0_95, %c0_96] : memref<2x128x384xbf16, #tpu.memory_space<vmem>>, vector<1x128x384xbf16>
      %179 = vector.shape_cast %178 : vector<1x128x384xbf16> to vector<128x384xbf16>
      %cst_97 = arith.constant dense<0.000000e+00> : vector<128x128xf32>
      %180 = tpu.matmul %179, %75, %cst_97 {dimension_numbers = #tpu.dot_dimension_numbers<[1], [0], [0], [1], [0, 0, 1, 1], [], []>} : vector<128x384xbf16>, vector<384x128xbf16>, vector<128x128xf32> -> vector<128x128xf32>
      %181 = arith.index_cast %176 : i32 to index
      %c0_98 = arith.constant 0 : index
      %182 = vector.load %arg12[%181, %c0_98] : memref<384x128xf32, #tpu.memory_space<vmem>>, vector<128x128xf32>
      tpu.vector_store %arg12[%181, %c0_98], %180 {strides = array<i32>} : memref<384x128xf32, #tpu.memory_space<vmem>>, vector<128x128xf32>,
    }
    %c3_i32_36 = arith.constant 3 : i32
    %c0_37 = arith.constant 0 : index
    %77 = memref.load %arg0[%c0_37] : memref<2xf32, #tpu.memory_space<smem>>
    %cst_38 = arith.constant 1.000000e+00 : f32
    %78 = arith.addf %cst_38, %77 : f32
    %79 = vector.broadcast %78 : f32 to vector<384x128xf32>
    %80 = arith.mulf %79, %74 : vector<384x128xf32>
    %c0_39 = arith.constant 0 : index
    %c0_40 = arith.constant 0 : index
    %81 = vector.load %arg12[%c0_39, %c0_40] : memref<384x128xf32, #tpu.memory_space<vmem>>, vector<384x128xf32>
    %82 = arith.addf %80, %81 : vector<384x128xf32>
    %c0_i32_41 = arith.constant 0 : i32
    %83 = tpu.assume_multiple %c0_i32_41, 128 : i32
    %c0_i32_42 = arith.constant 0 : i32
    %c0_i32_43 = arith.constant 0 : i32
    %c0_i32_44 = arith.constant 0 : i32
    %84 = tpu.memref_slice %arg1[%83, %c0_i32_44] : memref<384x384xbf16, #tpu.memory_space<any>> -> memref<128x384xbf16, #tpu.memory_space<any>>
    %c0_i32_45 = arith.constant 0 : i32
    %c0_i32_46 = arith.constant 0 : i32
    %85 = tpu.memref_slice %arg10[%c0_i32_42, %c0_i32_45, %c0_i32_46] : memref<2x128x384xbf16, #tpu.memory_space<vmem>> -> memref<1x128x384xbf16, #tpu.memory_space<vmem>>
    %86 = tpu.memref_squeeze %85 : memref<1x128x384xbf16, #tpu.memory_space<vmem>> -> memref<128x384xbf16, #tpu.memory_space<vmem>>
    %87 = tpu.memref_slice %arg11[%c0_i32_43] : memref<2x!tpu.dma_semaphore, #tpu.memory_space<semaphore_mem>> -> memref<1x!tpu.dma_semaphore, #tpu.memory_space<semaphore_mem>>
    %88 = tpu.memref_squeeze %87 : memref<1x!tpu.dma_semaphore, #tpu.memory_space<semaphore_mem>> -> memref<!tpu.dma_semaphore, #tpu.memory_space<semaphore_mem>>
    tpu.enqueue_dma source(%84 : memref<128x384xbf16, #tpu.memory_space<any>>) target(%86 : memref<128x384xbf16, #tpu.memory_space<vmem>>) target_semaphore(%88 : memref<!tpu.dma_semaphore, #tpu.memory_space<semaphore_mem>>)
    %c1 = arith.constant 1 : index
    %c0_47 = arith.constant 0 : index
    %c0_48 = arith.constant 0 : index
    %89 = vector.load %arg5[%c1, %c0_47, %c0_48] : memref<2x128x128xf32, #tpu.memory_space<vmem>>, vector<1x128x128xf32>
    %90 = vector.shape_cast %89 : vector<1x128x128xf32> to vector<128x128xf32>
    %cst_49 = arith.constant dense<0.000000e+00> : vector<384x128xf32>
    %91 = tpu.matmul %82, %90, %cst_49 {dimension_numbers = #tpu.dot_dimension_numbers<[1], [0], [0], [1], [0, 0, 1, 1], [], []>} : vector<384x128xf32>, vector<128x128xf32>, vector<384x128xf32> -> vector<384x128xf32>
    %c1_50 = arith.constant 1 : index
    %c0_51 = arith.constant 0 : index
    %c0_52 = arith.constant 0 : index
    %92 = vector.load %arg6[%c1_50, %c0_51, %c0_52] : memref<2x1x128xf32, #tpu.memory_space<vmem>>, vector<1x1x128xf32>
    %93 = vector.shape_cast %92 : vector<1x1x128xf32> to vector<1x128xf32>
    %94 = vector.broadcast %93 : vector<1x128xf32> to vector<384x128xf32>
    %95 = arith.addf %91, %94 : vector<384x128xf32>
    %cst_53 = arith.constant 0xFF800000 : f32
    %96 = vector.broadcast %cst_53 : f32 to vector<384x128xf32>
    %97 = arith.select %10, %95, %96 : vector<384x128xi1>, vector<384x128xf32>
    %cst_54 = arith.constant dense<0xFF800000> : vector<384xf32>
    %98 = vector.multi_reduction <maximumf>, %97, %cst_54 [1] : vector<384x128xf32> to vector<384xf32>
    %99 = vector.shape_cast %98 : vector<384xf32> to vector<384x1xf32>
    %100 = vector.broadcast %99 : vector<384x1xf32> to vector<384x128xf32>
    %101 = arith.cmpf oge, %97, %100 : vector<384x128xf32>
    %cst_55 = arith.constant 0xFF800000 : f32
    %102 = vector.broadcast %cst_55 : f32 to vector<384x128xf32>
    %103 = arith.select %101, %102, %97 : vector<384x128xi1>, vector<384x128xf32>
    %cst_56 = arith.constant dense<0xFF800000> : vector<384xf32>
    %104 = vector.multi_reduction <maximumf>, %103, %cst_56 [1] : vector<384x128xf32> to vector<384xf32>
    %105 = vector.shape_cast %104 : vector<384xf32> to vector<384x1xf32>
    %106 = vector.broadcast %105 : vector<384x1xf32> to vector<384x128xf32>
    %107 = arith.cmpf oge, %103, %106 : vector<384x128xf32>
    %cst_57 = arith.constant 0xFF800000 : f32
    %108 = vector.broadcast %cst_57 : f32 to vector<384x128xf32>
    %109 = arith.select %107, %108, %103 : vector<384x128xi1>, vector<384x128xf32>
    %cst_58 = arith.constant dense<0xFF800000> : vector<384xf32>
    %110 = vector.multi_reduction <maximumf>, %109, %cst_58 [1] : vector<384x128xf32> to vector<384xf32>
    %111 = vector.shape_cast %110 : vector<384xf32> to vector<384x1xf32>
    %112 = vector.broadcast %111 : vector<384x1xf32> to vector<384x128xf32>
    %113 = arith.cmpf oge, %109, %112 : vector<384x128xf32>
    %cst_59 = arith.constant 0xFF800000 : f32
    %114 = vector.broadcast %cst_59 : f32 to vector<384x128xf32>
    %115 = arith.select %113, %114, %109 : vector<384x128xi1>, vector<384x128xf32>
    %cst_60 = arith.constant dense<0xFF800000> : vector<384xf32>
    %116 = vector.multi_reduction <maximumf>, %115, %cst_60 [1] : vector<384x128xf32> to vector<384xf32>
    %117 = vector.shape_cast %116 : vector<384xf32> to vector<384x1xf32>
    %118 = vector.broadcast %117 : vector<384x1xf32> to vector<384x128xf32>
    %119 = arith.cmpf oge, %115, %118 : vector<384x128xf32>
    %cst_61 = arith.constant 0xFF800000 : f32
    %120 = vector.broadcast %cst_61 : f32 to vector<384x128xf32>
    %121 = arith.select %119, %120, %115 : vector<384x128xi1>, vector<384x128xf32>
    %cst_62 = arith.constant dense<0xFF800000> : vector<384xf32>
    %122 = vector.multi_reduction <maximumf>, %121, %cst_62 [1] : vector<384x128xf32> to vector<384xf32>
    %123 = vector.shape_cast %122 : vector<384xf32> to vector<384x1xf32>
    %124 = vector.broadcast %123 : vector<384x1xf32> to vector<384x128xf32>
    %125 = arith.cmpf oge, %121, %124 : vector<384x128xf32>
    %cst_63 = arith.constant 0xFF800000 : f32
    %126 = vector.broadcast %cst_63 : f32 to vector<384x128xf32>
    %127 = arith.select %125, %126, %121 : vector<384x128xi1>, vector<384x128xf32>
    %cst_64 = arith.constant dense<0xFF800000> : vector<384xf32>
    %128 = vector.multi_reduction <maximumf>, %127, %cst_64 [1] : vector<384x128xf32> to vector<384xf32>
    %129 = vector.shape_cast %128 : vector<384xf32> to vector<384x1xf32>
    %130 = vector.broadcast %129 : vector<384x1xf32> to vector<384x128xf32>
    %131 = arith.cmpf oge, %127, %130 : vector<384x128xf32>
    %cst_65 = arith.constant 0xFF800000 : f32
    %132 = vector.broadcast %cst_65 : f32 to vector<384x128xf32>
    %133 = arith.select %131, %132, %127 : vector<384x128xi1>, vector<384x128xf32>
    %cst_66 = arith.constant dense<0xFF800000> : vector<384xf32>
    %134 = vector.multi_reduction <maximumf>, %133, %cst_66 [1] : vector<384x128xf32> to vector<384xf32>
    %135 = vector.shape_cast %134 : vector<384xf32> to vector<384x1xf32>
    %136 = vector.broadcast %135 : vector<384x1xf32> to vector<384x128xf32>
    %137 = arith.cmpf oge, %133, %136 : vector<384x128xf32>
    %cst_67 = arith.constant 0xFF800000 : f32
    %138 = vector.broadcast %cst_67 : f32 to vector<384x128xf32>
    %139 = arith.select %137, %138, %133 : vector<384x128xi1>, vector<384x128xf32>
    %cst_68 = arith.constant dense<0xFF800000> : vector<384xf32>
    %140 = vector.multi_reduction <maximumf>, %139, %cst_68 [1] : vector<384x128xf32> to vector<384xf32>
    %141 = vector.shape_cast %140 : vector<384xf32> to vector<384x1xf32>
    %142 = vector.broadcast %141 : vector<384x1xf32> to vector<384x128xf32>
    %143 = arith.cmpf oge, %95, %142 : vector<384x128xf32>
    %144 = arith.andi %10, %143 : vector<384x128xi1>
    %cst_69 = arith.constant 0.000000e+00 : f32
    %145 = vector.broadcast %cst_69 : f32 to vector<384x128xf32>
    %146 = arith.select %144, %95, %145 : vector<384x128xi1>, vector<384x128xf32>
    %147 = arith.truncf %146 : vector<384x128xf32> to vector<384x128xbf16>
    %c0_i32_70 = arith.constant 0 : i32
    %c3_i32_71 = arith.constant 3 : i32
    %148 = arith.addi %c0_i32_70, %c3_i32_71 : i32
    %c1_i32_72 = arith.constant 1 : i32
    scf.for %arg13 = %c0_i32_70 to %148 step %c1_i32_72  : i32 {
      %c1_i32_85 = arith.constant 1 : i32
      %161 = arith.muli %arg13, %c1_i32_85 : i32
      %c0_i32_86 = arith.constant 0 : i32
      %162 = arith.addi %c0_i32_86, %161 : i32
      %c1_i32_87 = arith.constant 1 : i32
      %163 = arith.andi %162, %c1_i32_87 : i32
      %c128_i32 = arith.constant 128 : i32
      %164 = arith.muli %162, %c128_i32 : i32
      %165 = tpu.assume_multiple %164, 128 : i32
      %c0_i32_88 = arith.constant 0 : i32
      %166 = tpu.memref_slice %arg1[%165, %c0_i32_88] : memref<384x384xbf16, #tpu.memory_space<any>> -> memref<128x384xbf16, #tpu.memory_space<any>>
      %c0_i32_89 = arith.constant 0 : i32
      %c0_i32_90 = arith.constant 0 : i32
      %167 = tpu.memref_slice %arg10[%163, %c0_i32_89, %c0_i32_90] : memref<2x128x384xbf16, #tpu.memory_space<vmem>> -> memref<1x128x384xbf16, #tpu.memory_space<vmem>>
      %168 = tpu.memref_squeeze %167 : memref<1x128x384xbf16, #tpu.memory_space<vmem>> -> memref<128x384xbf16, #tpu.memory_space<vmem>>
      %169 = tpu.memref_slice %arg11[%163] : memref<2x!tpu.dma_semaphore, #tpu.memory_space<semaphore_mem>> -> memref<1x!tpu.dma_semaphore, #tpu.memory_space<semaphore_mem>>
      %170 = tpu.memref_squeeze %169 : memref<1x!tpu.dma_semaphore, #tpu.memory_space<semaphore_mem>> -> memref<!tpu.dma_semaphore, #tpu.memory_space<semaphore_mem>>
      tpu.wait_dma2 semaphore(%170 : memref<!tpu.dma_semaphore, #tpu.memory_space<semaphore_mem>>) src(%166 : memref<128x384xbf16, #tpu.memory_space<any>>) dst(%168 : memref<128x384xbf16, #tpu.memory_space<vmem>>)
      %c1_i32_91 = arith.constant 1 : i32
      %171 = arith.addi %162, %c1_i32_91 : i32
      %c3_i32_92 = arith.constant 3 : i32
      %172 = arith.cmpi slt, %171, %c3_i32_92 : i32
      %173 = arith.extui %172 : i1 to i32
      %c0_i32_93 = arith.constant 0 : i32
      %174 = arith.cmpi ne, %173, %c0_i32_93 : i32
      scf.if %174 {
        %c1_i32_99 = arith.constant 1 : i32
        %183 = arith.addi %162, %c1_i32_99 : i32
        %c1_i32_100 = arith.constant 1 : i32
        %184 = arith.subi %c1_i32_100, %163 : i32
        %c128_i32_101 = arith.constant 128 : i32
        %185 = arith.muli %183, %c128_i32_101 : i32
        %186 = tpu.assume_multiple %185, 128 : i32
        %c0_i32_102 = arith.constant 0 : i32
        %187 = tpu.memref_slice %arg1[%186, %c0_i32_102] : memref<384x384xbf16, #tpu.memory_space<any>> -> memref<128x384xbf16, #tpu.memory_space<any>>
        %c0_i32_103 = arith.constant 0 : i32
        %c0_i32_104 = arith.constant 0 : i32
        %188 = tpu.memref_slice %arg10[%184, %c0_i32_103, %c0_i32_104] : memref<2x128x384xbf16, #tpu.memory_space<vmem>> -> memref<1x128x384xbf16, #tpu.memory_space<vmem>>
        %189 = tpu.memref_squeeze %188 : memref<1x128x384xbf16, #tpu.memory_space<vmem>> -> memref<128x384xbf16, #tpu.memory_space<vmem>>
        %190 = tpu.memref_slice %arg11[%184] : memref<2x!tpu.dma_semaphore, #tpu.memory_space<semaphore_mem>> -> memref<1x!tpu.dma_semaphore, #tpu.memory_space<semaphore_mem>>
        %191 = tpu.memref_squeeze %190 : memref<1x!tpu.dma_semaphore, #tpu.memory_space<semaphore_mem>> -> memref<!tpu.dma_semaphore, #tpu.memory_space<semaphore_mem>>
        tpu.enqueue_dma source(%187 : memref<128x384xbf16, #tpu.memory_space<any>>) target(%189 : memref<128x384xbf16, #tpu.memory_space<vmem>>) target_semaphore(%191 : memref<!tpu.dma_semaphore, #tpu.memory_space<semaphore_mem>>)
      } else {
      }
      %c128_i32_94 = arith.constant 128 : i32
      %175 = arith.muli %162, %c128_i32_94 : i32
      %176 = tpu.assume_multiple %175, 128 : i32
      %177 = arith.index_cast %163 : i32 to index
      %c0_95 = arith.constant 0 : index
      %c0_96 = arith.constant 0 : index
      %178 = vector.load %arg10[%177, %c0_95, %c0_96] : memref<2x128x384xbf16, #tpu.memory_space<vmem>>, vector<1x128x384xbf16>
      %179 = vector.shape_cast %178 : vector<1x128x384xbf16> to vector<128x384xbf16>
      %cst_97 = arith.constant dense<0.000000e+00> : vector<128x128xf32>
      %180 = tpu.matmul %179, %147, %cst_97 {dimension_numbers = #tpu.dot_dimension_numbers<[1], [0], [0], [1], [0, 0, 1, 1], [], []>} : vector<128x384xbf16>, vector<384x128xbf16>, vector<128x128xf32> -> vector<128x128xf32>
      %181 = arith.index_cast %176 : i32 to index
      %c0_98 = arith.constant 0 : index
      %182 = vector.load %arg12[%181, %c0_98] : memref<384x128xf32, #tpu.memory_space<vmem>>, vector<128x128xf32>
      tpu.vector_store %arg12[%181, %c0_98], %180 {strides = array<i32>} : memref<384x128xf32, #tpu.memory_space<vmem>>, vector<128x128xf32>,
    }
    %c3_i32_73 = arith.constant 3 : i32
    %c1_74 = arith.constant 1 : index
    %149 = memref.load %arg0[%c1_74] : memref<2xf32, #tpu.memory_space<smem>>
    %cst_75 = arith.constant 1.000000e+00 : f32
    %150 = arith.addf %cst_75, %149 : f32
    %151 = vector.broadcast %150 : f32 to vector<384x128xf32>
    %152 = arith.mulf %151, %146 : vector<384x128xf32>
    %c0_76 = arith.constant 0 : index
    %c0_77 = arith.constant 0 : index
    %153 = vector.load %arg12[%c0_76, %c0_77] : memref<384x128xf32, #tpu.memory_space<vmem>>, vector<384x128xf32>
    %154 = arith.addf %152, %153 : vector<384x128xf32>
    %c0_78 = arith.constant 0 : index
    %c0_79 = arith.constant 0 : index
    %155 = vector.load %arg7[%c0_78, %c0_79] : memref<128x128xf32, #tpu.memory_space<vmem>>, vector<128x128xf32>
    %cst_80 = arith.constant dense<0.000000e+00> : vector<384x128xf32>
    %156 = tpu.matmul %154, %155, %cst_80 {dimension_numbers = #tpu.dot_dimension_numbers<[1], [0], [0], [1], [0, 0, 1, 1], [], []>} : vector<384x128xf32>, vector<128x128xf32>, vector<384x128xf32> -> vector<384x128xf32>
    %c0_81 = arith.constant 0 : index
    %c0_82 = arith.constant 0 : index
    %157 = vector.load %arg8[%c0_81, %c0_82] : memref<1x128xf32, #tpu.memory_space<vmem>>, vector<1x128xf32>
    %158 = vector.broadcast %157 : vector<1x128xf32> to vector<384x128xf32>
    %159 = arith.addf %156, %158 : vector<384x128xf32>
    %c0_83 = arith.constant 0 : index
    %c0_84 = arith.constant 0 : index
    %160 = vector.load %arg9[%c0_83, %c0_84] : memref<384x128xf32, #tpu.memory_space<vmem>>, vector<384x128xf32>
    tpu.vector_store %arg9[%c0_83, %c0_84], %159 {strides = array<i32>} : memref<384x128xf32, #tpu.memory_space<vmem>>, vector<384x128xf32>,
    return
  }
}

</mosaic_0001>

<llo_original>
// kernel: tpu_custom_call.1
$region0: #{tpu_custom_call.1}
  #allocation0 [shape = 'u32[]', space=smem, size = 0x4, offset = 0x4, fixed_abs, tag = 'smem constant byte address 0x4 - core index']
  #allocation1 [shape = 'u32[144,128]{1,0:T(1,128)}', space=vmem, size = 0x12000, scoped, tag = 'internal scratch']
  #allocation2 [shape = 'bf16[2,128,384]{2,1,0:T(8,128)(2,1)}', space=vmem, size = 0x30000, scoped, tag = 'scratch operand']
  #allocation3 [shape = 's32[2]{0}', space=sflag, size = 0x8, scoped, tag = 'scratch operand']
  #allocation4 [shape = 'f32[384,128]{1,0:T(8,128)}', space=vmem, size = 0x30000, scoped, tag = 'scratch operand']
  #allocation16 [shape = 's32[]', space=sflag, size = 0x4, offset = 0, fixed_abs, tag = 'sflag constant byte address 0x0 - dummy sync flag']
  #allocation17 [shape = 's32[]', space=sflag, size = 0x4, offset = 0, fixed_abs, tag = 'sflag constant byte address 0x0 - dummy sync flag']
  #allocation18 [shape = 'u32[]', space=smem, size = 0x4, offset = 0x44, fixed_abs, tag = 'smem constant byte address 0x44 - assertion arg 0']
  #allocation19 [shape = 'u32[]', space=smem, size = 0x4, offset = 0x48, fixed_abs, tag = 'smem constant byte address 0x48 - assertion arg 1']
  #allocation20 [shape = 's32[]', space=sflag, size = 0x4, offset = 0, fixed_abs, tag = 'sflag constant byte address 0x0 - dummy sync flag']
  #allocation21 [shape = 's32[]', space=sflag, size = 0x4, offset = 0, fixed_abs, tag = 'sflag constant byte address 0x0 - dummy sync flag']
  #allocation22 [shape = 's32[]', space=sflag, size = 0x4, offset = 0, fixed_abs, tag = 'sflag constant byte address 0x0 - dummy sync flag']
  #allocation23 [shape = 's32[]', space=sflag, size = 0x4, offset = 0, fixed_abs, tag = 'sflag constant byte address 0x0 - dummy sync flag']
  #allocation24 [shape = 's32[]', space=sflag, size = 0x4, offset = 0, fixed_abs, tag = 'sflag constant byte address 0x0 - dummy sync flag']
  #allocation25 [shape = 's32[]', space=sflag, size = 0x4, offset = 0, fixed_abs, tag = 'sflag constant byte address 0x0 - dummy sync flag']
  %s0 = inlined_call_operand.hbm [shape: f32[2], index: 0, kind: input, shape index: {}]
  %s1 = inlined_call_operand.hbm [shape: bf16[384,384], index: 1, kind: input, shape index: {}]
  %s2 = inlined_call_operand.hbm [shape: f32[384,128], index: 2, kind: input, shape index: {}]
  %s3 = inlined_call_operand.hbm [shape: f32[128,128], index: 3, kind: input, shape index: {}]
  %s4 = inlined_call_operand.vmem [shape: f32[1,128], index: 4, kind: input, shape index: {}]
  %s5 = inlined_call_operand.hbm [shape: f32[2,128,128], index: 5, kind: input, shape index: {}]
  %s6 = inlined_call_operand.vmem [shape: f32[2,1,128], index: 6, kind: input, shape index: {}]
  %s7 = inlined_call_operand.hbm [shape: f32[128,128], index: 7, kind: input, shape index: {}]
  %s8 = inlined_call_operand.vmem [shape: f32[1,128], index: 8, kind: input, shape index: {}]
  %s9 = inlined_call_operand.hbm [shape: f32[384,128], index: 9, kind: output, shape index: {}]
  %s10 = sld [smem:[#allocation0]]
  $region100: #{tpu_custom_call.1} parent=0
    _
  %s12 = ssub.s32 1, %s10
  %s13 = scalar_select 0, %s12, %s10
  $region1: #{tpu_custom_call.1} parent=0
    #allocation5 [shape = 'u8[512]{0}', space=smem, size = 0x200, scoped, tag = 'input window, operand 0, single buffered']
    #allocation6 [shape = 's32[1]{0}', space=sflag, size = 0x4, scoped, tag = 'scoped memory for tpu_custom_call.1']
    #allocation7 [shape = 's32[1]{0}', space=sflag, size = 0x4, scoped, tag = 'scoped memory for tpu_custom_call.1']
    #allocation8 [shape = 's32[1]{0}', space=sflag, size = 0x4, scoped, tag = 'scoped memory for tpu_custom_call.1']
    #allocation9 [shape = 'u8[196608]{0}', space=vmem, size = 0x30000, scoped, tag = 'input window, operand 2, single buffered']
    #allocation10 [shape = 'u8[65536]{0}', space=vmem, size = 0x10000, scoped, tag = 'input window, operand 3, single buffered']
    #allocation11 [shape = 's32[1]{0}', space=sflag, size = 0x4, scoped, tag = 'scoped memory for tpu_custom_call.1']
    #allocation12 [shape = 'u8[131072]{0}', space=vmem, size = 0x20000, scoped, tag = 'input window, operand 5, single buffered']
    #allocation13 [shape = 'u8[65536]{0}', space=vmem, size = 0x10000, scoped, tag = 'input window, operand 7, single buffered']
    #allocation14 [shape = 's32[1]{0}', space=sflag, size = 0x4, scoped, tag = 'scoped memory for tpu_custom_call.1']
    #allocation15 [shape = 'u8[196608]{0}', space=vmem, size = 0x30000, scoped, tag = 'output window, operand 0, single buffered']
    %14 = vsyncpa [#allocation8], 0
    %15 = vsyncpa [#allocation6], 0
    %16 = vsyncpa [#allocation11], 0
    %17 = vsyncpa [#allocation14], 0
    %18 = vsyncpa [#allocation7], 0
    // Predicated region
    $region2: #{tpu_custom_call.1} parent=1 // pred_check
      _
    $region3: #{tpu_custom_call.1} parent=1 // pred_check_branch
      %20 = sbr.rel (0) target = $region5
    $region4: #{tpu_custom_call.1} parent=1 // pred_region
      %s22 = ssub.s32 16, 16
      %23 = vsyncadd [#allocation8], %s22
      %26 = dma.hbm_to_smem %s0, 16, [#allocation5], [#allocation8]
    $region5: #{tpu_custom_call.1} parent=1 // pred_fallthru
      _
    // Predicated region
    $region6: #{tpu_custom_call.1} parent=1 // pred_check
      _
    $region7: #{tpu_custom_call.1} parent=1 // pred_check_branch
      %28 = sbr.rel (0) target = $region9
    $region8: #{tpu_custom_call.1} parent=1 // pred_region
      %s30 = ssub.s32 6144, 6144
      %31 = vsyncadd [#allocation6], %s30
      %s32 = sshll.u32 [#allocation9], 4
      %s33 = int_to_ptr.vmem [resolvable:$true] %s32
      %38 = dma.hbm_to_vmem [thread:$0]  %s2, 6144, %s33, [#allocation6], 128, 128, 8
    $region9: #{tpu_custom_call.1} parent=1 // pred_fallthru
      _
    // Predicated region
    $region10: #{tpu_custom_call.1} parent=1 // pred_check
      _
    $region11: #{tpu_custom_call.1} parent=1 // pred_check_branch
      %40 = sbr.rel (0) target = $region13
    $region12: #{tpu_custom_call.1} parent=1 // pred_region
      %s42 = ssub.s32 2048, 2048
      %43 = vsyncadd [#allocation11], %s42
      %s44 = sshll.u32 [#allocation10], 4
      %s45 = int_to_ptr.vmem [resolvable:$true] %s44
      %50 = dma.hbm_to_vmem [thread:$0]  %s3, 2048, %s45, [#allocation11], 128, 128, 8
    $region13: #{tpu_custom_call.1} parent=1 // pred_fallthru
      _
    // Predicated region
    $region14: #{tpu_custom_call.1} parent=1 // pred_check
      _
    $region15: #{tpu_custom_call.1} parent=1 // pred_check_branch
      %52 = sbr.rel (0) target = $region17
    $region16: #{tpu_custom_call.1} parent=1 // pred_region
      _
    $region17: #{tpu_custom_call.1} parent=1 // pred_fallthru
      _
    // Predicated region
    $region18: #{tpu_custom_call.1} parent=1 // pred_check
      _
    $region19: #{tpu_custom_call.1} parent=1 // pred_check_branch
      %54 = sbr.rel (0) target = $region21
    $region20: #{tpu_custom_call.1} parent=1 // pred_region
      %s56 = ssub.s32 4096, 4096
      %57 = vsyncadd [#allocation11], %s56
      %s58 = sshll.u32 [#allocation12], 4
      %s59 = int_to_ptr.vmem [resolvable:$true] %s58
      %64 = dma.hbm_to_vmem [thread:$0]  %s5, 4096, %s59, [#allocation11], 128, 128, 8
    $region21: #{tpu_custom_call.1} parent=1 // pred_fallthru
      _
    // Predicated region
    $region22: #{tpu_custom_call.1} parent=1 // pred_check
      _
    $region23: #{tpu_custom_call.1} parent=1 // pred_check_branch
      %66 = sbr.rel (0) target = $region25
    $region24: #{tpu_custom_call.1} parent=1 // pred_region
      _
    $region25: #{tpu_custom_call.1} parent=1 // pred_fallthru
      _
    // Predicated region
    $region26: #{tpu_custom_call.1} parent=1 // pred_check
      _
    $region27: #{tpu_custom_call.1} parent=1 // pred_check_branch
      %68 = sbr.rel (0) target = $region29
    $region28: #{tpu_custom_call.1} parent=1 // pred_region
      %s70 = ssub.s32 2048, 2048
      %71 = vsyncadd [#allocation14], %s70
      %s72 = sshll.u32 [#allocation13], 4
      %s73 = int_to_ptr.vmem [resolvable:$true] %s72
      %78 = dma.hbm_to_vmem [thread:$0]  %s7, 2048, %s73, [#allocation14], 128, 128, 8
    $region29: #{tpu_custom_call.1} parent=1 // pred_fallthru
      _
    // Predicated region
    $region30: #{tpu_custom_call.1} parent=1 // pred_check
      _
    $region31: #{tpu_custom_call.1} parent=1 // pred_check_branch
      %80 = sbr.rel (0) target = $region33
    $region32: #{tpu_custom_call.1} parent=1 // pred_region
      _
    $region33: #{tpu_custom_call.1} parent=1 // pred_fallthru
      _
    // Predicated region
    $region34: #{tpu_custom_call.1} parent=1 // pred_check
      _
    $region35: #{tpu_custom_call.1} parent=1 // pred_check_branch
      %82 = sbr.rel (0) target = $region37
    $region36: #{tpu_custom_call.1} parent=1 // pred_region
      %83 = dma.done [#allocation8], 16
    $region37: #{tpu_custom_call.1} parent=1 // pred_fallthru
      _
    // Predicated region
    $region38: #{tpu_custom_call.1} parent=1 // pred_check
      _
    $region39: #{tpu_custom_call.1} parent=1 // pred_check_branch
      %85 = sbr.rel (0) target = $region41
    $region40: #{tpu_custom_call.1} parent=1 // pred_region
      %86 = dma.done [#allocation6], 6144
    $region41: #{tpu_custom_call.1} parent=1 // pred_fallthru
      _
    // Predicated region
    $region42: #{tpu_custom_call.1} parent=1 // pred_check
      _
    $region43: #{tpu_custom_call.1} parent=1 // pred_check_branch
      %88 = sbr.rel (0) target = $region45
    $region44: #{tpu_custom_call.1} parent=1 // pred_region
      %89 = dma.done [#allocation11], 2048
    $region45: #{tpu_custom_call.1} parent=1 // pred_fallthru
      _
    // Predicated region
    $region46: #{tpu_custom_call.1} parent=1 // pred_check
      _
    $region47: #{tpu_custom_call.1} parent=1 // pred_check_branch
      %91 = sbr.rel (0) target = $region49
    $region48: #{tpu_custom_call.1} parent=1 // pred_region
      %92 = dma.done [#allocation11], 4096
    $region49: #{tpu_custom_call.1} parent=1 // pred_fallthru
      _
    // Predicated region
    $region50: #{tpu_custom_call.1} parent=1 // pred_check
      _
    $region51: #{tpu_custom_call.1} parent=1 // pred_check_branch
      %94 = sbr.rel (0) target = $region53
    $region52: #{tpu_custom_call.1} parent=1 // pred_region
      %95 = dma.done [#allocation14], 2048
    $region53: #{tpu_custom_call.1} parent=1 // pred_fallthru
      _
    %96 = sfence
    %v98 = vld [vmem:[#allocation9] sm:$0xff]
    %v99 = vld [vmem:[#allocation9 + $0x8] sm:$0xff]
    %v100 = vld [vmem:[#allocation9 + $0x10] sm:$0xff]
    %v101 = vld [vmem:[#allocation9 + $0x18] sm:$0xff]
    %v102 = vld [vmem:[#allocation9 + $0x20] sm:$0xff]
    %v103 = vld [vmem:[#allocation9 + $0x28] sm:$0xff]
    %v104 = vld [vmem:[#allocation9 + $0x30] sm:$0xff]
    %v105 = vld [vmem:[#allocation9 + $0x38] sm:$0xff]
    %v106 = vld [vmem:[#allocation9 + $0x40] sm:$0xff]
    %v107 = vld [vmem:[#allocation9 + $0x48] sm:$0xff]
    %v108 = vld [vmem:[#allocation9 + $0x50] sm:$0xff]
    %v109 = vld [vmem:[#allocation9 + $0x58] sm:$0xff]
    %v110 = vld [vmem:[#allocation9 + $0x60] sm:$0xff]
    %v111 = vld [vmem:[#allocation9 + $0x68] sm:$0xff]
    %v112 = vld [vmem:[#allocation9 + $0x70] sm:$0xff]
    %v113 = vld [vmem:[#allocation9 + $0x78] sm:$0xff]
    %v114 = vld [vmem:[#allocation9 + $0x80] sm:$0xff]
    %v115 = vld [vmem:[#allocation9 + $0x88] sm:$0xff]
    %v116 = vld [vmem:[#allocation9 + $0x90] sm:$0xff]
    %v117 = vld [vmem:[#allocation9 + $0x98] sm:$0xff]
    %v118 = vld [vmem:[#allocation9 + $0xa0] sm:$0xff]
    %v119 = vld [vmem:[#allocation9 + $0xa8] sm:$0xff]
    %v120 = vld [vmem:[#allocation9 + $0xb0] sm:$0xff]
    %v121 = vld [vmem:[#allocation9 + $0xb8] sm:$0xff]
    %v122 = vld [vmem:[#allocation9 + $0xc0] sm:$0xff]
    %v123 = vld [vmem:[#allocation9 + $0xc8] sm:$0xff]
    %v124 = vld [vmem:[#allocation9 + $0xd0] sm:$0xff]
    %v125 = vld [vmem:[#allocation9 + $0xd8] sm:$0xff]
    %v126 = vld [vmem:[#allocation9 + $0xe0] sm:$0xff]
    %v127 = vld [vmem:[#allocation9 + $0xe8] sm:$0xff]
    %v128 = vld [vmem:[#allocation9 + $0xf0] sm:$0xff]
    %v129 = vld [vmem:[#allocation9 + $0xf8] sm:$0xff]
    %v130 = vld [vmem:[#allocation9 + $0x100] sm:$0xff]
    %v131 = vld [vmem:[#allocation9 + $0x108] sm:$0xff]
    %v132 = vld [vmem:[#allocation9 + $0x110] sm:$0xff]
    %v133 = vld [vmem:[#allocation9 + $0x118] sm:$0xff]
    %v134 = vld [vmem:[#allocation9 + $0x120] sm:$0xff]
    %v135 = vld [vmem:[#allocation9 + $0x128] sm:$0xff]
    %v136 = vld [vmem:[#allocation9 + $0x130] sm:$0xff]
    %v137 = vld [vmem:[#allocation9 + $0x138] sm:$0xff]
    %v138 = vld [vmem:[#allocation9 + $0x140] sm:$0xff]
    %v139 = vld [vmem:[#allocation9 + $0x148] sm:$0xff]
    %v140 = vld [vmem:[#allocation9 + $0x150] sm:$0xff]
    %v141 = vld [vmem:[#allocation9 + $0x158] sm:$0xff]
    %v142 = vld [vmem:[#allocation9 + $0x160] sm:$0xff]
    %v143 = vld [vmem:[#allocation9 + $0x168] sm:$0xff]
    %v144 = vld [vmem:[#allocation9 + $0x170] sm:$0xff]
    %v145 = vld [vmem:[#allocation9 + $0x178] sm:$0xff]
    %v146 = vld [vmem:[#allocation10] sm:$0xff]
    %v147 = vld [vmem:[#allocation10 + $0x8] sm:$0xff]
    %v148 = vld [vmem:[#allocation10 + $0x10] sm:$0xff]
    %v149 = vld [vmem:[#allocation10 + $0x18] sm:$0xff]
    %v150 = vld [vmem:[#allocation10 + $0x20] sm:$0xff]
    %v151 = vld [vmem:[#allocation10 + $0x28] sm:$0xff]
    %v152 = vld [vmem:[#allocation10 + $0x30] sm:$0xff]
    %v153 = vld [vmem:[#allocation10 + $0x38] sm:$0xff]
    %v154 = vld [vmem:[#allocation10 + $0x40] sm:$0xff]
    %v155 = vld [vmem:[#allocation10 + $0x48] sm:$0xff]
    %v156 = vld [vmem:[#allocation10 + $0x50] sm:$0xff]
    %v157 = vld [vmem:[#allocation10 + $0x58] sm:$0xff]
    %v158 = vld [vmem:[#allocation10 + $0x60] sm:$0xff]
    %v159 = vld [vmem:[#allocation10 + $0x68] sm:$0xff]
    %v160 = vld [vmem:[#allocation10 + $0x70] sm:$0xff]
    %v161 = vld [vmem:[#allocation10 + $0x78] sm:$0xff]
    %v162 = vld [vmem:[%s4] sm:$0x1]
    %v164 = vlaneseq
    %v165 = vshrl.u32 %v164, 7
    %v166 = vsub.s32 0, %v165
    %v167 = vrot.slane %v162, %v166
    %169 = vmatprep.subr.mxu0 0.0
    %170 = vmatpush1.msra.mxu0 %v161
    %171 = vmatprep.subr.mxu0 0.0
    %172 = vmatpush1.msra.mxu0 %v160
    %173 = vmatprep.subr.mxu0 0.0
    %174 = vmatpush1.msra.mxu0 %v159
    %175 = vmatprep.subr.mxu0 0.0
    %176 = vmatpush1.msra.mxu0 %v158
    %177 = vmatprep.subr.mxu0 0.0
    %178 = vmatpush1.msra.mxu0 %v157
    %179 = vmatprep.subr.mxu0 0.0
    %180 = vmatpush1.msra.mxu0 %v156
    %181 = vmatprep.subr.mxu0 0.0
    %182 = vmatpush1.msra.mxu0 %v155
    %183 = vmatprep.subr.mxu0 0.0
    %184 = vmatpush1.msra.mxu0 %v154
    %185 = vmatprep.subr.mxu0 0.0
    %186 = vmatpush1.msra.mxu0 %v153
    %187 = vmatprep.subr.mxu0 0.0
    %188 = vmatpush1.msra.mxu0 %v152
    %189 = vmatprep.subr.mxu0 0.0
    %190 = vmatpush1.msra.mxu0 %v151
    %191 = vmatprep.subr.mxu0 0.0
    %192 = vmatpush1.msra.mxu0 %v150
    %193 = vmatprep.subr.mxu0 0.0
    %194 = vmatpush1.msra.mxu0 %v149
    %195 = vmatprep.subr.mxu0 0.0
    %196 = vmatpush1.msra.mxu0 %v148
    %197 = vmatprep.subr.mxu0 0.0
    %198 = vmatpush1.msra.mxu0 %v147
    %199 = vmatprep.subr.mxu0 0.0
    %200 = vmatpush1.msra.mxu0 %v146
    %201 = vmatprep.subr.mxu0 0.0
    %202 = vmatpush2.msra.mxu0 0.0
    %203 = vmatprep.subr.mxu0 0.0
    %204 = vmatpush2.msra.mxu0 0.0
    %205 = vmatprep.subr.mxu0 0.0
    %206 = vmatpush2.msra.mxu0 0.0
    %207 = vmatprep.subr.mxu0 0.0
    %208 = vmatpush2.msra.mxu0 0.0
    %209 = vmatprep.subr.mxu0 0.0
    %210 = vmatpush2.msra.mxu0 0.0
    %211 = vmatprep.subr.mxu0 0.0
    %212 = vmatpush2.msra.mxu0 0.0
    %213 = vmatprep.subr.mxu0 0.0
    %214 = vmatpush2.msra.mxu0 0.0
    %215 = vmatprep.subr.mxu0 0.0
    %216 = vmatpush2.msra.mxu0 0.0
    %217 = vmatprep.subr.mxu0 0.0
    %218 = vmatpush2.msra.mxu0 0.0
    %219 = vmatprep.subr.mxu0 0.0
    %220 = vmatpush2.msra.mxu0 0.0
    %221 = vmatprep.subr.mxu0 0.0
    %222 = vmatpush2.msra.mxu0 0.0
    %223 = vmatprep.subr.mxu0 0.0
    %224 = vmatpush2.msra.mxu0 0.0
    %225 = vmatprep.subr.mxu0 0.0
    %226 = vmatpush2.msra.mxu0 0.0
    %227 = vmatprep.subr.mxu0 0.0
    %228 = vmatpush2.msra.mxu0 0.0
    %229 = vmatprep.subr.mxu0 0.0
    %230 = vmatpush2.msra.mxu0 0.0
    %231 = vmatprep.subr.mxu0 0.0
    %232 = vmatpush2.msra.mxu0 0.0
    %233 = vmatprep.mubr.f32.mxu0 0.0
    %234 = vmatmul.mubr.f32.gmra.mxu0 %v98
    %v235 = vpop.f32.mrf.mxu0
    %v236 = vadd.f32 %v167, %v235
    %v237 = vpop.f32.mrf.mxu0
    %238 = vmatprep.mubr.f32.mxu0 0.0
    %239 = vmatmul.mubr.f32.gmra.mxu0 %v99
    %v240 = vpop.f32.mrf.mxu0
    %v241 = vadd.f32 %v167, %v240
    %v242 = vpop.f32.mrf.mxu0
    %243 = vmatprep.mubr.f32.mxu0 0.0
    %244 = vmatmul.mubr.f32.gmra.mxu0 %v100
    %v245 = vpop.f32.mrf.mxu0
    %v246 = vadd.f32 %v167, %v245
    %v247 = vpop.f32.mrf.mxu0
    %248 = vmatprep.mubr.f32.mxu0 0.0
    %249 = vmatmul.mubr.f32.gmra.mxu0 %v101
    %v250 = vpop.f32.mrf.mxu0
    %v251 = vadd.f32 %v167, %v250
    %v252 = vpop.f32.mrf.mxu0
    %253 = vmatprep.mubr.f32.mxu0 0.0
    %254 = vmatmul.mubr.f32.gmra.mxu0 %v102
    %v255 = vpop.f32.mrf.mxu0
    %v256 = vadd.f32 %v167, %v255
    %v257 = vpop.f32.mrf.mxu0
    %258 = vmatprep.mubr.f32.mxu0 0.0
    %259 = vmatmul.mubr.f32.gmra.mxu0 %v103
    %v260 = vpop.f32.mrf.mxu0
    %v261 = vadd.f32 %v167, %v260
    %v262 = vpop.f32.mrf.mxu0
    %263 = vmatprep.mubr.f32.mxu0 0.0
    %264 = vmatmul.mubr.f32.gmra.mxu0 %v104
    %v265 = vpop.f32.mrf.mxu0
    %v266 = vadd.f32 %v167, %v265
    %v267 = vpop.f32.mrf.mxu0
    %268 = vmatprep.mubr.f32.mxu0 0.0
    %269 = vmatmul.mubr.f32.gmra.mxu0 %v105
    %v270 = vpop.f32.mrf.mxu0
    %v271 = vadd.f32 %v167, %v270
    %v272 = vpop.f32.mrf.mxu0
    %273 = vmatprep.mubr.f32.mxu0 0.0
    %274 = vmatmul.mubr.f32.gmra.mxu0 %v106
    %v275 = vpop.f32.mrf.mxu0
    %v276 = vadd.f32 %v167, %v275
    %v277 = vpop.f32.mrf.mxu0
    %278 = vmatprep.mubr.f32.mxu0 0.0
    %279 = vmatmul.mubr.f32.gmra.mxu0 %v107
    %v280 = vpop.f32.mrf.mxu0
    %v281 = vadd.f32 %v167, %v280
    %v282 = vpop.f32.mrf.mxu0
    %283 = vmatprep.mubr.f32.mxu0 0.0
    %284 = vmatmul.mubr.f32.gmra.mxu0 %v108
    %v285 = vpop.f32.mrf.mxu0
    %v286 = vadd.f32 %v167, %v285
    %v287 = vpop.f32.mrf.mxu0
    %288 = vmatprep.mubr.f32.mxu0 0.0
    %289 = vmatmul.mubr.f32.gmra.mxu0 %v109
    %v290 = vpop.f32.mrf.mxu0
    %v291 = vadd.f32 %v167, %v290
    %v292 = vpop.f32.mrf.mxu0
    %293 = vmatprep.mubr.f32.mxu0 0.0
    %294 = vmatmul.mubr.f32.gmra.mxu0 %v110
    %v295 = vpop.f32.mrf.mxu0
    %v296 = vadd.f32 %v167, %v295
    %v297 = vpop.f32.mrf.mxu0
    %298 = vmatprep.mubr.f32.mxu0 0.0
    %299 = vmatmul.mubr.f32.gmra.mxu0 %v111
    %v300 = vpop.f32.mrf.mxu0
    %v301 = vadd.f32 %v167, %v300
    %v302 = vpop.f32.mrf.mxu0
    %303 = vmatprep.mubr.f32.mxu0 0.0
    %304 = vmatmul.mubr.f32.gmra.mxu0 %v112
    %v305 = vpop.f32.mrf.mxu0
    %v306 = vadd.f32 %v167, %v305
    %v307 = vpop.f32.mrf.mxu0
    %308 = vmatprep.mubr.f32.mxu0 0.0
    %309 = vmatmul.mubr.f32.gmra.mxu0 %v113
    %v310 = vpop.f32.mrf.mxu0
    %v311 = vadd.f32 %v167, %v310
    %v312 = vpop.f32.mrf.mxu0
    %313 = vmatprep.mubr.f32.mxu0 0.0
    %314 = vmatmul.mubr.f32.gmra.mxu0 %v114
    %v315 = vpop.f32.mrf.mxu0
    %v316 = vadd.f32 %v167, %v315
    %v317 = vpop.f32.mrf.mxu0
    %318 = vmatprep.mubr.f32.mxu0 0.0
    %319 = vmatmul.mubr.f32.gmra.mxu0 %v115
    %v320 = vpop.f32.mrf.mxu0
    %v321 = vadd.f32 %v167, %v320
    %v322 = vpop.f32.mrf.mxu0
    %323 = vmatprep.mubr.f32.mxu0 0.0
    %324 = vmatmul.mubr.f32.gmra.mxu0 %v116
    %v325 = vpop.f32.mrf.mxu0
    %v326 = vadd.f32 %v167, %v325
    %v327 = vpop.f32.mrf.mxu0
    %328 = vmatprep.mubr.f32.mxu0 0.0
    %329 = vmatmul.mubr.f32.gmra.mxu0 %v117
    %v330 = vpop.f32.mrf.mxu0
    %v331 = vadd.f32 %v167, %v330
    %v332 = vpop.f32.mrf.mxu0
    %333 = vmatprep.mubr.f32.mxu0 0.0
    %334 = vmatmul.mubr.f32.gmra.mxu0 %v118
    %v335 = vpop.f32.mrf.mxu0
    %v336 = vadd.f32 %v167, %v335
    %v337 = vpop.f32.mrf.mxu0
    %338 = vmatprep.mubr.f32.mxu0 0.0
    %339 = vmatmul.mubr.f32.gmra.mxu0 %v119
    %v340 = vpop.f32.mrf.mxu0
    %v341 = vadd.f32 %v167, %v340
    %v342 = vpop.f32.mrf.mxu0
    %343 = vmatprep.mubr.f32.mxu0 0.0
    %344 = vmatmul.mubr.f32.gmra.mxu0 %v120
    %v345 = vpop.f32.mrf.mxu0
    %v346 = vadd.f32 %v167, %v345
    %v347 = vpop.f32.mrf.mxu0
    %348 = vmatprep.mubr.f32.mxu0 0.0
    %349 = vmatmul.mubr.f32.gmra.mxu0 %v121
    %v350 = vpop.f32.mrf.mxu0
    %v351 = vadd.f32 %v167, %v350
    %v352 = vpop.f32.mrf.mxu0
    %353 = vmatprep.mubr.f32.mxu0 0.0
    %354 = vmatmul.mubr.f32.gmra.mxu0 %v122
    %v355 = vpop.f32.mrf.mxu0
    %v356 = vadd.f32 %v167, %v355
    %v357 = vpop.f32.mrf.mxu0
    %358 = vmatprep.mubr.f32.mxu0 0.0
    %359 = vmatmul.mubr.f32.gmra.mxu0 %v123
    %v360 = vpop.f32.mrf.mxu0
    %v361 = vadd.f32 %v167, %v360
    %v362 = vpop.f32.mrf.mxu0
    %363 = vmatprep.mubr.f32.mxu0 0.0
    %364 = vmatmul.mubr.f32.gmra.mxu0 %v124
    %v365 = vpop.f32.mrf.mxu0
    %v366 = vadd.f32 %v167, %v365
    %v367 = vpop.f32.mrf.mxu0
    %368 = vmatprep.mubr.f32.mxu0 0.0
    %369 = vmatmul.mubr.f32.gmra.mxu0 %v125
    %v370 = vpop.f32.mrf.mxu0
    %v371 = vadd.f32 %v167, %v370
    %v372 = vpop.f32.mrf.mxu0
    %373 = vmatprep.mubr.f32.mxu0 0.0
    %374 = vmatmul.mubr.f32.gmra.mxu0 %v126
    %v375 = vpop.f32.mrf.mxu0
    %v376 = vadd.f32 %v167, %v375
    %v377 = vpop.f32.mrf.mxu0
    %378 = vmatprep.mubr.f32.mxu0 0.0
    %379 = vmatmul.mubr.f32.gmra.mxu0 %v127
    %v380 = vpop.f32.mrf.mxu0
    %v381 = vadd.f32 %v167, %v380
    %v382 = vpop.f32.mrf.mxu0
    %383 = vmatprep.mubr.f32.mxu0 0.0
    %384 = vmatmul.mubr.f32.gmra.mxu0 %v128
    %v385 = vpop.f32.mrf.mxu0
    %v386 = vadd.f32 %v167, %v385
    %v387 = vpop.f32.mrf.mxu0
    %388 = vmatprep.mubr.f32.mxu0 0.0
    %389 = vmatmul.mubr.f32.gmra.mxu0 %v129
    %v390 = vpop.f32.mrf.mxu0
    %v391 = vadd.f32 %v167, %v390
    %v392 = vpop.f32.mrf.mxu0
    %393 = vmatprep.mubr.f32.mxu0 0.0
    %394 = vmatmul.mubr.f32.gmra.mxu0 %v130
    %v395 = vpop.f32.mrf.mxu0
    %v396 = vadd.f32 %v167, %v395
    %v397 = vpop.f32.mrf.mxu0
    %398 = vmatprep.mubr.f32.mxu0 0.0
    %399 = vmatmul.mubr.f32.gmra.mxu0 %v131
    %v400 = vpop.f32.mrf.mxu0
    %v401 = vadd.f32 %v167, %v400
    %v402 = vpop.f32.mrf.mxu0
    %403 = vmatprep.mubr.f32.mxu0 0.0
    %404 = vmatmul.mubr.f32.gmra.mxu0 %v132
    %v405 = vpop.f32.mrf.mxu0
    %v406 = vadd.f32 %v167, %v405
    %v407 = vpop.f32.mrf.mxu0
    %408 = vmatprep.mubr.f32.mxu0 0.0
    %409 = vmatmul.mubr.f32.gmra.mxu0 %v133
    %v410 = vpop.f32.mrf.mxu0
    %v411 = vadd.f32 %v167, %v410
    %v412 = vpop.f32.mrf.mxu0
    %413 = vmatprep.mubr.f32.mxu0 0.0
    %414 = vmatmul.mubr.f32.gmra.mxu0 %v134
    %v415 = vpop.f32.mrf.mxu0
    %v416 = vadd.f32 %v167, %v415
    %v417 = vpop.f32.mrf.mxu0
    %418 = vmatprep.mubr.f32.mxu0 0.0
    %419 = vmatmul.mubr.f32.gmra.mxu0 %v135
    %v420 = vpop.f32.mrf.mxu0
    %v421 = vadd.f32 %v167, %v420
    %v422 = vpop.f32.mrf.mxu0
    %423 = vmatprep.mubr.f32.mxu0 0.0
    %424 = vmatmul.mubr.f32.gmra.mxu0 %v136
    %v425 = vpop.f32.mrf.mxu0
    %v426 = vadd.f32 %v167, %v425
    %v427 = vpop.f32.mrf.mxu0
    %428 = vmatprep.mubr.f32.mxu0 0.0
    %429 = vmatmul.mubr.f32.gmra.mxu0 %v137
    %v430 = vpop.f32.mrf.mxu0
    %v431 = vadd.f32 %v167, %v430
    %v432 = vpop.f32.mrf.mxu0
    %433 = vmatprep.mubr.f32.mxu0 0.0
    %434 = vmatmul.mubr.f32.gmra.mxu0 %v138
    %v435 = vpop.f32.mrf.mxu0
    %v436 = vadd.f32 %v167, %v435
    %v437 = vpop.f32.mrf.mxu0
    %438 = vmatprep.mubr.f32.mxu0 0.0
    %439 = vmatmul.mubr.f32.gmra.mxu0 %v139
    %v440 = vpop.f32.mrf.mxu0
    %v441 = vadd.f32 %v167, %v440
    %v442 = vpop.f32.mrf.mxu0
    %443 = vmatprep.mubr.f32.mxu0 0.0
    %444 = vmatmul.mubr.f32.gmra.mxu0 %v140
    %v445 = vpop.f32.mrf.mxu0
    %v446 = vadd.f32 %v167, %v445
    %v447 = vpop.f32.mrf.mxu0
    %448 = vmatprep.mubr.f32.mxu0 0.0
    %449 = vmatmul.mubr.f32.gmra.mxu0 %v141
    %v450 = vpop.f32.mrf.mxu0
    %v451 = vadd.f32 %v167, %v450
    %v452 = vpop.f32.mrf.mxu0
    %453 = vmatprep.mubr.f32.mxu0 0.0
    %454 = vmatmul.mubr.f32.gmra.mxu0 %v142
    %v455 = vpop.f32.mrf.mxu0
    %v456 = vadd.f32 %v167, %v455
    %v457 = vpop.f32.mrf.mxu0
    %458 = vmatprep.mubr.f32.mxu0 0.0
    %459 = vmatmul.mubr.f32.gmra.mxu0 %v143
    %v460 = vpop.f32.mrf.mxu0
    %v461 = vadd.f32 %v167, %v460
    %v462 = vpop.f32.mrf.mxu0
    %463 = vmatprep.mubr.f32.mxu0 0.0
    %464 = vmatmul.mubr.f32.gmra.mxu0 %v144
    %v465 = vpop.f32.mrf.mxu0
    %v466 = vadd.f32 %v167, %v465
    %v467 = vpop.f32.mrf.mxu0
    %468 = vmatprep.mubr.f32.mxu0 0.0
    %469 = vmatmul.mubr.f32.gmra.mxu0 %v145
    %v470 = vpop.f32.mrf.mxu0
    %v471 = vadd.f32 %v167, %v470
    %v472 = vpop.f32.mrf.mxu0
    %473 = vdwg.mxu0
    %v474 = vmax.f32 %v236, 0.0
    %v475 = vmax.f32 %v241, 0.0
    %v476 = vmax.f32 %v246, 0.0
    %v477 = vmax.f32 %v251, 0.0
    %v478 = vmax.f32 %v256, 0.0
    %v479 = vmax.f32 %v261, 0.0
    %v480 = vmax.f32 %v266, 0.0
    %v481 = vmax.f32 %v271, 0.0
    %v482 = vmax.f32 %v276, 0.0
    %v483 = vmax.f32 %v281, 0.0
    %v484 = vmax.f32 %v286, 0.0
    %v485 = vmax.f32 %v291, 0.0
    %v486 = vmax.f32 %v296, 0.0
    %v487 = vmax.f32 %v301, 0.0
    %v488 = vmax.f32 %v306, 0.0
    %v489 = vmax.f32 %v311, 0.0
    %v490 = vmax.f32 %v316, 0.0
    %v491 = vmax.f32 %v321, 0.0
    %v492 = vmax.f32 %v326, 0.0
    %v493 = vmax.f32 %v331, 0.0
    %v494 = vmax.f32 %v336, 0.0
    %v495 = vmax.f32 %v341, 0.0
    %v496 = vmax.f32 %v346, 0.0
    %v497 = vmax.f32 %v351, 0.0
    %v498 = vmax.f32 %v356, 0.0
    %v499 = vmax.f32 %v361, 0.0
    %v500 = vmax.f32 %v366, 0.0
    %v501 = vmax.f32 %v371, 0.0
    %v502 = vmax.f32 %v376, 0.0
    %v503 = vmax.f32 %v381, 0.0
    %v504 = vmax.f32 %v386, 0.0
    %v505 = vmax.f32 %v391, 0.0
    %v506 = vmax.f32 %v396, 0.0
    %v507 = vmax.f32 %v401, 0.0
    %v508 = vmax.f32 %v406, 0.0
    %v509 = vmax.f32 %v411, 0.0
    %v510 = vmax.f32 %v416, 0.0
    %v511 = vmax.f32 %v421, 0.0
    %v512 = vmax.f32 %v426, 0.0
    %v513 = vmax.f32 %v431, 0.0
    %v514 = vmax.f32 %v436, 0.0
    %v515 = vmax.f32 %v441, 0.0
    %v516 = vmax.f32 %v446, 0.0
    %v517 = vmax.f32 %v451, 0.0
    %v518 = vmax.f32 %v456, 0.0
    %v519 = vmax.f32 %v461, 0.0
    %v520 = vmax.f32 %v466, 0.0
    %v521 = vmax.f32 %v471, 0.0
    %v522 = vlaneseq
    %v523 = vand.u32 %v522, 127
    %vm524 = vcmp.lt.s32.totalorder %v523, 64
    %s525 = smul.u32 0, 3
    %s526 = smul.addr %s525, 64
    %s527 = scalar_lea.hbm %s1, %s526
    // Predicated region
    $region54: #{tpu_custom_call.1} parent=1 // pred_check
      _
    $region55: #{tpu_custom_call.1} parent=1 // pred_check_branch
      %529 = sbr.rel target = $region57
    $region56: #{tpu_custom_call.1} parent=1 // pred_region
      %530 = sst [smem:[#allocation18]] [#allocation17]
      %531 = sst [smem:[#allocation19]] [#allocation16]
    $region57: #{tpu_custom_call.1} parent=1 // pred_fallthru
      _
    %533 = shalt.err (0)
    %s535 = sshll.u32 [#allocation2], 4
    %s536 = int_to_ptr.vmem [resolvable:$true] %s535
    %538 = dma.hbm_to_vmem [thread:$0]  %s527, 3072, %s536, [#allocation3]
    %v539 = vld [vmem:[#allocation12] sm:$0xff]
    %v540 = vld [vmem:[#allocation12 + $0x8] sm:$0xff]
    %v541 = vld [vmem:[#allocation12 + $0x10] sm:$0xff]
    %v542 = vld [vmem:[#allocation12 + $0x18] sm:$0xff]
    %v543 = vld [vmem:[#allocation12 + $0x20] sm:$0xff]
    %v544 = vld [vmem:[#allocation12 + $0x28] sm:$0xff]
    %v545 = vld [vmem:[#allocation12 + $0x30] sm:$0xff]
    %v546 = vld [vmem:[#allocation12 + $0x38] sm:$0xff]
    %v547 = vld [vmem:[#allocation12 + $0x40] sm:$0xff]
    %v548 = vld [vmem:[#allocation12 + $0x48] sm:$0xff]
    %v549 = vld [vmem:[#allocation12 + $0x50] sm:$0xff]
    %v550 = vld [vmem:[#allocation12 + $0x58] sm:$0xff]
    %v551 = vld [vmem:[#allocation12 + $0x60] sm:$0xff]
    %v552 = vld [vmem:[#allocation12 + $0x68] sm:$0xff]
    %v553 = vld [vmem:[#allocation12 + $0x70] sm:$0xff]
    %v554 = vld [vmem:[#allocation12 + $0x78] sm:$0xff]
    %v555 = vld [vmem:[%s6] sm:$0x1]
    %v557 = vlaneseq
    %v558 = vshrl.u32 %v557, 7
    %v559 = vsub.s32 0, %v558
    %v560 = vrot.slane %v555, %v559
    %562 = vmatprep.subr.mxu0 0.0
    %563 = vmatpush1.msra.mxu0 %v554
    %564 = vmatprep.subr.mxu0 0.0
    %565 = vmatpush1.msra.mxu0 %v553
    %566 = vmatprep.subr.mxu0 0.0
    %567 = vmatpush1.msra.mxu0 %v552
    %568 = vmatprep.subr.mxu0 0.0
    %569 = vmatpush1.msra.mxu0 %v551
    %570 = vmatprep.subr.mxu0 0.0
    %571 = vmatpush1.msra.mxu0 %v550
    %572 = vmatprep.subr.mxu0 0.0
    %573 = vmatpush1.msra.mxu0 %v549
    %574 = vmatprep.subr.mxu0 0.0
    %575 = vmatpush1.msra.mxu0 %v548
    %576 = vmatprep.subr.mxu0 0.0
    %577 = vmatpush1.msra.mxu0 %v547
    %578 = vmatprep.subr.mxu0 0.0
    %579 = vmatpush1.msra.mxu0 %v546
    %580 = vmatprep.subr.mxu0 0.0
    %581 = vmatpush1.msra.mxu0 %v545
    %582 = vmatprep.subr.mxu0 0.0
    %583 = vmatpush1.msra.mxu0 %v544
    %584 = vmatprep.subr.mxu0 0.0
    %585 = vmatpush1.msra.mxu0 %v543
    %586 = vmatprep.subr.mxu0 0.0
    %587 = vmatpush1.msra.mxu0 %v542
    %588 = vmatprep.subr.mxu0 0.0
    %589 = vmatpush1.msra.mxu0 %v541
    %590 = vmatprep.subr.mxu0 0.0
    %591 = vmatpush1.msra.mxu0 %v540
    %592 = vmatprep.subr.mxu0 0.0
    %593 = vmatpush1.msra.mxu0 %v539
    %594 = vmatprep.subr.mxu0 0.0
    %595 = vmatpush2.msra.mxu0 0.0
    %596 = vmatprep.subr.mxu0 0.0
    %597 = vmatpush2.msra.mxu0 0.0
    %598 = vmatprep.subr.mxu0 0.0
    %599 = vmatpush2.msra.mxu0 0.0
    %600 = vmatprep.subr.mxu0 0.0
    %601 = vmatpush2.msra.mxu0 0.0
    %602 = vmatprep.subr.mxu0 0.0
    %603 = vmatpush2.msra.mxu0 0.0
    %604 = vmatprep.subr.mxu0 0.0
    %605 = vmatpush2.msra.mxu0 0.0
    %606 = vmatprep.subr.mxu0 0.0
    %607 = vmatpush2.msra.mxu0 0.0
    %608 = vmatprep.subr.mxu0 0.0
    %609 = vmatpush2.msra.mxu0 0.0
    %610 = vmatprep.subr.mxu0 0.0
    %611 = vmatpush2.msra.mxu0 0.0
    %612 = vmatprep.subr.mxu0 0.0
    %613 = vmatpush2.msra.mxu0 0.0
    %614 = vmatprep.subr.mxu0 0.0
    %615 = vmatpush2.msra.mxu0 0.0
    %616 = vmatprep.subr.mxu0 0.0
    %617 = vmatpush2.msra.mxu0 0.0
    %618 = vmatprep.subr.mxu0 0.0
    %619 = vmatpush2.msra.mxu0 0.0
    %620 = vmatprep.subr.mxu0 0.0
    %621 = vmatpush2.msra.mxu0 0.0
    %622 = vmatprep.subr.mxu0 0.0
    %623 = vmatpush2.msra.mxu0 0.0
    %624 = vmatprep.subr.mxu0 0.0
    %625 = vmatpush2.msra.mxu0 0.0
    %626 = vmatprep.mubr.f32.mxu0 0.0
    %627 = vmatmul.mubr.f32.gmra.mxu0 %v474
    %v628 = vpop.f32.mrf.mxu0
    %v629 = vadd.f32 %v560, %v628
    %v630 = vpop.f32.mrf.mxu0
    %631 = vmatprep.mubr.f32.mxu0 0.0
    %632 = vmatmul.mubr.f32.gmra.mxu0 %v475
    %v633 = vpop.f32.mrf.mxu0
    %v634 = vadd.f32 %v560, %v633
    %v635 = vpop.f32.mrf.mxu0
    %636 = vmatprep.mubr.f32.mxu0 0.0
    %637 = vmatmul.mubr.f32.gmra.mxu0 %v476
    %v638 = vpop.f32.mrf.mxu0
    %v639 = vadd.f32 %v560, %v638
    %v640 = vpop.f32.mrf.mxu0
    %641 = vmatprep.mubr.f32.mxu0 0.0
    %642 = vmatmul.mubr.f32.gmra.mxu0 %v477
    %v643 = vpop.f32.mrf.mxu0
    %v644 = vadd.f32 %v560, %v643
    %v645 = vpop.f32.mrf.mxu0
    %646 = vmatprep.mubr.f32.mxu0 0.0
    %647 = vmatmul.mubr.f32.gmra.mxu0 %v478
    %v648 = vpop.f32.mrf.mxu0
    %v649 = vadd.f32 %v560, %v648
    %v650 = vpop.f32.mrf.mxu0
    %651 = vmatprep.mubr.f32.mxu0 0.0
    %652 = vmatmul.mubr.f32.gmra.mxu0 %v479
    %v653 = vpop.f32.mrf.mxu0
    %v654 = vadd.f32 %v560, %v653
    %v655 = vpop.f32.mrf.mxu0
    %656 = vmatprep.mubr.f32.mxu0 0.0
    %657 = vmatmul.mubr.f32.gmra.mxu0 %v480
    %v658 = vpop.f32.mrf.mxu0
    %v659 = vadd.f32 %v560, %v658
    %v660 = vpop.f32.mrf.mxu0
    %661 = vmatprep.mubr.f32.mxu0 0.0
    %662 = vmatmul.mubr.f32.gmra.mxu0 %v481
    %v663 = vpop.f32.mrf.mxu0
    %v664 = vadd.f32 %v560, %v663
    %v665 = vpop.f32.mrf.mxu0
    %666 = vmatprep.mubr.f32.mxu0 0.0
    %667 = vmatmul.mubr.f32.gmra.mxu0 %v482
    %v668 = vpop.f32.mrf.mxu0
    %v669 = vadd.f32 %v560, %v668
    %v670 = vpop.f32.mrf.mxu0
    %671 = vmatprep.mubr.f32.mxu0 0.0
    %672 = vmatmul.mubr.f32.gmra.mxu0 %v483
    %v673 = vpop.f32.mrf.mxu0
    %v674 = vadd.f32 %v560, %v673
    %v675 = vpop.f32.mrf.mxu0
    %676 = vmatprep.mubr.f32.mxu0 0.0
    %677 = vmatmul.mubr.f32.gmra.mxu0 %v484
    %v678 = vpop.f32.mrf.mxu0
    %v679 = vadd.f32 %v560, %v678
    %v680 = vpop.f32.mrf.mxu0
    %681 = vmatprep.mubr.f32.mxu0 0.0
    %682 = vmatmul.mubr.f32.gmra.mxu0 %v485
    %v683 = vpop.f32.mrf.mxu0
    %v684 = vadd.f32 %v560, %v683
    %v685 = vpop.f32.mrf.mxu0
    %686 = vmatprep.mubr.f32.mxu0 0.0
    %687 = vmatmul.mubr.f32.gmra.mxu0 %v486
    %v688 = vpop.f32.mrf.mxu0
    %v689 = vadd.f32 %v560, %v688
    %v690 = vpop.f32.mrf.mxu0
    %691 = vmatprep.mubr.f32.mxu0 0.0
    %692 = vmatmul.mubr.f32.gmra.mxu0 %v487
    %v693 = vpop.f32.mrf.mxu0
    %v694 = vadd.f32 %v560, %v693
    %v695 = vpop.f32.mrf.mxu0
    %696 = vmatprep.mubr.f32.mxu0 0.0
    %697 = vmatmul.mubr.f32.gmra.mxu0 %v488
    %v698 = vpop.f32.mrf.mxu0
    %v699 = vadd.f32 %v560, %v698
    %v700 = vpop.f32.mrf.mxu0
    %701 = vmatprep.mubr.f32.mxu0 0.0
    %702 = vmatmul.mubr.f32.gmra.mxu0 %v489
    %v703 = vpop.f32.mrf.mxu0
    %v704 = vadd.f32 %v560, %v703
    %v705 = vpop.f32.mrf.mxu0
    %706 = vmatprep.mubr.f32.mxu0 0.0
    %707 = vmatmul.mubr.f32.gmra.mxu0 %v490
    %v708 = vpop.f32.mrf.mxu0
    %v709 = vadd.f32 %v560, %v708
    %v710 = vpop.f32.mrf.mxu0
    %711 = vmatprep.mubr.f32.mxu0 0.0
    %712 = vmatmul.mubr.f32.gmra.mxu0 %v491
    %v713 = vpop.f32.mrf.mxu0
    %v714 = vadd.f32 %v560, %v713
    %v715 = vpop.f32.mrf.mxu0
    %716 = vmatprep.mubr.f32.mxu0 0.0
    %717 = vmatmul.mubr.f32.gmra.mxu0 %v492
    %v718 = vpop.f32.mrf.mxu0
    %v719 = vadd.f32 %v560, %v718
    %v720 = vpop.f32.mrf.mxu0
    %721 = vmatprep.mubr.f32.mxu0 0.0
    %722 = vmatmul.mubr.f32.gmra.mxu0 %v493
    %v723 = vpop.f32.mrf.mxu0
    %v724 = vadd.f32 %v560, %v723
    %v725 = vpop.f32.mrf.mxu0
    %726 = vmatprep.mubr.f32.mxu0 0.0
    %727 = vmatmul.mubr.f32.gmra.mxu0 %v494
    %v728 = vpop.f32.mrf.mxu0
    %v729 = vadd.f32 %v560, %v728
    %v730 = vpop.f32.mrf.mxu0
    %731 = vmatprep.mubr.f32.mxu0 0.0
    %732 = vmatmul.mubr.f32.gmra.mxu0 %v495
    %v733 = vpop.f32.mrf.mxu0
    %v734 = vadd.f32 %v560, %v733
    %v735 = vpop.f32.mrf.mxu0
    %736 = vmatprep.mubr.f32.mxu0 0.0
    %737 = vmatmul.mubr.f32.gmra.mxu0 %v496
    %v738 = vpop.f32.mrf.mxu0
    %v739 = vadd.f32 %v560, %v738
    %v740 = vpop.f32.mrf.mxu0
    %741 = vmatprep.mubr.f32.mxu0 0.0
    %742 = vmatmul.mubr.f32.gmra.mxu0 %v497
    %v743 = vpop.f32.mrf.mxu0
    %v744 = vadd.f32 %v560, %v743
    %v745 = vpop.f32.mrf.mxu0
    %746 = vmatprep.mubr.f32.mxu0 0.0
    %747 = vmatmul.mubr.f32.gmra.mxu0 %v498
    %v748 = vpop.f32.mrf.mxu0
    %v749 = vadd.f32 %v560, %v748
    %v750 = vpop.f32.mrf.mxu0
    %751 = vmatprep.mubr.f32.mxu0 0.0
    %752 = vmatmul.mubr.f32.gmra.mxu0 %v499
    %v753 = vpop.f32.mrf.mxu0
    %v754 = vadd.f32 %v560, %v753
    %v755 = vpop.f32.mrf.mxu0
    %756 = vmatprep.mubr.f32.mxu0 0.0
    %757 = vmatmul.mubr.f32.gmra.mxu0 %v500
    %v758 = vpop.f32.mrf.mxu0
    %v759 = vadd.f32 %v560, %v758
    %v760 = vpop.f32.mrf.mxu0
    %761 = vmatprep.mubr.f32.mxu0 0.0
    %762 = vmatmul.mubr.f32.gmra.mxu0 %v501
    %v763 = vpop.f32.mrf.mxu0
    %v764 = vadd.f32 %v560, %v763
    %v765 = vpop.f32.mrf.mxu0
    %766 = vmatprep.mubr.f32.mxu0 0.0
    %767 = vmatmul.mubr.f32.gmra.mxu0 %v502
    %v768 = vpop.f32.mrf.mxu0
    %v769 = vadd.f32 %v560, %v768
    %v770 = vpop.f32.mrf.mxu0
    %771 = vmatprep.mubr.f32.mxu0 0.0
    %772 = vmatmul.mubr.f32.gmra.mxu0 %v503
    %v773 = vpop.f32.mrf.mxu0
    %v774 = vadd.f32 %v560, %v773
    %v775 = vpop.f32.mrf.mxu0
    %776 = vmatprep.mubr.f32.mxu0 0.0
    %777 = vmatmul.mubr.f32.gmra.mxu0 %v504
    %v778 = vpop.f32.mrf.mxu0
    %v779 = vadd.f32 %v560, %v778
    %v780 = vpop.f32.mrf.mxu0
    %781 = vmatprep.mubr.f32.mxu0 0.0
    %782 = vmatmul.mubr.f32.gmra.mxu0 %v505
    %v783 = vpop.f32.mrf.mxu0
    %v784 = vadd.f32 %v560, %v783
    %v785 = vpop.f32.mrf.mxu0
    %786 = vmatprep.mubr.f32.mxu0 0.0
    %787 = vmatmul.mubr.f32.gmra.mxu0 %v506
    %v788 = vpop.f32.mrf.mxu0
    %v789 = vadd.f32 %v560, %v788
    %v790 = vpop.f32.mrf.mxu0
    %791 = vmatprep.mubr.f32.mxu0 0.0
    %792 = vmatmul.mubr.f32.gmra.mxu0 %v507
    %v793 = vpop.f32.mrf.mxu0
    %v794 = vadd.f32 %v560, %v793
    %v795 = vpop.f32.mrf.mxu0
    %796 = vmatprep.mubr.f32.mxu0 0.0
    %797 = vmatmul.mubr.f32.gmra.mxu0 %v508
    %v798 = vpop.f32.mrf.mxu0
    %v799 = vadd.f32 %v560, %v798
    %v800 = vpop.f32.mrf.mxu0
    %801 = vmatprep.mubr.f32.mxu0 0.0
    %802 = vmatmul.mubr.f32.gmra.mxu0 %v509
    %v803 = vpop.f32.mrf.mxu0
    %v804 = vadd.f32 %v560, %v803
    %v805 = vpop.f32.mrf.mxu0
    %806 = vmatprep.mubr.f32.mxu0 0.0
    %807 = vmatmul.mubr.f32.gmra.mxu0 %v510
    %v808 = vpop.f32.mrf.mxu0
    %v809 = vadd.f32 %v560, %v808
    %v810 = vpop.f32.mrf.mxu0
    %811 = vmatprep.mubr.f32.mxu0 0.0
    %812 = vmatmul.mubr.f32.gmra.mxu0 %v511
    %v813 = vpop.f32.mrf.mxu0
    %v814 = vadd.f32 %v560, %v813
    %v815 = vpop.f32.mrf.mxu0
    %816 = vmatprep.mubr.f32.mxu0 0.0
    %817 = vmatmul.mubr.f32.gmra.mxu0 %v512
    %v818 = vpop.f32.mrf.mxu0
    %v819 = vadd.f32 %v560, %v818
    %v820 = vpop.f32.mrf.mxu0
    %821 = vmatprep.mubr.f32.mxu0 0.0
    %822 = vmatmul.mubr.f32.gmra.mxu0 %v513
    %v823 = vpop.f32.mrf.mxu0
    %v824 = vadd.f32 %v560, %v823
    %v825 = vpop.f32.mrf.mxu0
    %826 = vmatprep.mubr.f32.mxu0 0.0
    %827 = vmatmul.mubr.f32.gmra.mxu0 %v514
    %v828 = vpop.f32.mrf.mxu0
    %v829 = vadd.f32 %v560, %v828
    %v830 = vpop.f32.mrf.mxu0
    %831 = vmatprep.mubr.f32.mxu0 0.0
    %832 = vmatmul.mubr.f32.gmra.mxu0 %v515
    %v833 = vpop.f32.mrf.mxu0
    %v834 = vadd.f32 %v560, %v833
    %v835 = vpop.f32.mrf.mxu0
    %836 = vmatprep.mubr.f32.mxu0 0.0
    %837 = vmatmul.mubr.f32.gmra.mxu0 %v516
    %v838 = vpop.f32.mrf.mxu0
    %v839 = vadd.f32 %v560, %v838
    %v840 = vpop.f32.mrf.mxu0
    %841 = vmatprep.mubr.f32.mxu0 0.0
    %842 = vmatmul.mubr.f32.gmra.mxu0 %v517
    %v843 = vpop.f32.mrf.mxu0
    %v844 = vadd.f32 %v560, %v843
    %v845 = vpop.f32.mrf.mxu0
    %846 = vmatprep.mubr.f32.mxu0 0.0
    %847 = vmatmul.mubr.f32.gmra.mxu0 %v518
    %v848 = vpop.f32.mrf.mxu0
    %v849 = vadd.f32 %v560, %v848
    %v850 = vpop.f32.mrf.mxu0
    %851 = vmatprep.mubr.f32.mxu0 0.0
    %852 = vmatmul.mubr.f32.gmra.mxu0 %v519
    %v853 = vpop.f32.mrf.mxu0
    %v854 = vadd.f32 %v560, %v853
    %v855 = vpop.f32.mrf.mxu0
    %856 = vmatprep.mubr.f32.mxu0 0.0
    %857 = vmatmul.mubr.f32.gmra.mxu0 %v520
    %v858 = vpop.f32.mrf.mxu0
    %v859 = vadd.f32 %v560, %v858
    %v860 = vpop.f32.mrf.mxu0
    %861 = vmatprep.mubr.f32.mxu0 0.0
    %862 = vmatmul.mubr.f32.gmra.mxu0 %v521
    %v863 = vpop.f32.mrf.mxu0
    %v864 = vadd.f32 %v560, %v863
    %v865 = vpop.f32.mrf.mxu0
    %866 = vdwg.mxu0
    %v867 = vsel %vm524, %v629, -inf
    %v868 = vsel %vm524, %v634, -inf
    %v869 = vsel %vm524, %v639, -inf
    %v870 = vsel %vm524, %v644, -inf
    %v871 = vsel %vm524, %v649, -inf
    %v872 = vsel %vm524, %v654, -inf
    %v873 = vsel %vm524, %v659, -inf
    %v874 = vsel %vm524, %v664, -inf
    %v875 = vsel %vm524, %v669, -inf
    %v876 = vsel %vm524, %v674, -inf
    %v877 = vsel %vm524, %v679, -inf
    %v878 = vsel %vm524, %v684, -inf
    %v879 = vsel %vm524, %v689, -inf
    %v880 = vsel %vm524, %v694, -inf
    %v881 = vsel %vm524, %v699, -inf
    %v882 = vsel %vm524, %v704, -inf
    %v883 = vsel %vm524, %v709, -inf
    %v884 = vsel %vm524, %v714, -inf
    %v885 = vsel %vm524, %v719, -inf
    %v886 = vsel %vm524, %v724, -inf
    %v887 = vsel %vm524, %v729, -inf
    %v888 = vsel %vm524, %v734, -inf
    %v889 = vsel %vm524, %v739, -inf
    %v890 = vsel %vm524, %v744, -inf
    %v891 = vsel %vm524, %v749, -inf
    %v892 = vsel %vm524, %v754, -inf
    %v893 = vsel %vm524, %v759, -inf
    %v894 = vsel %vm524, %v764, -inf
    %v895 = vsel %vm524, %v769, -inf
    %v896 = vsel %vm524, %v774, -inf
    %v897 = vsel %vm524, %v779, -inf
    %v898 = vsel %vm524, %v784, -inf
    %v899 = vsel %vm524, %v789, -inf
    %v900 = vsel %vm524, %v794, -inf
    %v901 = vsel %vm524, %v799, -inf
    %v902 = vsel %vm524, %v804, -inf
    %v903 = vsel %vm524, %v809, -inf
    %v904 = vsel %vm524, %v814, -inf
    %v905 = vsel %vm524, %v819, -inf
    %v906 = vsel %vm524, %v824, -inf
    %v907 = vsel %vm524, %v829, -inf
    %v908 = vsel %vm524, %v834, -inf
    %v909 = vsel %vm524, %v839, -inf
    %v910 = vsel %vm524, %v844, -inf
    %v911 = vsel %vm524, %v849, -inf
    %v912 = vsel %vm524, %v854, -inf
    %v913 = vsel %vm524, %v859, -inf
    %v914 = vsel %vm524, %v864, -inf
    %915 = vmax.xlane.f32.xlu0 %v867
    %v916 = vpop.xlane.xlu0 %915
    %917 = vmax.xlane.f32.xlu0 %v868
    %v918 = vpop.xlane.xlu0 %917
    %919 = vmax.xlane.f32.xlu0 %v869
    %v920 = vpop.xlane.xlu0 %919
    %921 = vmax.xlane.f32.xlu0 %v870
    %v922 = vpop.xlane.xlu0 %921
    %923 = vmax.xlane.f32.xlu0 %v871
    %v924 = vpop.xlane.xlu0 %923
    %925 = vmax.xlane.f32.xlu0 %v872
    %v926 = vpop.xlane.xlu0 %925
    %927 = vmax.xlane.f32.xlu0 %v873
    %v928 = vpop.xlane.xlu0 %927
    %929 = vmax.xlane.f32.xlu0 %v874
    %v930 = vpop.xlane.xlu0 %929
    %931 = vmax.xlane.f32.xlu0 %v875
    %v932 = vpop.xlane.xlu0 %931
    %933 = vmax.xlane.f32.xlu0 %v876
    %v934 = vpop.xlane.xlu0 %933
    %935 = vmax.xlane.f32.xlu0 %v877
    %v936 = vpop.xlane.xlu0 %935
    %937 = vmax.xlane.f32.xlu0 %v878
    %v938 = vpop.xlane.xlu0 %937
    %939 = vmax.xlane.f32.xlu0 %v879
    %v940 = vpop.xlane.xlu0 %939
    %941 = vmax.xlane.f32.xlu0 %v880
    %v942 = vpop.xlane.xlu0 %941
    %943 = vmax.xlane.f32.xlu0 %v881
    %v944 = vpop.xlane.xlu0 %943
    %945 = vmax.xlane.f32.xlu0 %v882
    %v946 = vpop.xlane.xlu0 %945
    %947 = vmax.xlane.f32.xlu0 %v883
    %v948 = vpop.xlane.xlu0 %947
    %949 = vmax.xlane.f32.xlu0 %v884
    %v950 = vpop.xlane.xlu0 %949
    %951 = vmax.xlane.f32.xlu0 %v885
    %v952 = vpop.xlane.xlu0 %951
    %953 = vmax.xlane.f32.xlu0 %v886
    %v954 = vpop.xlane.xlu0 %953
    %955 = vmax.xlane.f32.xlu0 %v887
    %v956 = vpop.xlane.xlu0 %955
    %957 = vmax.xlane.f32.xlu0 %v888
    %v958 = vpop.xlane.xlu0 %957
    %959 = vmax.xlane.f32.xlu0 %v889
    %v960 = vpop.xlane.xlu0 %959
    %961 = vmax.xlane.f32.xlu0 %v890
    %v962 = vpop.xlane.xlu0 %961
    %963 = vmax.xlane.f32.xlu0 %v891
    %v964 = vpop.xlane.xlu0 %963
    %965 = vmax.xlane.f32.xlu0 %v892
    %v966 = vpop.xlane.xlu0 %965
    %967 = vmax.xlane.f32.xlu0 %v893
    %v968 = vpop.xlane.xlu0 %967
    %969 = vmax.xlane.f32.xlu0 %v894
    %v970 = vpop.xlane.xlu0 %969
    %971 = vmax.xlane.f32.xlu0 %v895
    %v972 = vpop.xlane.xlu0 %971
    %973 = vmax.xlane.f32.xlu0 %v896
    %v974 = vpop.xlane.xlu0 %973
    %975 = vmax.xlane.f32.xlu0 %v897
    %v976 = vpop.xlane.xlu0 %975
    %977 = vmax.xlane.f32.xlu0 %v898
    %v978 = vpop.xlane.xlu0 %977
    %979 = vmax.xlane.f32.xlu0 %v899
    %v980 = vpop.xlane.xlu0 %979
    %981 = vmax.xlane.f32.xlu0 %v900
    %v982 = vpop.xlane.xlu0 %981
    %983 = vmax.xlane.f32.xlu0 %v901
    %v984 = vpop.xlane.xlu0 %983
    %985 = vmax.xlane.f32.xlu0 %v902
    %v986 = vpop.xlane.xlu0 %985
    %987 = vmax.xlane.f32.xlu0 %v903
    %v988 = vpop.xlane.xlu0 %987
    %989 = vmax.xlane.f32.xlu0 %v904
    %v990 = vpop.xlane.xlu0 %989
    %991 = vmax.xlane.f32.xlu0 %v905
    %v992 = vpop.xlane.xlu0 %991
    %993 = vmax.xlane.f32.xlu0 %v906
    %v994 = vpop.xlane.xlu0 %993
    %995 = vmax.xlane.f32.xlu0 %v907
    %v996 = vpop.xlane.xlu0 %995
    %997 = vmax.xlane.f32.xlu0 %v908
    %v998 = vpop.xlane.xlu0 %997
    %999 = vmax.xlane.f32.xlu0 %v909
    %v1000 = vpop.xlane.xlu0 %999
    %1001 = vmax.xlane.f32.xlu0 %v910
    %v1002 = vpop.xlane.xlu0 %1001
    %1003 = vmax.xlane.f32.xlu0 %v911
    %v1004 = vpop.xlane.xlu0 %1003
    %1005 = vmax.xlane.f32.xlu0 %v912
    %v1006 = vpop.xlane.xlu0 %1005
    %1007 = vmax.xlane.f32.xlu0 %v913
    %v1008 = vpop.xlane.xlu0 %1007
    %1009 = vmax.xlane.f32.xlu0 %v914
    %v1010 = vpop.xlane.xlu0 %1009
    %vm1011 = vcmp.ge.f32.partialorder %v867, %v916
    %vm1012 = vcmp.ge.f32.partialorder %v868, %v918
    %vm1013 = vcmp.ge.f32.partialorder %v869, %v920
    %vm1014 = vcmp.ge.f32.partialorder %v870, %v922
    %vm1015 = vcmp.ge.f32.partialorder %v871, %v924
    %vm1016 = vcmp.ge.f32.partialorder %v872, %v926
    %vm1017 = vcmp.ge.f32.partialorder %v873, %v928
    %vm1018 = vcmp.ge.f32.partialorder %v874, %v930
    %vm1019 = vcmp.ge.f32.partialorder %v875, %v932
    %vm1020 = vcmp.ge.f32.partialorder %v876, %v934
    %vm1021 = vcmp.ge.f32.partialorder %v877, %v936
    %vm1022 = vcmp.ge.f32.partialorder %v878, %v938
    %vm1023 = vcmp.ge.f32.partialorder %v879, %v940
    %vm1024 = vcmp.ge.f32.partialorder %v880, %v942
    %vm1025 = vcmp.ge.f32.partialorder %v881, %v944
    %vm1026 = vcmp.ge.f32.partialorder %v882, %v946
    %vm1027 = vcmp.ge.f32.partialorder %v883, %v948
    %vm1028 = vcmp.ge.f32.partialorder %v884, %v950
    %vm1029 = vcmp.ge.f32.partialorder %v885, %v952
    %vm1030 = vcmp.ge.f32.partialorder %v886, %v954
    %vm1031 = vcmp.ge.f32.partialorder %v887, %v956
    %vm1032 = vcmp.ge.f32.partialorder %v888, %v958
    %vm1033 = vcmp.ge.f32.partialorder %v889, %v960
    %vm1034 = vcmp.ge.f32.partialorder %v890, %v962
    %vm1035 = vcmp.ge.f32.partialorder %v891, %v964
    %vm1036 = vcmp.ge.f32.partialorder %v892, %v966
    %vm1037 = vcmp.ge.f32.partialorder %v893, %v968
    %vm1038 = vcmp.ge.f32.partialorder %v894, %v970
    %vm1039 = vcmp.ge.f32.partialorder %v895, %v972
    %vm1040 = vcmp.ge.f32.partialorder %v896, %v974
    %vm1041 = vcmp.ge.f32.partialorder %v897, %v976
    %vm1042 = vcmp.ge.f32.partialorder %v898, %v978
    %vm1043 = vcmp.ge.f32.partialorder %v899, %v980
    %vm1044 = vcmp.ge.f32.partialorder %v900, %v982
    %vm1045 = vcmp.ge.f32.partialorder %v901, %v984
    %vm1046 = vcmp.ge.f32.partialorder %v902, %v986
    %vm1047 = vcmp.ge.f32.partialorder %v903, %v988
    %vm1048 = vcmp.ge.f32.partialorder %v904, %v990
    %vm1049 = vcmp.ge.f32.partialorder %v905, %v992
    %vm1050 = vcmp.ge.f32.partialorder %v906, %v994
    %vm1051 = vcmp.ge.f32.partialorder %v907, %v996
    %vm1052 = vcmp.ge.f32.partialorder %v908, %v998
    %vm1053 = vcmp.ge.f32.partialorder %v909, %v1000
    %vm1054 = vcmp.ge.f32.partialorder %v910, %v1002
    %vm1055 = vcmp.ge.f32.partialorder %v911, %v1004
    %vm1056 = vcmp.ge.f32.partialorder %v912, %v1006
    %vm1057 = vcmp.ge.f32.partialorder %v913, %v1008
    %vm1058 = vcmp.ge.f32.partialorder %v914, %v1010
    %v1059 = vsel %vm1011, -inf, %v867
    %v1060 = vsel %vm1012, -inf, %v868
    %v1061 = vsel %vm1013, -inf, %v869
    %v1062 = vsel %vm1014, -inf, %v870
    %v1063 = vsel %vm1015, -inf, %v871
    %v1064 = vsel %vm1016, -inf, %v872
    %v1065 = vsel %vm1017, -inf, %v873
    %v1066 = vsel %vm1018, -inf, %v874
    %v1067 = vsel %vm1019, -inf, %v875
    %v1068 = vsel %vm1020, -inf, %v876
    %v1069 = vsel %vm1021, -inf, %v877
    %v1070 = vsel %vm1022, -inf, %v878
    %v1071 = vsel %vm1023, -inf, %v879
    %v1072 = vsel %vm1024, -inf, %v880
    %v1073 = vsel %vm1025, -inf, %v881
    %v1074 = vsel %vm1026, -inf, %v882
    %v1075 = vsel %vm1027, -inf, %v883
    %v1076 = vsel %vm1028, -inf, %v884
    %v1077 = vsel %vm1029, -inf, %v885
    %v1078 = vsel %vm1030, -inf, %v886
    %v1079 = vsel %vm1031, -inf, %v887
    %v1080 = vsel %vm1032, -inf, %v888
    %v1081 = vsel %vm1033, -inf, %v889
    %v1082 = vsel %vm1034, -inf, %v890
    %v1083 = vsel %vm1035, -inf, %v891
    %v1084 = vsel %vm1036, -inf, %v892
    %v1085 = vsel %vm1037, -inf, %v893
    %v1086 = vsel %vm1038, -inf, %v894
    %v1087 = vsel %vm1039, -inf, %v895
    %v1088 = vsel %vm1040, -inf, %v896
    %v1089 = vsel %vm1041, -inf, %v897
    %v1090 = vsel %vm1042, -inf, %v898
    %v1091 = vsel %vm1043, -inf, %v899
    %v1092 = vsel %vm1044, -inf, %v900
    %v1093 = vsel %vm1045, -inf, %v901
    %v1094 = vsel %vm1046, -inf, %v902
    %v1095 = vsel %vm1047, -inf, %v903
    %v1096 = vsel %vm1048, -inf, %v904
    %v1097 = vsel %vm1049, -inf, %v905
    %v1098 = vsel %vm1050, -inf, %v906
    %v1099 = vsel %vm1051, -inf, %v907
    %v1100 = vsel %vm1052, -inf, %v908
    %v1101 = vsel %vm1053, -inf, %v909
    %v1102 = vsel %vm1054, -inf, %v910
    %v1103 = vsel %vm1055, -inf, %v911
    %v1104 = vsel %vm1056, -inf, %v912
    %v1105 = vsel %vm1057, -inf, %v913
    %v1106 = vsel %vm1058, -inf, %v914
    %1107 = vmax.xlane.f32.xlu0 %v1059
    %v1108 = vpop.xlane.xlu0 %1107
    %1109 = vmax.xlane.f32.xlu0 %v1060
    %v1110 = vpop.xlane.xlu0 %1109
    %1111 = vmax.xlane.f32.xlu0 %v1061
    %v1112 = vpop.xlane.xlu0 %1111
    %1113 = vmax.xlane.f32.xlu0 %v1062
    %v1114 = vpop.xlane.xlu0 %1113
    %1115 = vmax.xlane.f32.xlu0 %v1063
    %v1116 = vpop.xlane.xlu0 %1115
    %1117 = vmax.xlane.f32.xlu0 %v1064
    %v1118 = vpop.xlane.xlu0 %1117
    %1119 = vmax.xlane.f32.xlu0 %v1065
    %v1120 = vpop.xlane.xlu0 %1119
    %1121 = vmax.xlane.f32.xlu0 %v1066
    %v1122 = vpop.xlane.xlu0 %1121
    %1123 = vmax.xlane.f32.xlu0 %v1067
    %v1124 = vpop.xlane.xlu0 %1123
    %1125 = vmax.xlane.f32.xlu0 %v1068
    %v1126 = vpop.xlane.xlu0 %1125
    %1127 = vmax.xlane.f32.xlu0 %v1069
    %v1128 = vpop.xlane.xlu0 %1127
    %1129 = vmax.xlane.f32.xlu0 %v1070
    %v1130 = vpop.xlane.xlu0 %1129
    %1131 = vmax.xlane.f32.xlu0 %v1071
    %v1132 = vpop.xlane.xlu0 %1131
    %1133 = vmax.xlane.f32.xlu0 %v1072
    %v1134 = vpop.xlane.xlu0 %1133
    %1135 = vmax.xlane.f32.xlu0 %v1073
    %v1136 = vpop.xlane.xlu0 %1135
    %1137 = vmax.xlane.f32.xlu0 %v1074
    %v1138 = vpop.xlane.xlu0 %1137
    %1139 = vmax.xlane.f32.xlu0 %v1075
    %v1140 = vpop.xlane.xlu0 %1139
    %1141 = vmax.xlane.f32.xlu0 %v1076
    %v1142 = vpop.xlane.xlu0 %1141
    %1143 = vmax.xlane.f32.xlu0 %v1077
    %v1144 = vpop.xlane.xlu0 %1143
    %1145 = vmax.xlane.f32.xlu0 %v1078
    %v1146 = vpop.xlane.xlu0 %1145
    %1147 = vmax.xlane.f32.xlu0 %v1079
    %v1148 = vpop.xlane.xlu0 %1147
    %1149 = vmax.xlane.f32.xlu0 %v1080
    %v1150 = vpop.xlane.xlu0 %1149
    %1151 = vmax.xlane.f32.xlu0 %v1081
    %v1152 = vpop.xlane.xlu0 %1151
    %1153 = vmax.xlane.f32.xlu0 %v1082
    %v1154 = vpop.xlane.xlu0 %1153
    %1155 = vmax.xlane.f32.xlu0 %v1083
    %v1156 = vpop.xlane.xlu0 %1155
    %1157 = vmax.xlane.f32.xlu0 %v1084
    %v1158 = vpop.xlane.xlu0 %1157
    %1159 = vmax.xlane.f32.xlu0 %v1085
    %v1160 = vpop.xlane.xlu0 %1159
    %1161 = vmax.xlane.f32.xlu0 %v1086
    %v1162 = vpop.xlane.xlu0 %1161
    %1163 = vmax.xlane.f32.xlu0 %v1087
    %v1164 = vpop.xlane.xlu0 %1163
    %1165 = vmax.xlane.f32.xlu0 %v1088
    %v1166 = vpop.xlane.xlu0 %1165
    %1167 = vmax.xlane.f32.xlu0 %v1089
    %v1168 = vpop.xlane.xlu0 %1167
    %1169 = vmax.xlane.f32.xlu0 %v1090
    %v1170 = vpop.xlane.xlu0 %1169
    %1171 = vmax.xlane.f32.xlu0 %v1091
    %v1172 = vpop.xlane.xlu0 %1171
    %1173 = vmax.xlane.f32.xlu0 %v1092
    %v1174 = vpop.xlane.xlu0 %1173
    %1175 = vmax.xlane.f32.xlu0 %v1093
    %v1176 = vpop.xlane.xlu0 %1175
    %1177 = vmax.xlane.f32.xlu0 %v1094
    %v1178 = vpop.xlane.xlu0 %1177
    %1179 = vmax.xlane.f32.xlu0 %v1095
    %v1180 = vpop.xlane.xlu0 %1179
    %1181 = vmax.xlane.f32.xlu0 %v1096
    %v1182 = vpop.xlane.xlu0 %1181
    %1183 = vmax.xlane.f32.xlu0 %v1097
    %v1184 = vpop.xlane.xlu0 %1183
    %1185 = vmax.xlane.f32.xlu0 %v1098
    %v1186 = vpop.xlane.xlu0 %1185
    %1187 = vmax.xlane.f32.xlu0 %v1099
    %v1188 = vpop.xlane.xlu0 %1187
    %1189 = vmax.xlane.f32.xlu0 %v1100
    %v1190 = vpop.xlane.xlu0 %1189
    %1191 = vmax.xlane.f32.xlu0 %v1101
    %v1192 = vpop.xlane.xlu0 %1191
    %1193 = vmax.xlane.f32.xlu0 %v1102
    %v1194 = vpop.xlane.xlu0 %1193
    %1195 = vmax.xlane.f32.xlu0 %v1103
    %v1196 = vpop.xlane.xlu0 %1195
    %1197 = vmax.xlane.f32.xlu0 %v1104
    %v1198 = vpop.xlane.xlu0 %1197
    %1199 = vmax.xlane.f32.xlu0 %v1105
    %v1200 = vpop.xlane.xlu0 %1199
    %1201 = vmax.xlane.f32.xlu0 %v1106
    %v1202 = vpop.xlane.xlu0 %1201
    %vm1203 = vcmp.ge.f32.partialorder %v1059, %v1108
    %vm1204 = vcmp.ge.f32.partialorder %v1060, %v1110
    %vm1205 = vcmp.ge.f32.partialorder %v1061, %v1112
    %vm1206 = vcmp.ge.f32.partialorder %v1062, %v1114
    %vm1207 = vcmp.ge.f32.partialorder %v1063, %v1116
    %vm1208 = vcmp.ge.f32.partialorder %v1064, %v1118
    %vm1209 = vcmp.ge.f32.partialorder %v1065, %v1120
    %vm1210 = vcmp.ge.f32.partialorder %v1066, %v1122
    %vm1211 = vcmp.ge.f32.partialorder %v1067, %v1124
    %vm1212 = vcmp.ge.f32.partialorder %v1068, %v1126
    %vm1213 = vcmp.ge.f32.partialorder %v1069, %v1128
    %vm1214 = vcmp.ge.f32.partialorder %v1070, %v1130
    %vm1215 = vcmp.ge.f32.partialorder %v1071, %v1132
    %vm1216 = vcmp.ge.f32.partialorder %v1072, %v1134
    %vm1217 = vcmp.ge.f32.partialorder %v1073, %v1136
    %vm1218 = vcmp.ge.f32.partialorder %v1074, %v1138
    %vm1219 = vcmp.ge.f32.partialorder %v1075, %v1140
    %vm1220 = vcmp.ge.f32.partialorder %v1076, %v1142
    %vm1221 = vcmp.ge.f32.partialorder %v1077, %v1144
    %vm1222 = vcmp.ge.f32.partialorder %v1078, %v1146
    %vm1223 = vcmp.ge.f32.partialorder %v1079, %v1148
    %vm1224 = vcmp.ge.f32.partialorder %v1080, %v1150
    %vm1225 = vcmp.ge.f32.partialorder %v1081, %v1152
    %vm1226 = vcmp.ge.f32.partialorder %v1082, %v1154
    %vm1227 = vcmp.ge.f32.partialorder %v1083, %v1156
    %vm1228 = vcmp.ge.f32.partialorder %v1084, %v1158
    %vm1229 = vcmp.ge.f32.partialorder %v1085, %v1160
    %vm1230 = vcmp.ge.f32.partialorder %v1086, %v1162
    %vm1231 = vcmp.ge.f32.partialorder %v1087, %v1164
    %vm1232 = vcmp.ge.f32.partialorder %v1088, %v1166
    %vm1233 = vcmp.ge.f32.partialorder %v1089, %v1168
    %vm1234 = vcmp.ge.f32.partialorder %v1090, %v1170
    %vm1235 = vcmp.ge.f32.partialorder %v1091, %v1172
    %vm1236 = vcmp.ge.f32.partialorder %v1092, %v1174
    %vm1237 = vcmp.ge.f32.partialorder %v1093, %v1176
    %vm1238 = vcmp.ge.f32.partialorder %v1094, %v1178
    %vm1239 = vcmp.ge.f32.partialorder %v1095, %v1180
    %vm1240 = vcmp.ge.f32.partialorder %v1096, %v1182
    %vm1241 = vcmp.ge.f32.partialorder %v1097, %v1184
    %vm1242 = vcmp.ge.f32.partialorder %v1098, %v1186
    %vm1243 = vcmp.ge.f32.partialorder %v1099, %v1188
    %vm1244 = vcmp.ge.f32.partialorder %v1100, %v1190
    %vm1245 = vcmp.ge.f32.partialorder %v1101, %v1192
    %vm1246 = vcmp.ge.f32.partialorder %v1102, %v1194
    %vm1247 = vcmp.ge.f32.partialorder %v1103, %v1196
    %vm1248 = vcmp.ge.f32.partialorder %v1104, %v1198
    %vm1249 = vcmp.ge.f32.partialorder %v1105, %v1200
    %vm1250 = vcmp.ge.f32.partialorder %v1106, %v1202
    %v1251 = vsel %vm1203, -inf, %v1059
    %v1252 = vsel %vm1204, -inf, %v1060
    %v1253 = vsel %vm1205, -inf, %v1061
    %v1254 = vsel %vm1206, -inf, %v1062
    %v1255 = vsel %vm1207, -inf, %v1063
    %v1256 = vsel %vm1208, -inf, %v1064
    %v1257 = vsel %vm1209, -inf, %v1065
    %v1258 = vsel %vm1210, -inf, %v1066
    %v1259 = vsel %vm1211, -inf, %v1067
    %v1260 = vsel %vm1212, -inf, %v1068
    %v1261 = vsel %vm1213, -inf, %v1069
    %v1262 = vsel %vm1214, -inf, %v1070
    %v1263 = vsel %vm1215, -inf, %v1071
    %v1264 = vsel %vm1216, -inf, %v1072
    %v1265 = vsel %vm1217, -inf, %v1073
    %v1266 = vsel %vm1218, -inf, %v1074
    %v1267 = vsel %vm1219, -inf, %v1075
    %v1268 = vsel %vm1220, -inf, %v1076
    %v1269 = vsel %vm1221, -inf, %v1077
    %v1270 = vsel %vm1222, -inf, %v1078
    %v1271 = vsel %vm1223, -inf, %v1079
    %v1272 = vsel %vm1224, -inf, %v1080
    %v1273 = vsel %vm1225, -inf, %v1081
    %v1274 = vsel %vm1226, -inf, %v1082
    %v1275 = vsel %vm1227, -inf, %v1083
    %v1276 = vsel %vm1228, -inf, %v1084
    %v1277 = vsel %vm1229, -inf, %v1085
    %v1278 = vsel %vm1230, -inf, %v1086
    %v1279 = vsel %vm1231, -inf, %v1087
    %v1280 = vsel %vm1232, -inf, %v1088
    %v1281 = vsel %vm1233, -inf, %v1089
    %v1282 = vsel %vm1234, -inf, %v1090
    %v1283 = vsel %vm1235, -inf, %v1091
    %v1284 = vsel %vm1236, -inf, %v1092
    %v1285 = vsel %vm1237, -inf, %v1093
    %v1286 = vsel %vm1238, -inf, %v1094
    %v1287 = vsel %vm1239, -inf, %v1095
    %v1288 = vsel %vm1240, -inf, %v1096
    %v1289 = vsel %vm1241, -inf, %v1097
    %v1290 = vsel %vm1242, -inf, %v1098
    %v1291 = vsel %vm1243, -inf, %v1099
    %v1292 = vsel %vm1244, -inf, %v1100
    %v1293 = vsel %vm1245, -inf, %v1101
    %v1294 = vsel %vm1246, -inf, %v1102
    %v1295 = vsel %vm1247, -inf, %v1103
    %v1296 = vsel %vm1248, -inf, %v1104
    %v1297 = vsel %vm1249, -inf, %v1105
    %v1298 = vsel %vm1250, -inf, %v1106
    %1299 = vmax.xlane.f32.xlu0 %v1251
    %v1300 = vpop.xlane.xlu0 %1299
    %1301 = vmax.xlane.f32.xlu0 %v1252
    %v1302 = vpop.xlane.xlu0 %1301
    %1303 = vmax.xlane.f32.xlu0 %v1253
    %v1304 = vpop.xlane.xlu0 %1303
    %1305 = vmax.xlane.f32.xlu0 %v1254
    %v1306 = vpop.xlane.xlu0 %1305
    %1307 = vmax.xlane.f32.xlu0 %v1255
    %v1308 = vpop.xlane.xlu0 %1307
    %1309 = vmax.xlane.f32.xlu0 %v1256
    %v1310 = vpop.xlane.xlu0 %1309
    %1311 = vmax.xlane.f32.xlu0 %v1257
    %v1312 = vpop.xlane.xlu0 %1311
    %1313 = vmax.xlane.f32.xlu0 %v1258
    %v1314 = vpop.xlane.xlu0 %1313
    %1315 = vmax.xlane.f32.xlu0 %v1259
    %v1316 = vpop.xlane.xlu0 %1315
    %1317 = vmax.xlane.f32.xlu0 %v1260
    %v1318 = vpop.xlane.xlu0 %1317
    %1319 = vmax.xlane.f32.xlu0 %v1261
    %v1320 = vpop.xlane.xlu0 %1319
    %1321 = vmax.xlane.f32.xlu0 %v1262
    %v1322 = vpop.xlane.xlu0 %1321
    %1323 = vmax.xlane.f32.xlu0 %v1263
    %v1324 = vpop.xlane.xlu0 %1323
    %1325 = vmax.xlane.f32.xlu0 %v1264
    %v1326 = vpop.xlane.xlu0 %1325
    %1327 = vmax.xlane.f32.xlu0 %v1265
    %v1328 = vpop.xlane.xlu0 %1327
    %1329 = vmax.xlane.f32.xlu0 %v1266
    %v1330 = vpop.xlane.xlu0 %1329
    %1331 = vmax.xlane.f32.xlu0 %v1267
    %v1332 = vpop.xlane.xlu0 %1331
    %1333 = vmax.xlane.f32.xlu0 %v1268
    %v1334 = vpop.xlane.xlu0 %1333
    %1335 = vmax.xlane.f32.xlu0 %v1269
    %v1336 = vpop.xlane.xlu0 %1335
    %1337 = vmax.xlane.f32.xlu0 %v1270
    %v1338 = vpop.xlane.xlu0 %1337
    %1339 = vmax.xlane.f32.xlu0 %v1271
    %v1340 = vpop.xlane.xlu0 %1339
    %1341 = vmax.xlane.f32.xlu0 %v1272
    %v1342 = vpop.xlane.xlu0 %1341
    %1343 = vmax.xlane.f32.xlu0 %v1273
    %v1344 = vpop.xlane.xlu0 %1343
    %1345 = vmax.xlane.f32.xlu0 %v1274
    %v1346 = vpop.xlane.xlu0 %1345
    %1347 = vmax.xlane.f32.xlu0 %v1275
    %v1348 = vpop.xlane.xlu0 %1347
    %1349 = vmax.xlane.f32.xlu0 %v1276
    %v1350 = vpop.xlane.xlu0 %1349
    %1351 = vmax.xlane.f32.xlu0 %v1277
    %v1352 = vpop.xlane.xlu0 %1351
    %1353 = vmax.xlane.f32.xlu0 %v1278
    %v1354 = vpop.xlane.xlu0 %1353
    %1355 = vmax.xlane.f32.xlu0 %v1279
    %v1356 = vpop.xlane.xlu0 %1355
    %1357 = vmax.xlane.f32.xlu0 %v1280
    %v1358 = vpop.xlane.xlu0 %1357
    %1359 = vmax.xlane.f32.xlu0 %v1281
    %v1360 = vpop.xlane.xlu0 %1359
    %1361 = vmax.xlane.f32.xlu0 %v1282
    %v1362 = vpop.xlane.xlu0 %1361
    %1363 = vmax.xlane.f32.xlu0 %v1283
    %v1364 = vpop.xlane.xlu0 %1363
    %1365 = vmax.xlane.f32.xlu0 %v1284
    %v1366 = vpop.xlane.xlu0 %1365
    %1367 = vmax.xlane.f32.xlu0 %v1285
    %v1368 = vpop.xlane.xlu0 %1367
    %1369 = vmax.xlane.f32.xlu0 %v1286
    %v1370 = vpop.xlane.xlu0 %1369
    %1371 = vmax.xlane.f32.xlu0 %v1287
    %v1372 = vpop.xlane.xlu0 %1371
    %1373 = vmax.xlane.f32.xlu0 %v1288
    %v1374 = vpop.xlane.xlu0 %1373
    %1375 = vmax.xlane.f32.xlu0 %v1289
    %v1376 = vpop.xlane.xlu0 %1375
    %1377 = vmax.xlane.f32.xlu0 %v1290
    %v1378 = vpop.xlane.xlu0 %1377
    %1379 = vmax.xlane.f32.xlu0 %v1291
    %v1380 = vpop.xlane.xlu0 %1379
    %1381 = vmax.xlane.f32.xlu0 %v1292
    %v1382 = vpop.xlane.xlu0 %1381
    %1383 = vmax.xlane.f32.xlu0 %v1293
    %v1384 = vpop.xlane.xlu0 %1383
    %1385 = vmax.xlane.f32.xlu0 %v1294
    %v1386 = vpop.xlane.xlu0 %1385
    %1387 = vmax.xlane.f32.xlu0 %v1295
    %v1388 = vpop.xlane.xlu0 %1387
    %1389 = vmax.xlane.f32.xlu0 %v1296
    %v1390 = vpop.xlane.xlu0 %1389
    %1391 = vmax.xlane.f32.xlu0 %v1297
    %v1392 = vpop.xlane.xlu0 %1391
    %1393 = vmax.xlane.f32.xlu0 %v1298
    %v1394 = vpop.xlane.xlu0 %1393
    %vm1395 = vcmp.ge.f32.partialorder %v1251, %v1300
    %vm1396 = vcmp.ge.f32.partialorder %v1252, %v1302
    %vm1397 = vcmp.ge.f32.partialorder %v1253, %v1304
    %vm1398 = vcmp.ge.f32.partialorder %v1254, %v1306
    %vm1399 = vcmp.ge.f32.partialorder %v1255, %v1308
    %vm1400 = vcmp.ge.f32.partialorder %v1256, %v1310
    %vm1401 = vcmp.ge.f32.partialorder %v1257, %v1312
    %vm1402 = vcmp.ge.f32.partialorder %v1258, %v1314
    %vm1403 = vcmp.ge.f32.partialorder %v1259, %v1316
    %vm1404 = vcmp.ge.f32.partialorder %v1260, %v1318
    %vm1405 = vcmp.ge.f32.partialorder %v1261, %v1320
    %vm1406 = vcmp.ge.f32.partialorder %v1262, %v1322
    %vm1407 = vcmp.ge.f32.partialorder %v1263, %v1324
    %vm1408 = vcmp.ge.f32.partialorder %v1264, %v1326
    %vm1409 = vcmp.ge.f32.partialorder %v1265, %v1328
    %vm1410 = vcmp.ge.f32.partialorder %v1266, %v1330
    %vm1411 = vcmp.ge.f32.partialorder %v1267, %v1332
    %vm1412 = vcmp.ge.f32.partialorder %v1268, %v1334
    %vm1413 = vcmp.ge.f32.partialorder %v1269, %v1336
    %vm1414 = vcmp.ge.f32.partialorder %v1270, %v1338
    %vm1415 = vcmp.ge.f32.partialorder %v1271, %v1340
    %vm1416 = vcmp.ge.f32.partialorder %v1272, %v1342
    %vm1417 = vcmp.ge.f32.partialorder %v1273, %v1344
    %vm1418 = vcmp.ge.f32.partialorder %v1274, %v1346
    %vm1419 = vcmp.ge.f32.partialorder %v1275, %v1348
    %vm1420 = vcmp.ge.f32.partialorder %v1276, %v1350
    %vm1421 = vcmp.ge.f32.partialorder %v1277, %v1352
    %vm1422 = vcmp.ge.f32.partialorder %v1278, %v1354
    %vm1423 = vcmp.ge.f32.partialorder %v1279, %v1356
    %vm1424 = vcmp.ge.f32.partialorder %v1280, %v1358
    %vm1425 = vcmp.ge.f32.partialorder %v1281, %v1360
    %vm1426 = vcmp.ge.f32.partialorder %v1282, %v1362
    %vm1427 = vcmp.ge.f32.partialorder %v1283, %v1364
    %vm1428 = vcmp.ge.f32.partialorder %v1284, %v1366
    %vm1429 = vcmp.ge.f32.partialorder %v1285, %v1368
    %vm1430 = vcmp.ge.f32.partialorder %v1286, %v1370
    %vm1431 = vcmp.ge.f32.partialorder %v1287, %v1372
    %vm1432 = vcmp.ge.f32.partialorder %v1288, %v1374
    %vm1433 = vcmp.ge.f32.partialorder %v1289, %v1376
    %vm1434 = vcmp.ge.f32.partialorder %v1290, %v1378
    %vm1435 = vcmp.ge.f32.partialorder %v1291, %v1380
    %vm1436 = vcmp.ge.f32.partialorder %v1292, %v1382
    %vm1437 = vcmp.ge.f32.partialorder %v1293, %v1384
    %vm1438 = vcmp.ge.f32.partialorder %v1294, %v1386
    %vm1439 = vcmp.ge.f32.partialorder %v1295, %v1388
    %vm1440 = vcmp.ge.f32.partialorder %v1296, %v1390
    %vm1441 = vcmp.ge.f32.partialorder %v1297, %v1392
    %vm1442 = vcmp.ge.f32.partialorder %v1298, %v1394
    %v1443 = vsel %vm1395, -inf, %v1251
    %v1444 = vsel %vm1396, -inf, %v1252
    %v1445 = vsel %vm1397, -inf, %v1253
    %v1446 = vsel %vm1398, -inf, %v1254
    %v1447 = vsel %vm1399, -inf, %v1255
    %v1448 = vsel %vm1400, -inf, %v1256
    %v1449 = vsel %vm1401, -inf, %v1257
    %v1450 = vsel %vm1402, -inf, %v1258
    %v1451 = vsel %vm1403, -inf, %v1259
    %v1452 = vsel %vm1404, -inf, %v1260
    %v1453 = vsel %vm1405, -inf, %v1261
    %v1454 = vsel %vm1406, -inf, %v1262
    %v1455 = vsel %vm1407, -inf, %v1263
    %v1456 = vsel %vm1408, -inf, %v1264
    %v1457 = vsel %vm1409, -inf, %v1265
    %v1458 = vsel %vm1410, -inf, %v1266
    %v1459 = vsel %vm1411, -inf, %v1267
    %v1460 = vsel %vm1412, -inf, %v1268
    %v1461 = vsel %vm1413, -inf, %v1269
    %v1462 = vsel %vm1414, -inf, %v1270
    %v1463 = vsel %vm1415, -inf, %v1271
    %v1464 = vsel %vm1416, -inf, %v1272
    %v1465 = vsel %vm1417, -inf, %v1273
    %v1466 = vsel %vm1418, -inf, %v1274
    %v1467 = vsel %vm1419, -inf, %v1275
    %v1468 = vsel %vm1420, -inf, %v1276
    %v1469 = vsel %vm1421, -inf, %v1277
    %v1470 = vsel %vm1422, -inf, %v1278
    %v1471 = vsel %vm1423, -inf, %v1279
    %v1472 = vsel %vm1424, -inf, %v1280
    %v1473 = vsel %vm1425, -inf, %v1281
    %v1474 = vsel %vm1426, -inf, %v1282
    %v1475 = vsel %vm1427, -inf, %v1283
    %v1476 = vsel %vm1428, -inf, %v1284
    %v1477 = vsel %vm1429, -inf, %v1285
    %v1478 = vsel %vm1430, -inf, %v1286
    %v1479 = vsel %vm1431, -inf, %v1287
    %v1480 = vsel %vm1432, -inf, %v1288
    %v1481 = vsel %vm1433, -inf, %v1289
    %v1482 = vsel %vm1434, -inf, %v1290
    %v1483 = vsel %vm1435, -inf, %v1291
    %v1484 = vsel %vm1436, -inf, %v1292
    %v1485 = vsel %vm1437, -inf, %v1293
    %v1486 = vsel %vm1438, -inf, %v1294
    %v1487 = vsel %vm1439, -inf, %v1295
    %v1488 = vsel %vm1440, -inf, %v1296
    %v1489 = vsel %vm1441, -inf, %v1297
    %v1490 = vsel %vm1442, -inf, %v1298
    %1491 = vmax.xlane.f32.xlu0 %v1443
    %v1492 = vpop.xlane.xlu0 %1491
    %1493 = vmax.xlane.f32.xlu0 %v1444
    %v1494 = vpop.xlane.xlu0 %1493
    %1495 = vmax.xlane.f32.xlu0 %v1445
    %v1496 = vpop.xlane.xlu0 %1495
    %1497 = vmax.xlane.f32.xlu0 %v1446
    %v1498 = vpop.xlane.xlu0 %1497
    %1499 = vmax.xlane.f32.xlu0 %v1447
    %v1500 = vpop.xlane.xlu0 %1499
    %1501 = vmax.xlane.f32.xlu0 %v1448
    %v1502 = vpop.xlane.xlu0 %1501
    %1503 = vmax.xlane.f32.xlu0 %v1449
    %v1504 = vpop.xlane.xlu0 %1503
    %1505 = vmax.xlane.f32.xlu0 %v1450
    %v1506 = vpop.xlane.xlu0 %1505
    %1507 = vmax.xlane.f32.xlu0 %v1451
    %v1508 = vpop.xlane.xlu0 %1507
    %1509 = vmax.xlane.f32.xlu0 %v1452
    %v1510 = vpop.xlane.xlu0 %1509
    %1511 = vmax.xlane.f32.xlu0 %v1453
    %v1512 = vpop.xlane.xlu0 %1511
    %1513 = vmax.xlane.f32.xlu0 %v1454
    %v1514 = vpop.xlane.xlu0 %1513
    %1515 = vmax.xlane.f32.xlu0 %v1455
    %v1516 = vpop.xlane.xlu0 %1515
    %1517 = vmax.xlane.f32.xlu0 %v1456
    %v1518 = vpop.xlane.xlu0 %1517
    %1519 = vmax.xlane.f32.xlu0 %v1457
    %v1520 = vpop.xlane.xlu0 %1519
    %1521 = vmax.xlane.f32.xlu0 %v1458
    %v1522 = vpop.xlane.xlu0 %1521
    %1523 = vmax.xlane.f32.xlu0 %v1459
    %v1524 = vpop.xlane.xlu0 %1523
    %1525 = vmax.xlane.f32.xlu0 %v1460
    %v1526 = vpop.xlane.xlu0 %1525
    %1527 = vmax.xlane.f32.xlu0 %v1461
    %v1528 = vpop.xlane.xlu0 %1527
    %1529 = vmax.xlane.f32.xlu0 %v1462
    %v1530 = vpop.xlane.xlu0 %1529
    %1531 = vmax.xlane.f32.xlu0 %v1463
    %v1532 = vpop.xlane.xlu0 %1531
    %1533 = vmax.xlane.f32.xlu0 %v1464
    %v1534 = vpop.xlane.xlu0 %1533
    %1535 = vmax.xlane.f32.xlu0 %v1465
    %v1536 = vpop.xlane.xlu0 %1535
    %1537 = vmax.xlane.f32.xlu0 %v1466
    %v1538 = vpop.xlane.xlu0 %1537
    %1539 = vmax.xlane.f32.xlu0 %v1467
    %v1540 = vpop.xlane.xlu0 %1539
    %1541 = vmax.xlane.f32.xlu0 %v1468
    %v1542 = vpop.xlane.xlu0 %1541
    %1543 = vmax.xlane.f32.xlu0 %v1469
    %v1544 = vpop.xlane.xlu0 %1543
    %1545 = vmax.xlane.f32.xlu0 %v1470
    %v1546 = vpop.xlane.xlu0 %1545
    %1547 = vmax.xlane.f32.xlu0 %v1471
    %v1548 = vpop.xlane.xlu0 %1547
    %1549 = vmax.xlane.f32.xlu0 %v1472
    %v1550 = vpop.xlane.xlu0 %1549
    %1551 = vmax.xlane.f32.xlu0 %v1473
    %v1552 = vpop.xlane.xlu0 %1551
    %1553 = vmax.xlane.f32.xlu0 %v1474
    %v1554 = vpop.xlane.xlu0 %1553
    %1555 = vmax.xlane.f32.xlu0 %v1475
    %v1556 = vpop.xlane.xlu0 %1555
    %1557 = vmax.xlane.f32.xlu0 %v1476
    %v1558 = vpop.xlane.xlu0 %1557
    %1559 = vmax.xlane.f32.xlu0 %v1477
    %v1560 = vpop.xlane.xlu0 %1559
    %1561 = vmax.xlane.f32.xlu0 %v1478
    %v1562 = vpop.xlane.xlu0 %1561
    %1563 = vmax.xlane.f32.xlu0 %v1479
    %v1564 = vpop.xlane.xlu0 %1563
    %1565 = vmax.xlane.f32.xlu0 %v1480
    %v1566 = vpop.xlane.xlu0 %1565
    %1567 = vmax.xlane.f32.xlu0 %v1481
    %v1568 = vpop.xlane.xlu0 %1567
    %1569 = vmax.xlane.f32.xlu0 %v1482
    %v1570 = vpop.xlane.xlu0 %1569
    %1571 = vmax.xlane.f32.xlu0 %v1483
    %v1572 = vpop.xlane.xlu0 %1571
    %1573 = vmax.xlane.f32.xlu0 %v1484
    %v1574 = vpop.xlane.xlu0 %1573
    %1575 = vmax.xlane.f32.xlu0 %v1485
    %v1576 = vpop.xlane.xlu0 %1575
    %1577 = vmax.xlane.f32.xlu0 %v1486
    %v1578 = vpop.xlane.xlu0 %1577
    %1579 = vmax.xlane.f32.xlu0 %v1487
    %v1580 = vpop.xlane.xlu0 %1579
    %1581 = vmax.xlane.f32.xlu0 %v1488
    %v1582 = vpop.xlane.xlu0 %1581
    %1583 = vmax.xlane.f32.xlu0 %v1489
    %v1584 = vpop.xlane.xlu0 %1583
    %1585 = vmax.xlane.f32.xlu0 %v1490
    %v1586 = vpop.xlane.xlu0 %1585
    %vm1587 = vcmp.ge.f32.partialorder %v1443, %v1492
    %vm1588 = vcmp.ge.f32.partialorder %v1444, %v1494
    %vm1589 = vcmp.ge.f32.partialorder %v1445, %v1496
    %vm1590 = vcmp.ge.f32.partialorder %v1446, %v1498
    %vm1591 = vcmp.ge.f32.partialorder %v1447, %v1500
    %vm1592 = vcmp.ge.f32.partialorder %v1448, %v1502
    %vm1593 = vcmp.ge.f32.partialorder %v1449, %v1504
    %vm1594 = vcmp.ge.f32.partialorder %v1450, %v1506
    %vm1595 = vcmp.ge.f32.partialorder %v1451, %v1508
    %vm1596 = vcmp.ge.f32.partialorder %v1452, %v1510
    %vm1597 = vcmp.ge.f32.partialorder %v1453, %v1512
    %vm1598 = vcmp.ge.f32.partialorder %v1454, %v1514
    %vm1599 = vcmp.ge.f32.partialorder %v1455, %v1516
    %vm1600 = vcmp.ge.f32.partialorder %v1456, %v1518
    %vm1601 = vcmp.ge.f32.partialorder %v1457, %v1520
    %vm1602 = vcmp.ge.f32.partialorder %v1458, %v1522
    %vm1603 = vcmp.ge.f32.partialorder %v1459, %v1524
    %vm1604 = vcmp.ge.f32.partialorder %v1460, %v1526
    %vm1605 = vcmp.ge.f32.partialorder %v1461, %v1528
    %vm1606 = vcmp.ge.f32.partialorder %v1462, %v1530
    %vm1607 = vcmp.ge.f32.partialorder %v1463, %v1532
    %vm1608 = vcmp.ge.f32.partialorder %v1464, %v1534
    %vm1609 = vcmp.ge.f32.partialorder %v1465, %v1536
    %vm1610 = vcmp.ge.f32.partialorder %v1466, %v1538
    %vm1611 = vcmp.ge.f32.partialorder %v1467, %v1540
    %vm1612 = vcmp.ge.f32.partialorder %v1468, %v1542
    %vm1613 = vcmp.ge.f32.partialorder %v1469, %v1544
    %vm1614 = vcmp.ge.f32.partialorder %v1470, %v1546
    %vm1615 = vcmp.ge.f32.partialorder %v1471, %v1548
    %vm1616 = vcmp.ge.f32.partialorder %v1472, %v1550
    %vm1617 = vcmp.ge.f32.partialorder %v1473, %v1552
    %vm1618 = vcmp.ge.f32.partialorder %v1474, %v1554
    %vm1619 = vcmp.ge.f32.partialorder %v1475, %v1556
    %vm1620 = vcmp.ge.f32.partialorder %v1476, %v1558
    %vm1621 = vcmp.ge.f32.partialorder %v1477, %v1560
    %vm1622 = vcmp.ge.f32.partialorder %v1478, %v1562
    %vm1623 = vcmp.ge.f32.partialorder %v1479, %v1564
    %vm1624 = vcmp.ge.f32.partialorder %v1480, %v1566
    %vm1625 = vcmp.ge.f32.partialorder %v1481, %v1568
    %vm1626 = vcmp.ge.f32.partialorder %v1482, %v1570
    %vm1627 = vcmp.ge.f32.partialorder %v1483, %v1572
    %vm1628 = vcmp.ge.f32.partialorder %v1484, %v1574
    %vm1629 = vcmp.ge.f32.partialorder %v1485, %v1576
    %vm1630 = vcmp.ge.f32.partialorder %v1486, %v1578
    %vm1631 = vcmp.ge.f32.partialorder %v1487, %v1580
    %vm1632 = vcmp.ge.f32.partialorder %v1488, %v1582
    %vm1633 = vcmp.ge.f32.partialorder %v1489, %v1584
    %vm1634 = vcmp.ge.f32.partialorder %v1490, %v1586
    %v1635 = vsel %vm1587, -inf, %v1443
    %v1636 = vsel %vm1588, -inf, %v1444
    %v1637 = vsel %vm1589, -inf, %v1445
    %v1638 = vsel %vm1590, -inf, %v1446
    %v1639 = vsel %vm1591, -inf, %v1447
    %v1640 = vsel %vm1592, -inf, %v1448
    %v1641 = vsel %vm1593, -inf, %v1449
    %v1642 = vsel %vm1594, -inf, %v1450
    %v1643 = vsel %vm1595, -inf, %v1451
    %v1644 = vsel %vm1596, -inf, %v1452
    %v1645 = vsel %vm1597, -inf, %v1453
    %v1646 = vsel %vm1598, -inf, %v1454
    %v1647 = vsel %vm1599, -inf, %v1455
    %v1648 = vsel %vm1600, -inf, %v1456
    %v1649 = vsel %vm1601, -inf, %v1457
    %v1650 = vsel %vm1602, -inf, %v1458
    %v1651 = vsel %vm1603, -inf, %v1459
    %v1652 = vsel %vm1604, -inf, %v1460
    %v1653 = vsel %vm1605, -inf, %v1461
    %v1654 = vsel %vm1606, -inf, %v1462
    %v1655 = vsel %vm1607, -inf, %v1463
    %v1656 = vsel %vm1608, -inf, %v1464
    %v1657 = vsel %vm1609, -inf, %v1465
    %v1658 = vsel %vm1610, -inf, %v1466
    %v1659 = vsel %vm1611, -inf, %v1467
    %v1660 = vsel %vm1612, -inf, %v1468
    %v1661 = vsel %vm1613, -inf, %v1469
    %v1662 = vsel %vm1614, -inf, %v1470
    %v1663 = vsel %vm1615, -inf, %v1471
    %v1664 = vsel %vm1616, -inf, %v1472
    %v1665 = vsel %vm1617, -inf, %v1473
    %v1666 = vsel %vm1618, -inf, %v1474
    %v1667 = vsel %vm1619, -inf, %v1475
    %v1668 = vsel %vm1620, -inf, %v1476
    %v1669 = vsel %vm1621, -inf, %v1477
    %v1670 = vsel %vm1622, -inf, %v1478
    %v1671 = vsel %vm1623, -inf, %v1479
    %v1672 = vsel %vm1624, -inf, %v1480
    %v1673 = vsel %vm1625, -inf, %v1481
    %v1674 = vsel %vm1626, -inf, %v1482
    %v1675 = vsel %vm1627, -inf, %v1483
    %v1676 = vsel %vm1628, -inf, %v1484
    %v1677 = vsel %vm1629, -inf, %v1485
    %v1678 = vsel %vm1630, -inf, %v1486
    %v1679 = vsel %vm1631, -inf, %v1487
    %v1680 = vsel %vm1632, -inf, %v1488
    %v1681 = vsel %vm1633, -inf, %v1489
    %v1682 = vsel %vm1634, -inf, %v1490
    %1683 = vmax.xlane.f32.xlu0 %v1635
    %v1684 = vpop.xlane.xlu0 %1683
    %1685 = vmax.xlane.f32.xlu0 %v1636
    %v1686 = vpop.xlane.xlu0 %1685
    %1687 = vmax.xlane.f32.xlu0 %v1637
    %v1688 = vpop.xlane.xlu0 %1687
    %1689 = vmax.xlane.f32.xlu0 %v1638
    %v1690 = vpop.xlane.xlu0 %1689
    %1691 = vmax.xlane.f32.xlu0 %v1639
    %v1692 = vpop.xlane.xlu0 %1691
    %1693 = vmax.xlane.f32.xlu0 %v1640
    %v1694 = vpop.xlane.xlu0 %1693
    %1695 = vmax.xlane.f32.xlu0 %v1641
    %v1696 = vpop.xlane.xlu0 %1695
    %1697 = vmax.xlane.f32.xlu0 %v1642
    %v1698 = vpop.xlane.xlu0 %1697
    %1699 = vmax.xlane.f32.xlu0 %v1643
    %v1700 = vpop.xlane.xlu0 %1699
    %1701 = vmax.xlane.f32.xlu0 %v1644
    %v1702 = vpop.xlane.xlu0 %1701
    %1703 = vmax.xlane.f32.xlu0 %v1645
    %v1704 = vpop.xlane.xlu0 %1703
    %1705 = vmax.xlane.f32.xlu0 %v1646
    %v1706 = vpop.xlane.xlu0 %1705
    %1707 = vmax.xlane.f32.xlu0 %v1647
    %v1708 = vpop.xlane.xlu0 %1707
    %1709 = vmax.xlane.f32.xlu0 %v1648
    %v1710 = vpop.xlane.xlu0 %1709
    %1711 = vmax.xlane.f32.xlu0 %v1649
    %v1712 = vpop.xlane.xlu0 %1711
    %1713 = vmax.xlane.f32.xlu0 %v1650
    %v1714 = vpop.xlane.xlu0 %1713
    %1715 = vmax.xlane.f32.xlu0 %v1651
    %v1716 = vpop.xlane.xlu0 %1715
    %1717 = vmax.xlane.f32.xlu0 %v1652
    %v1718 = vpop.xlane.xlu0 %1717
    %1719 = vmax.xlane.f32.xlu0 %v1653
    %v1720 = vpop.xlane.xlu0 %1719
    %1721 = vmax.xlane.f32.xlu0 %v1654
    %v1722 = vpop.xlane.xlu0 %1721
    %1723 = vmax.xlane.f32.xlu0 %v1655
    %v1724 = vpop.xlane.xlu0 %1723
    %1725 = vmax.xlane.f32.xlu0 %v1656
    %v1726 = vpop.xlane.xlu0 %1725
    %1727 = vmax.xlane.f32.xlu0 %v1657
    %v1728 = vpop.xlane.xlu0 %1727
    %1729 = vmax.xlane.f32.xlu0 %v1658
    %v1730 = vpop.xlane.xlu0 %1729
    %1731 = vmax.xlane.f32.xlu0 %v1659
    %v1732 = vpop.xlane.xlu0 %1731
    %1733 = vmax.xlane.f32.xlu0 %v1660
    %v1734 = vpop.xlane.xlu0 %1733
    %1735 = vmax.xlane.f32.xlu0 %v1661
    %v1736 = vpop.xlane.xlu0 %1735
    %1737 = vmax.xlane.f32.xlu0 %v1662
    %v1738 = vpop.xlane.xlu0 %1737
    %1739 = vmax.xlane.f32.xlu0 %v1663
    %v1740 = vpop.xlane.xlu0 %1739
    %1741 = vmax.xlane.f32.xlu0 %v1664
    %v1742 = vpop.xlane.xlu0 %1741
    %1743 = vmax.xlane.f32.xlu0 %v1665
    %v1744 = vpop.xlane.xlu0 %1743
    %1745 = vmax.xlane.f32.xlu0 %v1666
    %v1746 = vpop.xlane.xlu0 %1745
    %1747 = vmax.xlane.f32.xlu0 %v1667
    %v1748 = vpop.xlane.xlu0 %1747
    %1749 = vmax.xlane.f32.xlu0 %v1668
    %v1750 = vpop.xlane.xlu0 %1749
    %1751 = vmax.xlane.f32.xlu0 %v1669
    %v1752 = vpop.xlane.xlu0 %1751
    %1753 = vmax.xlane.f32.xlu0 %v1670
    %v1754 = vpop.xlane.xlu0 %1753
    %1755 = vmax.xlane.f32.xlu0 %v1671
    %v1756 = vpop.xlane.xlu0 %1755
    %1757 = vmax.xlane.f32.xlu0 %v1672
    %v1758 = vpop.xlane.xlu0 %1757
    %1759 = vmax.xlane.f32.xlu0 %v1673
    %v1760 = vpop.xlane.xlu0 %1759
    %1761 = vmax.xlane.f32.xlu0 %v1674
    %v1762 = vpop.xlane.xlu0 %1761
    %1763 = vmax.xlane.f32.xlu0 %v1675
    %v1764 = vpop.xlane.xlu0 %1763
    %1765 = vmax.xlane.f32.xlu0 %v1676
    %v1766 = vpop.xlane.xlu0 %1765
    %1767 = vmax.xlane.f32.xlu0 %v1677
    %v1768 = vpop.xlane.xlu0 %1767
    %1769 = vmax.xlane.f32.xlu0 %v1678
    %v1770 = vpop.xlane.xlu0 %1769
    %1771 = vmax.xlane.f32.xlu0 %v1679
    %v1772 = vpop.xlane.xlu0 %1771
    %1773 = vmax.xlane.f32.xlu0 %v1680
    %v1774 = vpop.xlane.xlu0 %1773
    %1775 = vmax.xlane.f32.xlu0 %v1681
    %v1776 = vpop.xlane.xlu0 %1775
    %1777 = vmax.xlane.f32.xlu0 %v1682
    %v1778 = vpop.xlane.xlu0 %1777
    %vm1779 = vcmp.ge.f32.partialorder %v1635, %v1684
    %vm1780 = vcmp.ge.f32.partialorder %v1636, %v1686
    %vm1781 = vcmp.ge.f32.partialorder %v1637, %v1688
    %vm1782 = vcmp.ge.f32.partialorder %v1638, %v1690
    %vm1783 = vcmp.ge.f32.partialorder %v1639, %v1692
    %vm1784 = vcmp.ge.f32.partialorder %v1640, %v1694
    %vm1785 = vcmp.ge.f32.partialorder %v1641, %v1696
    %vm1786 = vcmp.ge.f32.partialorder %v1642, %v1698
    %vm1787 = vcmp.ge.f32.partialorder %v1643, %v1700
    %vm1788 = vcmp.ge.f32.partialorder %v1644, %v1702
    %vm1789 = vcmp.ge.f32.partialorder %v1645, %v1704
    %vm1790 = vcmp.ge.f32.partialorder %v1646, %v1706
    %vm1791 = vcmp.ge.f32.partialorder %v1647, %v1708
    %vm1792 = vcmp.ge.f32.partialorder %v1648, %v1710
    %vm1793 = vcmp.ge.f32.partialorder %v1649, %v1712
    %vm1794 = vcmp.ge.f32.partialorder %v1650, %v1714
    %vm1795 = vcmp.ge.f32.partialorder %v1651, %v1716
    %vm1796 = vcmp.ge.f32.partialorder %v1652, %v1718
    %vm1797 = vcmp.ge.f32.partialorder %v1653, %v1720
    %vm1798 = vcmp.ge.f32.partialorder %v1654, %v1722
    %vm1799 = vcmp.ge.f32.partialorder %v1655, %v1724
    %vm1800 = vcmp.ge.f32.partialorder %v1656, %v1726
    %vm1801 = vcmp.ge.f32.partialorder %v1657, %v1728
    %vm1802 = vcmp.ge.f32.partialorder %v1658, %v1730
    %vm1803 = vcmp.ge.f32.partialorder %v1659, %v1732
    %vm1804 = vcmp.ge.f32.partialorder %v1660, %v1734
    %vm1805 = vcmp.ge.f32.partialorder %v1661, %v1736
    %vm1806 = vcmp.ge.f32.partialorder %v1662, %v1738
    %vm1807 = vcmp.ge.f32.partialorder %v1663, %v1740
    %vm1808 = vcmp.ge.f32.partialorder %v1664, %v1742
    %vm1809 = vcmp.ge.f32.partialorder %v1665, %v1744
    %vm1810 = vcmp.ge.f32.partialorder %v1666, %v1746
    %vm1811 = vcmp.ge.f32.partialorder %v1667, %v1748
    %vm1812 = vcmp.ge.f32.partialorder %v1668, %v1750
    %vm1813 = vcmp.ge.f32.partialorder %v1669, %v1752
    %vm1814 = vcmp.ge.f32.partialorder %v1670, %v1754
    %vm1815 = vcmp.ge.f32.partialorder %v1671, %v1756
    %vm1816 = vcmp.ge.f32.partialorder %v1672, %v1758
    %vm1817 = vcmp.ge.f32.partialorder %v1673, %v1760
    %vm1818 = vcmp.ge.f32.partialorder %v1674, %v1762
    %vm1819 = vcmp.ge.f32.partialorder %v1675, %v1764
    %vm1820 = vcmp.ge.f32.partialorder %v1676, %v1766
    %vm1821 = vcmp.ge.f32.partialorder %v1677, %v1768
    %vm1822 = vcmp.ge.f32.partialorder %v1678, %v1770
    %vm1823 = vcmp.ge.f32.partialorder %v1679, %v1772
    %vm1824 = vcmp.ge.f32.partialorder %v1680, %v1774
    %vm1825 = vcmp.ge.f32.partialorder %v1681, %v1776
    %vm1826 = vcmp.ge.f32.partialorder %v1682, %v1778
    %v1827 = vsel %vm1779, -inf, %v1635
    %v1828 = vsel %vm1780, -inf, %v1636
    %v1829 = vsel %vm1781, -inf, %v1637
    %v1830 = vsel %vm1782, -inf, %v1638
    %v1831 = vsel %vm1783, -inf, %v1639
    %v1832 = vsel %vm1784, -inf, %v1640
    %v1833 = vsel %vm1785, -inf, %v1641
    %v1834 = vsel %vm1786, -inf, %v1642
    %v1835 = vsel %vm1787, -inf, %v1643
    %v1836 = vsel %vm1788, -inf, %v1644
    %v1837 = vsel %vm1789, -inf, %v1645
    %v1838 = vsel %vm1790, -inf, %v1646
    %v1839 = vsel %vm1791, -inf, %v1647
    %v1840 = vsel %vm1792, -inf, %v1648
    %v1841 = vsel %vm1793, -inf, %v1649
    %v1842 = vsel %vm1794, -inf, %v1650
    %v1843 = vsel %vm1795, -inf, %v1651
    %v1844 = vsel %vm1796, -inf, %v1652
    %v1845 = vsel %vm1797, -inf, %v1653
    %v1846 = vsel %vm1798, -inf, %v1654
    %v1847 = vsel %vm1799, -inf, %v1655
    %v1848 = vsel %vm1800, -inf, %v1656
    %v1849 = vsel %vm1801, -inf, %v1657
    %v1850 = vsel %vm1802, -inf, %v1658
    %v1851 = vsel %vm1803, -inf, %v1659
    %v1852 = vsel %vm1804, -inf, %v1660
    %v1853 = vsel %vm1805, -inf, %v1661
    %v1854 = vsel %vm1806, -inf, %v1662
    %v1855 = vsel %vm1807, -inf, %v1663
    %v1856 = vsel %vm1808, -inf, %v1664
    %v1857 = vsel %vm1809, -inf, %v1665
    %v1858 = vsel %vm1810, -inf, %v1666
    %v1859 = vsel %vm1811, -inf, %v1667
    %v1860 = vsel %vm1812, -inf, %v1668
    %v1861 = vsel %vm1813, -inf, %v1669
    %v1862 = vsel %vm1814, -inf, %v1670
    %v1863 = vsel %vm1815, -inf, %v1671
    %v1864 = vsel %vm1816, -inf, %v1672
    %v1865 = vsel %vm1817, -inf, %v1673
    %v1866 = vsel %vm1818, -inf, %v1674
    %v1867 = vsel %vm1819, -inf, %v1675
    %v1868 = vsel %vm1820, -inf, %v1676
    %v1869 = vsel %vm1821, -inf, %v1677
    %v1870 = vsel %vm1822, -inf, %v1678
    %v1871 = vsel %vm1823, -inf, %v1679
    %v1872 = vsel %vm1824, -inf, %v1680
    %v1873 = vsel %vm1825, -inf, %v1681
    %v1874 = vsel %vm1826, -inf, %v1682
    %1875 = vmax.xlane.f32.xlu0 %v1827
    %v1876 = vpop.xlane.xlu0 %1875
    %1877 = vmax.xlane.f32.xlu0 %v1828
    %v1878 = vpop.xlane.xlu0 %1877
    %1879 = vmax.xlane.f32.xlu0 %v1829
    %v1880 = vpop.xlane.xlu0 %1879
    %1881 = vmax.xlane.f32.xlu0 %v1830
    %v1882 = vpop.xlane.xlu0 %1881
    %1883 = vmax.xlane.f32.xlu0 %v1831
    %v1884 = vpop.xlane.xlu0 %1883
    %1885 = vmax.xlane.f32.xlu0 %v1832
    %v1886 = vpop.xlane.xlu0 %1885
    %1887 = vmax.xlane.f32.xlu0 %v1833
    %v1888 = vpop.xlane.xlu0 %1887
    %1889 = vmax.xlane.f32.xlu0 %v1834
    %v1890 = vpop.xlane.xlu0 %1889
    %1891 = vmax.xlane.f32.xlu0 %v1835
    %v1892 = vpop.xlane.xlu0 %1891
    %1893 = vmax.xlane.f32.xlu0 %v1836
    %v1894 = vpop.xlane.xlu0 %1893
    %1895 = vmax.xlane.f32.xlu0 %v1837
    %v1896 = vpop.xlane.xlu0 %1895
    %1897 = vmax.xlane.f32.xlu0 %v1838
    %v1898 = vpop.xlane.xlu0 %1897
    %1899 = vmax.xlane.f32.xlu0 %v1839
    %v1900 = vpop.xlane.xlu0 %1899
    %1901 = vmax.xlane.f32.xlu0 %v1840
    %v1902 = vpop.xlane.xlu0 %1901
    %1903 = vmax.xlane.f32.xlu0 %v1841
    %v1904 = vpop.xlane.xlu0 %1903
    %1905 = vmax.xlane.f32.xlu0 %v1842
    %v1906 = vpop.xlane.xlu0 %1905
    %1907 = vmax.xlane.f32.xlu0 %v1843
    %v1908 = vpop.xlane.xlu0 %1907
    %1909 = vmax.xlane.f32.xlu0 %v1844
    %v1910 = vpop.xlane.xlu0 %1909
    %1911 = vmax.xlane.f32.xlu0 %v1845
    %v1912 = vpop.xlane.xlu0 %1911
    %1913 = vmax.xlane.f32.xlu0 %v1846
    %v1914 = vpop.xlane.xlu0 %1913
    %1915 = vmax.xlane.f32.xlu0 %v1847
    %v1916 = vpop.xlane.xlu0 %1915
    %1917 = vmax.xlane.f32.xlu0 %v1848
    %v1918 = vpop.xlane.xlu0 %1917
    %1919 = vmax.xlane.f32.xlu0 %v1849
    %v1920 = vpop.xlane.xlu0 %1919
    %1921 = vmax.xlane.f32.xlu0 %v1850
    %v1922 = vpop.xlane.xlu0 %1921
    %1923 = vmax.xlane.f32.xlu0 %v1851
    %v1924 = vpop.xlane.xlu0 %1923
    %1925 = vmax.xlane.f32.xlu0 %v1852
    %v1926 = vpop.xlane.xlu0 %1925
    %1927 = vmax.xlane.f32.xlu0 %v1853
    %v1928 = vpop.xlane.xlu0 %1927
    %1929 = vmax.xlane.f32.xlu0 %v1854
    %v1930 = vpop.xlane.xlu0 %1929
    %1931 = vmax.xlane.f32.xlu0 %v1855
    %v1932 = vpop.xlane.xlu0 %1931
    %1933 = vmax.xlane.f32.xlu0 %v1856
    %v1934 = vpop.xlane.xlu0 %1933
    %1935 = vmax.xlane.f32.xlu0 %v1857
    %v1936 = vpop.xlane.xlu0 %1935
    %1937 = vmax.xlane.f32.xlu0 %v1858
    %v1938 = vpop.xlane.xlu0 %1937
    %1939 = vmax.xlane.f32.xlu0 %v1859
    %v1940 = vpop.xlane.xlu0 %1939
    %1941 = vmax.xlane.f32.xlu0 %v1860
    %v1942 = vpop.xlane.xlu0 %1941
    %1943 = vmax.xlane.f32.xlu0 %v1861
    %v1944 = vpop.xlane.xlu0 %1943
    %1945 = vmax.xlane.f32.xlu0 %v1862
    %v1946 = vpop.xlane.xlu0 %1945
    %1947 = vmax.xlane.f32.xlu0 %v1863
    %v1948 = vpop.xlane.xlu0 %1947
    %1949 = vmax.xlane.f32.xlu0 %v1864
    %v1950 = vpop.xlane.xlu0 %1949
    %1951 = vmax.xlane.f32.xlu0 %v1865
    %v1952 = vpop.xlane.xlu0 %1951
    %1953 = vmax.xlane.f32.xlu0 %v1866
    %v1954 = vpop.xlane.xlu0 %1953
    %1955 = vmax.xlane.f32.xlu0 %v1867
    %v1956 = vpop.xlane.xlu0 %1955
    %1957 = vmax.xlane.f32.xlu0 %v1868
    %v1958 = vpop.xlane.xlu0 %1957
    %1959 = vmax.xlane.f32.xlu0 %v1869
    %v1960 = vpop.xlane.xlu0 %1959
    %1961 = vmax.xlane.f32.xlu0 %v1870
    %v1962 = vpop.xlane.xlu0 %1961
    %1963 = vmax.xlane.f32.xlu0 %v1871
    %v1964 = vpop.xlane.xlu0 %1963
    %1965 = vmax.xlane.f32.xlu0 %v1872
    %v1966 = vpop.xlane.xlu0 %1965
    %1967 = vmax.xlane.f32.xlu0 %v1873
    %v1968 = vpop.xlane.xlu0 %1967
    %1969 = vmax.xlane.f32.xlu0 %v1874
    %v1970 = vpop.xlane.xlu0 %1969
    %vm1971 = vcmp.ge.f32.partialorder %v1827, %v1876
    %vm1972 = vcmp.ge.f32.partialorder %v1828, %v1878
    %vm1973 = vcmp.ge.f32.partialorder %v1829, %v1880
    %vm1974 = vcmp.ge.f32.partialorder %v1830, %v1882
    %vm1975 = vcmp.ge.f32.partialorder %v1831, %v1884
    %vm1976 = vcmp.ge.f32.partialorder %v1832, %v1886
    %vm1977 = vcmp.ge.f32.partialorder %v1833, %v1888
    %vm1978 = vcmp.ge.f32.partialorder %v1834, %v1890
    %vm1979 = vcmp.ge.f32.partialorder %v1835, %v1892
    %vm1980 = vcmp.ge.f32.partialorder %v1836, %v1894
    %vm1981 = vcmp.ge.f32.partialorder %v1837, %v1896
    %vm1982 = vcmp.ge.f32.partialorder %v1838, %v1898
    %vm1983 = vcmp.ge.f32.partialorder %v1839, %v1900
    %vm1984 = vcmp.ge.f32.partialorder %v1840, %v1902
    %vm1985 = vcmp.ge.f32.partialorder %v1841, %v1904
    %vm1986 = vcmp.ge.f32.partialorder %v1842, %v1906
    %vm1987 = vcmp.ge.f32.partialorder %v1843, %v1908
    %vm1988 = vcmp.ge.f32.partialorder %v1844, %v1910
    %vm1989 = vcmp.ge.f32.partialorder %v1845, %v1912
    %vm1990 = vcmp.ge.f32.partialorder %v1846, %v1914
    %vm1991 = vcmp.ge.f32.partialorder %v1847, %v1916
    %vm1992 = vcmp.ge.f32.partialorder %v1848, %v1918
    %vm1993 = vcmp.ge.f32.partialorder %v1849, %v1920
    %vm1994 = vcmp.ge.f32.partialorder %v1850, %v1922
    %vm1995 = vcmp.ge.f32.partialorder %v1851, %v1924
    %vm1996 = vcmp.ge.f32.partialorder %v1852, %v1926
    %vm1997 = vcmp.ge.f32.partialorder %v1853, %v1928
    %vm1998 = vcmp.ge.f32.partialorder %v1854, %v1930
    %vm1999 = vcmp.ge.f32.partialorder %v1855, %v1932
    %vm2000 = vcmp.ge.f32.partialorder %v1856, %v1934
    %vm2001 = vcmp.ge.f32.partialorder %v1857, %v1936
    %vm2002 = vcmp.ge.f32.partialorder %v1858, %v1938
    %vm2003 = vcmp.ge.f32.partialorder %v1859, %v1940
    %vm2004 = vcmp.ge.f32.partialorder %v1860, %v1942
    %vm2005 = vcmp.ge.f32.partialorder %v1861, %v1944
    %vm2006 = vcmp.ge.f32.partialorder %v1862, %v1946
    %vm2007 = vcmp.ge.f32.partialorder %v1863, %v1948
    %vm2008 = vcmp.ge.f32.partialorder %v1864, %v1950
    %vm2009 = vcmp.ge.f32.partialorder %v1865, %v1952
    %vm2010 = vcmp.ge.f32.partialorder %v1866, %v1954
    %vm2011 = vcmp.ge.f32.partialorder %v1867, %v1956
    %vm2012 = vcmp.ge.f32.partialorder %v1868, %v1958
    %vm2013 = vcmp.ge.f32.partialorder %v1869, %v1960
    %vm2014 = vcmp.ge.f32.partialorder %v1870, %v1962
    %vm2015 = vcmp.ge.f32.partialorder %v1871, %v1964
    %vm2016 = vcmp.ge.f32.partialorder %v1872, %v1966
    %vm2017 = vcmp.ge.f32.partialorder %v1873, %v1968
    %vm2018 = vcmp.ge.f32.partialorder %v1874, %v1970
    %v2019 = vsel %vm1971, -inf, %v1827
    %v2020 = vsel %vm1972, -inf, %v1828
    %v2021 = vsel %vm1973, -inf, %v1829
    %v2022 = vsel %vm1974, -inf, %v1830
    %v2023 = vsel %vm1975, -inf, %v1831
    %v2024 = vsel %vm1976, -inf, %v1832
    %v2025 = vsel %vm1977, -inf, %v1833
    %v2026 = vsel %vm1978, -inf, %v1834
    %v2027 = vsel %vm1979, -inf, %v1835
    %v2028 = vsel %vm1980, -inf, %v1836
    %v2029 = vsel %vm1981, -inf, %v1837
    %v2030 = vsel %vm1982, -inf, %v1838
    %v2031 = vsel %vm1983, -inf, %v1839
    %v2032 = vsel %vm1984, -inf, %v1840
    %v2033 = vsel %vm1985, -inf, %v1841
    %v2034 = vsel %vm1986, -inf, %v1842
    %v2035 = vsel %vm1987, -inf, %v1843
    %v2036 = vsel %vm1988, -inf, %v1844
    %v2037 = vsel %vm1989, -inf, %v1845
    %v2038 = vsel %vm1990, -inf, %v1846
    %v2039 = vsel %vm1991, -inf, %v1847
    %v2040 = vsel %vm1992, -inf, %v1848
    %v2041 = vsel %vm1993, -inf, %v1849
    %v2042 = vsel %vm1994, -inf, %v1850
    %v2043 = vsel %vm1995, -inf, %v1851
    %v2044 = vsel %vm1996, -inf, %v1852
    %v2045 = vsel %vm1997, -inf, %v1853
    %v2046 = vsel %vm1998, -inf, %v1854
    %v2047 = vsel %vm1999, -inf, %v1855
    %v2048 = vsel %vm2000, -inf, %v1856
    %v2049 = vsel %vm2001, -inf, %v1857
    %v2050 = vsel %vm2002, -inf, %v1858
    %v2051 = vsel %vm2003, -inf, %v1859
    %v2052 = vsel %vm2004, -inf, %v1860
    %v2053 = vsel %vm2005, -inf, %v1861
    %v2054 = vsel %vm2006, -inf, %v1862
    %v2055 = vsel %vm2007, -inf, %v1863
    %v2056 = vsel %vm2008, -inf, %v1864
    %v2057 = vsel %vm2009, -inf, %v1865
    %v2058 = vsel %vm2010, -inf, %v1866
    %v2059 = vsel %vm2011, -inf, %v1867
    %v2060 = vsel %vm2012, -inf, %v1868
    %v2061 = vsel %vm2013, -inf, %v1869
    %v2062 = vsel %vm2014, -inf, %v1870
    %v2063 = vsel %vm2015, -inf, %v1871
    %v2064 = vsel %vm2016, -inf, %v1872
    %v2065 = vsel %vm2017, -inf, %v1873
    %v2066 = vsel %vm2018, -inf, %v1874
    %2067 = vmax.xlane.f32.xlu0 %v2019
    %v2068 = vpop.xlane.xlu0 %2067
    %2069 = vmax.xlane.f32.xlu0 %v2020
    %v2070 = vpop.xlane.xlu0 %2069
    %2071 = vmax.xlane.f32.xlu0 %v2021
    %v2072 = vpop.xlane.xlu0 %2071
    %2073 = vmax.xlane.f32.xlu0 %v2022
    %v2074 = vpop.xlane.xlu0 %2073
    %2075 = vmax.xlane.f32.xlu0 %v2023
    %v2076 = vpop.xlane.xlu0 %2075
    %2077 = vmax.xlane.f32.xlu0 %v2024
    %v2078 = vpop.xlane.xlu0 %2077
    %2079 = vmax.xlane.f32.xlu0 %v2025
    %v2080 = vpop.xlane.xlu0 %2079
    %2081 = vmax.xlane.f32.xlu0 %v2026
    %v2082 = vpop.xlane.xlu0 %2081
    %2083 = vmax.xlane.f32.xlu0 %v2027
    %v2084 = vpop.xlane.xlu0 %2083
    %2085 = vmax.xlane.f32.xlu0 %v2028
    %v2086 = vpop.xlane.xlu0 %2085
    %2087 = vmax.xlane.f32.xlu0 %v2029
    %v2088 = vpop.xlane.xlu0 %2087
    %2089 = vmax.xlane.f32.xlu0 %v2030
    %v2090 = vpop.xlane.xlu0 %2089
    %2091 = vmax.xlane.f32.xlu0 %v2031
    %v2092 = vpop.xlane.xlu0 %2091
    %2093 = vmax.xlane.f32.xlu0 %v2032
    %v2094 = vpop.xlane.xlu0 %2093
    %2095 = vmax.xlane.f32.xlu0 %v2033
    %v2096 = vpop.xlane.xlu0 %2095
    %2097 = vmax.xlane.f32.xlu0 %v2034
    %v2098 = vpop.xlane.xlu0 %2097
    %2099 = vmax.xlane.f32.xlu0 %v2035
    %v2100 = vpop.xlane.xlu0 %2099
    %2101 = vmax.xlane.f32.xlu0 %v2036
    %v2102 = vpop.xlane.xlu0 %2101
    %2103 = vmax.xlane.f32.xlu0 %v2037
    %v2104 = vpop.xlane.xlu0 %2103
    %2105 = vmax.xlane.f32.xlu0 %v2038
    %v2106 = vpop.xlane.xlu0 %2105
    %2107 = vmax.xlane.f32.xlu0 %v2039
    %v2108 = vpop.xlane.xlu0 %2107
    %2109 = vmax.xlane.f32.xlu0 %v2040
    %v2110 = vpop.xlane.xlu0 %2109
    %2111 = vmax.xlane.f32.xlu0 %v2041
    %v2112 = vpop.xlane.xlu0 %2111
    %2113 = vmax.xlane.f32.xlu0 %v2042
    %v2114 = vpop.xlane.xlu0 %2113
    %2115 = vmax.xlane.f32.xlu0 %v2043
    %v2116 = vpop.xlane.xlu0 %2115
    %2117 = vmax.xlane.f32.xlu0 %v2044
    %v2118 = vpop.xlane.xlu0 %2117
    %2119 = vmax.xlane.f32.xlu0 %v2045
    %v2120 = vpop.xlane.xlu0 %2119
    %2121 = vmax.xlane.f32.xlu0 %v2046
    %v2122 = vpop.xlane.xlu0 %2121
    %2123 = vmax.xlane.f32.xlu0 %v2047
    %v2124 = vpop.xlane.xlu0 %2123
    %2125 = vmax.xlane.f32.xlu0 %v2048
    %v2126 = vpop.xlane.xlu0 %2125
    %2127 = vmax.xlane.f32.xlu0 %v2049
    %v2128 = vpop.xlane.xlu0 %2127
    %2129 = vmax.xlane.f32.xlu0 %v2050
    %v2130 = vpop.xlane.xlu0 %2129
    %2131 = vmax.xlane.f32.xlu0 %v2051
    %v2132 = vpop.xlane.xlu0 %2131
    %2133 = vmax.xlane.f32.xlu0 %v2052
    %v2134 = vpop.xlane.xlu0 %2133
    %2135 = vmax.xlane.f32.xlu0 %v2053
    %v2136 = vpop.xlane.xlu0 %2135
    %2137 = vmax.xlane.f32.xlu0 %v2054
    %v2138 = vpop.xlane.xlu0 %2137
    %2139 = vmax.xlane.f32.xlu0 %v2055
    %v2140 = vpop.xlane.xlu0 %2139
    %2141 = vmax.xlane.f32.xlu0 %v2056
    %v2142 = vpop.xlane.xlu0 %2141
    %2143 = vmax.xlane.f32.xlu0 %v2057
    %v2144 = vpop.xlane.xlu0 %2143
    %2145 = vmax.xlane.f32.xlu0 %v2058
    %v2146 = vpop.xlane.xlu0 %2145
    %2147 = vmax.xlane.f32.xlu0 %v2059
    %v2148 = vpop.xlane.xlu0 %2147
    %2149 = vmax.xlane.f32.xlu0 %v2060
    %v2150 = vpop.xlane.xlu0 %2149
    %2151 = vmax.xlane.f32.xlu0 %v2061
    %v2152 = vpop.xlane.xlu0 %2151
    %2153 = vmax.xlane.f32.xlu0 %v2062
    %v2154 = vpop.xlane.xlu0 %2153
    %2155 = vmax.xlane.f32.xlu0 %v2063
    %v2156 = vpop.xlane.xlu0 %2155
    %2157 = vmax.xlane.f32.xlu0 %v2064
    %v2158 = vpop.xlane.xlu0 %2157
    %2159 = vmax.xlane.f32.xlu0 %v2065
    %v2160 = vpop.xlane.xlu0 %2159
    %2161 = vmax.xlane.f32.xlu0 %v2066
    %v2162 = vpop.xlane.xlu0 %2161
    %vm2163 = vcmp.ge.f32.partialorder %v2019, %v2068
    %vm2164 = vcmp.ge.f32.partialorder %v2020, %v2070
    %vm2165 = vcmp.ge.f32.partialorder %v2021, %v2072
    %vm2166 = vcmp.ge.f32.partialorder %v2022, %v2074
    %vm2167 = vcmp.ge.f32.partialorder %v2023, %v2076
    %vm2168 = vcmp.ge.f32.partialorder %v2024, %v2078
    %vm2169 = vcmp.ge.f32.partialorder %v2025, %v2080
    %vm2170 = vcmp.ge.f32.partialorder %v2026, %v2082
    %vm2171 = vcmp.ge.f32.partialorder %v2027, %v2084
    %vm2172 = vcmp.ge.f32.partialorder %v2028, %v2086
    %vm2173 = vcmp.ge.f32.partialorder %v2029, %v2088
    %vm2174 = vcmp.ge.f32.partialorder %v2030, %v2090
    %vm2175 = vcmp.ge.f32.partialorder %v2031, %v2092
    %vm2176 = vcmp.ge.f32.partialorder %v2032, %v2094
    %vm2177 = vcmp.ge.f32.partialorder %v2033, %v2096
    %vm2178 = vcmp.ge.f32.partialorder %v2034, %v2098
    %vm2179 = vcmp.ge.f32.partialorder %v2035, %v2100
    %vm2180 = vcmp.ge.f32.partialorder %v2036, %v2102
    %vm2181 = vcmp.ge.f32.partialorder %v2037, %v2104
    %vm2182 = vcmp.ge.f32.partialorder %v2038, %v2106
    %vm2183 = vcmp.ge.f32.partialorder %v2039, %v2108
    %vm2184 = vcmp.ge.f32.partialorder %v2040, %v2110
    %vm2185 = vcmp.ge.f32.partialorder %v2041, %v2112
    %vm2186 = vcmp.ge.f32.partialorder %v2042, %v2114
    %vm2187 = vcmp.ge.f32.partialorder %v2043, %v2116
    %vm2188 = vcmp.ge.f32.partialorder %v2044, %v2118
    %vm2189 = vcmp.ge.f32.partialorder %v2045, %v2120
    %vm2190 = vcmp.ge.f32.partialorder %v2046, %v2122
    %vm2191 = vcmp.ge.f32.partialorder %v2047, %v2124
    %vm2192 = vcmp.ge.f32.partialorder %v2048, %v2126
    %vm2193 = vcmp.ge.f32.partialorder %v2049, %v2128
    %vm2194 = vcmp.ge.f32.partialorder %v2050, %v2130
    %vm2195 = vcmp.ge.f32.partialorder %v2051, %v2132
    %vm2196 = vcmp.ge.f32.partialorder %v2052, %v2134
    %vm2197 = vcmp.ge.f32.partialorder %v2053, %v2136
    %vm2198 = vcmp.ge.f32.partialorder %v2054, %v2138
    %vm2199 = vcmp.ge.f32.partialorder %v2055, %v2140
    %vm2200 = vcmp.ge.f32.partialorder %v2056, %v2142
    %vm2201 = vcmp.ge.f32.partialorder %v2057, %v2144
    %vm2202 = vcmp.ge.f32.partialorder %v2058, %v2146
    %vm2203 = vcmp.ge.f32.partialorder %v2059, %v2148
    %vm2204 = vcmp.ge.f32.partialorder %v2060, %v2150
    %vm2205 = vcmp.ge.f32.partialorder %v2061, %v2152
    %vm2206 = vcmp.ge.f32.partialorder %v2062, %v2154
    %vm2207 = vcmp.ge.f32.partialorder %v2063, %v2156
    %vm2208 = vcmp.ge.f32.partialorder %v2064, %v2158
    %vm2209 = vcmp.ge.f32.partialorder %v2065, %v2160
    %vm2210 = vcmp.ge.f32.partialorder %v2066, %v2162
    %v2211 = vsel %vm2163, -inf, %v2019
    %v2212 = vsel %vm2164, -inf, %v2020
    %v2213 = vsel %vm2165, -inf, %v2021
    %v2214 = vsel %vm2166, -inf, %v2022
    %v2215 = vsel %vm2167, -inf, %v2023
    %v2216 = vsel %vm2168, -inf, %v2024
    %v2217 = vsel %vm2169, -inf, %v2025
    %v2218 = vsel %vm2170, -inf, %v2026
    %v2219 = vsel %vm2171, -inf, %v2027
    %v2220 = vsel %vm2172, -inf, %v2028
    %v2221 = vsel %vm2173, -inf, %v2029
    %v2222 = vsel %vm2174, -inf, %v2030
    %v2223 = vsel %vm2175, -inf, %v2031
    %v2224 = vsel %vm2176, -inf, %v2032
    %v2225 = vsel %vm2177, -inf, %v2033
    %v2226 = vsel %vm2178, -inf, %v2034
    %v2227 = vsel %vm2179, -inf, %v2035
    %v2228 = vsel %vm2180, -inf, %v2036
    %v2229 = vsel %vm2181, -inf, %v2037
    %v2230 = vsel %vm2182, -inf, %v2038
    %v2231 = vsel %vm2183, -inf, %v2039
    %v2232 = vsel %vm2184, -inf, %v2040
    %v2233 = vsel %vm2185, -inf, %v2041
    %v2234 = vsel %vm2186, -inf, %v2042
    %v2235 = vsel %vm2187, -inf, %v2043
    %v2236 = vsel %vm2188, -inf, %v2044
    %v2237 = vsel %vm2189, -inf, %v2045
    %v2238 = vsel %vm2190, -inf, %v2046
    %v2239 = vsel %vm2191, -inf, %v2047
    %v2240 = vsel %vm2192, -inf, %v2048
    %v2241 = vsel %vm2193, -inf, %v2049
    %v2242 = vsel %vm2194, -inf, %v2050
    %v2243 = vsel %vm2195, -inf, %v2051
    %v2244 = vsel %vm2196, -inf, %v2052
    %v2245 = vsel %vm2197, -inf, %v2053
    %v2246 = vsel %vm2198, -inf, %v2054
    %v2247 = vsel %vm2199, -inf, %v2055
    %v2248 = vsel %vm2200, -inf, %v2056
    %v2249 = vsel %vm2201, -inf, %v2057
    %v2250 = vsel %vm2202, -inf, %v2058
    %v2251 = vsel %vm2203, -inf, %v2059
    %v2252 = vsel %vm2204, -inf, %v2060
    %v2253 = vsel %vm2205, -inf, %v2061
    %v2254 = vsel %vm2206, -inf, %v2062
    %v2255 = vsel %vm2207, -inf, %v2063
    %v2256 = vsel %vm2208, -inf, %v2064
    %v2257 = vsel %vm2209, -inf, %v2065
    %v2258 = vsel %vm2210, -inf, %v2066
    %2259 = vmax.xlane.f32.xlu0 %v2211
    %v2260 = vpop.xlane.xlu0 %2259
    %2261 = vmax.xlane.f32.xlu0 %v2212
    %v2262 = vpop.xlane.xlu0 %2261
    %2263 = vmax.xlane.f32.xlu0 %v2213
    %v2264 = vpop.xlane.xlu0 %2263
    %2265 = vmax.xlane.f32.xlu0 %v2214
    %v2266 = vpop.xlane.xlu0 %2265
    %2267 = vmax.xlane.f32.xlu0 %v2215
    %v2268 = vpop.xlane.xlu0 %2267
    %2269 = vmax.xlane.f32.xlu0 %v2216
    %v2270 = vpop.xlane.xlu0 %2269
    %2271 = vmax.xlane.f32.xlu0 %v2217
    %v2272 = vpop.xlane.xlu0 %2271
    %2273 = vmax.xlane.f32.xlu0 %v2218
    %v2274 = vpop.xlane.xlu0 %2273
    %2275 = vmax.xlane.f32.xlu0 %v2219
    %v2276 = vpop.xlane.xlu0 %2275
    %2277 = vmax.xlane.f32.xlu0 %v2220
    %v2278 = vpop.xlane.xlu0 %2277
    %2279 = vmax.xlane.f32.xlu0 %v2221
    %v2280 = vpop.xlane.xlu0 %2279
    %2281 = vmax.xlane.f32.xlu0 %v2222
    %v2282 = vpop.xlane.xlu0 %2281
    %2283 = vmax.xlane.f32.xlu0 %v2223
    %v2284 = vpop.xlane.xlu0 %2283
    %2285 = vmax.xlane.f32.xlu0 %v2224
    %v2286 = vpop.xlane.xlu0 %2285
    %2287 = vmax.xlane.f32.xlu0 %v2225
    %v2288 = vpop.xlane.xlu0 %2287
    %2289 = vmax.xlane.f32.xlu0 %v2226
    %v2290 = vpop.xlane.xlu0 %2289
    %2291 = vmax.xlane.f32.xlu0 %v2227
    %v2292 = vpop.xlane.xlu0 %2291
    %2293 = vmax.xlane.f32.xlu0 %v2228
    %v2294 = vpop.xlane.xlu0 %2293
    %2295 = vmax.xlane.f32.xlu0 %v2229
    %v2296 = vpop.xlane.xlu0 %2295
    %2297 = vmax.xlane.f32.xlu0 %v2230
    %v2298 = vpop.xlane.xlu0 %2297
    %2299 = vmax.xlane.f32.xlu0 %v2231
    %v2300 = vpop.xlane.xlu0 %2299
    %2301 = vmax.xlane.f32.xlu0 %v2232
    %v2302 = vpop.xlane.xlu0 %2301
    %2303 = vmax.xlane.f32.xlu0 %v2233
    %v2304 = vpop.xlane.xlu0 %2303
    %2305 = vmax.xlane.f32.xlu0 %v2234
    %v2306 = vpop.xlane.xlu0 %2305
    %2307 = vmax.xlane.f32.xlu0 %v2235
    %v2308 = vpop.xlane.xlu0 %2307
    %2309 = vmax.xlane.f32.xlu0 %v2236
    %v2310 = vpop.xlane.xlu0 %2309
    %2311 = vmax.xlane.f32.xlu0 %v2237
    %v2312 = vpop.xlane.xlu0 %2311
    %2313 = vmax.xlane.f32.xlu0 %v2238
    %v2314 = vpop.xlane.xlu0 %2313
    %2315 = vmax.xlane.f32.xlu0 %v2239
    %v2316 = vpop.xlane.xlu0 %2315
    %2317 = vmax.xlane.f32.xlu0 %v2240
    %v2318 = vpop.xlane.xlu0 %2317
    %2319 = vmax.xlane.f32.xlu0 %v2241
    %v2320 = vpop.xlane.xlu0 %2319
    %2321 = vmax.xlane.f32.xlu0 %v2242
    %v2322 = vpop.xlane.xlu0 %2321
    %2323 = vmax.xlane.f32.xlu0 %v2243
    %v2324 = vpop.xlane.xlu0 %2323
    %2325 = vmax.xlane.f32.xlu0 %v2244
    %v2326 = vpop.xlane.xlu0 %2325
    %2327 = vmax.xlane.f32.xlu0 %v2245
    %v2328 = vpop.xlane.xlu0 %2327
    %2329 = vmax.xlane.f32.xlu0 %v2246
    %v2330 = vpop.xlane.xlu0 %2329
    %2331 = vmax.xlane.f32.xlu0 %v2247
    %v2332 = vpop.xlane.xlu0 %2331
    %2333 = vmax.xlane.f32.xlu0 %v2248
    %v2334 = vpop.xlane.xlu0 %2333
    %2335 = vmax.xlane.f32.xlu0 %v2249
    %v2336 = vpop.xlane.xlu0 %2335
    %2337 = vmax.xlane.f32.xlu0 %v2250
    %v2338 = vpop.xlane.xlu0 %2337
    %2339 = vmax.xlane.f32.xlu0 %v2251
    %v2340 = vpop.xlane.xlu0 %2339
    %2341 = vmax.xlane.f32.xlu0 %v2252
    %v2342 = vpop.xlane.xlu0 %2341
    %2343 = vmax.xlane.f32.xlu0 %v2253
    %v2344 = vpop.xlane.xlu0 %2343
    %2345 = vmax.xlane.f32.xlu0 %v2254
    %v2346 = vpop.xlane.xlu0 %2345
    %2347 = vmax.xlane.f32.xlu0 %v2255
    %v2348 = vpop.xlane.xlu0 %2347
    %2349 = vmax.xlane.f32.xlu0 %v2256
    %v2350 = vpop.xlane.xlu0 %2349
    %2351 = vmax.xlane.f32.xlu0 %v2257
    %v2352 = vpop.xlane.xlu0 %2351
    %2353 = vmax.xlane.f32.xlu0 %v2258
    %v2354 = vpop.xlane.xlu0 %2353
    %vm2355 = vcmp.ge.f32.partialorder %v629, %v2260
    %vm2356 = vcmp.ge.f32.partialorder %v634, %v2262
    %vm2357 = vcmp.ge.f32.partialorder %v639, %v2264
    %vm2358 = vcmp.ge.f32.partialorder %v644, %v2266
    %vm2359 = vcmp.ge.f32.partialorder %v649, %v2268
    %vm2360 = vcmp.ge.f32.partialorder %v654, %v2270
    %vm2361 = vcmp.ge.f32.partialorder %v659, %v2272
    %vm2362 = vcmp.ge.f32.partialorder %v664, %v2274
    %vm2363 = vcmp.ge.f32.partialorder %v669, %v2276
    %vm2364 = vcmp.ge.f32.partialorder %v674, %v2278
    %vm2365 = vcmp.ge.f32.partialorder %v679, %v2280
    %vm2366 = vcmp.ge.f32.partialorder %v684, %v2282
    %vm2367 = vcmp.ge.f32.partialorder %v689, %v2284
    %vm2368 = vcmp.ge.f32.partialorder %v694, %v2286
    %vm2369 = vcmp.ge.f32.partialorder %v699, %v2288
    %vm2370 = vcmp.ge.f32.partialorder %v704, %v2290
    %vm2371 = vcmp.ge.f32.partialorder %v709, %v2292
    %vm2372 = vcmp.ge.f32.partialorder %v714, %v2294
    %vm2373 = vcmp.ge.f32.partialorder %v719, %v2296
    %vm2374 = vcmp.ge.f32.partialorder %v724, %v2298
    %vm2375 = vcmp.ge.f32.partialorder %v729, %v2300
    %vm2376 = vcmp.ge.f32.partialorder %v734, %v2302
    %vm2377 = vcmp.ge.f32.partialorder %v739, %v2304
    %vm2378 = vcmp.ge.f32.partialorder %v744, %v2306
    %vm2379 = vcmp.ge.f32.partialorder %v749, %v2308
    %vm2380 = vcmp.ge.f32.partialorder %v754, %v2310
    %vm2381 = vcmp.ge.f32.partialorder %v759, %v2312
    %vm2382 = vcmp.ge.f32.partialorder %v764, %v2314
    %vm2383 = vcmp.ge.f32.partialorder %v769, %v2316
    %vm2384 = vcmp.ge.f32.partialorder %v774, %v2318
    %vm2385 = vcmp.ge.f32.partialorder %v779, %v2320
    %vm2386 = vcmp.ge.f32.partialorder %v784, %v2322
    %vm2387 = vcmp.ge.f32.partialorder %v789, %v2324
    %vm2388 = vcmp.ge.f32.partialorder %v794, %v2326
    %vm2389 = vcmp.ge.f32.partialorder %v799, %v2328
    %vm2390 = vcmp.ge.f32.partialorder %v804, %v2330
    %vm2391 = vcmp.ge.f32.partialorder %v809, %v2332
    %vm2392 = vcmp.ge.f32.partialorder %v814, %v2334
    %vm2393 = vcmp.ge.f32.partialorder %v819, %v2336
    %vm2394 = vcmp.ge.f32.partialorder %v824, %v2338
    %vm2395 = vcmp.ge.f32.partialorder %v829, %v2340
    %vm2396 = vcmp.ge.f32.partialorder %v834, %v2342
    %vm2397 = vcmp.ge.f32.partialorder %v839, %v2344
    %vm2398 = vcmp.ge.f32.partialorder %v844, %v2346
    %vm2399 = vcmp.ge.f32.partialorder %v849, %v2348
    %vm2400 = vcmp.ge.f32.partialorder %v854, %v2350
    %vm2401 = vcmp.ge.f32.partialorder %v859, %v2352
    %vm2402 = vcmp.ge.f32.partialorder %v864, %v2354
    %vm2403 = vmand %vm524, %vm2355
    %vm2404 = vmand %vm524, %vm2356
    %vm2405 = vmand %vm524, %vm2357
    %vm2406 = vmand %vm524, %vm2358
    %vm2407 = vmand %vm524, %vm2359
    %vm2408 = vmand %vm524, %vm2360
    %vm2409 = vmand %vm524, %vm2361
    %vm2410 = vmand %vm524, %vm2362
    %vm2411 = vmand %vm524, %vm2363
    %vm2412 = vmand %vm524, %vm2364
    %vm2413 = vmand %vm524, %vm2365
    %vm2414 = vmand %vm524, %vm2366
    %vm2415 = vmand %vm524, %vm2367
    %vm2416 = vmand %vm524, %vm2368
    %vm2417 = vmand %vm524, %vm2369
    %vm2418 = vmand %vm524, %vm2370
    %vm2419 = vmand %vm524, %vm2371
    %vm2420 = vmand %vm524, %vm2372
    %vm2421 = vmand %vm524, %vm2373
    %vm2422 = vmand %vm524, %vm2374
    %vm2423 = vmand %vm524, %vm2375
    %vm2424 = vmand %vm524, %vm2376
    %vm2425 = vmand %vm524, %vm2377
    %vm2426 = vmand %vm524, %vm2378
    %vm2427 = vmand %vm524, %vm2379
    %vm2428 = vmand %vm524, %vm2380
    %vm2429 = vmand %vm524, %vm2381
    %vm2430 = vmand %vm524, %vm2382
    %vm2431 = vmand %vm524, %vm2383
    %vm2432 = vmand %vm524, %vm2384
    %vm2433 = vmand %vm524, %vm2385
    %vm2434 = vmand %vm524, %vm2386
    %vm2435 = vmand %vm524, %vm2387
    %vm2436 = vmand %vm524, %vm2388
    %vm2437 = vmand %vm524, %vm2389
    %vm2438 = vmand %vm524, %vm2390
    %vm2439 = vmand %vm524, %vm2391
    %vm2440 = vmand %vm524, %vm2392
    %vm2441 = vmand %vm524, %vm2393
    %vm2442 = vmand %vm524, %vm2394
    %vm2443 = vmand %vm524, %vm2395
    %vm2444 = vmand %vm524, %vm2396
    %vm2445 = vmand %vm524, %vm2397
    %vm2446 = vmand %vm524, %vm2398
    %vm2447 = vmand %vm524, %vm2399
    %vm2448 = vmand %vm524, %vm2400
    %vm2449 = vmand %vm524, %vm2401
    %vm2450 = vmand %vm524, %vm2402
    %v2451 = vsel %vm2403, %v629, 0.0
    %v2452 = vsel %vm2404, %v634, 0.0
    %v2453 = vsel %vm2405, %v639, 0.0
    %v2454 = vsel %vm2406, %v644, 0.0
    %v2455 = vsel %vm2407, %v649, 0.0
    %v2456 = vsel %vm2408, %v654, 0.0
    %v2457 = vsel %vm2409, %v659, 0.0
    %v2458 = vsel %vm2410, %v664, 0.0
    %v2459 = vsel %vm2411, %v669, 0.0
    %v2460 = vsel %vm2412, %v674, 0.0
    %v2461 = vsel %vm2413, %v679, 0.0
    %v2462 = vsel %vm2414, %v684, 0.0
    %v2463 = vsel %vm2415, %v689, 0.0
    %v2464 = vsel %vm2416, %v694, 0.0
    %v2465 = vsel %vm2417, %v699, 0.0
    %v2466 = vsel %vm2418, %v704, 0.0
    %v2467 = vsel %vm2419, %v709, 0.0
    %v2468 = vsel %vm2420, %v714, 0.0
    %v2469 = vsel %vm2421, %v719, 0.0
    %v2470 = vsel %vm2422, %v724, 0.0
    %v2471 = vsel %vm2423, %v729, 0.0
    %v2472 = vsel %vm2424, %v734, 0.0
    %v2473 = vsel %vm2425, %v739, 0.0
    %v2474 = vsel %vm2426, %v744, 0.0
    %v2475 = vsel %vm2427, %v749, 0.0
    %v2476 = vsel %vm2428, %v754, 0.0
    %v2477 = vsel %vm2429, %v759, 0.0
    %v2478 = vsel %vm2430, %v764, 0.0
    %v2479 = vsel %vm2431, %v769, 0.0
    %v2480 = vsel %vm2432, %v774, 0.0
    %v2481 = vsel %vm2433, %v779, 0.0
    %v2482 = vsel %vm2434, %v784, 0.0
    %v2483 = vsel %vm2435, %v789, 0.0
    %v2484 = vsel %vm2436, %v794, 0.0
    %v2485 = vsel %vm2437, %v799, 0.0
    %v2486 = vsel %vm2438, %v804, 0.0
    %v2487 = vsel %vm2439, %v809, 0.0
    %v2488 = vsel %vm2440, %v814, 0.0
    %v2489 = vsel %vm2441, %v819, 0.0
    %v2490 = vsel %vm2442, %v824, 0.0
    %v2491 = vsel %vm2443, %v829, 0.0
    %v2492 = vsel %vm2444, %v834, 0.0
    %v2493 = vsel %vm2445, %v839, 0.0
    %v2494 = vsel %vm2446, %v844, 0.0
    %v2495 = vsel %vm2447, %v849, 0.0
    %v2496 = vsel %vm2448, %v854, 0.0
    %v2497 = vsel %vm2449, %v859, 0.0
    %v2498 = vsel %vm2450, %v864, 0.0
    %v2499 = vpack.c.bf16 %v2452, %v2451
    %v2500 = vpack.c.bf16 %v2454, %v2453
    %v2501 = vpack.c.bf16 %v2456, %v2455
    %v2502 = vpack.c.bf16 %v2458, %v2457
    %v2503 = vpack.c.bf16 %v2460, %v2459
    %v2504 = vpack.c.bf16 %v2462, %v2461
    %v2505 = vpack.c.bf16 %v2464, %v2463
    %v2506 = vpack.c.bf16 %v2466, %v2465
    %v2507 = vpack.c.bf16 %v2468, %v2467
    %v2508 = vpack.c.bf16 %v2470, %v2469
    %v2509 = vpack.c.bf16 %v2472, %v2471
    %v2510 = vpack.c.bf16 %v2474, %v2473
    %v2511 = vpack.c.bf16 %v2476, %v2475
    %v2512 = vpack.c.bf16 %v2478, %v2477
    %v2513 = vpack.c.bf16 %v2480, %v2479
    %v2514 = vpack.c.bf16 %v2482, %v2481
    %v2515 = vpack.c.bf16 %v2484, %v2483
    %v2516 = vpack.c.bf16 %v2486, %v2485
    %v2517 = vpack.c.bf16 %v2488, %v2487
    %v2518 = vpack.c.bf16 %v2490, %v2489
    %v2519 = vpack.c.bf16 %v2492, %v2491
    %v2520 = vpack.c.bf16 %v2494, %v2493
    %v2521 = vpack.c.bf16 %v2496, %v2495
    %v2522 = vpack.c.bf16 %v2498, %v2497
    loop: start=0, step=1, limit=3
    $region58: #{tpu_custom_call.1} parent=1 // loop_pre_header
      _
    $region59: #{tpu_custom_call.1} parent=1 // loop_header
      %s2524 = sphi 0, %s2528
      %p2525 = scmp.ge.s32.totalorder %s2524, 3
    $region60: #{tpu_custom_call.1} parent=1 // loop_header_branch
      %2527 = sbr.rel (%p2525) target = $region64
    $region61: #{tpu_custom_call.1} parent=1 // loop_body
      %s2529 = sand.u32 %s2524, 1
      %s2530 = smul.u32 %s2524, 128
      %s2531 = smul.u32 %s2529, 48
      %s2532 = smul.addr %s2531, 4
      %s2533 = scalar_lea.vmem [#allocation2], %s2532
      %s2534 = scalar_lea.sflag [#allocation3], %s2529
      %s2535 = smul.u32 4, 16
      %s2536 = smul.u32 %s2535, 3
      %s2537 = sshll.u32 %s2536, 4
      %2538 = dma.done %s2534, %s2537
      %s2539 = sadd.s32 %s2524, 1
      %p2540 = scmp.lt.s32.totalorder %s2539, 3
      // Predicated region
      $region65: #{tpu_custom_call.1} parent=61 // pred_check
        %p2541 = pneg %p2540
      $region66: #{tpu_custom_call.1} parent=61 // pred_check_branch
        %2543 = sbr.rel (%p2541) target = $region68
      $region67: #{tpu_custom_call.1} parent=61 // pred_region
        %s2544 = ssub.s32 1, %s2529
        %s2545 = smul.u32 %s2539, 128
        %s2546 = sshra.s32 %s2545, 3
        %s2547 = sand.u32 %s2545, 7
        %s2548 = smul.u32 %s2546, 3
        %s2549 = smul.addr %s2548, 64
        %s2550 = scalar_lea.hbm %s1, %s2549
        %s2551 = smul.u32 %s2544, 48
        %s2552 = smul.addr %s2551, 4
        %s2553 = scalar_lea.vmem [#allocation2], %s2552
        %s2554 = scalar_lea.sflag [#allocation3], %s2544
        // Predicated region
        $region69: #{tpu_custom_call.1} parent=67 // pred_check
          _
        $region70: #{tpu_custom_call.1} parent=67 // pred_check_branch
          %2556 = sbr.rel target = $region72
        $region71: #{tpu_custom_call.1} parent=67 // pred_region
          %2557 = sst [smem:[#allocation18]] [#allocation21]
          %2558 = sst [smem:[#allocation19]] [#allocation20]
        $region72: #{tpu_custom_call.1} parent=67 // pred_fallthru
          _
        %2560 = shalt.err (0)
        %s2562 = sshll.u32 %s2553, 4
        %s2563 = int_to_ptr.vmem [resolvable:$true] %s2562
        %2565 = dma.hbm_to_vmem [thread:$0]  %s2550, 3072, %s2563, %s2554
      $region68: #{tpu_custom_call.1} parent=61 // pred_fallthru
        _
      %v2566 = vld [vmem:[%s2533] sm:$0xff]
      %v2567 = vld [vmem:[%s2533 + $0x8] sm:$0xf]
      %v2568 = vld [vmem:[%s2533 + $0xc] sm:$0xff]
      %v2569 = vld [vmem:[%s2533 + $0x14] sm:$0xf]
      %v2570 = vld [vmem:[%s2533 + $0x18] sm:$0xff]
      %v2571 = vld [vmem:[%s2533 + $0x20] sm:$0xf]
      %v2572 = vld [vmem:[%s2533 + $0x24] sm:$0xff]
      %v2573 = vld [vmem:[%s2533 + $0x2c] sm:$0xf]
      %v2574 = vld [vmem:[%s2533 + $0x30] sm:$0xff]
      %v2575 = vld [vmem:[%s2533 + $0x38] sm:$0xf]
      %v2576 = vld [vmem:[%s2533 + $0x3c] sm:$0xff]
      %v2577 = vld [vmem:[%s2533 + $0x44] sm:$0xf]
      %v2578 = vld [vmem:[%s2533 + $0x48] sm:$0xff]
      %v2579 = vld [vmem:[%s2533 + $0x50] sm:$0xf]
      %v2580 = vld [vmem:[%s2533 + $0x54] sm:$0xff]
      %v2581 = vld [vmem:[%s2533 + $0x5c] sm:$0xf]
      %v2582 = vld [vmem:[%s2533 + $0x60] sm:$0xff]
      %v2583 = vld [vmem:[%s2533 + $0x68] sm:$0xf]
      %v2584 = vld [vmem:[%s2533 + $0x6c] sm:$0xff]
      %v2585 = vld [vmem:[%s2533 + $0x74] sm:$0xf]
      %v2586 = vld [vmem:[%s2533 + $0x78] sm:$0xff]
      %v2587 = vld [vmem:[%s2533 + $0x80] sm:$0xf]
      %v2588 = vld [vmem:[%s2533 + $0x84] sm:$0xff]
      %v2589 = vld [vmem:[%s2533 + $0x8c] sm:$0xf]
      %v2590 = vld [vmem:[%s2533 + $0x90] sm:$0xff]
      %v2591 = vld [vmem:[%s2533 + $0x98] sm:$0xf]
      %v2592 = vld [vmem:[%s2533 + $0x9c] sm:$0xff]
      %v2593 = vld [vmem:[%s2533 + $0xa4] sm:$0xf]
      %v2594 = vld [vmem:[%s2533 + $0xa8] sm:$0xff]
      %v2595 = vld [vmem:[%s2533 + $0xb0] sm:$0xf]
      %v2596 = vld [vmem:[%s2533 + $0xb4] sm:$0xff]
      %v2597 = vld [vmem:[%s2533 + $0xbc] sm:$0xf]
      %v2630 = vunpack.c.l.b16 %v2566
      %v2631 = vunpack.c.h.b16 %v2566
      %v2632 = vunpack.c.l.b16 %v2567
      %v2633 = vunpack.c.l.b16 %v2568
      %v2634 = vunpack.c.h.b16 %v2568
      %v2635 = vunpack.c.l.b16 %v2569
      %v2636 = vunpack.c.l.b16 %v2570
      %v2637 = vunpack.c.h.b16 %v2570
      %v2638 = vunpack.c.l.b16 %v2571
      %v2639 = vunpack.c.l.b16 %v2572
      %v2640 = vunpack.c.h.b16 %v2572
      %v2641 = vunpack.c.l.b16 %v2573
      %v2642 = vunpack.c.l.b16 %v2574
      %v2643 = vunpack.c.h.b16 %v2574
      %v2644 = vunpack.c.l.b16 %v2575
      %v2645 = vunpack.c.l.b16 %v2576
      %v2646 = vunpack.c.h.b16 %v2576
      %v2647 = vunpack.c.l.b16 %v2577
      %v2648 = vunpack.c.l.b16 %v2578
      %v2649 = vunpack.c.h.b16 %v2578
      %v2650 = vunpack.c.l.b16 %v2579
      %v2651 = vunpack.c.l.b16 %v2580
      %v2652 = vunpack.c.h.b16 %v2580
      %v2653 = vunpack.c.l.b16 %v2581
      %v2654 = vunpack.c.l.b16 %v2582
      %v2655 = vunpack.c.h.b16 %v2582
      %v2656 = vunpack.c.l.b16 %v2583
      %v2657 = vunpack.c.l.b16 %v2584
      %v2658 = vunpack.c.h.b16 %v2584
      %v2659 = vunpack.c.l.b16 %v2585
      %v2660 = vunpack.c.l.b16 %v2586
      %v2661 = vunpack.c.h.b16 %v2586
      %v2662 = vunpack.c.l.b16 %v2587
      %v2663 = vunpack.c.l.b16 %v2588
      %v2664 = vunpack.c.h.b16 %v2588
      %v2665 = vunpack.c.l.b16 %v2589
      %v2666 = vunpack.c.l.b16 %v2590
      %v2667 = vunpack.c.h.b16 %v2590
      %v2668 = vunpack.c.l.b16 %v2591
      %v2669 = vunpack.c.l.b16 %v2592
      %v2670 = vunpack.c.h.b16 %v2592
      %v2671 = vunpack.c.l.b16 %v2593
      %v2672 = vunpack.c.l.b16 %v2594
      %v2673 = vunpack.c.h.b16 %v2594
      %v2674 = vunpack.c.l.b16 %v2595
      %v2675 = vunpack.c.l.b16 %v2596
      %v2676 = vunpack.c.h.b16 %v2596
      %v2677 = vunpack.c.l.b16 %v2597
      %v2678 = vpack.c.b16 %v2633, %v2630
      %v2679 = vpack.c.b16 %v2634, %v2631
      %v2680 = vpack.c.b16 %v2635, %v2632
      %v2681 = vpack.c.b16 %v2639, %v2636
      %v2682 = vpack.c.b16 %v2640, %v2637
      %v2683 = vpack.c.b16 %v2641, %v2638
      %v2684 = vpack.c.b16 %v2645, %v2642
      %v2685 = vpack.c.b16 %v2646, %v2643
      %v2686 = vpack.c.b16 %v2647, %v2644
      %v2687 = vpack.c.b16 %v2651, %v2648
      %v2688 = vpack.c.b16 %v2652, %v2649
      %v2689 = vpack.c.b16 %v2653, %v2650
      %v2690 = vpack.c.b16 %v2657, %v2654
      %v2691 = vpack.c.b16 %v2658, %v2655
      %v2692 = vpack.c.b16 %v2659, %v2656
      %v2693 = vpack.c.b16 %v2663, %v2660
      %v2694 = vpack.c.b16 %v2664, %v2661
      %v2695 = vpack.c.b16 %v2665, %v2662
      %v2696 = vpack.c.b16 %v2669, %v2666
      %v2697 = vpack.c.b16 %v2670, %v2667
      %v2698 = vpack.c.b16 %v2671, %v2668
      %v2699 = vpack.c.b16 %v2675, %v2672
      %v2700 = vpack.c.b16 %v2676, %v2673
      %v2701 = vpack.c.b16 %v2677, %v2674
      %2726 = vmatprep.subr.bf16.mxu0 0
      %2727 = vmatpush1.bf16.msra.mxu0 %v2506
      %2728 = vmatprep.subr.bf16.mxu0 0
      %2729 = vmatpush1.bf16.msra.mxu0 %v2505
      %2730 = vmatprep.subr.bf16.mxu0 0
      %2731 = vmatpush1.bf16.msra.mxu0 %v2504
      %2732 = vmatprep.subr.bf16.mxu0 0
      %2733 = vmatpush1.bf16.msra.mxu0 %v2503
      %2734 = vmatprep.subr.bf16.mxu0 0
      %2735 = vmatpush1.bf16.msra.mxu0 %v2502
      %2736 = vmatprep.subr.bf16.mxu0 0
      %2737 = vmatpush1.bf16.msra.mxu0 %v2501
      %2738 = vmatprep.subr.bf16.mxu0 0
      %2739 = vmatpush1.bf16.msra.mxu0 %v2500
      %2740 = vmatprep.subr.bf16.mxu0 0
      %2741 = vmatpush1.bf16.msra.mxu0 %v2499
      %2742 = vmatprep.subr.bf16.mxu0 0
      %2743 = vmatpush2.bf16.msra.mxu0 %v2514
      %2744 = vmatprep.subr.bf16.mxu0 0
      %2745 = vmatpush2.bf16.msra.mxu0 %v2513
      %2746 = vmatprep.subr.bf16.mxu0 0
      %2747 = vmatpush2.bf16.msra.mxu0 %v2512
      %2748 = vmatprep.subr.bf16.mxu0 0
      %2749 = vmatpush2.bf16.msra.mxu0 %v2511
      %2750 = vmatprep.subr.bf16.mxu0 0
      %2751 = vmatpush2.bf16.msra.mxu0 %v2510
      %2752 = vmatprep.subr.bf16.mxu0 0
      %2753 = vmatpush2.bf16.msra.mxu0 %v2509
      %2754 = vmatprep.subr.bf16.mxu0 0
      %2755 = vmatpush2.bf16.msra.mxu0 %v2508
      %2756 = vmatprep.subr.bf16.mxu0 0
      %2757 = vmatpush2.bf16.msra.mxu0 %v2507
      %2758 = vmatprep.mubr.bf16.mxu0 %v2679
      %2759 = vmatmul.mubr.bf16.gmra.mxu0 %v2678
      %v2760 = vpop.f32.mrf.mxu0
      %v2761 = vadd.f32 0.0, %v2760
      %v2762 = vpop.f32.mrf.mxu0
      %v2763 = vpop.f32.mrf.mxu0
      %v2764 = vadd.f32 0.0, %v2763
      %v2765 = vpop.f32.mrf.mxu0
      %2766 = vmatprep.mubr.bf16.mxu0 %v2682
      %2767 = vmatmul.mubr.bf16.gmra.mxu0 %v2681
      %v2768 = vpop.f32.mrf.mxu0
      %v2769 = vadd.f32 0.0, %v2768
      %v2770 = vpop.f32.mrf.mxu0
      %v2771 = vpop.f32.mrf.mxu0
      %v2772 = vadd.f32 0.0, %v2771
      %v2773 = vpop.f32.mrf.mxu0
      %2774 = vmatprep.mubr.bf16.mxu0 %v2685
      %2775 = vmatmul.mubr.bf16.gmra.mxu0 %v2684
      %v2776 = vpop.f32.mrf.mxu0
      %v2777 = vadd.f32 0.0, %v2776
      %v2778 = vpop.f32.mrf.mxu0
      %v2779 = vpop.f32.mrf.mxu0
      %v2780 = vadd.f32 0.0, %v2779
      %v2781 = vpop.f32.mrf.mxu0
      %2782 = vmatprep.mubr.bf16.mxu0 %v2688
      %2783 = vmatmul.mubr.bf16.gmra.mxu0 %v2687
      %v2784 = vpop.f32.mrf.mxu0
      %v2785 = vadd.f32 0.0, %v2784
      %v2786 = vpop.f32.mrf.mxu0
      %v2787 = vpop.f32.mrf.mxu0
      %v2788 = vadd.f32 0.0, %v2787
      %v2789 = vpop.f32.mrf.mxu0
      %2790 = vmatprep.mubr.bf16.mxu0 %v2691
      %2791 = vmatmul.mubr.bf16.gmra.mxu0 %v2690
      %v2792 = vpop.f32.mrf.mxu0
      %v2793 = vadd.f32 0.0, %v2792
      %v2794 = vpop.f32.mrf.mxu0
      %v2795 = vpop.f32.mrf.mxu0
      %v2796 = vadd.f32 0.0, %v2795
      %v2797 = vpop.f32.mrf.mxu0
      %2798 = vmatprep.mubr.bf16.mxu0 %v2694
      %2799 = vmatmul.mubr.bf16.gmra.mxu0 %v2693
      %v2800 = vpop.f32.mrf.mxu0
      %v2801 = vadd.f32 0.0, %v2800
      %v2802 = vpop.f32.mrf.mxu0
      %v2803 = vpop.f32.mrf.mxu0
      %v2804 = vadd.f32 0.0, %v2803
      %v2805 = vpop.f32.mrf.mxu0
      %2806 = vmatprep.mubr.bf16.mxu0 %v2697
      %2807 = vmatmul.mubr.bf16.gmra.mxu0 %v2696
      %v2808 = vpop.f32.mrf.mxu0
      %v2809 = vadd.f32 0.0, %v2808
      %v2810 = vpop.f32.mrf.mxu0
      %v2811 = vpop.f32.mrf.mxu0
      %v2812 = vadd.f32 0.0, %v2811
      %v2813 = vpop.f32.mrf.mxu0
      %2814 = vmatprep.mubr.bf16.mxu0 %v2700
      %2815 = vmatmul.mubr.bf16.gmra.mxu0 %v2699
      %v2816 = vpop.f32.mrf.mxu0
      %v2817 = vadd.f32 0.0, %v2816
      %v2818 = vpop.f32.mrf.mxu0
      %v2819 = vpop.f32.mrf.mxu0
      %v2820 = vadd.f32 0.0, %v2819
      %v2821 = vpop.f32.mrf.mxu0
      %2822 = vdwg.mxu0
      %2823 = vmatprep.subr.bf16.mxu0 0
      %2824 = vmatpush1.bf16.msra.mxu0 %v2522
      %2825 = vmatprep.subr.bf16.mxu0 0
      %2826 = vmatpush1.bf16.msra.mxu0 %v2521
      %2827 = vmatprep.subr.bf16.mxu0 0
      %2828 = vmatpush1.bf16.msra.mxu0 %v2520
      %2829 = vmatprep.subr.bf16.mxu0 0
      %2830 = vmatpush1.bf16.msra.mxu0 %v2519
      %2831 = vmatprep.subr.bf16.mxu0 0
      %2832 = vmatpush1.bf16.msra.mxu0 %v2518
      %2833 = vmatprep.subr.bf16.mxu0 0
      %2834 = vmatpush1.bf16.msra.mxu0 %v2517
      %2835 = vmatprep.subr.bf16.mxu0 0
      %2836 = vmatpush1.bf16.msra.mxu0 %v2516
      %2837 = vmatprep.subr.bf16.mxu0 0
      %2838 = vmatpush1.bf16.msra.mxu0 %v2515
      %2839 = vmatprep.subr.bf16.mxu0 0
      %2840 = vmatpush2.bf16.msra.mxu0 0
      %2841 = vmatprep.subr.bf16.mxu0 0
      %2842 = vmatpush2.bf16.msra.mxu0 0
      %2843 = vmatprep.subr.bf16.mxu0 0
      %2844 = vmatpush2.bf16.msra.mxu0 0
      %2845 = vmatprep.subr.bf16.mxu0 0
      %2846 = vmatpush2.bf16.msra.mxu0 0
      %2847 = vmatprep.subr.bf16.mxu0 0
      %2848 = vmatpush2.bf16.msra.mxu0 0
      %2849 = vmatprep.subr.bf16.mxu0 0
      %2850 = vmatpush2.bf16.msra.mxu0 0
      %2851 = vmatprep.subr.bf16.mxu0 0
      %2852 = vmatpush2.bf16.msra.mxu0 0
      %2853 = vmatprep.subr.bf16.mxu0 0
      %2854 = vmatpush2.bf16.msra.mxu0 0
      %2855 = vmatprep.mubr.bf16.mxu0 0
      %2856 = vmatmul.mubr.bf16.gmra.mxu0 %v2680
      %v2857 = vpop.f32.mrf.mxu0
      %v2858 = vadd.f32 %v2761, %v2857
      %v2859 = vpop.f32.mrf.mxu0
      %v2860 = vpop.f32.mrf.mxu0
      %v2861 = vadd.f32 %v2764, %v2860
      %v2862 = vpop.f32.mrf.mxu0
      %2863 = vmatprep.mubr.bf16.mxu0 0
      %2864 = vmatmul.mubr.bf16.gmra.mxu0 %v2683
      %v2865 = vpop.f32.mrf.mxu0
      %v2866 = vadd.f32 %v2769, %v2865
      %v2867 = vpop.f32.mrf.mxu0
      %v2868 = vpop.f32.mrf.mxu0
      %v2869 = vadd.f32 %v2772, %v2868
      %v2870 = vpop.f32.mrf.mxu0
      %2871 = vmatprep.mubr.bf16.mxu0 0
      %2872 = vmatmul.mubr.bf16.gmra.mxu0 %v2686
      %v2873 = vpop.f32.mrf.mxu0
      %v2874 = vadd.f32 %v2777, %v2873
      %v2875 = vpop.f32.mrf.mxu0
      %v2876 = vpop.f32.mrf.mxu0
      %v2877 = vadd.f32 %v2780, %v2876
      %v2878 = vpop.f32.mrf.mxu0
      %2879 = vmatprep.mubr.bf16.mxu0 0
      %2880 = vmatmul.mubr.bf16.gmra.mxu0 %v2689
      %v2881 = vpop.f32.mrf.mxu0
      %v2882 = vadd.f32 %v2785, %v2881
      %v2883 = vpop.f32.mrf.mxu0
      %v2884 = vpop.f32.mrf.mxu0
      %v2885 = vadd.f32 %v2788, %v2884
      %v2886 = vpop.f32.mrf.mxu0
      %2887 = vmatprep.mubr.bf16.mxu0 0
      %2888 = vmatmul.mubr.bf16.gmra.mxu0 %v2692
      %v2889 = vpop.f32.mrf.mxu0
      %v2890 = vadd.f32 %v2793, %v2889
      %v2891 = vpop.f32.mrf.mxu0
      %v2892 = vpop.f32.mrf.mxu0
      %v2893 = vadd.f32 %v2796, %v2892
      %v2894 = vpop.f32.mrf.mxu0
      %2895 = vmatprep.mubr.bf16.mxu0 0
      %2896 = vmatmul.mubr.bf16.gmra.mxu0 %v2695
      %v2897 = vpop.f32.mrf.mxu0
      %v2898 = vadd.f32 %v2801, %v2897
      %v2899 = vpop.f32.mrf.mxu0
      %v2900 = vpop.f32.mrf.mxu0
      %v2901 = vadd.f32 %v2804, %v2900
      %v2902 = vpop.f32.mrf.mxu0
      %2903 = vmatprep.mubr.bf16.mxu0 0
      %2904 = vmatmul.mubr.bf16.gmra.mxu0 %v2698
      %v2905 = vpop.f32.mrf.mxu0
      %v2906 = vadd.f32 %v2809, %v2905
      %v2907 = vpop.f32.mrf.mxu0
      %v2908 = vpop.f32.mrf.mxu0
      %v2909 = vadd.f32 %v2812, %v2908
      %v2910 = vpop.f32.mrf.mxu0
      %2911 = vmatprep.mubr.bf16.mxu0 0
      %2912 = vmatmul.mubr.bf16.gmra.mxu0 %v2701
      %v2913 = vpop.f32.mrf.mxu0
      %v2914 = vadd.f32 %v2817, %v2913
      %v2915 = vpop.f32.mrf.mxu0
      %v2916 = vpop.f32.mrf.mxu0
      %v2917 = vadd.f32 %v2820, %v2916
      %v2918 = vpop.f32.mrf.mxu0
      %2919 = vdwg.mxu0
      %s2920 = scalar_lea.vmem [#allocation4], %s2530
      %2921 = vst [vmem:[%s2920] sm:$0xff] %v2858
      %2922 = vst [vmem:[%s2920 + $0x8] sm:$0xff] %v2861
      %2923 = vst [vmem:[%s2920 + $0x10] sm:$0xff] %v2866
      %2924 = vst [vmem:[%s2920 + $0x18] sm:$0xff] %v2869
      %2925 = vst [vmem:[%s2920 + $0x20] sm:$0xff] %v2874
      %2926 = vst [vmem:[%s2920 + $0x28] sm:$0xff] %v2877
      %2927 = vst [vmem:[%s2920 + $0x30] sm:$0xff] %v2882
      %2928 = vst [vmem:[%s2920 + $0x38] sm:$0xff] %v2885
      %2929 = vst [vmem:[%s2920 + $0x40] sm:$0xff] %v2890
      %2930 = vst [vmem:[%s2920 + $0x48] sm:$0xff] %v2893
      %2931 = vst [vmem:[%s2920 + $0x50] sm:$0xff] %v2898
      %2932 = vst [vmem:[%s2920 + $0x58] sm:$0xff] %v2901
      %2933 = vst [vmem:[%s2920 + $0x60] sm:$0xff] %v2906
      %2934 = vst [vmem:[%s2920 + $0x68] sm:$0xff] %v2909
      %2935 = vst [vmem:[%s2920 + $0x70] sm:$0xff] %v2914
      %2936 = vst [vmem:[%s2920 + $0x78] sm:$0xff] %v2917
    $region62: #{tpu_custom_call.1} parent=1 // loop_footer
      %s2528 = sadd.s32 1, %s2524
    $region63: #{tpu_custom_call.1} parent=1 // loop_footer_branch
      %2523 = sbr.rel target = $region59
    $region64: #{tpu_custom_call.1} parent=1 // loop_exit
      _
    %s2937 = sld [smem:[#allocation5]]
    %s2938 = sadd.f32 %s2937, 1.0
    %v2939 = vstv %s2938
    %v2940 = vmul.f32 %v2939, %v2451
    %v2941 = vmul.f32 %v2939, %v2452
    %v2942 = vmul.f32 %v2939, %v2453
    %v2943 = vmul.f32 %v2939, %v2454
    %v2944 = vmul.f32 %v2939, %v2455
    %v2945 = vmul.f32 %v2939, %v2456
    %v2946 = vmul.f32 %v2939, %v2457
    %v2947 = vmul.f32 %v2939, %v2458
    %v2948 = vmul.f32 %v2939, %v2459
    %v2949 = vmul.f32 %v2939, %v2460
    %v2950 = vmul.f32 %v2939, %v2461
    %v2951 = vmul.f32 %v2939, %v2462
    %v2952 = vmul.f32 %v2939, %v2463
    %v2953 = vmul.f32 %v2939, %v2464
    %v2954 = vmul.f32 %v2939, %v2465
    %v2955 = vmul.f32 %v2939, %v2466
    %v2956 = vmul.f32 %v2939, %v2467
    %v2957 = vmul.f32 %v2939, %v2468
    %v2958 = vmul.f32 %v2939, %v2469
    %v2959 = vmul.f32 %v2939, %v2470
    %v2960 = vmul.f32 %v2939, %v2471
    %v2961 = vmul.f32 %v2939, %v2472
    %v2962 = vmul.f32 %v2939, %v2473
    %v2963 = vmul.f32 %v2939, %v2474
    %v2964 = vmul.f32 %v2939, %v2475
    %v2965 = vmul.f32 %v2939, %v2476
    %v2966 = vmul.f32 %v2939, %v2477
    %v2967 = vmul.f32 %v2939, %v2478
    %v2968 = vmul.f32 %v2939, %v2479
    %v2969 = vmul.f32 %v2939, %v2480
    %v2970 = vmul.f32 %v2939, %v2481
    %v2971 = vmul.f32 %v2939, %v2482
    %v2972 = vmul.f32 %v2939, %v2483
    %v2973 = vmul.f32 %v2939, %v2484
    %v2974 = vmul.f32 %v2939, %v2485
    %v2975 = vmul.f32 %v2939, %v2486
    %v2976 = vmul.f32 %v2939, %v2487
    %v2977 = vmul.f32 %v2939, %v2488
    %v2978 = vmul.f32 %v2939, %v2489
    %v2979 = vmul.f32 %v2939, %v2490
    %v2980 = vmul.f32 %v2939, %v2491
    %v2981 = vmul.f32 %v2939, %v2492
    %v2982 = vmul.f32 %v2939, %v2493
    %v2983 = vmul.f32 %v2939, %v2494
    %v2984 = vmul.f32 %v2939, %v2495
    %v2985 = vmul.f32 %v2939, %v2496
    %v2986 = vmul.f32 %v2939, %v2497
    %v2987 = vmul.f32 %v2939, %v2498
    %v2988 = vld [vmem:[#allocation4] sm:$0xff]
    %v2989 = vld [vmem:[#allocation4 + $0x8] sm:$0xff]
    %v2990 = vld [vmem:[#allocation4 + $0x10] sm:$0xff]
    %v2991 = vld [vmem:[#allocation4 + $0x18] sm:$0xff]
    %v2992 = vld [vmem:[#allocation4 + $0x20] sm:$0xff]
    %v2993 = vld [vmem:[#allocation4 + $0x28] sm:$0xff]
    %v2994 = vld [vmem:[#allocation4 + $0x30] sm:$0xff]
    %v2995 = vld [vmem:[#allocation4 + $0x38] sm:$0xff]
    %v2996 = vld [vmem:[#allocation4 + $0x40] sm:$0xff]
    %v2997 = vld [vmem:[#allocation4 + $0x48] sm:$0xff]
    %v2998 = vld [vmem:[#allocation4 + $0x50] sm:$0xff]
    %v2999 = vld [vmem:[#allocation4 + $0x58] sm:$0xff]
    %v3000 = vld [vmem:[#allocation4 + $0x60] sm:$0xff]
    %v3001 = vld [vmem:[#allocation4 + $0x68] sm:$0xff]
    %v3002 = vld [vmem:[#allocation4 + $0x70] sm:$0xff]
    %v3003 = vld [vmem:[#allocation4 + $0x78] sm:$0xff]
    %v3004 = vld [vmem:[#allocation4 + $0x80] sm:$0xff]
    %v3005 = vld [vmem:[#allocation4 + $0x88] sm:$0xff]
    %v3006 = vld [vmem:[#allocation4 + $0x90] sm:$0xff]
    %v3007 = vld [vmem:[#allocation4 + $0x98] sm:$0xff]
    %v3008 = vld [vmem:[#allocation4 + $0xa0] sm:$0xff]
    %v3009 = vld [vmem:[#allocation4 + $0xa8] sm:$0xff]
    %v3010 = vld [vmem:[#allocation4 + $0xb0] sm:$0xff]
    %v3011 = vld [vmem:[#allocation4 + $0xb8] sm:$0xff]
    %v3012 = vld [vmem:[#allocation4 + $0xc0] sm:$0xff]
    %v3013 = vld [vmem:[#allocation4 + $0xc8] sm:$0xff]
    %v3014 = vld [vmem:[#allocation4 + $0xd0] sm:$0xff]
    %v3015 = vld [vmem:[#allocation4 + $0xd8] sm:$0xff]
    %v3016 = vld [vmem:[#allocation4 + $0xe0] sm:$0xff]
    %v3017 = vld [vmem:[#allocation4 + $0xe8] sm:$0xff]
    %v3018 = vld [vmem:[#allocation4 + $0xf0] sm:$0xff]
    %v3019 = vld [vmem:[#allocation4 + $0xf8] sm:$0xff]
    %v3020 = vld [vmem:[#allocation4 + $0x100] sm:$0xff]
    %v3021 = vld [vmem:[#allocation4 + $0x108] sm:$0xff]
    %v3022 = vld [vmem:[#allocation4 + $0x110] sm:$0xff]
    %v3023 = vld [vmem:[#allocation4 + $0x118] sm:$0xff]
    %v3024 = vld [vmem:[#allocation4 + $0x120] sm:$0xff]
    %v3025 = vld [vmem:[#allocation4 + $0x128] sm:$0xff]
    %v3026 = vld [vmem:[#allocation4 + $0x130] sm:$0xff]
    %v3027 = vld [vmem:[#allocation4 + $0x138] sm:$0xff]
    %v3028 = vld [vmem:[#allocation4 + $0x140] sm:$0xff]
    %v3029 = vld [vmem:[#allocation4 + $0x148] sm:$0xff]
    %v3030 = vld [vmem:[#allocation4 + $0x150] sm:$0xff]
    %v3031 = vld [vmem:[#allocation4 + $0x158] sm:$0xff]
    %v3032 = vld [vmem:[#allocation4 + $0x160] sm:$0xff]
    %v3033 = vld [vmem:[#allocation4 + $0x168] sm:$0xff]
    %v3034 = vld [vmem:[#allocation4 + $0x170] sm:$0xff]
    %v3035 = vld [vmem:[#allocation4 + $0x178] sm:$0xff]
    %v3036 = vadd.f32 %v2940, %v2988
    %v3037 = vadd.f32 %v2941, %v2989
    %v3038 = vadd.f32 %v2942, %v2990
    %v3039 = vadd.f32 %v2943, %v2991
    %v3040 = vadd.f32 %v2944, %v2992
    %v3041 = vadd.f32 %v2945, %v2993
    %v3042 = vadd.f32 %v2946, %v2994
    %v3043 = vadd.f32 %v2947, %v2995
    %v3044 = vadd.f32 %v2948, %v2996
    %v3045 = vadd.f32 %v2949, %v2997
    %v3046 = vadd.f32 %v2950, %v2998
    %v3047 = vadd.f32 %v2951, %v2999
    %v3048 = vadd.f32 %v2952, %v3000
    %v3049 = vadd.f32 %v2953, %v3001
    %v3050 = vadd.f32 %v2954, %v3002
    %v3051 = vadd.f32 %v2955, %v3003
    %v3052 = vadd.f32 %v2956, %v3004
    %v3053 = vadd.f32 %v2957, %v3005
    %v3054 = vadd.f32 %v2958, %v3006
    %v3055 = vadd.f32 %v2959, %v3007
    %v3056 = vadd.f32 %v2960, %v3008
    %v3057 = vadd.f32 %v2961, %v3009
    %v3058 = vadd.f32 %v2962, %v3010
    %v3059 = vadd.f32 %v2963, %v3011
    %v3060 = vadd.f32 %v2964, %v3012
    %v3061 = vadd.f32 %v2965, %v3013
    %v3062 = vadd.f32 %v2966, %v3014
    %v3063 = vadd.f32 %v2967, %v3015
    %v3064 = vadd.f32 %v2968, %v3016
    %v3065 = vadd.f32 %v2969, %v3017
    %v3066 = vadd.f32 %v2970, %v3018
    %v3067 = vadd.f32 %v2971, %v3019
    %v3068 = vadd.f32 %v2972, %v3020
    %v3069 = vadd.f32 %v2973, %v3021
    %v3070 = vadd.f32 %v2974, %v3022
    %v3071 = vadd.f32 %v2975, %v3023
    %v3072 = vadd.f32 %v2976, %v3024
    %v3073 = vadd.f32 %v2977, %v3025
    %v3074 = vadd.f32 %v2978, %v3026
    %v3075 = vadd.f32 %v2979, %v3027
    %v3076 = vadd.f32 %v2980, %v3028
    %v3077 = vadd.f32 %v2981, %v3029
    %v3078 = vadd.f32 %v2982, %v3030
    %v3079 = vadd.f32 %v2983, %v3031
    %v3080 = vadd.f32 %v2984, %v3032
    %v3081 = vadd.f32 %v2985, %v3033
    %v3082 = vadd.f32 %v2986, %v3034
    %v3083 = vadd.f32 %v2987, %v3035
    // Predicated region
    $region73: #{tpu_custom_call.1} parent=1 // pred_check
      _
    $region74: #{tpu_custom_call.1} parent=1 // pred_check_branch
      %3085 = sbr.rel target = $region76
    $region75: #{tpu_custom_call.1} parent=1 // pred_region
      %3086 = sst [smem:[#allocation18]] [#allocation23]
      %3087 = sst [smem:[#allocation19]] [#allocation22]
    $region76: #{tpu_custom_call.1} parent=1 // pred_fallthru
      _
    %3089 = shalt.err (0)
    %s3091 = sshll.u32 [#allocation2], 4
    %s3092 = int_to_ptr.vmem [resolvable:$true] %s3091
    %3094 = dma.hbm_to_vmem [thread:$0]  %s527, 3072, %s3092, [#allocation3]
    %s3095 = scalar_lea.vmem [#allocation12], 128
    %v3096 = vld [vmem:[%s3095] sm:$0xff]
    %v3097 = vld [vmem:[%s3095 + $0x8] sm:$0xff]
    %v3098 = vld [vmem:[%s3095 + $0x10] sm:$0xff]
    %v3099 = vld [vmem:[%s3095 + $0x18] sm:$0xff]
    %v3100 = vld [vmem:[%s3095 + $0x20] sm:$0xff]
    %v3101 = vld [vmem:[%s3095 + $0x28] sm:$0xff]
    %v3102 = vld [vmem:[%s3095 + $0x30] sm:$0xff]
    %v3103 = vld [vmem:[%s3095 + $0x38] sm:$0xff]
    %v3104 = vld [vmem:[%s3095 + $0x40] sm:$0xff]
    %v3105 = vld [vmem:[%s3095 + $0x48] sm:$0xff]
    %v3106 = vld [vmem:[%s3095 + $0x50] sm:$0xff]
    %v3107 = vld [vmem:[%s3095 + $0x58] sm:$0xff]
    %v3108 = vld [vmem:[%s3095 + $0x60] sm:$0xff]
    %v3109 = vld [vmem:[%s3095 + $0x68] sm:$0xff]
    %v3110 = vld [vmem:[%s3095 + $0x70] sm:$0xff]
    %v3111 = vld [vmem:[%s3095 + $0x78] sm:$0xff]
    %s3112 = scalar_lea.vmem %s6, 1
    %v3113 = vld [vmem:[%s3112] sm:$0x1]
    %v3115 = vlaneseq
    %v3116 = vshrl.u32 %v3115, 7
    %v3117 = vsub.s32 0, %v3116
    %v3118 = vrot.slane %v3113, %v3117
    %3120 = vmatprep.subr.mxu0 0.0
    %3121 = vmatpush1.msra.mxu0 %v3111
    %3122 = vmatprep.subr.mxu0 0.0
    %3123 = vmatpush1.msra.mxu0 %v3110
    %3124 = vmatprep.subr.mxu0 0.0
    %3125 = vmatpush1.msra.mxu0 %v3109
    %3126 = vmatprep.subr.mxu0 0.0
    %3127 = vmatpush1.msra.mxu0 %v3108
    %3128 = vmatprep.subr.mxu0 0.0
    %3129 = vmatpush1.msra.mxu0 %v3107
    %3130 = vmatprep.subr.mxu0 0.0
    %3131 = vmatpush1.msra.mxu0 %v3106
    %3132 = vmatprep.subr.mxu0 0.0
    %3133 = vmatpush1.msra.mxu0 %v3105
    %3134 = vmatprep.subr.mxu0 0.0
    %3135 = vmatpush1.msra.mxu0 %v3104
    %3136 = vmatprep.subr.mxu0 0.0
    %3137 = vmatpush1.msra.mxu0 %v3103
    %3138 = vmatprep.subr.mxu0 0.0
    %3139 = vmatpush1.msra.mxu0 %v3102
    %3140 = vmatprep.subr.mxu0 0.0
    %3141 = vmatpush1.msra.mxu0 %v3101
    %3142 = vmatprep.subr.mxu0 0.0
    %3143 = vmatpush1.msra.mxu0 %v3100
    %3144 = vmatprep.subr.mxu0 0.0
    %3145 = vmatpush1.msra.mxu0 %v3099
    %3146 = vmatprep.subr.mxu0 0.0
    %3147 = vmatpush1.msra.mxu0 %v3098
    %3148 = vmatprep.subr.mxu0 0.0
    %3149 = vmatpush1.msra.mxu0 %v3097
    %3150 = vmatprep.subr.mxu0 0.0
    %3151 = vmatpush1.msra.mxu0 %v3096
    %3152 = vmatprep.subr.mxu0 0.0
    %3153 = vmatpush2.msra.mxu0 0.0
    %3154 = vmatprep.subr.mxu0 0.0
    %3155 = vmatpush2.msra.mxu0 0.0
    %3156 = vmatprep.subr.mxu0 0.0
    %3157 = vmatpush2.msra.mxu0 0.0
    %3158 = vmatprep.subr.mxu0 0.0
    %3159 = vmatpush2.msra.mxu0 0.0
    %3160 = vmatprep.subr.mxu0 0.0
    %3161 = vmatpush2.msra.mxu0 0.0
    %3162 = vmatprep.subr.mxu0 0.0
    %3163 = vmatpush2.msra.mxu0 0.0
    %3164 = vmatprep.subr.mxu0 0.0
    %3165 = vmatpush2.msra.mxu0 0.0
    %3166 = vmatprep.subr.mxu0 0.0
    %3167 = vmatpush2.msra.mxu0 0.0
    %3168 = vmatprep.subr.mxu0 0.0
    %3169 = vmatpush2.msra.mxu0 0.0
    %3170 = vmatprep.subr.mxu0 0.0
    %3171 = vmatpush2.msra.mxu0 0.0
    %3172 = vmatprep.subr.mxu0 0.0
    %3173 = vmatpush2.msra.mxu0 0.0
    %3174 = vmatprep.subr.mxu0 0.0
    %3175 = vmatpush2.msra.mxu0 0.0
    %3176 = vmatprep.subr.mxu0 0.0
    %3177 = vmatpush2.msra.mxu0 0.0
    %3178 = vmatprep.subr.mxu0 0.0
    %3179 = vmatpush2.msra.mxu0 0.0
    %3180 = vmatprep.subr.mxu0 0.0
    %3181 = vmatpush2.msra.mxu0 0.0
    %3182 = vmatprep.subr.mxu0 0.0
    %3183 = vmatpush2.msra.mxu0 0.0
    %3184 = vmatprep.mubr.f32.mxu0 0.0
    %3185 = vmatmul.mubr.f32.gmra.mxu0 %v3036
    %v3186 = vpop.f32.mrf.mxu0
    %v3187 = vadd.f32 %v3118, %v3186
    %v3188 = vpop.f32.mrf.mxu0
    %3189 = vmatprep.mubr.f32.mxu0 0.0
    %3190 = vmatmul.mubr.f32.gmra.mxu0 %v3037
    %v3191 = vpop.f32.mrf.mxu0
    %v3192 = vadd.f32 %v3118, %v3191
    %v3193 = vpop.f32.mrf.mxu0
    %3194 = vmatprep.mubr.f32.mxu0 0.0
    %3195 = vmatmul.mubr.f32.gmra.mxu0 %v3038
    %v3196 = vpop.f32.mrf.mxu0
    %v3197 = vadd.f32 %v3118, %v3196
    %v3198 = vpop.f32.mrf.mxu0
    %3199 = vmatprep.mubr.f32.mxu0 0.0
    %3200 = vmatmul.mubr.f32.gmra.mxu0 %v3039
    %v3201 = vpop.f32.mrf.mxu0
    %v3202 = vadd.f32 %v3118, %v3201
    %v3203 = vpop.f32.mrf.mxu0
    %3204 = vmatprep.mubr.f32.mxu0 0.0
    %3205 = vmatmul.mubr.f32.gmra.mxu0 %v3040
    %v3206 = vpop.f32.mrf.mxu0
    %v3207 = vadd.f32 %v3118, %v3206
    %v3208 = vpop.f32.mrf.mxu0
    %3209 = vmatprep.mubr.f32.mxu0 0.0
    %3210 = vmatmul.mubr.f32.gmra.mxu0 %v3041
    %v3211 = vpop.f32.mrf.mxu0
    %v3212 = vadd.f32 %v3118, %v3211
    %v3213 = vpop.f32.mrf.mxu0
    %3214 = vmatprep.mubr.f32.mxu0 0.0
    %3215 = vmatmul.mubr.f32.gmra.mxu0 %v3042
    %v3216 = vpop.f32.mrf.mxu0
    %v3217 = vadd.f32 %v3118, %v3216
    %v3218 = vpop.f32.mrf.mxu0
    %3219 = vmatprep.mubr.f32.mxu0 0.0
    %3220 = vmatmul.mubr.f32.gmra.mxu0 %v3043
    %v3221 = vpop.f32.mrf.mxu0
    %v3222 = vadd.f32 %v3118, %v3221
    %v3223 = vpop.f32.mrf.mxu0
    %3224 = vmatprep.mubr.f32.mxu0 0.0
    %3225 = vmatmul.mubr.f32.gmra.mxu0 %v3044
    %v3226 = vpop.f32.mrf.mxu0
    %v3227 = vadd.f32 %v3118, %v3226
    %v3228 = vpop.f32.mrf.mxu0
    %3229 = vmatprep.mubr.f32.mxu0 0.0
    %3230 = vmatmul.mubr.f32.gmra.mxu0 %v3045
    %v3231 = vpop.f32.mrf.mxu0
    %v3232 = vadd.f32 %v3118, %v3231
    %v3233 = vpop.f32.mrf.mxu0
    %3234 = vmatprep.mubr.f32.mxu0 0.0
    %3235 = vmatmul.mubr.f32.gmra.mxu0 %v3046
    %v3236 = vpop.f32.mrf.mxu0
    %v3237 = vadd.f32 %v3118, %v3236
    %v3238 = vpop.f32.mrf.mxu0
    %3239 = vmatprep.mubr.f32.mxu0 0.0
    %3240 = vmatmul.mubr.f32.gmra.mxu0 %v3047
    %v3241 = vpop.f32.mrf.mxu0
    %v3242 = vadd.f32 %v3118, %v3241
    %v3243 = vpop.f32.mrf.mxu0
    %3244 = vmatprep.mubr.f32.mxu0 0.0
    %3245 = vmatmul.mubr.f32.gmra.mxu0 %v3048
    %v3246 = vpop.f32.mrf.mxu0
    %v3247 = vadd.f32 %v3118, %v3246
    %v3248 = vpop.f32.mrf.mxu0
    %3249 = vmatprep.mubr.f32.mxu0 0.0
    %3250 = vmatmul.mubr.f32.gmra.mxu0 %v3049
    %v3251 = vpop.f32.mrf.mxu0
    %v3252 = vadd.f32 %v3118, %v3251
    %v3253 = vpop.f32.mrf.mxu0
    %3254 = vmatprep.mubr.f32.mxu0 0.0
    %3255 = vmatmul.mubr.f32.gmra.mxu0 %v3050
    %v3256 = vpop.f32.mrf.mxu0
    %v3257 = vadd.f32 %v3118, %v3256
    %v3258 = vpop.f32.mrf.mxu0
    %3259 = vmatprep.mubr.f32.mxu0 0.0
    %3260 = vmatmul.mubr.f32.gmra.mxu0 %v3051
    %v3261 = vpop.f32.mrf.mxu0
    %v3262 = vadd.f32 %v3118, %v3261
    %v3263 = vpop.f32.mrf.mxu0
    %3264 = vmatprep.mubr.f32.mxu0 0.0
    %3265 = vmatmul.mubr.f32.gmra.mxu0 %v3052
    %v3266 = vpop.f32.mrf.mxu0
    %v3267 = vadd.f32 %v3118, %v3266
    %v3268 = vpop.f32.mrf.mxu0
    %3269 = vmatprep.mubr.f32.mxu0 0.0
    %3270 = vmatmul.mubr.f32.gmra.mxu0 %v3053
    %v3271 = vpop.f32.mrf.mxu0
    %v3272 = vadd.f32 %v3118, %v3271
    %v3273 = vpop.f32.mrf.mxu0
    %3274 = vmatprep.mubr.f32.mxu0 0.0
    %3275 = vmatmul.mubr.f32.gmra.mxu0 %v3054
    %v3276 = vpop.f32.mrf.mxu0
    %v3277 = vadd.f32 %v3118, %v3276
    %v3278 = vpop.f32.mrf.mxu0
    %3279 = vmatprep.mubr.f32.mxu0 0.0
    %3280 = vmatmul.mubr.f32.gmra.mxu0 %v3055
    %v3281 = vpop.f32.mrf.mxu0
    %v3282 = vadd.f32 %v3118, %v3281
    %v3283 = vpop.f32.mrf.mxu0
    %3284 = vmatprep.mubr.f32.mxu0 0.0
    %3285 = vmatmul.mubr.f32.gmra.mxu0 %v3056
    %v3286 = vpop.f32.mrf.mxu0
    %v3287 = vadd.f32 %v3118, %v3286
    %v3288 = vpop.f32.mrf.mxu0
    %3289 = vmatprep.mubr.f32.mxu0 0.0
    %3290 = vmatmul.mubr.f32.gmra.mxu0 %v3057
    %v3291 = vpop.f32.mrf.mxu0
    %v3292 = vadd.f32 %v3118, %v3291
    %v3293 = vpop.f32.mrf.mxu0
    %3294 = vmatprep.mubr.f32.mxu0 0.0
    %3295 = vmatmul.mubr.f32.gmra.mxu0 %v3058
    %v3296 = vpop.f32.mrf.mxu0
    %v3297 = vadd.f32 %v3118, %v3296
    %v3298 = vpop.f32.mrf.mxu0
    %3299 = vmatprep.mubr.f32.mxu0 0.0
    %3300 = vmatmul.mubr.f32.gmra.mxu0 %v3059
    %v3301 = vpop.f32.mrf.mxu0
    %v3302 = vadd.f32 %v3118, %v3301
    %v3303 = vpop.f32.mrf.mxu0
    %3304 = vmatprep.mubr.f32.mxu0 0.0
    %3305 = vmatmul.mubr.f32.gmra.mxu0 %v3060
    %v3306 = vpop.f32.mrf.mxu0
    %v3307 = vadd.f32 %v3118, %v3306
    %v3308 = vpop.f32.mrf.mxu0
    %3309 = vmatprep.mubr.f32.mxu0 0.0
    %3310 = vmatmul.mubr.f32.gmra.mxu0 %v3061
    %v3311 = vpop.f32.mrf.mxu0
    %v3312 = vadd.f32 %v3118, %v3311
    %v3313 = vpop.f32.mrf.mxu0
    %3314 = vmatprep.mubr.f32.mxu0 0.0
    %3315 = vmatmul.mubr.f32.gmra.mxu0 %v3062
    %v3316 = vpop.f32.mrf.mxu0
    %v3317 = vadd.f32 %v3118, %v3316
    %v3318 = vpop.f32.mrf.mxu0
    %3319 = vmatprep.mubr.f32.mxu0 0.0
    %3320 = vmatmul.mubr.f32.gmra.mxu0 %v3063
    %v3321 = vpop.f32.mrf.mxu0
    %v3322 = vadd.f32 %v3118, %v3321
    %v3323 = vpop.f32.mrf.mxu0
    %3324 = vmatprep.mubr.f32.mxu0 0.0
    %3325 = vmatmul.mubr.f32.gmra.mxu0 %v3064
    %v3326 = vpop.f32.mrf.mxu0
    %v3327 = vadd.f32 %v3118, %v3326
    %v3328 = vpop.f32.mrf.mxu0
    %3329 = vmatprep.mubr.f32.mxu0 0.0
    %3330 = vmatmul.mubr.f32.gmra.mxu0 %v3065
    %v3331 = vpop.f32.mrf.mxu0
    %v3332 = vadd.f32 %v3118, %v3331
    %v3333 = vpop.f32.mrf.mxu0
    %3334 = vmatprep.mubr.f32.mxu0 0.0
    %3335 = vmatmul.mubr.f32.gmra.mxu0 %v3066
    %v3336 = vpop.f32.mrf.mxu0
    %v3337 = vadd.f32 %v3118, %v3336
    %v3338 = vpop.f32.mrf.mxu0
    %3339 = vmatprep.mubr.f32.mxu0 0.0
    %3340 = vmatmul.mubr.f32.gmra.mxu0 %v3067
    %v3341 = vpop.f32.mrf.mxu0
    %v3342 = vadd.f32 %v3118, %v3341
    %v3343 = vpop.f32.mrf.mxu0
    %3344 = vmatprep.mubr.f32.mxu0 0.0
    %3345 = vmatmul.mubr.f32.gmra.mxu0 %v3068
    %v3346 = vpop.f32.mrf.mxu0
    %v3347 = vadd.f32 %v3118, %v3346
    %v3348 = vpop.f32.mrf.mxu0
    %3349 = vmatprep.mubr.f32.mxu0 0.0
    %3350 = vmatmul.mubr.f32.gmra.mxu0 %v3069
    %v3351 = vpop.f32.mrf.mxu0
    %v3352 = vadd.f32 %v3118, %v3351
    %v3353 = vpop.f32.mrf.mxu0
    %3354 = vmatprep.mubr.f32.mxu0 0.0
    %3355 = vmatmul.mubr.f32.gmra.mxu0 %v3070
    %v3356 = vpop.f32.mrf.mxu0
    %v3357 = vadd.f32 %v3118, %v3356
    %v3358 = vpop.f32.mrf.mxu0
    %3359 = vmatprep.mubr.f32.mxu0 0.0
    %3360 = vmatmul.mubr.f32.gmra.mxu0 %v3071
    %v3361 = vpop.f32.mrf.mxu0
    %v3362 = vadd.f32 %v3118, %v3361
    %v3363 = vpop.f32.mrf.mxu0
    %3364 = vmatprep.mubr.f32.mxu0 0.0
    %3365 = vmatmul.mubr.f32.gmra.mxu0 %v3072
    %v3366 = vpop.f32.mrf.mxu0
    %v3367 = vadd.f32 %v3118, %v3366
    %v3368 = vpop.f32.mrf.mxu0
    %3369 = vmatprep.mubr.f32.mxu0 0.0
    %3370 = vmatmul.mubr.f32.gmra.mxu0 %v3073
    %v3371 = vpop.f32.mrf.mxu0
    %v3372 = vadd.f32 %v3118, %v3371
    %v3373 = vpop.f32.mrf.mxu0
    %3374 = vmatprep.mubr.f32.mxu0 0.0
    %3375 = vmatmul.mubr.f32.gmra.mxu0 %v3074
    %v3376 = vpop.f32.mrf.mxu0
    %v3377 = vadd.f32 %v3118, %v3376
    %v3378 = vpop.f32.mrf.mxu0
    %3379 = vmatprep.mubr.f32.mxu0 0.0
    %3380 = vmatmul.mubr.f32.gmra.mxu0 %v3075
    %v3381 = vpop.f32.mrf.mxu0
    %v3382 = vadd.f32 %v3118, %v3381
    %v3383 = vpop.f32.mrf.mxu0
    %3384 = vmatprep.mubr.f32.mxu0 0.0
    %3385 = vmatmul.mubr.f32.gmra.mxu0 %v3076
    %v3386 = vpop.f32.mrf.mxu0
    %v3387 = vadd.f32 %v3118, %v3386
    %v3388 = vpop.f32.mrf.mxu0
    %3389 = vmatprep.mubr.f32.mxu0 0.0
    %3390 = vmatmul.mubr.f32.gmra.mxu0 %v3077
    %v3391 = vpop.f32.mrf.mxu0
    %v3392 = vadd.f32 %v3118, %v3391
    %v3393 = vpop.f32.mrf.mxu0
    %3394 = vmatprep.mubr.f32.mxu0 0.0
    %3395 = vmatmul.mubr.f32.gmra.mxu0 %v3078
    %v3396 = vpop.f32.mrf.mxu0
    %v3397 = vadd.f32 %v3118, %v3396
    %v3398 = vpop.f32.mrf.mxu0
    %3399 = vmatprep.mubr.f32.mxu0 0.0
    %3400 = vmatmul.mubr.f32.gmra.mxu0 %v3079
    %v3401 = vpop.f32.mrf.mxu0
    %v3402 = vadd.f32 %v3118, %v3401
    %v3403 = vpop.f32.mrf.mxu0
    %3404 = vmatprep.mubr.f32.mxu0 0.0
    %3405 = vmatmul.mubr.f32.gmra.mxu0 %v3080
    %v3406 = vpop.f32.mrf.mxu0
    %v3407 = vadd.f32 %v3118, %v3406
    %v3408 = vpop.f32.mrf.mxu0
    %3409 = vmatprep.mubr.f32.mxu0 0.0
    %3410 = vmatmul.mubr.f32.gmra.mxu0 %v3081
    %v3411 = vpop.f32.mrf.mxu0
    %v3412 = vadd.f32 %v3118, %v3411
    %v3413 = vpop.f32.mrf.mxu0
    %3414 = vmatprep.mubr.f32.mxu0 0.0
    %3415 = vmatmul.mubr.f32.gmra.mxu0 %v3082
    %v3416 = vpop.f32.mrf.mxu0
    %v3417 = vadd.f32 %v3118, %v3416
    %v3418 = vpop.f32.mrf.mxu0
    %3419 = vmatprep.mubr.f32.mxu0 0.0
    %3420 = vmatmul.mubr.f32.gmra.mxu0 %v3083
    %v3421 = vpop.f32.mrf.mxu0
    %v3422 = vadd.f32 %v3118, %v3421
    %v3423 = vpop.f32.mrf.mxu0
    %3424 = vdwg.mxu0
    %v3425 = vsel %vm524, %v3187, -inf
    %v3426 = vsel %vm524, %v3192, -inf
    %v3427 = vsel %vm524, %v3197, -inf
    %v3428 = vsel %vm524, %v3202, -inf
    %v3429 = vsel %vm524, %v3207, -inf
    %v3430 = vsel %vm524, %v3212, -inf
    %v3431 = vsel %vm524, %v3217, -inf
    %v3432 = vsel %vm524, %v3222, -inf
    %v3433 = vsel %vm524, %v3227, -inf
    %v3434 = vsel %vm524, %v3232, -inf
    %v3435 = vsel %vm524, %v3237, -inf
    %v3436 = vsel %vm524, %v3242, -inf
    %v3437 = vsel %vm524, %v3247, -inf
    %v3438 = vsel %vm524, %v3252, -inf
    %v3439 = vsel %vm524, %v3257, -inf
    %v3440 = vsel %vm524, %v3262, -inf
    %v3441 = vsel %vm524, %v3267, -inf
    %v3442 = vsel %vm524, %v3272, -inf
    %v3443 = vsel %vm524, %v3277, -inf
    %v3444 = vsel %vm524, %v3282, -inf
    %v3445 = vsel %vm524, %v3287, -inf
    %v3446 = vsel %vm524, %v3292, -inf
    %v3447 = vsel %vm524, %v3297, -inf
    %v3448 = vsel %vm524, %v3302, -inf
    %v3449 = vsel %vm524, %v3307, -inf
    %v3450 = vsel %vm524, %v3312, -inf
    %v3451 = vsel %vm524, %v3317, -inf
    %v3452 = vsel %vm524, %v3322, -inf
    %v3453 = vsel %vm524, %v3327, -inf
    %v3454 = vsel %vm524, %v3332, -inf
    %v3455 = vsel %vm524, %v3337, -inf
    %v3456 = vsel %vm524, %v3342, -inf
    %v3457 = vsel %vm524, %v3347, -inf
    %v3458 = vsel %vm524, %v3352, -inf
    %v3459 = vsel %vm524, %v3357, -inf
    %v3460 = vsel %vm524, %v3362, -inf
    %v3461 = vsel %vm524, %v3367, -inf
    %v3462 = vsel %vm524, %v3372, -inf
    %v3463 = vsel %vm524, %v3377, -inf
    %v3464 = vsel %vm524, %v3382, -inf
    %v3465 = vsel %vm524, %v3387, -inf
    %v3466 = vsel %vm524, %v3392, -inf
    %v3467 = vsel %vm524, %v3397, -inf
    %v3468 = vsel %vm524, %v3402, -inf
    %v3469 = vsel %vm524, %v3407, -inf
    %v3470 = vsel %vm524, %v3412, -inf
    %v3471 = vsel %vm524, %v3417, -inf
    %v3472 = vsel %vm524, %v3422, -inf
    %3473 = vmax.xlane.f32.xlu0 %v3425
    %v3474 = vpop.xlane.xlu0 %3473
    %3475 = vmax.xlane.f32.xlu0 %v3426
    %v3476 = vpop.xlane.xlu0 %3475
    %3477 = vmax.xlane.f32.xlu0 %v3427
    %v3478 = vpop.xlane.xlu0 %3477
    %3479 = vmax.xlane.f32.xlu0 %v3428
    %v3480 = vpop.xlane.xlu0 %3479
    %3481 = vmax.xlane.f32.xlu0 %v3429
    %v3482 = vpop.xlane.xlu0 %3481
    %3483 = vmax.xlane.f32.xlu0 %v3430
    %v3484 = vpop.xlane.xlu0 %3483
    %3485 = vmax.xlane.f32.xlu0 %v3431
    %v3486 = vpop.xlane.xlu0 %3485
    %3487 = vmax.xlane.f32.xlu0 %v3432
    %v3488 = vpop.xlane.xlu0 %3487
    %3489 = vmax.xlane.f32.xlu0 %v3433
    %v3490 = vpop.xlane.xlu0 %3489
    %3491 = vmax.xlane.f32.xlu0 %v3434
    %v3492 = vpop.xlane.xlu0 %3491
    %3493 = vmax.xlane.f32.xlu0 %v3435
    %v3494 = vpop.xlane.xlu0 %3493
    %3495 = vmax.xlane.f32.xlu0 %v3436
    %v3496 = vpop.xlane.xlu0 %3495
    %3497 = vmax.xlane.f32.xlu0 %v3437
    %v3498 = vpop.xlane.xlu0 %3497
    %3499 = vmax.xlane.f32.xlu0 %v3438
    %v3500 = vpop.xlane.xlu0 %3499
    %3501 = vmax.xlane.f32.xlu0 %v3439
    %v3502 = vpop.xlane.xlu0 %3501
    %3503 = vmax.xlane.f32.xlu0 %v3440
    %v3504 = vpop.xlane.xlu0 %3503
    %3505 = vmax.xlane.f32.xlu0 %v3441
    %v3506 = vpop.xlane.xlu0 %3505
    %3507 = vmax.xlane.f32.xlu0 %v3442
    %v3508 = vpop.xlane.xlu0 %3507
    %3509 = vmax.xlane.f32.xlu0 %v3443
    %v3510 = vpop.xlane.xlu0 %3509
    %3511 = vmax.xlane.f32.xlu0 %v3444
    %v3512 = vpop.xlane.xlu0 %3511
    %3513 = vmax.xlane.f32.xlu0 %v3445
    %v3514 = vpop.xlane.xlu0 %3513
    %3515 = vmax.xlane.f32.xlu0 %v3446
    %v3516 = vpop.xlane.xlu0 %3515
    %3517 = vmax.xlane.f32.xlu0 %v3447
    %v3518 = vpop.xlane.xlu0 %3517
    %3519 = vmax.xlane.f32.xlu0 %v3448
    %v3520 = vpop.xlane.xlu0 %3519
    %3521 = vmax.xlane.f32.xlu0 %v3449
    %v3522 = vpop.xlane.xlu0 %3521
    %3523 = vmax.xlane.f32.xlu0 %v3450
    %v3524 = vpop.xlane.xlu0 %3523
    %3525 = vmax.xlane.f32.xlu0 %v3451
    %v3526 = vpop.xlane.xlu0 %3525
    %3527 = vmax.xlane.f32.xlu0 %v3452
    %v3528 = vpop.xlane.xlu0 %3527
    %3529 = vmax.xlane.f32.xlu0 %v3453
    %v3530 = vpop.xlane.xlu0 %3529
    %3531 = vmax.xlane.f32.xlu0 %v3454
    %v3532 = vpop.xlane.xlu0 %3531
    %3533 = vmax.xlane.f32.xlu0 %v3455
    %v3534 = vpop.xlane.xlu0 %3533
    %3535 = vmax.xlane.f32.xlu0 %v3456
    %v3536 = vpop.xlane.xlu0 %3535
    %3537 = vmax.xlane.f32.xlu0 %v3457
    %v3538 = vpop.xlane.xlu0 %3537
    %3539 = vmax.xlane.f32.xlu0 %v3458
    %v3540 = vpop.xlane.xlu0 %3539
    %3541 = vmax.xlane.f32.xlu0 %v3459
    %v3542 = vpop.xlane.xlu0 %3541
    %3543 = vmax.xlane.f32.xlu0 %v3460
    %v3544 = vpop.xlane.xlu0 %3543
    %3545 = vmax.xlane.f32.xlu0 %v3461
    %v3546 = vpop.xlane.xlu0 %3545
    %3547 = vmax.xlane.f32.xlu0 %v3462
    %v3548 = vpop.xlane.xlu0 %3547
    %3549 = vmax.xlane.f32.xlu0 %v3463
    %v3550 = vpop.xlane.xlu0 %3549
    %3551 = vmax.xlane.f32.xlu0 %v3464
    %v3552 = vpop.xlane.xlu0 %3551
    %3553 = vmax.xlane.f32.xlu0 %v3465
    %v3554 = vpop.xlane.xlu0 %3553
    %3555 = vmax.xlane.f32.xlu0 %v3466
    %v3556 = vpop.xlane.xlu0 %3555
    %3557 = vmax.xlane.f32.xlu0 %v3467
    %v3558 = vpop.xlane.xlu0 %3557
    %3559 = vmax.xlane.f32.xlu0 %v3468
    %v3560 = vpop.xlane.xlu0 %3559
    %3561 = vmax.xlane.f32.xlu0 %v3469
    %v3562 = vpop.xlane.xlu0 %3561
    %3563 = vmax.xlane.f32.xlu0 %v3470
    %v3564 = vpop.xlane.xlu0 %3563
    %3565 = vmax.xlane.f32.xlu0 %v3471
    %v3566 = vpop.xlane.xlu0 %3565
    %3567 = vmax.xlane.f32.xlu0 %v3472
    %v3568 = vpop.xlane.xlu0 %3567
    %vm3569 = vcmp.ge.f32.partialorder %v3425, %v3474
    %vm3570 = vcmp.ge.f32.partialorder %v3426, %v3476
    %vm3571 = vcmp.ge.f32.partialorder %v3427, %v3478
    %vm3572 = vcmp.ge.f32.partialorder %v3428, %v3480
    %vm3573 = vcmp.ge.f32.partialorder %v3429, %v3482
    %vm3574 = vcmp.ge.f32.partialorder %v3430, %v3484
    %vm3575 = vcmp.ge.f32.partialorder %v3431, %v3486
    %vm3576 = vcmp.ge.f32.partialorder %v3432, %v3488
    %vm3577 = vcmp.ge.f32.partialorder %v3433, %v3490
    %vm3578 = vcmp.ge.f32.partialorder %v3434, %v3492
    %vm3579 = vcmp.ge.f32.partialorder %v3435, %v3494
    %vm3580 = vcmp.ge.f32.partialorder %v3436, %v3496
    %vm3581 = vcmp.ge.f32.partialorder %v3437, %v3498
    %vm3582 = vcmp.ge.f32.partialorder %v3438, %v3500
    %vm3583 = vcmp.ge.f32.partialorder %v3439, %v3502
    %vm3584 = vcmp.ge.f32.partialorder %v3440, %v3504
    %vm3585 = vcmp.ge.f32.partialorder %v3441, %v3506
    %vm3586 = vcmp.ge.f32.partialorder %v3442, %v3508
    %vm3587 = vcmp.ge.f32.partialorder %v3443, %v3510
    %vm3588 = vcmp.ge.f32.partialorder %v3444, %v3512
    %vm3589 = vcmp.ge.f32.partialorder %v3445, %v3514
    %vm3590 = vcmp.ge.f32.partialorder %v3446, %v3516
    %vm3591 = vcmp.ge.f32.partialorder %v3447, %v3518
    %vm3592 = vcmp.ge.f32.partialorder %v3448, %v3520
    %vm3593 = vcmp.ge.f32.partialorder %v3449, %v3522
    %vm3594 = vcmp.ge.f32.partialorder %v3450, %v3524
    %vm3595 = vcmp.ge.f32.partialorder %v3451, %v3526
    %vm3596 = vcmp.ge.f32.partialorder %v3452, %v3528
    %vm3597 = vcmp.ge.f32.partialorder %v3453, %v3530
    %vm3598 = vcmp.ge.f32.partialorder %v3454, %v3532
    %vm3599 = vcmp.ge.f32.partialorder %v3455, %v3534
    %vm3600 = vcmp.ge.f32.partialorder %v3456, %v3536
    %vm3601 = vcmp.ge.f32.partialorder %v3457, %v3538
    %vm3602 = vcmp.ge.f32.partialorder %v3458, %v3540
    %vm3603 = vcmp.ge.f32.partialorder %v3459, %v3542
    %vm3604 = vcmp.ge.f32.partialorder %v3460, %v3544
    %vm3605 = vcmp.ge.f32.partialorder %v3461, %v3546
    %vm3606 = vcmp.ge.f32.partialorder %v3462, %v3548
    %vm3607 = vcmp.ge.f32.partialorder %v3463, %v3550
    %vm3608 = vcmp.ge.f32.partialorder %v3464, %v3552
    %vm3609 = vcmp.ge.f32.partialorder %v3465, %v3554
    %vm3610 = vcmp.ge.f32.partialorder %v3466, %v3556
    %vm3611 = vcmp.ge.f32.partialorder %v3467, %v3558
    %vm3612 = vcmp.ge.f32.partialorder %v3468, %v3560
    %vm3613 = vcmp.ge.f32.partialorder %v3469, %v3562
    %vm3614 = vcmp.ge.f32.partialorder %v3470, %v3564
    %vm3615 = vcmp.ge.f32.partialorder %v3471, %v3566
    %vm3616 = vcmp.ge.f32.partialorder %v3472, %v3568
    %v3617 = vsel %vm3569, -inf, %v3425
    %v3618 = vsel %vm3570, -inf, %v3426
    %v3619 = vsel %vm3571, -inf, %v3427
    %v3620 = vsel %vm3572, -inf, %v3428
    %v3621 = vsel %vm3573, -inf, %v3429
    %v3622 = vsel %vm3574, -inf, %v3430
    %v3623 = vsel %vm3575, -inf, %v3431
    %v3624 = vsel %vm3576, -inf, %v3432
    %v3625 = vsel %vm3577, -inf, %v3433
    %v3626 = vsel %vm3578, -inf, %v3434
    %v3627 = vsel %vm3579, -inf, %v3435
    %v3628 = vsel %vm3580, -inf, %v3436
    %v3629 = vsel %vm3581, -inf, %v3437
    %v3630 = vsel %vm3582, -inf, %v3438
    %v3631 = vsel %vm3583, -inf, %v3439
    %v3632 = vsel %vm3584, -inf, %v3440
    %v3633 = vsel %vm3585, -inf, %v3441
    %v3634 = vsel %vm3586, -inf, %v3442
    %v3635 = vsel %vm3587, -inf, %v3443
    %v3636 = vsel %vm3588, -inf, %v3444
    %v3637 = vsel %vm3589, -inf, %v3445
    %v3638 = vsel %vm3590, -inf, %v3446
    %v3639 = vsel %vm3591, -inf, %v3447
    %v3640 = vsel %vm3592, -inf, %v3448
    %v3641 = vsel %vm3593, -inf, %v3449
    %v3642 = vsel %vm3594, -inf, %v3450
    %v3643 = vsel %vm3595, -inf, %v3451
    %v3644 = vsel %vm3596, -inf, %v3452
    %v3645 = vsel %vm3597, -inf, %v3453
    %v3646 = vsel %vm3598, -inf, %v3454
    %v3647 = vsel %vm3599, -inf, %v3455
    %v3648 = vsel %vm3600, -inf, %v3456
    %v3649 = vsel %vm3601, -inf, %v3457
    %v3650 = vsel %vm3602, -inf, %v3458
    %v3651 = vsel %vm3603, -inf, %v3459
    %v3652 = vsel %vm3604, -inf, %v3460
    %v3653 = vsel %vm3605, -inf, %v3461
    %v3654 = vsel %vm3606, -inf, %v3462
    %v3655 = vsel %vm3607, -inf, %v3463
    %v3656 = vsel %vm3608, -inf, %v3464
    %v3657 = vsel %vm3609, -inf, %v3465
    %v3658 = vsel %vm3610, -inf, %v3466
    %v3659 = vsel %vm3611, -inf, %v3467
    %v3660 = vsel %vm3612, -inf, %v3468
    %v3661 = vsel %vm3613, -inf, %v3469
    %v3662 = vsel %vm3614, -inf, %v3470
    %v3663 = vsel %vm3615, -inf, %v3471
    %v3664 = vsel %vm3616, -inf, %v3472
    %3665 = vmax.xlane.f32.xlu0 %v3617
    %v3666 = vpop.xlane.xlu0 %3665
    %3667 = vmax.xlane.f32.xlu0 %v3618
    %v3668 = vpop.xlane.xlu0 %3667
    %3669 = vmax.xlane.f32.xlu0 %v3619
    %v3670 = vpop.xlane.xlu0 %3669
    %3671 = vmax.xlane.f32.xlu0 %v3620
    %v3672 = vpop.xlane.xlu0 %3671
    %3673 = vmax.xlane.f32.xlu0 %v3621
    %v3674 = vpop.xlane.xlu0 %3673
    %3675 = vmax.xlane.f32.xlu0 %v3622
    %v3676 = vpop.xlane.xlu0 %3675
    %3677 = vmax.xlane.f32.xlu0 %v3623
    %v3678 = vpop.xlane.xlu0 %3677
    %3679 = vmax.xlane.f32.xlu0 %v3624
    %v3680 = vpop.xlane.xlu0 %3679
    %3681 = vmax.xlane.f32.xlu0 %v3625
    %v3682 = vpop.xlane.xlu0 %3681
    %3683 = vmax.xlane.f32.xlu0 %v3626
    %v3684 = vpop.xlane.xlu0 %3683
    %3685 = vmax.xlane.f32.xlu0 %v3627
    %v3686 = vpop.xlane.xlu0 %3685
    %3687 = vmax.xlane.f32.xlu0 %v3628
    %v3688 = vpop.xlane.xlu0 %3687
    %3689 = vmax.xlane.f32.xlu0 %v3629
    %v3690 = vpop.xlane.xlu0 %3689
    %3691 = vmax.xlane.f32.xlu0 %v3630
    %v3692 = vpop.xlane.xlu0 %3691
    %3693 = vmax.xlane.f32.xlu0 %v3631
    %v3694 = vpop.xlane.xlu0 %3693
    %3695 = vmax.xlane.f32.xlu0 %v3632
    %v3696 = vpop.xlane.xlu0 %3695
    %3697 = vmax.xlane.f32.xlu0 %v3633
    %v3698 = vpop.xlane.xlu0 %3697
    %3699 = vmax.xlane.f32.xlu0 %v3634
    %v3700 = vpop.xlane.xlu0 %3699
    %3701 = vmax.xlane.f32.xlu0 %v3635
    %v3702 = vpop.xlane.xlu0 %3701
    %3703 = vmax.xlane.f32.xlu0 %v3636
    %v3704 = vpop.xlane.xlu0 %3703
    %3705 = vmax.xlane.f32.xlu0 %v3637
    %v3706 = vpop.xlane.xlu0 %3705
    %3707 = vmax.xlane.f32.xlu0 %v3638
    %v3708 = vpop.xlane.xlu0 %3707
    %3709 = vmax.xlane.f32.xlu0 %v3639
    %v3710 = vpop.xlane.xlu0 %3709
    %3711 = vmax.xlane.f32.xlu0 %v3640
    %v3712 = vpop.xlane.xlu0 %3711
    %3713 = vmax.xlane.f32.xlu0 %v3641
    %v3714 = vpop.xlane.xlu0 %3713
    %3715 = vmax.xlane.f32.xlu0 %v3642
    %v3716 = vpop.xlane.xlu0 %3715
    %3717 = vmax.xlane.f32.xlu0 %v3643
    %v3718 = vpop.xlane.xlu0 %3717
    %3719 = vmax.xlane.f32.xlu0 %v3644
    %v3720 = vpop.xlane.xlu0 %3719
    %3721 = vmax.xlane.f32.xlu0 %v3645
    %v3722 = vpop.xlane.xlu0 %3721
    %3723 = vmax.xlane.f32.xlu0 %v3646
    %v3724 = vpop.xlane.xlu0 %3723
    %3725 = vmax.xlane.f32.xlu0 %v3647
    %v3726 = vpop.xlane.xlu0 %3725
    %3727 = vmax.xlane.f32.xlu0 %v3648
    %v3728 = vpop.xlane.xlu0 %3727
    %3729 = vmax.xlane.f32.xlu0 %v3649
    %v3730 = vpop.xlane.xlu0 %3729
    %3731 = vmax.xlane.f32.xlu0 %v3650
    %v3732 = vpop.xlane.xlu0 %3731
    %3733 = vmax.xlane.f32.xlu0 %v3651
    %v3734 = vpop.xlane.xlu0 %3733
    %3735 = vmax.xlane.f32.xlu0 %v3652
    %v3736 = vpop.xlane.xlu0 %3735
    %3737 = vmax.xlane.f32.xlu0 %v3653
    %v3738 = vpop.xlane.xlu0 %3737
    %3739 = vmax.xlane.f32.xlu0 %v3654
    %v3740 = vpop.xlane.xlu0 %3739
    %3741 = vmax.xlane.f32.xlu0 %v3655
    %v3742 = vpop.xlane.xlu0 %3741
    %3743 = vmax.xlane.f32.xlu0 %v3656
    %v3744 = vpop.xlane.xlu0 %3743
    %3745 = vmax.xlane.f32.xlu0 %v3657
    %v3746 = vpop.xlane.xlu0 %3745
    %3747 = vmax.xlane.f32.xlu0 %v3658
    %v3748 = vpop.xlane.xlu0 %3747
    %3749 = vmax.xlane.f32.xlu0 %v3659
    %v3750 = vpop.xlane.xlu0 %3749
    %3751 = vmax.xlane.f32.xlu0 %v3660
    %v3752 = vpop.xlane.xlu0 %3751
    %3753 = vmax.xlane.f32.xlu0 %v3661
    %v3754 = vpop.xlane.xlu0 %3753
    %3755 = vmax.xlane.f32.xlu0 %v3662
    %v3756 = vpop.xlane.xlu0 %3755
    %3757 = vmax.xlane.f32.xlu0 %v3663
    %v3758 = vpop.xlane.xlu0 %3757
    %3759 = vmax.xlane.f32.xlu0 %v3664
    %v3760 = vpop.xlane.xlu0 %3759
    %vm3761 = vcmp.ge.f32.partialorder %v3617, %v3666
    %vm3762 = vcmp.ge.f32.partialorder %v3618, %v3668
    %vm3763 = vcmp.ge.f32.partialorder %v3619, %v3670
    %vm3764 = vcmp.ge.f32.partialorder %v3620, %v3672
    %vm3765 = vcmp.ge.f32.partialorder %v3621, %v3674
    %vm3766 = vcmp.ge.f32.partialorder %v3622, %v3676
    %vm3767 = vcmp.ge.f32.partialorder %v3623, %v3678
    %vm3768 = vcmp.ge.f32.partialorder %v3624, %v3680
    %vm3769 = vcmp.ge.f32.partialorder %v3625, %v3682
    %vm3770 = vcmp.ge.f32.partialorder %v3626, %v3684
    %vm3771 = vcmp.ge.f32.partialorder %v3627, %v3686
    %vm3772 = vcmp.ge.f32.partialorder %v3628, %v3688
    %vm3773 = vcmp.ge.f32.partialorder %v3629, %v3690
    %vm3774 = vcmp.ge.f32.partialorder %v3630, %v3692
    %vm3775 = vcmp.ge.f32.partialorder %v3631, %v3694
    %vm3776 = vcmp.ge.f32.partialorder %v3632, %v3696
    %vm3777 = vcmp.ge.f32.partialorder %v3633, %v3698
    %vm3778 = vcmp.ge.f32.partialorder %v3634, %v3700
    %vm3779 = vcmp.ge.f32.partialorder %v3635, %v3702
    %vm3780 = vcmp.ge.f32.partialorder %v3636, %v3704
    %vm3781 = vcmp.ge.f32.partialorder %v3637, %v3706
    %vm3782 = vcmp.ge.f32.partialorder %v3638, %v3708
    %vm3783 = vcmp.ge.f32.partialorder %v3639, %v3710
    %vm3784 = vcmp.ge.f32.partialorder %v3640, %v3712
    %vm3785 = vcmp.ge.f32.partialorder %v3641, %v3714
    %vm3786 = vcmp.ge.f32.partialorder %v3642, %v3716
    %vm3787 = vcmp.ge.f32.partialorder %v3643, %v3718
    %vm3788 = vcmp.ge.f32.partialorder %v3644, %v3720
    %vm3789 = vcmp.ge.f32.partialorder %v3645, %v3722
    %vm3790 = vcmp.ge.f32.partialorder %v3646, %v3724
    %vm3791 = vcmp.ge.f32.partialorder %v3647, %v3726
    %vm3792 = vcmp.ge.f32.partialorder %v3648, %v3728
    %vm3793 = vcmp.ge.f32.partialorder %v3649, %v3730
    %vm3794 = vcmp.ge.f32.partialorder %v3650, %v3732
    %vm3795 = vcmp.ge.f32.partialorder %v3651, %v3734
    %vm3796 = vcmp.ge.f32.partialorder %v3652, %v3736
    %vm3797 = vcmp.ge.f32.partialorder %v3653, %v3738
    %vm3798 = vcmp.ge.f32.partialorder %v3654, %v3740
    %vm3799 = vcmp.ge.f32.partialorder %v3655, %v3742
    %vm3800 = vcmp.ge.f32.partialorder %v3656, %v3744
    %vm3801 = vcmp.ge.f32.partialorder %v3657, %v3746
    %vm3802 = vcmp.ge.f32.partialorder %v3658, %v3748
    %vm3803 = vcmp.ge.f32.partialorder %v3659, %v3750
    %vm3804 = vcmp.ge.f32.partialorder %v3660, %v3752
    %vm3805 = vcmp.ge.f32.partialorder %v3661, %v3754
    %vm3806 = vcmp.ge.f32.partialorder %v3662, %v3756
    %vm3807 = vcmp.ge.f32.partialorder %v3663, %v3758
    %vm3808 = vcmp.ge.f32.partialorder %v3664, %v3760
    %v3809 = vsel %vm3761, -inf, %v3617
    %v3810 = vsel %vm3762, -inf, %v3618
    %v3811 = vsel %vm3763, -inf, %v3619
    %v3812 = vsel %vm3764, -inf, %v3620
    %v3813 = vsel %vm3765, -inf, %v3621
    %v3814 = vsel %vm3766, -inf, %v3622
    %v3815 = vsel %vm3767, -inf, %v3623
    %v3816 = vsel %vm3768, -inf, %v3624
    %v3817 = vsel %vm3769, -inf, %v3625
    %v3818 = vsel %vm3770, -inf, %v3626
    %v3819 = vsel %vm3771, -inf, %v3627
    %v3820 = vsel %vm3772, -inf, %v3628
    %v3821 = vsel %vm3773, -inf, %v3629
    %v3822 = vsel %vm3774, -inf, %v3630
    %v3823 = vsel %vm3775, -inf, %v3631
    %v3824 = vsel %vm3776, -inf, %v3632
    %v3825 = vsel %vm3777, -inf, %v3633
    %v3826 = vsel %vm3778, -inf, %v3634
    %v3827 = vsel %vm3779, -inf, %v3635
    %v3828 = vsel %vm3780, -inf, %v3636
    %v3829 = vsel %vm3781, -inf, %v3637
    %v3830 = vsel %vm3782, -inf, %v3638
    %v3831 = vsel %vm3783, -inf, %v3639
    %v3832 = vsel %vm3784, -inf, %v3640
    %v3833 = vsel %vm3785, -inf, %v3641
    %v3834 = vsel %vm3786, -inf, %v3642
    %v3835 = vsel %vm3787, -inf, %v3643
    %v3836 = vsel %vm3788, -inf, %v3644
    %v3837 = vsel %vm3789, -inf, %v3645
    %v3838 = vsel %vm3790, -inf, %v3646
    %v3839 = vsel %vm3791, -inf, %v3647
    %v3840 = vsel %vm3792, -inf, %v3648
    %v3841 = vsel %vm3793, -inf, %v3649
    %v3842 = vsel %vm3794, -inf, %v3650
    %v3843 = vsel %vm3795, -inf, %v3651
    %v3844 = vsel %vm3796, -inf, %v3652
    %v3845 = vsel %vm3797, -inf, %v3653
    %v3846 = vsel %vm3798, -inf, %v3654
    %v3847 = vsel %vm3799, -inf, %v3655
    %v3848 = vsel %vm3800, -inf, %v3656
    %v3849 = vsel %vm3801, -inf, %v3657
    %v3850 = vsel %vm3802, -inf, %v3658
    %v3851 = vsel %vm3803, -inf, %v3659
    %v3852 = vsel %vm3804, -inf, %v3660
    %v3853 = vsel %vm3805, -inf, %v3661
    %v3854 = vsel %vm3806, -inf, %v3662
    %v3855 = vsel %vm3807, -inf, %v3663
    %v3856 = vsel %vm3808, -inf, %v3664
    %3857 = vmax.xlane.f32.xlu0 %v3809
    %v3858 = vpop.xlane.xlu0 %3857
    %3859 = vmax.xlane.f32.xlu0 %v3810
    %v3860 = vpop.xlane.xlu0 %3859
    %3861 = vmax.xlane.f32.xlu0 %v3811
    %v3862 = vpop.xlane.xlu0 %3861
    %3863 = vmax.xlane.f32.xlu0 %v3812
    %v3864 = vpop.xlane.xlu0 %3863
    %3865 = vmax.xlane.f32.xlu0 %v3813
    %v3866 = vpop.xlane.xlu0 %3865
    %3867 = vmax.xlane.f32.xlu0 %v3814
    %v3868 = vpop.xlane.xlu0 %3867
    %3869 = vmax.xlane.f32.xlu0 %v3815
    %v3870 = vpop.xlane.xlu0 %3869
    %3871 = vmax.xlane.f32.xlu0 %v3816
    %v3872 = vpop.xlane.xlu0 %3871
    %3873 = vmax.xlane.f32.xlu0 %v3817
    %v3874 = vpop.xlane.xlu0 %3873
    %3875 = vmax.xlane.f32.xlu0 %v3818
    %v3876 = vpop.xlane.xlu0 %3875
    %3877 = vmax.xlane.f32.xlu0 %v3819
    %v3878 = vpop.xlane.xlu0 %3877
    %3879 = vmax.xlane.f32.xlu0 %v3820
    %v3880 = vpop.xlane.xlu0 %3879
    %3881 = vmax.xlane.f32.xlu0 %v3821
    %v3882 = vpop.xlane.xlu0 %3881
    %3883 = vmax.xlane.f32.xlu0 %v3822
    %v3884 = vpop.xlane.xlu0 %3883
    %3885 = vmax.xlane.f32.xlu0 %v3823
    %v3886 = vpop.xlane.xlu0 %3885
    %3887 = vmax.xlane.f32.xlu0 %v3824
    %v3888 = vpop.xlane.xlu0 %3887
    %3889 = vmax.xlane.f32.xlu0 %v3825
    %v3890 = vpop.xlane.xlu0 %3889
    %3891 = vmax.xlane.f32.xlu0 %v3826
    %v3892 = vpop.xlane.xlu0 %3891
    %3893 = vmax.xlane.f32.xlu0 %v3827
    %v3894 = vpop.xlane.xlu0 %3893
    %3895 = vmax.xlane.f32.xlu0 %v3828
    %v3896 = vpop.xlane.xlu0 %3895
    %3897 = vmax.xlane.f32.xlu0 %v3829
    %v3898 = vpop.xlane.xlu0 %3897
    %3899 = vmax.xlane.f32.xlu0 %v3830
    %v3900 = vpop.xlane.xlu0 %3899
    %3901 = vmax.xlane.f32.xlu0 %v3831
    %v3902 = vpop.xlane.xlu0 %3901
    %3903 = vmax.xlane.f32.xlu0 %v3832
    %v3904 = vpop.xlane.xlu0 %3903
    %3905 = vmax.xlane.f32.xlu0 %v3833
    %v3906 = vpop.xlane.xlu0 %3905
    %3907 = vmax.xlane.f32.xlu0 %v3834
    %v3908 = vpop.xlane.xlu0 %3907
    %3909 = vmax.xlane.f32.xlu0 %v3835
    %v3910 = vpop.xlane.xlu0 %3909
    %3911 = vmax.xlane.f32.xlu0 %v3836
    %v3912 = vpop.xlane.xlu0 %3911
    %3913 = vmax.xlane.f32.xlu0 %v3837
    %v3914 = vpop.xlane.xlu0 %3913
    %3915 = vmax.xlane.f32.xlu0 %v3838
    %v3916 = vpop.xlane.xlu0 %3915
    %3917 = vmax.xlane.f32.xlu0 %v3839
    %v3918 = vpop.xlane.xlu0 %3917
    %3919 = vmax.xlane.f32.xlu0 %v3840
    %v3920 = vpop.xlane.xlu0 %3919
    %3921 = vmax.xlane.f32.xlu0 %v3841
    %v3922 = vpop.xlane.xlu0 %3921
    %3923 = vmax.xlane.f32.xlu0 %v3842
    %v3924 = vpop.xlane.xlu0 %3923
    %3925 = vmax.xlane.f32.xlu0 %v3843
    %v3926 = vpop.xlane.xlu0 %3925
    %3927 = vmax.xlane.f32.xlu0 %v3844
    %v3928 = vpop.xlane.xlu0 %3927
    %3929 = vmax.xlane.f32.xlu0 %v3845
    %v3930 = vpop.xlane.xlu0 %3929
    %3931 = vmax.xlane.f32.xlu0 %v3846
    %v3932 = vpop.xlane.xlu0 %3931
    %3933 = vmax.xlane.f32.xlu0 %v3847
    %v3934 = vpop.xlane.xlu0 %3933
    %3935 = vmax.xlane.f32.xlu0 %v3848
    %v3936 = vpop.xlane.xlu0 %3935
    %3937 = vmax.xlane.f32.xlu0 %v3849
    %v3938 = vpop.xlane.xlu0 %3937
    %3939 = vmax.xlane.f32.xlu0 %v3850
    %v3940 = vpop.xlane.xlu0 %3939
    %3941 = vmax.xlane.f32.xlu0 %v3851
    %v3942 = vpop.xlane.xlu0 %3941
    %3943 = vmax.xlane.f32.xlu0 %v3852
    %v3944 = vpop.xlane.xlu0 %3943
    %3945 = vmax.xlane.f32.xlu0 %v3853
    %v3946 = vpop.xlane.xlu0 %3945
    %3947 = vmax.xlane.f32.xlu0 %v3854
    %v3948 = vpop.xlane.xlu0 %3947
    %3949 = vmax.xlane.f32.xlu0 %v3855
    %v3950 = vpop.xlane.xlu0 %3949
    %3951 = vmax.xlane.f32.xlu0 %v3856
    %v3952 = vpop.xlane.xlu0 %3951
    %vm3953 = vcmp.ge.f32.partialorder %v3809, %v3858
    %vm3954 = vcmp.ge.f32.partialorder %v3810, %v3860
    %vm3955 = vcmp.ge.f32.partialorder %v3811, %v3862
    %vm3956 = vcmp.ge.f32.partialorder %v3812, %v3864
    %vm3957 = vcmp.ge.f32.partialorder %v3813, %v3866
    %vm3958 = vcmp.ge.f32.partialorder %v3814, %v3868
    %vm3959 = vcmp.ge.f32.partialorder %v3815, %v3870
    %vm3960 = vcmp.ge.f32.partialorder %v3816, %v3872
    %vm3961 = vcmp.ge.f32.partialorder %v3817, %v3874
    %vm3962 = vcmp.ge.f32.partialorder %v3818, %v3876
    %vm3963 = vcmp.ge.f32.partialorder %v3819, %v3878
    %vm3964 = vcmp.ge.f32.partialorder %v3820, %v3880
    %vm3965 = vcmp.ge.f32.partialorder %v3821, %v3882
    %vm3966 = vcmp.ge.f32.partialorder %v3822, %v3884
    %vm3967 = vcmp.ge.f32.partialorder %v3823, %v3886
    %vm3968 = vcmp.ge.f32.partialorder %v3824, %v3888
    %vm3969 = vcmp.ge.f32.partialorder %v3825, %v3890
    %vm3970 = vcmp.ge.f32.partialorder %v3826, %v3892
    %vm3971 = vcmp.ge.f32.partialorder %v3827, %v3894
    %vm3972 = vcmp.ge.f32.partialorder %v3828, %v3896
    %vm3973 = vcmp.ge.f32.partialorder %v3829, %v3898
    %vm3974 = vcmp.ge.f32.partialorder %v3830, %v3900
    %vm3975 = vcmp.ge.f32.partialorder %v3831, %v3902
    %vm3976 = vcmp.ge.f32.partialorder %v3832, %v3904
    %vm3977 = vcmp.ge.f32.partialorder %v3833, %v3906
    %vm3978 = vcmp.ge.f32.partialorder %v3834, %v3908
    %vm3979 = vcmp.ge.f32.partialorder %v3835, %v3910
    %vm3980 = vcmp.ge.f32.partialorder %v3836, %v3912
    %vm3981 = vcmp.ge.f32.partialorder %v3837, %v3914
    %vm3982 = vcmp.ge.f32.partialorder %v3838, %v3916
    %vm3983 = vcmp.ge.f32.partialorder %v3839, %v3918
    %vm3984 = vcmp.ge.f32.partialorder %v3840, %v3920
    %vm3985 = vcmp.ge.f32.partialorder %v3841, %v3922
    %vm3986 = vcmp.ge.f32.partialorder %v3842, %v3924
    %vm3987 = vcmp.ge.f32.partialorder %v3843, %v3926
    %vm3988 = vcmp.ge.f32.partialorder %v3844, %v3928
    %vm3989 = vcmp.ge.f32.partialorder %v3845, %v3930
    %vm3990 = vcmp.ge.f32.partialorder %v3846, %v3932
    %vm3991 = vcmp.ge.f32.partialorder %v3847, %v3934
    %vm3992 = vcmp.ge.f32.partialorder %v3848, %v3936
    %vm3993 = vcmp.ge.f32.partialorder %v3849, %v3938
    %vm3994 = vcmp.ge.f32.partialorder %v3850, %v3940
    %vm3995 = vcmp.ge.f32.partialorder %v3851, %v3942
    %vm3996 = vcmp.ge.f32.partialorder %v3852, %v3944
    %vm3997 = vcmp.ge.f32.partialorder %v3853, %v3946
    %vm3998 = vcmp.ge.f32.partialorder %v3854, %v3948
    %vm3999 = vcmp.ge.f32.partialorder %v3855, %v3950
    %vm4000 = vcmp.ge.f32.partialorder %v3856, %v3952
    %v4001 = vsel %vm3953, -inf, %v3809
    %v4002 = vsel %vm3954, -inf, %v3810
    %v4003 = vsel %vm3955, -inf, %v3811
    %v4004 = vsel %vm3956, -inf, %v3812
    %v4005 = vsel %vm3957, -inf, %v3813
    %v4006 = vsel %vm3958, -inf, %v3814
    %v4007 = vsel %vm3959, -inf, %v3815
    %v4008 = vsel %vm3960, -inf, %v3816
    %v4009 = vsel %vm3961, -inf, %v3817
    %v4010 = vsel %vm3962, -inf, %v3818
    %v4011 = vsel %vm3963, -inf, %v3819
    %v4012 = vsel %vm3964, -inf, %v3820
    %v4013 = vsel %vm3965, -inf, %v3821
    %v4014 = vsel %vm3966, -inf, %v3822
    %v4015 = vsel %vm3967, -inf, %v3823
    %v4016 = vsel %vm3968, -inf, %v3824
    %v4017 = vsel %vm3969, -inf, %v3825
    %v4018 = vsel %vm3970, -inf, %v3826
    %v4019 = vsel %vm3971, -inf, %v3827
    %v4020 = vsel %vm3972, -inf, %v3828
    %v4021 = vsel %vm3973, -inf, %v3829
    %v4022 = vsel %vm3974, -inf, %v3830
    %v4023 = vsel %vm3975, -inf, %v3831
    %v4024 = vsel %vm3976, -inf, %v3832
    %v4025 = vsel %vm3977, -inf, %v3833
    %v4026 = vsel %vm3978, -inf, %v3834
    %v4027 = vsel %vm3979, -inf, %v3835
    %v4028 = vsel %vm3980, -inf, %v3836
    %v4029 = vsel %vm3981, -inf, %v3837
    %v4030 = vsel %vm3982, -inf, %v3838
    %v4031 = vsel %vm3983, -inf, %v3839
    %v4032 = vsel %vm3984, -inf, %v3840
    %v4033 = vsel %vm3985, -inf, %v3841
    %v4034 = vsel %vm3986, -inf, %v3842
    %v4035 = vsel %vm3987, -inf, %v3843
    %v4036 = vsel %vm3988, -inf, %v3844
    %v4037 = vsel %vm3989, -inf, %v3845
    %v4038 = vsel %vm3990, -inf, %v3846
    %v4039 = vsel %vm3991, -inf, %v3847
    %v4040 = vsel %vm3992, -inf, %v3848
    %v4041 = vsel %vm3993, -inf, %v3849
    %v4042 = vsel %vm3994, -inf, %v3850
    %v4043 = vsel %vm3995, -inf, %v3851
    %v4044 = vsel %vm3996, -inf, %v3852
    %v4045 = vsel %vm3997, -inf, %v3853
    %v4046 = vsel %vm3998, -inf, %v3854
    %v4047 = vsel %vm3999, -inf, %v3855
    %v4048 = vsel %vm4000, -inf, %v3856
    %4049 = vmax.xlane.f32.xlu0 %v4001
    %v4050 = vpop.xlane.xlu0 %4049
    %4051 = vmax.xlane.f32.xlu0 %v4002
    %v4052 = vpop.xlane.xlu0 %4051
    %4053 = vmax.xlane.f32.xlu0 %v4003
    %v4054 = vpop.xlane.xlu0 %4053
    %4055 = vmax.xlane.f32.xlu0 %v4004
    %v4056 = vpop.xlane.xlu0 %4055
    %4057 = vmax.xlane.f32.xlu0 %v4005
    %v4058 = vpop.xlane.xlu0 %4057
    %4059 = vmax.xlane.f32.xlu0 %v4006
    %v4060 = vpop.xlane.xlu0 %4059
    %4061 = vmax.xlane.f32.xlu0 %v4007
    %v4062 = vpop.xlane.xlu0 %4061
    %4063 = vmax.xlane.f32.xlu0 %v4008
    %v4064 = vpop.xlane.xlu0 %4063
    %4065 = vmax.xlane.f32.xlu0 %v4009
    %v4066 = vpop.xlane.xlu0 %4065
    %4067 = vmax.xlane.f32.xlu0 %v4010
    %v4068 = vpop.xlane.xlu0 %4067
    %4069 = vmax.xlane.f32.xlu0 %v4011
    %v4070 = vpop.xlane.xlu0 %4069
    %4071 = vmax.xlane.f32.xlu0 %v4012
    %v4072 = vpop.xlane.xlu0 %4071
    %4073 = vmax.xlane.f32.xlu0 %v4013
    %v4074 = vpop.xlane.xlu0 %4073
    %4075 = vmax.xlane.f32.xlu0 %v4014
    %v4076 = vpop.xlane.xlu0 %4075
    %4077 = vmax.xlane.f32.xlu0 %v4015
    %v4078 = vpop.xlane.xlu0 %4077
    %4079 = vmax.xlane.f32.xlu0 %v4016
    %v4080 = vpop.xlane.xlu0 %4079
    %4081 = vmax.xlane.f32.xlu0 %v4017
    %v4082 = vpop.xlane.xlu0 %4081
    %4083 = vmax.xlane.f32.xlu0 %v4018
    %v4084 = vpop.xlane.xlu0 %4083
    %4085 = vmax.xlane.f32.xlu0 %v4019
    %v4086 = vpop.xlane.xlu0 %4085
    %4087 = vmax.xlane.f32.xlu0 %v4020
    %v4088 = vpop.xlane.xlu0 %4087
    %4089 = vmax.xlane.f32.xlu0 %v4021
    %v4090 = vpop.xlane.xlu0 %4089
    %4091 = vmax.xlane.f32.xlu0 %v4022
    %v4092 = vpop.xlane.xlu0 %4091
    %4093 = vmax.xlane.f32.xlu0 %v4023
    %v4094 = vpop.xlane.xlu0 %4093
    %4095 = vmax.xlane.f32.xlu0 %v4024
    %v4096 = vpop.xlane.xlu0 %4095
    %4097 = vmax.xlane.f32.xlu0 %v4025
    %v4098 = vpop.xlane.xlu0 %4097
    %4099 = vmax.xlane.f32.xlu0 %v4026
    %v4100 = vpop.xlane.xlu0 %4099
    %4101 = vmax.xlane.f32.xlu0 %v4027
    %v4102 = vpop.xlane.xlu0 %4101
    %4103 = vmax.xlane.f32.xlu0 %v4028
    %v4104 = vpop.xlane.xlu0 %4103
    %4105 = vmax.xlane.f32.xlu0 %v4029
    %v4106 = vpop.xlane.xlu0 %4105
    %4107 = vmax.xlane.f32.xlu0 %v4030
    %v4108 = vpop.xlane.xlu0 %4107
    %4109 = vmax.xlane.f32.xlu0 %v4031
    %v4110 = vpop.xlane.xlu0 %4109
    %4111 = vmax.xlane.f32.xlu0 %v4032
    %v4112 = vpop.xlane.xlu0 %4111
    %4113 = vmax.xlane.f32.xlu0 %v4033
    %v4114 = vpop.xlane.xlu0 %4113
    %4115 = vmax.xlane.f32.xlu0 %v4034
    %v4116 = vpop.xlane.xlu0 %4115
    %4117 = vmax.xlane.f32.xlu0 %v4035
    %v4118 = vpop.xlane.xlu0 %4117
    %4119 = vmax.xlane.f32.xlu0 %v4036
    %v4120 = vpop.xlane.xlu0 %4119
    %4121 = vmax.xlane.f32.xlu0 %v4037
    %v4122 = vpop.xlane.xlu0 %4121
    %4123 = vmax.xlane.f32.xlu0 %v4038
    %v4124 = vpop.xlane.xlu0 %4123
    %4125 = vmax.xlane.f32.xlu0 %v4039
    %v4126 = vpop.xlane.xlu0 %4125
    %4127 = vmax.xlane.f32.xlu0 %v4040
    %v4128 = vpop.xlane.xlu0 %4127
    %4129 = vmax.xlane.f32.xlu0 %v4041
    %v4130 = vpop.xlane.xlu0 %4129
    %4131 = vmax.xlane.f32.xlu0 %v4042
    %v4132 = vpop.xlane.xlu0 %4131
    %4133 = vmax.xlane.f32.xlu0 %v4043
    %v4134 = vpop.xlane.xlu0 %4133
    %4135 = vmax.xlane.f32.xlu0 %v4044
    %v4136 = vpop.xlane.xlu0 %4135
    %4137 = vmax.xlane.f32.xlu0 %v4045
    %v4138 = vpop.xlane.xlu0 %4137
    %4139 = vmax.xlane.f32.xlu0 %v4046
    %v4140 = vpop.xlane.xlu0 %4139
    %4141 = vmax.xlane.f32.xlu0 %v4047
    %v4142 = vpop.xlane.xlu0 %4141
    %4143 = vmax.xlane.f32.xlu0 %v4048
    %v4144 = vpop.xlane.xlu0 %4143
    %vm4145 = vcmp.ge.f32.partialorder %v4001, %v4050
    %vm4146 = vcmp.ge.f32.partialorder %v4002, %v4052
    %vm4147 = vcmp.ge.f32.partialorder %v4003, %v4054
    %vm4148 = vcmp.ge.f32.partialorder %v4004, %v4056
    %vm4149 = vcmp.ge.f32.partialorder %v4005, %v4058
    %vm4150 = vcmp.ge.f32.partialorder %v4006, %v4060
    %vm4151 = vcmp.ge.f32.partialorder %v4007, %v4062
    %vm4152 = vcmp.ge.f32.partialorder %v4008, %v4064
    %vm4153 = vcmp.ge.f32.partialorder %v4009, %v4066
    %vm4154 = vcmp.ge.f32.partialorder %v4010, %v4068
    %vm4155 = vcmp.ge.f32.partialorder %v4011, %v4070
    %vm4156 = vcmp.ge.f32.partialorder %v4012, %v4072
    %vm4157 = vcmp.ge.f32.partialorder %v4013, %v4074
    %vm4158 = vcmp.ge.f32.partialorder %v4014, %v4076
    %vm4159 = vcmp.ge.f32.partialorder %v4015, %v4078
    %vm4160 = vcmp.ge.f32.partialorder %v4016, %v4080
    %vm4161 = vcmp.ge.f32.partialorder %v4017, %v4082
    %vm4162 = vcmp.ge.f32.partialorder %v4018, %v4084
    %vm4163 = vcmp.ge.f32.partialorder %v4019, %v4086
    %vm4164 = vcmp.ge.f32.partialorder %v4020, %v4088
    %vm4165 = vcmp.ge.f32.partialorder %v4021, %v4090
    %vm4166 = vcmp.ge.f32.partialorder %v4022, %v4092
    %vm4167 = vcmp.ge.f32.partialorder %v4023, %v4094
    %vm4168 = vcmp.ge.f32.partialorder %v4024, %v4096
    %vm4169 = vcmp.ge.f32.partialorder %v4025, %v4098
    %vm4170 = vcmp.ge.f32.partialorder %v4026, %v4100
    %vm4171 = vcmp.ge.f32.partialorder %v4027, %v4102
    %vm4172 = vcmp.ge.f32.partialorder %v4028, %v4104
    %vm4173 = vcmp.ge.f32.partialorder %v4029, %v4106
    %vm4174 = vcmp.ge.f32.partialorder %v4030, %v4108
    %vm4175 = vcmp.ge.f32.partialorder %v4031, %v4110
    %vm4176 = vcmp.ge.f32.partialorder %v4032, %v4112
    %vm4177 = vcmp.ge.f32.partialorder %v4033, %v4114
    %vm4178 = vcmp.ge.f32.partialorder %v4034, %v4116
    %vm4179 = vcmp.ge.f32.partialorder %v4035, %v4118
    %vm4180 = vcmp.ge.f32.partialorder %v4036, %v4120
    %vm4181 = vcmp.ge.f32.partialorder %v4037, %v4122
    %vm4182 = vcmp.ge.f32.partialorder %v4038, %v4124
    %vm4183 = vcmp.ge.f32.partialorder %v4039, %v4126
    %vm4184 = vcmp.ge.f32.partialorder %v4040, %v4128
    %vm4185 = vcmp.ge.f32.partialorder %v4041, %v4130
    %vm4186 = vcmp.ge.f32.partialorder %v4042, %v4132
    %vm4187 = vcmp.ge.f32.partialorder %v4043, %v4134
    %vm4188 = vcmp.ge.f32.partialorder %v4044, %v4136
    %vm4189 = vcmp.ge.f32.partialorder %v4045, %v4138
    %vm4190 = vcmp.ge.f32.partialorder %v4046, %v4140
    %vm4191 = vcmp.ge.f32.partialorder %v4047, %v4142
    %vm4192 = vcmp.ge.f32.partialorder %v4048, %v4144
    %v4193 = vsel %vm4145, -inf, %v4001
    %v4194 = vsel %vm4146, -inf, %v4002
    %v4195 = vsel %vm4147, -inf, %v4003
    %v4196 = vsel %vm4148, -inf, %v4004
    %v4197 = vsel %vm4149, -inf, %v4005
    %v4198 = vsel %vm4150, -inf, %v4006
    %v4199 = vsel %vm4151, -inf, %v4007
    %v4200 = vsel %vm4152, -inf, %v4008
    %v4201 = vsel %vm4153, -inf, %v4009
    %v4202 = vsel %vm4154, -inf, %v4010
    %v4203 = vsel %vm4155, -inf, %v4011
    %v4204 = vsel %vm4156, -inf, %v4012
    %v4205 = vsel %vm4157, -inf, %v4013
    %v4206 = vsel %vm4158, -inf, %v4014
    %v4207 = vsel %vm4159, -inf, %v4015
    %v4208 = vsel %vm4160, -inf, %v4016
    %v4209 = vsel %vm4161, -inf, %v4017
    %v4210 = vsel %vm4162, -inf, %v4018
    %v4211 = vsel %vm4163, -inf, %v4019
    %v4212 = vsel %vm4164, -inf, %v4020
    %v4213 = vsel %vm4165, -inf, %v4021
    %v4214 = vsel %vm4166, -inf, %v4022
    %v4215 = vsel %vm4167, -inf, %v4023
    %v4216 = vsel %vm4168, -inf, %v4024
    %v4217 = vsel %vm4169, -inf, %v4025
    %v4218 = vsel %vm4170, -inf, %v4026
    %v4219 = vsel %vm4171, -inf, %v4027
    %v4220 = vsel %vm4172, -inf, %v4028
    %v4221 = vsel %vm4173, -inf, %v4029
    %v4222 = vsel %vm4174, -inf, %v4030
    %v4223 = vsel %vm4175, -inf, %v4031
    %v4224 = vsel %vm4176, -inf, %v4032
    %v4225 = vsel %vm4177, -inf, %v4033
    %v4226 = vsel %vm4178, -inf, %v4034
    %v4227 = vsel %vm4179, -inf, %v4035
    %v4228 = vsel %vm4180, -inf, %v4036
    %v4229 = vsel %vm4181, -inf, %v4037
    %v4230 = vsel %vm4182, -inf, %v4038
    %v4231 = vsel %vm4183, -inf, %v4039
    %v4232 = vsel %vm4184, -inf, %v4040
    %v4233 = vsel %vm4185, -inf, %v4041
    %v4234 = vsel %vm4186, -inf, %v4042
    %v4235 = vsel %vm4187, -inf, %v4043
    %v4236 = vsel %vm4188, -inf, %v4044
    %v4237 = vsel %vm4189, -inf, %v4045
    %v4238 = vsel %vm4190, -inf, %v4046
    %v4239 = vsel %vm4191, -inf, %v4047
    %v4240 = vsel %vm4192, -inf, %v4048
    %4241 = vmax.xlane.f32.xlu0 %v4193
    %v4242 = vpop.xlane.xlu0 %4241
    %4243 = vmax.xlane.f32.xlu0 %v4194
    %v4244 = vpop.xlane.xlu0 %4243
    %4245 = vmax.xlane.f32.xlu0 %v4195
    %v4246 = vpop.xlane.xlu0 %4245
    %4247 = vmax.xlane.f32.xlu0 %v4196
    %v4248 = vpop.xlane.xlu0 %4247
    %4249 = vmax.xlane.f32.xlu0 %v4197
    %v4250 = vpop.xlane.xlu0 %4249
    %4251 = vmax.xlane.f32.xlu0 %v4198
    %v4252 = vpop.xlane.xlu0 %4251
    %4253 = vmax.xlane.f32.xlu0 %v4199
    %v4254 = vpop.xlane.xlu0 %4253
    %4255 = vmax.xlane.f32.xlu0 %v4200
    %v4256 = vpop.xlane.xlu0 %4255
    %4257 = vmax.xlane.f32.xlu0 %v4201
    %v4258 = vpop.xlane.xlu0 %4257
    %4259 = vmax.xlane.f32.xlu0 %v4202
    %v4260 = vpop.xlane.xlu0 %4259
    %4261 = vmax.xlane.f32.xlu0 %v4203
    %v4262 = vpop.xlane.xlu0 %4261
    %4263 = vmax.xlane.f32.xlu0 %v4204
    %v4264 = vpop.xlane.xlu0 %4263
    %4265 = vmax.xlane.f32.xlu0 %v4205
    %v4266 = vpop.xlane.xlu0 %4265
    %4267 = vmax.xlane.f32.xlu0 %v4206
    %v4268 = vpop.xlane.xlu0 %4267
    %4269 = vmax.xlane.f32.xlu0 %v4207
    %v4270 = vpop.xlane.xlu0 %4269
    %4271 = vmax.xlane.f32.xlu0 %v4208
    %v4272 = vpop.xlane.xlu0 %4271
    %4273 = vmax.xlane.f32.xlu0 %v4209
    %v4274 = vpop.xlane.xlu0 %4273
    %4275 = vmax.xlane.f32.xlu0 %v4210
    %v4276 = vpop.xlane.xlu0 %4275
    %4277 = vmax.xlane.f32.xlu0 %v4211
    %v4278 = vpop.xlane.xlu0 %4277
    %4279 = vmax.xlane.f32.xlu0 %v4212
    %v4280 = vpop.xlane.xlu0 %4279
    %4281 = vmax.xlane.f32.xlu0 %v4213
    %v4282 = vpop.xlane.xlu0 %4281
    %4283 = vmax.xlane.f32.xlu0 %v4214
    %v4284 = vpop.xlane.xlu0 %4283
    %4285 = vmax.xlane.f32.xlu0 %v4215
    %v4286 = vpop.xlane.xlu0 %4285
    %4287 = vmax.xlane.f32.xlu0 %v4216
    %v4288 = vpop.xlane.xlu0 %4287
    %4289 = vmax.xlane.f32.xlu0 %v4217
    %v4290 = vpop.xlane.xlu0 %4289
    %4291 = vmax.xlane.f32.xlu0 %v4218
    %v4292 = vpop.xlane.xlu0 %4291
    %4293 = vmax.xlane.f32.xlu0 %v4219
    %v4294 = vpop.xlane.xlu0 %4293
    %4295 = vmax.xlane.f32.xlu0 %v4220
    %v4296 = vpop.xlane.xlu0 %4295
    %4297 = vmax.xlane.f32.xlu0 %v4221
    %v4298 = vpop.xlane.xlu0 %4297
    %4299 = vmax.xlane.f32.xlu0 %v4222
    %v4300 = vpop.xlane.xlu0 %4299
    %4301 = vmax.xlane.f32.xlu0 %v4223
    %v4302 = vpop.xlane.xlu0 %4301
    %4303 = vmax.xlane.f32.xlu0 %v4224
    %v4304 = vpop.xlane.xlu0 %4303
    %4305 = vmax.xlane.f32.xlu0 %v4225
    %v4306 = vpop.xlane.xlu0 %4305
    %4307 = vmax.xlane.f32.xlu0 %v4226
    %v4308 = vpop.xlane.xlu0 %4307
    %4309 = vmax.xlane.f32.xlu0 %v4227
    %v4310 = vpop.xlane.xlu0 %4309
    %4311 = vmax.xlane.f32.xlu0 %v4228
    %v4312 = vpop.xlane.xlu0 %4311
    %4313 = vmax.xlane.f32.xlu0 %v4229
    %v4314 = vpop.xlane.xlu0 %4313
    %4315 = vmax.xlane.f32.xlu0 %v4230
    %v4316 = vpop.xlane.xlu0 %4315
    %4317 = vmax.xlane.f32.xlu0 %v4231
    %v4318 = vpop.xlane.xlu0 %4317
    %4319 = vmax.xlane.f32.xlu0 %v4232
    %v4320 = vpop.xlane.xlu0 %4319
    %4321 = vmax.xlane.f32.xlu0 %v4233
    %v4322 = vpop.xlane.xlu0 %4321
    %4323 = vmax.xlane.f32.xlu0 %v4234
    %v4324 = vpop.xlane.xlu0 %4323
    %4325 = vmax.xlane.f32.xlu0 %v4235
    %v4326 = vpop.xlane.xlu0 %4325
    %4327 = vmax.xlane.f32.xlu0 %v4236
    %v4328 = vpop.xlane.xlu0 %4327
    %4329 = vmax.xlane.f32.xlu0 %v4237
    %v4330 = vpop.xlane.xlu0 %4329
    %4331 = vmax.xlane.f32.xlu0 %v4238
    %v4332 = vpop.xlane.xlu0 %4331
    %4333 = vmax.xlane.f32.xlu0 %v4239
    %v4334 = vpop.xlane.xlu0 %4333
    %4335 = vmax.xlane.f32.xlu0 %v4240
    %v4336 = vpop.xlane.xlu0 %4335
    %vm4337 = vcmp.ge.f32.partialorder %v4193, %v4242
    %vm4338 = vcmp.ge.f32.partialorder %v4194, %v4244
    %vm4339 = vcmp.ge.f32.partialorder %v4195, %v4246
    %vm4340 = vcmp.ge.f32.partialorder %v4196, %v4248
    %vm4341 = vcmp.ge.f32.partialorder %v4197, %v4250
    %vm4342 = vcmp.ge.f32.partialorder %v4198, %v4252
    %vm4343 = vcmp.ge.f32.partialorder %v4199, %v4254
    %vm4344 = vcmp.ge.f32.partialorder %v4200, %v4256
    %vm4345 = vcmp.ge.f32.partialorder %v4201, %v4258
    %vm4346 = vcmp.ge.f32.partialorder %v4202, %v4260
    %vm4347 = vcmp.ge.f32.partialorder %v4203, %v4262
    %vm4348 = vcmp.ge.f32.partialorder %v4204, %v4264
    %vm4349 = vcmp.ge.f32.partialorder %v4205, %v4266
    %vm4350 = vcmp.ge.f32.partialorder %v4206, %v4268
    %vm4351 = vcmp.ge.f32.partialorder %v4207, %v4270
    %vm4352 = vcmp.ge.f32.partialorder %v4208, %v4272
    %vm4353 = vcmp.ge.f32.partialorder %v4209, %v4274
    %vm4354 = vcmp.ge.f32.partialorder %v4210, %v4276
    %vm4355 = vcmp.ge.f32.partialorder %v4211, %v4278
    %vm4356 = vcmp.ge.f32.partialorder %v4212, %v4280
    %vm4357 = vcmp.ge.f32.partialorder %v4213, %v4282
    %vm4358 = vcmp.ge.f32.partialorder %v4214, %v4284
    %vm4359 = vcmp.ge.f32.partialorder %v4215, %v4286
    %vm4360 = vcmp.ge.f32.partialorder %v4216, %v4288
    %vm4361 = vcmp.ge.f32.partialorder %v4217, %v4290
    %vm4362 = vcmp.ge.f32.partialorder %v4218, %v4292
    %vm4363 = vcmp.ge.f32.partialorder %v4219, %v4294
    %vm4364 = vcmp.ge.f32.partialorder %v4220, %v4296
    %vm4365 = vcmp.ge.f32.partialorder %v4221, %v4298
    %vm4366 = vcmp.ge.f32.partialorder %v4222, %v4300
    %vm4367 = vcmp.ge.f32.partialorder %v4223, %v4302
    %vm4368 = vcmp.ge.f32.partialorder %v4224, %v4304
    %vm4369 = vcmp.ge.f32.partialorder %v4225, %v4306
    %vm4370 = vcmp.ge.f32.partialorder %v4226, %v4308
    %vm4371 = vcmp.ge.f32.partialorder %v4227, %v4310
    %vm4372 = vcmp.ge.f32.partialorder %v4228, %v4312
    %vm4373 = vcmp.ge.f32.partialorder %v4229, %v4314
    %vm4374 = vcmp.ge.f32.partialorder %v4230, %v4316
    %vm4375 = vcmp.ge.f32.partialorder %v4231, %v4318
    %vm4376 = vcmp.ge.f32.partialorder %v4232, %v4320
    %vm4377 = vcmp.ge.f32.partialorder %v4233, %v4322
    %vm4378 = vcmp.ge.f32.partialorder %v4234, %v4324
    %vm4379 = vcmp.ge.f32.partialorder %v4235, %v4326
    %vm4380 = vcmp.ge.f32.partialorder %v4236, %v4328
    %vm4381 = vcmp.ge.f32.partialorder %v4237, %v4330
    %vm4382 = vcmp.ge.f32.partialorder %v4238, %v4332
    %vm4383 = vcmp.ge.f32.partialorder %v4239, %v4334
    %vm4384 = vcmp.ge.f32.partialorder %v4240, %v4336
    %v4385 = vsel %vm4337, -inf, %v4193
    %v4386 = vsel %vm4338, -inf, %v4194
    %v4387 = vsel %vm4339, -inf, %v4195
    %v4388 = vsel %vm4340, -inf, %v4196
    %v4389 = vsel %vm4341, -inf, %v4197
    %v4390 = vsel %vm4342, -inf, %v4198
    %v4391 = vsel %vm4343, -inf, %v4199
    %v4392 = vsel %vm4344, -inf, %v4200
    %v4393 = vsel %vm4345, -inf, %v4201
    %v4394 = vsel %vm4346, -inf, %v4202
    %v4395 = vsel %vm4347, -inf, %v4203
    %v4396 = vsel %vm4348, -inf, %v4204
    %v4397 = vsel %vm4349, -inf, %v4205
    %v4398 = vsel %vm4350, -inf, %v4206
    %v4399 = vsel %vm4351, -inf, %v4207
    %v4400 = vsel %vm4352, -inf, %v4208
    %v4401 = vsel %vm4353, -inf, %v4209
    %v4402 = vsel %vm4354, -inf, %v4210
    %v4403 = vsel %vm4355, -inf, %v4211
    %v4404 = vsel %vm4356, -inf, %v4212
    %v4405 = vsel %vm4357, -inf, %v4213
    %v4406 = vsel %vm4358, -inf, %v4214
    %v4407 = vsel %vm4359, -inf, %v4215
    %v4408 = vsel %vm4360, -inf, %v4216
    %v4409 = vsel %vm4361, -inf, %v4217
    %v4410 = vsel %vm4362, -inf, %v4218
    %v4411 = vsel %vm4363, -inf, %v4219
    %v4412 = vsel %vm4364, -inf, %v4220
    %v4413 = vsel %vm4365, -inf, %v4221
    %v4414 = vsel %vm4366, -inf, %v4222
    %v4415 = vsel %vm4367, -inf, %v4223
    %v4416 = vsel %vm4368, -inf, %v4224
    %v4417 = vsel %vm4369, -inf, %v4225
    %v4418 = vsel %vm4370, -inf, %v4226
    %v4419 = vsel %vm4371, -inf, %v4227
    %v4420 = vsel %vm4372, -inf, %v4228
    %v4421 = vsel %vm4373, -inf, %v4229
    %v4422 = vsel %vm4374, -inf, %v4230
    %v4423 = vsel %vm4375, -inf, %v4231
    %v4424 = vsel %vm4376, -inf, %v4232
    %v4425 = vsel %vm4377, -inf, %v4233
    %v4426 = vsel %vm4378, -inf, %v4234
    %v4427 = vsel %vm4379, -inf, %v4235
    %v4428 = vsel %vm4380, -inf, %v4236
    %v4429 = vsel %vm4381, -inf, %v4237
    %v4430 = vsel %vm4382, -inf, %v4238
    %v4431 = vsel %vm4383, -inf, %v4239
    %v4432 = vsel %vm4384, -inf, %v4240
    %4433 = vmax.xlane.f32.xlu0 %v4385
    %v4434 = vpop.xlane.xlu0 %4433
    %4435 = vmax.xlane.f32.xlu0 %v4386
    %v4436 = vpop.xlane.xlu0 %4435
    %4437 = vmax.xlane.f32.xlu0 %v4387
    %v4438 = vpop.xlane.xlu0 %4437
    %4439 = vmax.xlane.f32.xlu0 %v4388
    %v4440 = vpop.xlane.xlu0 %4439
    %4441 = vmax.xlane.f32.xlu0 %v4389
    %v4442 = vpop.xlane.xlu0 %4441
    %4443 = vmax.xlane.f32.xlu0 %v4390
    %v4444 = vpop.xlane.xlu0 %4443
    %4445 = vmax.xlane.f32.xlu0 %v4391
    %v4446 = vpop.xlane.xlu0 %4445
    %4447 = vmax.xlane.f32.xlu0 %v4392
    %v4448 = vpop.xlane.xlu0 %4447
    %4449 = vmax.xlane.f32.xlu0 %v4393
    %v4450 = vpop.xlane.xlu0 %4449
    %4451 = vmax.xlane.f32.xlu0 %v4394
    %v4452 = vpop.xlane.xlu0 %4451
    %4453 = vmax.xlane.f32.xlu0 %v4395
    %v4454 = vpop.xlane.xlu0 %4453
    %4455 = vmax.xlane.f32.xlu0 %v4396
    %v4456 = vpop.xlane.xlu0 %4455
    %4457 = vmax.xlane.f32.xlu0 %v4397
    %v4458 = vpop.xlane.xlu0 %4457
    %4459 = vmax.xlane.f32.xlu0 %v4398
    %v4460 = vpop.xlane.xlu0 %4459
    %4461 = vmax.xlane.f32.xlu0 %v4399
    %v4462 = vpop.xlane.xlu0 %4461
    %4463 = vmax.xlane.f32.xlu0 %v4400
    %v4464 = vpop.xlane.xlu0 %4463
    %4465 = vmax.xlane.f32.xlu0 %v4401
    %v4466 = vpop.xlane.xlu0 %4465
    %4467 = vmax.xlane.f32.xlu0 %v4402
    %v4468 = vpop.xlane.xlu0 %4467
    %4469 = vmax.xlane.f32.xlu0 %v4403
    %v4470 = vpop.xlane.xlu0 %4469
    %4471 = vmax.xlane.f32.xlu0 %v4404
    %v4472 = vpop.xlane.xlu0 %4471
    %4473 = vmax.xlane.f32.xlu0 %v4405
    %v4474 = vpop.xlane.xlu0 %4473
    %4475 = vmax.xlane.f32.xlu0 %v4406
    %v4476 = vpop.xlane.xlu0 %4475
    %4477 = vmax.xlane.f32.xlu0 %v4407
    %v4478 = vpop.xlane.xlu0 %4477
    %4479 = vmax.xlane.f32.xlu0 %v4408
    %v4480 = vpop.xlane.xlu0 %4479
    %4481 = vmax.xlane.f32.xlu0 %v4409
    %v4482 = vpop.xlane.xlu0 %4481
    %4483 = vmax.xlane.f32.xlu0 %v4410
    %v4484 = vpop.xlane.xlu0 %4483
    %4485 = vmax.xlane.f32.xlu0 %v4411
    %v4486 = vpop.xlane.xlu0 %4485
    %4487 = vmax.xlane.f32.xlu0 %v4412
    %v4488 = vpop.xlane.xlu0 %4487
    %4489 = vmax.xlane.f32.xlu0 %v4413
    %v4490 = vpop.xlane.xlu0 %4489
    %4491 = vmax.xlane.f32.xlu0 %v4414
    %v4492 = vpop.xlane.xlu0 %4491
    %4493 = vmax.xlane.f32.xlu0 %v4415
    %v4494 = vpop.xlane.xlu0 %4493
    %4495 = vmax.xlane.f32.xlu0 %v4416
    %v4496 = vpop.xlane.xlu0 %4495
    %4497 = vmax.xlane.f32.xlu0 %v4417
    %v4498 = vpop.xlane.xlu0 %4497
    %4499 = vmax.xlane.f32.xlu0 %v4418
    %v4500 = vpop.xlane.xlu0 %4499
    %4501 = vmax.xlane.f32.xlu0 %v4419
    %v4502 = vpop.xlane.xlu0 %4501
    %4503 = vmax.xlane.f32.xlu0 %v4420
    %v4504 = vpop.xlane.xlu0 %4503
    %4505 = vmax.xlane.f32.xlu0 %v4421
    %v4506 = vpop.xlane.xlu0 %4505
    %4507 = vmax.xlane.f32.xlu0 %v4422
    %v4508 = vpop.xlane.xlu0 %4507
    %4509 = vmax.xlane.f32.xlu0 %v4423
    %v4510 = vpop.xlane.xlu0 %4509
    %4511 = vmax.xlane.f32.xlu0 %v4424
    %v4512 = vpop.xlane.xlu0 %4511
    %4513 = vmax.xlane.f32.xlu0 %v4425
    %v4514 = vpop.xlane.xlu0 %4513
    %4515 = vmax.xlane.f32.xlu0 %v4426
    %v4516 = vpop.xlane.xlu0 %4515
    %4517 = vmax.xlane.f32.xlu0 %v4427
    %v4518 = vpop.xlane.xlu0 %4517
    %4519 = vmax.xlane.f32.xlu0 %v4428
    %v4520 = vpop.xlane.xlu0 %4519
    %4521 = vmax.xlane.f32.xlu0 %v4429
    %v4522 = vpop.xlane.xlu0 %4521
    %4523 = vmax.xlane.f32.xlu0 %v4430
    %v4524 = vpop.xlane.xlu0 %4523
    %4525 = vmax.xlane.f32.xlu0 %v4431
    %v4526 = vpop.xlane.xlu0 %4525
    %4527 = vmax.xlane.f32.xlu0 %v4432
    %v4528 = vpop.xlane.xlu0 %4527
    %vm4529 = vcmp.ge.f32.partialorder %v4385, %v4434
    %vm4530 = vcmp.ge.f32.partialorder %v4386, %v4436
    %vm4531 = vcmp.ge.f32.partialorder %v4387, %v4438
    %vm4532 = vcmp.ge.f32.partialorder %v4388, %v4440
    %vm4533 = vcmp.ge.f32.partialorder %v4389, %v4442
    %vm4534 = vcmp.ge.f32.partialorder %v4390, %v4444
    %vm4535 = vcmp.ge.f32.partialorder %v4391, %v4446
    %vm4536 = vcmp.ge.f32.partialorder %v4392, %v4448
    %vm4537 = vcmp.ge.f32.partialorder %v4393, %v4450
    %vm4538 = vcmp.ge.f32.partialorder %v4394, %v4452
    %vm4539 = vcmp.ge.f32.partialorder %v4395, %v4454
    %vm4540 = vcmp.ge.f32.partialorder %v4396, %v4456
    %vm4541 = vcmp.ge.f32.partialorder %v4397, %v4458
    %vm4542 = vcmp.ge.f32.partialorder %v4398, %v4460
    %vm4543 = vcmp.ge.f32.partialorder %v4399, %v4462
    %vm4544 = vcmp.ge.f32.partialorder %v4400, %v4464
    %vm4545 = vcmp.ge.f32.partialorder %v4401, %v4466
    %vm4546 = vcmp.ge.f32.partialorder %v4402, %v4468
    %vm4547 = vcmp.ge.f32.partialorder %v4403, %v4470
    %vm4548 = vcmp.ge.f32.partialorder %v4404, %v4472
    %vm4549 = vcmp.ge.f32.partialorder %v4405, %v4474
    %vm4550 = vcmp.ge.f32.partialorder %v4406, %v4476
    %vm4551 = vcmp.ge.f32.partialorder %v4407, %v4478
    %vm4552 = vcmp.ge.f32.partialorder %v4408, %v4480
    %vm4553 = vcmp.ge.f32.partialorder %v4409, %v4482
    %vm4554 = vcmp.ge.f32.partialorder %v4410, %v4484
    %vm4555 = vcmp.ge.f32.partialorder %v4411, %v4486
    %vm4556 = vcmp.ge.f32.partialorder %v4412, %v4488
    %vm4557 = vcmp.ge.f32.partialorder %v4413, %v4490
    %vm4558 = vcmp.ge.f32.partialorder %v4414, %v4492
    %vm4559 = vcmp.ge.f32.partialorder %v4415, %v4494
    %vm4560 = vcmp.ge.f32.partialorder %v4416, %v4496
    %vm4561 = vcmp.ge.f32.partialorder %v4417, %v4498
    %vm4562 = vcmp.ge.f32.partialorder %v4418, %v4500
    %vm4563 = vcmp.ge.f32.partialorder %v4419, %v4502
    %vm4564 = vcmp.ge.f32.partialorder %v4420, %v4504
    %vm4565 = vcmp.ge.f32.partialorder %v4421, %v4506
    %vm4566 = vcmp.ge.f32.partialorder %v4422, %v4508
    %vm4567 = vcmp.ge.f32.partialorder %v4423, %v4510
    %vm4568 = vcmp.ge.f32.partialorder %v4424, %v4512
    %vm4569 = vcmp.ge.f32.partialorder %v4425, %v4514
    %vm4570 = vcmp.ge.f32.partialorder %v4426, %v4516
    %vm4571 = vcmp.ge.f32.partialorder %v4427, %v4518
    %vm4572 = vcmp.ge.f32.partialorder %v4428, %v4520
    %vm4573 = vcmp.ge.f32.partialorder %v4429, %v4522
    %vm4574 = vcmp.ge.f32.partialorder %v4430, %v4524
    %vm4575 = vcmp.ge.f32.partialorder %v4431, %v4526
    %vm4576 = vcmp.ge.f32.partialorder %v4432, %v4528
    %v4577 = vsel %vm4529, -inf, %v4385
    %v4578 = vsel %vm4530, -inf, %v4386
    %v4579 = vsel %vm4531, -inf, %v4387
    %v4580 = vsel %vm4532, -inf, %v4388
    %v4581 = vsel %vm4533, -inf, %v4389
    %v4582 = vsel %vm4534, -inf, %v4390
    %v4583 = vsel %vm4535, -inf, %v4391
    %v4584 = vsel %vm4536, -inf, %v4392
    %v4585 = vsel %vm4537, -inf, %v4393
    %v4586 = vsel %vm4538, -inf, %v4394
    %v4587 = vsel %vm4539, -inf, %v4395
    %v4588 = vsel %vm4540, -inf, %v4396
    %v4589 = vsel %vm4541, -inf, %v4397
    %v4590 = vsel %vm4542, -inf, %v4398
    %v4591 = vsel %vm4543, -inf, %v4399
    %v4592 = vsel %vm4544, -inf, %v4400
    %v4593 = vsel %vm4545, -inf, %v4401
    %v4594 = vsel %vm4546, -inf, %v4402
    %v4595 = vsel %vm4547, -inf, %v4403
    %v4596 = vsel %vm4548, -inf, %v4404
    %v4597 = vsel %vm4549, -inf, %v4405
    %v4598 = vsel %vm4550, -inf, %v4406
    %v4599 = vsel %vm4551, -inf, %v4407
    %v4600 = vsel %vm4552, -inf, %v4408
    %v4601 = vsel %vm4553, -inf, %v4409
    %v4602 = vsel %vm4554, -inf, %v4410
    %v4603 = vsel %vm4555, -inf, %v4411
    %v4604 = vsel %vm4556, -inf, %v4412
    %v4605 = vsel %vm4557, -inf, %v4413
    %v4606 = vsel %vm4558, -inf, %v4414
    %v4607 = vsel %vm4559, -inf, %v4415
    %v4608 = vsel %vm4560, -inf, %v4416
    %v4609 = vsel %vm4561, -inf, %v4417
    %v4610 = vsel %vm4562, -inf, %v4418
    %v4611 = vsel %vm4563, -inf, %v4419
    %v4612 = vsel %vm4564, -inf, %v4420
    %v4613 = vsel %vm4565, -inf, %v4421
    %v4614 = vsel %vm4566, -inf, %v4422
    %v4615 = vsel %vm4567, -inf, %v4423
    %v4616 = vsel %vm4568, -inf, %v4424
    %v4617 = vsel %vm4569, -inf, %v4425
    %v4618 = vsel %vm4570, -inf, %v4426
    %v4619 = vsel %vm4571, -inf, %v4427
    %v4620 = vsel %vm4572, -inf, %v4428
    %v4621 = vsel %vm4573, -inf, %v4429
    %v4622 = vsel %vm4574, -inf, %v4430
    %v4623 = vsel %vm4575, -inf, %v4431
    %v4624 = vsel %vm4576, -inf, %v4432
    %4625 = vmax.xlane.f32.xlu0 %v4577
    %v4626 = vpop.xlane.xlu0 %4625
    %4627 = vmax.xlane.f32.xlu0 %v4578
    %v4628 = vpop.xlane.xlu0 %4627
    %4629 = vmax.xlane.f32.xlu0 %v4579
    %v4630 = vpop.xlane.xlu0 %4629
    %4631 = vmax.xlane.f32.xlu0 %v4580
    %v4632 = vpop.xlane.xlu0 %4631
    %4633 = vmax.xlane.f32.xlu0 %v4581
    %v4634 = vpop.xlane.xlu0 %4633
    %4635 = vmax.xlane.f32.xlu0 %v4582
    %v4636 = vpop.xlane.xlu0 %4635
    %4637 = vmax.xlane.f32.xlu0 %v4583
    %v4638 = vpop.xlane.xlu0 %4637
    %4639 = vmax.xlane.f32.xlu0 %v4584
    %v4640 = vpop.xlane.xlu0 %4639
    %4641 = vmax.xlane.f32.xlu0 %v4585
    %v4642 = vpop.xlane.xlu0 %4641
    %4643 = vmax.xlane.f32.xlu0 %v4586
    %v4644 = vpop.xlane.xlu0 %4643
    %4645 = vmax.xlane.f32.xlu0 %v4587
    %v4646 = vpop.xlane.xlu0 %4645
    %4647 = vmax.xlane.f32.xlu0 %v4588
    %v4648 = vpop.xlane.xlu0 %4647
    %4649 = vmax.xlane.f32.xlu0 %v4589
    %v4650 = vpop.xlane.xlu0 %4649
    %4651 = vmax.xlane.f32.xlu0 %v4590
    %v4652 = vpop.xlane.xlu0 %4651
    %4653 = vmax.xlane.f32.xlu0 %v4591
    %v4654 = vpop.xlane.xlu0 %4653
    %4655 = vmax.xlane.f32.xlu0 %v4592
    %v4656 = vpop.xlane.xlu0 %4655
    %4657 = vmax.xlane.f32.xlu0 %v4593
    %v4658 = vpop.xlane.xlu0 %4657
    %4659 = vmax.xlane.f32.xlu0 %v4594
    %v4660 = vpop.xlane.xlu0 %4659
    %4661 = vmax.xlane.f32.xlu0 %v4595
    %v4662 = vpop.xlane.xlu0 %4661
    %4663 = vmax.xlane.f32.xlu0 %v4596
    %v4664 = vpop.xlane.xlu0 %4663
    %4665 = vmax.xlane.f32.xlu0 %v4597
    %v4666 = vpop.xlane.xlu0 %4665
    %4667 = vmax.xlane.f32.xlu0 %v4598
    %v4668 = vpop.xlane.xlu0 %4667
    %4669 = vmax.xlane.f32.xlu0 %v4599
    %v4670 = vpop.xlane.xlu0 %4669
    %4671 = vmax.xlane.f32.xlu0 %v4600
    %v4672 = vpop.xlane.xlu0 %4671
    %4673 = vmax.xlane.f32.xlu0 %v4601
    %v4674 = vpop.xlane.xlu0 %4673
    %4675 = vmax.xlane.f32.xlu0 %v4602
    %v4676 = vpop.xlane.xlu0 %4675
    %4677 = vmax.xlane.f32.xlu0 %v4603
    %v4678 = vpop.xlane.xlu0 %4677
    %4679 = vmax.xlane.f32.xlu0 %v4604
    %v4680 = vpop.xlane.xlu0 %4679
    %4681 = vmax.xlane.f32.xlu0 %v4605
    %v4682 = vpop.xlane.xlu0 %4681
    %4683 = vmax.xlane.f32.xlu0 %v4606
    %v4684 = vpop.xlane.xlu0 %4683
    %4685 = vmax.xlane.f32.xlu0 %v4607
    %v4686 = vpop.xlane.xlu0 %4685
    %4687 = vmax.xlane.f32.xlu0 %v4608
    %v4688 = vpop.xlane.xlu0 %4687
    %4689 = vmax.xlane.f32.xlu0 %v4609
    %v4690 = vpop.xlane.xlu0 %4689
    %4691 = vmax.xlane.f32.xlu0 %v4610
    %v4692 = vpop.xlane.xlu0 %4691
    %4693 = vmax.xlane.f32.xlu0 %v4611
    %v4694 = vpop.xlane.xlu0 %4693
    %4695 = vmax.xlane.f32.xlu0 %v4612
    %v4696 = vpop.xlane.xlu0 %4695
    %4697 = vmax.xlane.f32.xlu0 %v4613
    %v4698 = vpop.xlane.xlu0 %4697
    %4699 = vmax.xlane.f32.xlu0 %v4614
    %v4700 = vpop.xlane.xlu0 %4699
    %4701 = vmax.xlane.f32.xlu0 %v4615
    %v4702 = vpop.xlane.xlu0 %4701
    %4703 = vmax.xlane.f32.xlu0 %v4616
    %v4704 = vpop.xlane.xlu0 %4703
    %4705 = vmax.xlane.f32.xlu0 %v4617
    %v4706 = vpop.xlane.xlu0 %4705
    %4707 = vmax.xlane.f32.xlu0 %v4618
    %v4708 = vpop.xlane.xlu0 %4707
    %4709 = vmax.xlane.f32.xlu0 %v4619
    %v4710 = vpop.xlane.xlu0 %4709
    %4711 = vmax.xlane.f32.xlu0 %v4620
    %v4712 = vpop.xlane.xlu0 %4711
    %4713 = vmax.xlane.f32.xlu0 %v4621
    %v4714 = vpop.xlane.xlu0 %4713
    %4715 = vmax.xlane.f32.xlu0 %v4622
    %v4716 = vpop.xlane.xlu0 %4715
    %4717 = vmax.xlane.f32.xlu0 %v4623
    %v4718 = vpop.xlane.xlu0 %4717
    %4719 = vmax.xlane.f32.xlu0 %v4624
    %v4720 = vpop.xlane.xlu0 %4719
    %vm4721 = vcmp.ge.f32.partialorder %v4577, %v4626
    %vm4722 = vcmp.ge.f32.partialorder %v4578, %v4628
    %vm4723 = vcmp.ge.f32.partialorder %v4579, %v4630
    %vm4724 = vcmp.ge.f32.partialorder %v4580, %v4632
    %vm4725 = vcmp.ge.f32.partialorder %v4581, %v4634
    %vm4726 = vcmp.ge.f32.partialorder %v4582, %v4636
    %vm4727 = vcmp.ge.f32.partialorder %v4583, %v4638
    %vm4728 = vcmp.ge.f32.partialorder %v4584, %v4640
    %vm4729 = vcmp.ge.f32.partialorder %v4585, %v4642
    %vm4730 = vcmp.ge.f32.partialorder %v4586, %v4644
    %vm4731 = vcmp.ge.f32.partialorder %v4587, %v4646
    %vm4732 = vcmp.ge.f32.partialorder %v4588, %v4648
    %vm4733 = vcmp.ge.f32.partialorder %v4589, %v4650
    %vm4734 = vcmp.ge.f32.partialorder %v4590, %v4652
    %vm4735 = vcmp.ge.f32.partialorder %v4591, %v4654
    %vm4736 = vcmp.ge.f32.partialorder %v4592, %v4656
    %vm4737 = vcmp.ge.f32.partialorder %v4593, %v4658
    %vm4738 = vcmp.ge.f32.partialorder %v4594, %v4660
    %vm4739 = vcmp.ge.f32.partialorder %v4595, %v4662
    %vm4740 = vcmp.ge.f32.partialorder %v4596, %v4664
    %vm4741 = vcmp.ge.f32.partialorder %v4597, %v4666
    %vm4742 = vcmp.ge.f32.partialorder %v4598, %v4668
    %vm4743 = vcmp.ge.f32.partialorder %v4599, %v4670
    %vm4744 = vcmp.ge.f32.partialorder %v4600, %v4672
    %vm4745 = vcmp.ge.f32.partialorder %v4601, %v4674
    %vm4746 = vcmp.ge.f32.partialorder %v4602, %v4676
    %vm4747 = vcmp.ge.f32.partialorder %v4603, %v4678
    %vm4748 = vcmp.ge.f32.partialorder %v4604, %v4680
    %vm4749 = vcmp.ge.f32.partialorder %v4605, %v4682
    %vm4750 = vcmp.ge.f32.partialorder %v4606, %v4684
    %vm4751 = vcmp.ge.f32.partialorder %v4607, %v4686
    %vm4752 = vcmp.ge.f32.partialorder %v4608, %v4688
    %vm4753 = vcmp.ge.f32.partialorder %v4609, %v4690
    %vm4754 = vcmp.ge.f32.partialorder %v4610, %v4692
    %vm4755 = vcmp.ge.f32.partialorder %v4611, %v4694
    %vm4756 = vcmp.ge.f32.partialorder %v4612, %v4696
    %vm4757 = vcmp.ge.f32.partialorder %v4613, %v4698
    %vm4758 = vcmp.ge.f32.partialorder %v4614, %v4700
    %vm4759 = vcmp.ge.f32.partialorder %v4615, %v4702
    %vm4760 = vcmp.ge.f32.partialorder %v4616, %v4704
    %vm4761 = vcmp.ge.f32.partialorder %v4617, %v4706
    %vm4762 = vcmp.ge.f32.partialorder %v4618, %v4708
    %vm4763 = vcmp.ge.f32.partialorder %v4619, %v4710
    %vm4764 = vcmp.ge.f32.partialorder %v4620, %v4712
    %vm4765 = vcmp.ge.f32.partialorder %v4621, %v4714
    %vm4766 = vcmp.ge.f32.partialorder %v4622, %v4716
    %vm4767 = vcmp.ge.f32.partialorder %v4623, %v4718
    %vm4768 = vcmp.ge.f32.partialorder %v4624, %v4720
    %v4769 = vsel %vm4721, -inf, %v4577
    %v4770 = vsel %vm4722, -inf, %v4578
    %v4771 = vsel %vm4723, -inf, %v4579
    %v4772 = vsel %vm4724, -inf, %v4580
    %v4773 = vsel %vm4725, -inf, %v4581
    %v4774 = vsel %vm4726, -inf, %v4582
    %v4775 = vsel %vm4727, -inf, %v4583
    %v4776 = vsel %vm4728, -inf, %v4584
    %v4777 = vsel %vm4729, -inf, %v4585
    %v4778 = vsel %vm4730, -inf, %v4586
    %v4779 = vsel %vm4731, -inf, %v4587
    %v4780 = vsel %vm4732, -inf, %v4588
    %v4781 = vsel %vm4733, -inf, %v4589
    %v4782 = vsel %vm4734, -inf, %v4590
    %v4783 = vsel %vm4735, -inf, %v4591
    %v4784 = vsel %vm4736, -inf, %v4592
    %v4785 = vsel %vm4737, -inf, %v4593
    %v4786 = vsel %vm4738, -inf, %v4594
    %v4787 = vsel %vm4739, -inf, %v4595
    %v4788 = vsel %vm4740, -inf, %v4596
    %v4789 = vsel %vm4741, -inf, %v4597
    %v4790 = vsel %vm4742, -inf, %v4598
    %v4791 = vsel %vm4743, -inf, %v4599
    %v4792 = vsel %vm4744, -inf, %v4600
    %v4793 = vsel %vm4745, -inf, %v4601
    %v4794 = vsel %vm4746, -inf, %v4602
    %v4795 = vsel %vm4747, -inf, %v4603
    %v4796 = vsel %vm4748, -inf, %v4604
    %v4797 = vsel %vm4749, -inf, %v4605
    %v4798 = vsel %vm4750, -inf, %v4606
    %v4799 = vsel %vm4751, -inf, %v4607
    %v4800 = vsel %vm4752, -inf, %v4608
    %v4801 = vsel %vm4753, -inf, %v4609
    %v4802 = vsel %vm4754, -inf, %v4610
    %v4803 = vsel %vm4755, -inf, %v4611
    %v4804 = vsel %vm4756, -inf, %v4612
    %v4805 = vsel %vm4757, -inf, %v4613
    %v4806 = vsel %vm4758, -inf, %v4614
    %v4807 = vsel %vm4759, -inf, %v4615
    %v4808 = vsel %vm4760, -inf, %v4616
    %v4809 = vsel %vm4761, -inf, %v4617
    %v4810 = vsel %vm4762, -inf, %v4618
    %v4811 = vsel %vm4763, -inf, %v4619
    %v4812 = vsel %vm4764, -inf, %v4620
    %v4813 = vsel %vm4765, -inf, %v4621
    %v4814 = vsel %vm4766, -inf, %v4622
    %v4815 = vsel %vm4767, -inf, %v4623
    %v4816 = vsel %vm4768, -inf, %v4624
    %4817 = vmax.xlane.f32.xlu0 %v4769
    %v4818 = vpop.xlane.xlu0 %4817
    %4819 = vmax.xlane.f32.xlu0 %v4770
    %v4820 = vpop.xlane.xlu0 %4819
    %4821 = vmax.xlane.f32.xlu0 %v4771
    %v4822 = vpop.xlane.xlu0 %4821
    %4823 = vmax.xlane.f32.xlu0 %v4772
    %v4824 = vpop.xlane.xlu0 %4823
    %4825 = vmax.xlane.f32.xlu0 %v4773
    %v4826 = vpop.xlane.xlu0 %4825
    %4827 = vmax.xlane.f32.xlu0 %v4774
    %v4828 = vpop.xlane.xlu0 %4827
    %4829 = vmax.xlane.f32.xlu0 %v4775
    %v4830 = vpop.xlane.xlu0 %4829
    %4831 = vmax.xlane.f32.xlu0 %v4776
    %v4832 = vpop.xlane.xlu0 %4831
    %4833 = vmax.xlane.f32.xlu0 %v4777
    %v4834 = vpop.xlane.xlu0 %4833
    %4835 = vmax.xlane.f32.xlu0 %v4778
    %v4836 = vpop.xlane.xlu0 %4835
    %4837 = vmax.xlane.f32.xlu0 %v4779
    %v4838 = vpop.xlane.xlu0 %4837
    %4839 = vmax.xlane.f32.xlu0 %v4780
    %v4840 = vpop.xlane.xlu0 %4839
    %4841 = vmax.xlane.f32.xlu0 %v4781
    %v4842 = vpop.xlane.xlu0 %4841
    %4843 = vmax.xlane.f32.xlu0 %v4782
    %v4844 = vpop.xlane.xlu0 %4843
    %4845 = vmax.xlane.f32.xlu0 %v4783
    %v4846 = vpop.xlane.xlu0 %4845
    %4847 = vmax.xlane.f32.xlu0 %v4784
    %v4848 = vpop.xlane.xlu0 %4847
    %4849 = vmax.xlane.f32.xlu0 %v4785
    %v4850 = vpop.xlane.xlu0 %4849
    %4851 = vmax.xlane.f32.xlu0 %v4786
    %v4852 = vpop.xlane.xlu0 %4851
    %4853 = vmax.xlane.f32.xlu0 %v4787
    %v4854 = vpop.xlane.xlu0 %4853
    %4855 = vmax.xlane.f32.xlu0 %v4788
    %v4856 = vpop.xlane.xlu0 %4855
    %4857 = vmax.xlane.f32.xlu0 %v4789
    %v4858 = vpop.xlane.xlu0 %4857
    %4859 = vmax.xlane.f32.xlu0 %v4790
    %v4860 = vpop.xlane.xlu0 %4859
    %4861 = vmax.xlane.f32.xlu0 %v4791
    %v4862 = vpop.xlane.xlu0 %4861
    %4863 = vmax.xlane.f32.xlu0 %v4792
    %v4864 = vpop.xlane.xlu0 %4863
    %4865 = vmax.xlane.f32.xlu0 %v4793
    %v4866 = vpop.xlane.xlu0 %4865
    %4867 = vmax.xlane.f32.xlu0 %v4794
    %v4868 = vpop.xlane.xlu0 %4867
    %4869 = vmax.xlane.f32.xlu0 %v4795
    %v4870 = vpop.xlane.xlu0 %4869
    %4871 = vmax.xlane.f32.xlu0 %v4796
    %v4872 = vpop.xlane.xlu0 %4871
    %4873 = vmax.xlane.f32.xlu0 %v4797
    %v4874 = vpop.xlane.xlu0 %4873
    %4875 = vmax.xlane.f32.xlu0 %v4798
    %v4876 = vpop.xlane.xlu0 %4875
    %4877 = vmax.xlane.f32.xlu0 %v4799
    %v4878 = vpop.xlane.xlu0 %4877
    %4879 = vmax.xlane.f32.xlu0 %v4800
    %v4880 = vpop.xlane.xlu0 %4879
    %4881 = vmax.xlane.f32.xlu0 %v4801
    %v4882 = vpop.xlane.xlu0 %4881
    %4883 = vmax.xlane.f32.xlu0 %v4802
    %v4884 = vpop.xlane.xlu0 %4883
    %4885 = vmax.xlane.f32.xlu0 %v4803
    %v4886 = vpop.xlane.xlu0 %4885
    %4887 = vmax.xlane.f32.xlu0 %v4804
    %v4888 = vpop.xlane.xlu0 %4887
    %4889 = vmax.xlane.f32.xlu0 %v4805
    %v4890 = vpop.xlane.xlu0 %4889
    %4891 = vmax.xlane.f32.xlu0 %v4806
    %v4892 = vpop.xlane.xlu0 %4891
    %4893 = vmax.xlane.f32.xlu0 %v4807
    %v4894 = vpop.xlane.xlu0 %4893
    %4895 = vmax.xlane.f32.xlu0 %v4808
    %v4896 = vpop.xlane.xlu0 %4895
    %4897 = vmax.xlane.f32.xlu0 %v4809
    %v4898 = vpop.xlane.xlu0 %4897
    %4899 = vmax.xlane.f32.xlu0 %v4810
    %v4900 = vpop.xlane.xlu0 %4899
    %4901 = vmax.xlane.f32.xlu0 %v4811
    %v4902 = vpop.xlane.xlu0 %4901
    %4903 = vmax.xlane.f32.xlu0 %v4812
    %v4904 = vpop.xlane.xlu0 %4903
    %4905 = vmax.xlane.f32.xlu0 %v4813
    %v4906 = vpop.xlane.xlu0 %4905
    %4907 = vmax.xlane.f32.xlu0 %v4814
    %v4908 = vpop.xlane.xlu0 %4907
    %4909 = vmax.xlane.f32.xlu0 %v4815
    %v4910 = vpop.xlane.xlu0 %4909
    %4911 = vmax.xlane.f32.xlu0 %v4816
    %v4912 = vpop.xlane.xlu0 %4911
    %vm4913 = vcmp.ge.f32.partialorder %v3187, %v4818
    %vm4914 = vcmp.ge.f32.partialorder %v3192, %v4820
    %vm4915 = vcmp.ge.f32.partialorder %v3197, %v4822
    %vm4916 = vcmp.ge.f32.partialorder %v3202, %v4824
    %vm4917 = vcmp.ge.f32.partialorder %v3207, %v4826
    %vm4918 = vcmp.ge.f32.partialorder %v3212, %v4828
    %vm4919 = vcmp.ge.f32.partialorder %v3217, %v4830
    %vm4920 = vcmp.ge.f32.partialorder %v3222, %v4832
    %vm4921 = vcmp.ge.f32.partialorder %v3227, %v4834
    %vm4922 = vcmp.ge.f32.partialorder %v3232, %v4836
    %vm4923 = vcmp.ge.f32.partialorder %v3237, %v4838
    %vm4924 = vcmp.ge.f32.partialorder %v3242, %v4840
    %vm4925 = vcmp.ge.f32.partialorder %v3247, %v4842
    %vm4926 = vcmp.ge.f32.partialorder %v3252, %v4844
    %vm4927 = vcmp.ge.f32.partialorder %v3257, %v4846
    %vm4928 = vcmp.ge.f32.partialorder %v3262, %v4848
    %vm4929 = vcmp.ge.f32.partialorder %v3267, %v4850
    %vm4930 = vcmp.ge.f32.partialorder %v3272, %v4852
    %vm4931 = vcmp.ge.f32.partialorder %v3277, %v4854
    %vm4932 = vcmp.ge.f32.partialorder %v3282, %v4856
    %vm4933 = vcmp.ge.f32.partialorder %v3287, %v4858
    %vm4934 = vcmp.ge.f32.partialorder %v3292, %v4860
    %vm4935 = vcmp.ge.f32.partialorder %v3297, %v4862
    %vm4936 = vcmp.ge.f32.partialorder %v3302, %v4864
    %vm4937 = vcmp.ge.f32.partialorder %v3307, %v4866
    %vm4938 = vcmp.ge.f32.partialorder %v3312, %v4868
    %vm4939 = vcmp.ge.f32.partialorder %v3317, %v4870
    %vm4940 = vcmp.ge.f32.partialorder %v3322, %v4872
    %vm4941 = vcmp.ge.f32.partialorder %v3327, %v4874
    %vm4942 = vcmp.ge.f32.partialorder %v3332, %v4876
    %vm4943 = vcmp.ge.f32.partialorder %v3337, %v4878
    %vm4944 = vcmp.ge.f32.partialorder %v3342, %v4880
    %vm4945 = vcmp.ge.f32.partialorder %v3347, %v4882
    %vm4946 = vcmp.ge.f32.partialorder %v3352, %v4884
    %vm4947 = vcmp.ge.f32.partialorder %v3357, %v4886
    %vm4948 = vcmp.ge.f32.partialorder %v3362, %v4888
    %vm4949 = vcmp.ge.f32.partialorder %v3367, %v4890
    %vm4950 = vcmp.ge.f32.partialorder %v3372, %v4892
    %vm4951 = vcmp.ge.f32.partialorder %v3377, %v4894
    %vm4952 = vcmp.ge.f32.partialorder %v3382, %v4896
    %vm4953 = vcmp.ge.f32.partialorder %v3387, %v4898
    %vm4954 = vcmp.ge.f32.partialorder %v3392, %v4900
    %vm4955 = vcmp.ge.f32.partialorder %v3397, %v4902
    %vm4956 = vcmp.ge.f32.partialorder %v3402, %v4904
    %vm4957 = vcmp.ge.f32.partialorder %v3407, %v4906
    %vm4958 = vcmp.ge.f32.partialorder %v3412, %v4908
    %vm4959 = vcmp.ge.f32.partialorder %v3417, %v4910
    %vm4960 = vcmp.ge.f32.partialorder %v3422, %v4912
    %vm4961 = vmand %vm524, %vm4913
    %vm4962 = vmand %vm524, %vm4914
    %vm4963 = vmand %vm524, %vm4915
    %vm4964 = vmand %vm524, %vm4916
    %vm4965 = vmand %vm524, %vm4917
    %vm4966 = vmand %vm524, %vm4918
    %vm4967 = vmand %vm524, %vm4919
    %vm4968 = vmand %vm524, %vm4920
    %vm4969 = vmand %vm524, %vm4921
    %vm4970 = vmand %vm524, %vm4922
    %vm4971 = vmand %vm524, %vm4923
    %vm4972 = vmand %vm524, %vm4924
    %vm4973 = vmand %vm524, %vm4925
    %vm4974 = vmand %vm524, %vm4926
    %vm4975 = vmand %vm524, %vm4927
    %vm4976 = vmand %vm524, %vm4928
    %vm4977 = vmand %vm524, %vm4929
    %vm4978 = vmand %vm524, %vm4930
    %vm4979 = vmand %vm524, %vm4931
    %vm4980 = vmand %vm524, %vm4932
    %vm4981 = vmand %vm524, %vm4933
    %vm4982 = vmand %vm524, %vm4934
    %vm4983 = vmand %vm524, %vm4935
    %vm4984 = vmand %vm524, %vm4936
    %vm4985 = vmand %vm524, %vm4937
    %vm4986 = vmand %vm524, %vm4938
    %vm4987 = vmand %vm524, %vm4939
    %vm4988 = vmand %vm524, %vm4940
    %vm4989 = vmand %vm524, %vm4941
    %vm4990 = vmand %vm524, %vm4942
    %vm4991 = vmand %vm524, %vm4943
    %vm4992 = vmand %vm524, %vm4944
    %vm4993 = vmand %vm524, %vm4945
    %vm4994 = vmand %vm524, %vm4946
    %vm4995 = vmand %vm524, %vm4947
    %vm4996 = vmand %vm524, %vm4948
    %vm4997 = vmand %vm524, %vm4949
    %vm4998 = vmand %vm524, %vm4950
    %vm4999 = vmand %vm524, %vm4951
    %vm5000 = vmand %vm524, %vm4952
    %vm5001 = vmand %vm524, %vm4953
    %vm5002 = vmand %vm524, %vm4954
    %vm5003 = vmand %vm524, %vm4955
    %vm5004 = vmand %vm524, %vm4956
    %vm5005 = vmand %vm524, %vm4957
    %vm5006 = vmand %vm524, %vm4958
    %vm5007 = vmand %vm524, %vm4959
    %vm5008 = vmand %vm524, %vm4960
    %v5009 = vsel %vm4961, %v3187, 0.0
    %v5010 = vsel %vm4962, %v3192, 0.0
    %v5011 = vsel %vm4963, %v3197, 0.0
    %v5012 = vsel %vm4964, %v3202, 0.0
    %v5013 = vsel %vm4965, %v3207, 0.0
    %v5014 = vsel %vm4966, %v3212, 0.0
    %v5015 = vsel %vm4967, %v3217, 0.0
    %v5016 = vsel %vm4968, %v3222, 0.0
    %v5017 = vsel %vm4969, %v3227, 0.0
    %v5018 = vsel %vm4970, %v3232, 0.0
    %v5019 = vsel %vm4971, %v3237, 0.0
    %v5020 = vsel %vm4972, %v3242, 0.0
    %v5021 = vsel %vm4973, %v3247, 0.0
    %v5022 = vsel %vm4974, %v3252, 0.0
    %v5023 = vsel %vm4975, %v3257, 0.0
    %v5024 = vsel %vm4976, %v3262, 0.0
    %v5025 = vsel %vm4977, %v3267, 0.0
    %v5026 = vsel %vm4978, %v3272, 0.0
    %v5027 = vsel %vm4979, %v3277, 0.0
    %v5028 = vsel %vm4980, %v3282, 0.0
    %v5029 = vsel %vm4981, %v3287, 0.0
    %v5030 = vsel %vm4982, %v3292, 0.0
    %v5031 = vsel %vm4983, %v3297, 0.0
    %v5032 = vsel %vm4984, %v3302, 0.0
    %v5033 = vsel %vm4985, %v3307, 0.0
    %v5034 = vsel %vm4986, %v3312, 0.0
    %v5035 = vsel %vm4987, %v3317, 0.0
    %v5036 = vsel %vm4988, %v3322, 0.0
    %v5037 = vsel %vm4989, %v3327, 0.0
    %v5038 = vsel %vm4990, %v3332, 0.0
    %v5039 = vsel %vm4991, %v3337, 0.0
    %v5040 = vsel %vm4992, %v3342, 0.0
    %v5041 = vsel %vm4993, %v3347, 0.0
    %v5042 = vsel %vm4994, %v3352, 0.0
    %v5043 = vsel %vm4995, %v3357, 0.0
    %v5044 = vsel %vm4996, %v3362, 0.0
    %v5045 = vsel %vm4997, %v3367, 0.0
    %v5046 = vsel %vm4998, %v3372, 0.0
    %v5047 = vsel %vm4999, %v3377, 0.0
    %v5048 = vsel %vm5000, %v3382, 0.0
    %v5049 = vsel %vm5001, %v3387, 0.0
    %v5050 = vsel %vm5002, %v3392, 0.0
    %v5051 = vsel %vm5003, %v3397, 0.0
    %v5052 = vsel %vm5004, %v3402, 0.0
    %v5053 = vsel %vm5005, %v3407, 0.0
    %v5054 = vsel %vm5006, %v3412, 0.0
    %v5055 = vsel %vm5007, %v3417, 0.0
    %v5056 = vsel %vm5008, %v3422, 0.0
    %v5057 = vpack.c.bf16 %v5010, %v5009
    %v5058 = vpack.c.bf16 %v5012, %v5011
    %v5059 = vpack.c.bf16 %v5014, %v5013
    %v5060 = vpack.c.bf16 %v5016, %v5015
    %v5061 = vpack.c.bf16 %v5018, %v5017
    %v5062 = vpack.c.bf16 %v5020, %v5019
    %v5063 = vpack.c.bf16 %v5022, %v5021
    %v5064 = vpack.c.bf16 %v5024, %v5023
    %v5065 = vpack.c.bf16 %v5026, %v5025
    %v5066 = vpack.c.bf16 %v5028, %v5027
    %v5067 = vpack.c.bf16 %v5030, %v5029
    %v5068 = vpack.c.bf16 %v5032, %v5031
    %v5069 = vpack.c.bf16 %v5034, %v5033
    %v5070 = vpack.c.bf16 %v5036, %v5035
    %v5071 = vpack.c.bf16 %v5038, %v5037
    %v5072 = vpack.c.bf16 %v5040, %v5039
    %v5073 = vpack.c.bf16 %v5042, %v5041
    %v5074 = vpack.c.bf16 %v5044, %v5043
    %v5075 = vpack.c.bf16 %v5046, %v5045
    %v5076 = vpack.c.bf16 %v5048, %v5047
    %v5077 = vpack.c.bf16 %v5050, %v5049
    %v5078 = vpack.c.bf16 %v5052, %v5051
    %v5079 = vpack.c.bf16 %v5054, %v5053
    %v5080 = vpack.c.bf16 %v5056, %v5055
    loop: start=0, step=1, limit=3
    $region77: #{tpu_custom_call.1} parent=1 // loop_pre_header
      _
    $region78: #{tpu_custom_call.1} parent=1 // loop_header
      %s5082 = sphi 0, %s5086
      %p5083 = scmp.ge.s32.totalorder %s5082, 3
    $region79: #{tpu_custom_call.1} parent=1 // loop_header_branch
      %5085 = sbr.rel (%p5083) target = $region83
    $region80: #{tpu_custom_call.1} parent=1 // loop_body
      %s5087 = sand.u32 %s5082, 1
      %s5088 = smul.u32 %s5082, 128
      %s5089 = smul.u32 %s5087, 48
      %s5090 = smul.addr %s5089, 4
      %s5091 = scalar_lea.vmem [#allocation2], %s5090
      %s5092 = scalar_lea.sflag [#allocation3], %s5087
      %s5093 = smul.u32 4, 16
      %s5094 = smul.u32 %s5093, 3
      %s5095 = sshll.u32 %s5094, 4
      %5096 = dma.done %s5092, %s5095
      %s5097 = sadd.s32 %s5082, 1
      %p5098 = scmp.lt.s32.totalorder %s5097, 3
      // Predicated region
      $region84: #{tpu_custom_call.1} parent=80 // pred_check
        %p5099 = pneg %p5098
      $region85: #{tpu_custom_call.1} parent=80 // pred_check_branch
        %5101 = sbr.rel (%p5099) target = $region87
      $region86: #{tpu_custom_call.1} parent=80 // pred_region
        %s5102 = ssub.s32 1, %s5087
        %s5103 = smul.u32 %s5097, 128
        %s5104 = sshra.s32 %s5103, 3
        %s5105 = sand.u32 %s5103, 7
        %s5106 = smul.u32 %s5104, 3
        %s5107 = smul.addr %s5106, 64
        %s5108 = scalar_lea.hbm %s1, %s5107
        %s5109 = smul.u32 %s5102, 48
        %s5110 = smul.addr %s5109, 4
        %s5111 = scalar_lea.vmem [#allocation2], %s5110
        %s5112 = scalar_lea.sflag [#allocation3], %s5102
        // Predicated region
        $region88: #{tpu_custom_call.1} parent=86 // pred_check
          _
        $region89: #{tpu_custom_call.1} parent=86 // pred_check_branch
          %5114 = sbr.rel target = $region91
        $region90: #{tpu_custom_call.1} parent=86 // pred_region
          %5115 = sst [smem:[#allocation18]] [#allocation25]
          %5116 = sst [smem:[#allocation19]] [#allocation24]
        $region91: #{tpu_custom_call.1} parent=86 // pred_fallthru
          _
        %5118 = shalt.err (0)
        %s5120 = sshll.u32 %s5111, 4
        %s5121 = int_to_ptr.vmem [resolvable:$true] %s5120
        %5123 = dma.hbm_to_vmem [thread:$0]  %s5108, 3072, %s5121, %s5112
      $region87: #{tpu_custom_call.1} parent=80 // pred_fallthru
        _
      %v5124 = vld [vmem:[%s5091] sm:$0xff]
      %v5125 = vld [vmem:[%s5091 + $0x8] sm:$0xf]
      %v5126 = vld [vmem:[%s5091 + $0xc] sm:$0xff]
      %v5127 = vld [vmem:[%s5091 + $0x14] sm:$0xf]
      %v5128 = vld [vmem:[%s5091 + $0x18] sm:$0xff]
      %v5129 = vld [vmem:[%s5091 + $0x20] sm:$0xf]
      %v5130 = vld [vmem:[%s5091 + $0x24] sm:$0xff]
      %v5131 = vld [vmem:[%s5091 + $0x2c] sm:$0xf]
      %v5132 = vld [vmem:[%s5091 + $0x30] sm:$0xff]
      %v5133 = vld [vmem:[%s5091 + $0x38] sm:$0xf]
      %v5134 = vld [vmem:[%s5091 + $0x3c] sm:$0xff]
      %v5135 = vld [vmem:[%s5091 + $0x44] sm:$0xf]
      %v5136 = vld [vmem:[%s5091 + $0x48] sm:$0xff]
      %v5137 = vld [vmem:[%s5091 + $0x50] sm:$0xf]
      %v5138 = vld [vmem:[%s5091 + $0x54] sm:$0xff]
      %v5139 = vld [vmem:[%s5091 + $0x5c] sm:$0xf]
      %v5140 = vld [vmem:[%s5091 + $0x60] sm:$0xff]
      %v5141 = vld [vmem:[%s5091 + $0x68] sm:$0xf]
      %v5142 = vld [vmem:[%s5091 + $0x6c] sm:$0xff]
      %v5143 = vld [vmem:[%s5091 + $0x74] sm:$0xf]
      %v5144 = vld [vmem:[%s5091 + $0x78] sm:$0xff]
      %v5145 = vld [vmem:[%s5091 + $0x80] sm:$0xf]
      %v5146 = vld [vmem:[%s5091 + $0x84] sm:$0xff]
      %v5147 = vld [vmem:[%s5091 + $0x8c] sm:$0xf]
      %v5148 = vld [vmem:[%s5091 + $0x90] sm:$0xff]
      %v5149 = vld [vmem:[%s5091 + $0x98] sm:$0xf]
      %v5150 = vld [vmem:[%s5091 + $0x9c] sm:$0xff]
      %v5151 = vld [vmem:[%s5091 + $0xa4] sm:$0xf]
      %v5152 = vld [vmem:[%s5091 + $0xa8] sm:$0xff]
      %v5153 = vld [vmem:[%s5091 + $0xb0] sm:$0xf]
      %v5154 = vld [vmem:[%s5091 + $0xb4] sm:$0xff]
      %v5155 = vld [vmem:[%s5091 + $0xbc] sm:$0xf]
      %v5188 = vunpack.c.l.b16 %v5124
      %v5189 = vunpack.c.h.b16 %v5124
      %v5190 = vunpack.c.l.b16 %v5125
      %v5191 = vunpack.c.l.b16 %v5126
      %v5192 = vunpack.c.h.b16 %v5126
      %v5193 = vunpack.c.l.b16 %v5127
      %v5194 = vunpack.c.l.b16 %v5128
      %v5195 = vunpack.c.h.b16 %v5128
      %v5196 = vunpack.c.l.b16 %v5129
      %v5197 = vunpack.c.l.b16 %v5130
      %v5198 = vunpack.c.h.b16 %v5130
      %v5199 = vunpack.c.l.b16 %v5131
      %v5200 = vunpack.c.l.b16 %v5132
      %v5201 = vunpack.c.h.b16 %v5132
      %v5202 = vunpack.c.l.b16 %v5133
      %v5203 = vunpack.c.l.b16 %v5134
      %v5204 = vunpack.c.h.b16 %v5134
      %v5205 = vunpack.c.l.b16 %v5135
      %v5206 = vunpack.c.l.b16 %v5136
      %v5207 = vunpack.c.h.b16 %v5136
      %v5208 = vunpack.c.l.b16 %v5137
      %v5209 = vunpack.c.l.b16 %v5138
      %v5210 = vunpack.c.h.b16 %v5138
      %v5211 = vunpack.c.l.b16 %v5139
      %v5212 = vunpack.c.l.b16 %v5140
      %v5213 = vunpack.c.h.b16 %v5140
      %v5214 = vunpack.c.l.b16 %v5141
      %v5215 = vunpack.c.l.b16 %v5142
      %v5216 = vunpack.c.h.b16 %v5142
      %v5217 = vunpack.c.l.b16 %v5143
      %v5218 = vunpack.c.l.b16 %v5144
      %v5219 = vunpack.c.h.b16 %v5144
      %v5220 = vunpack.c.l.b16 %v5145
      %v5221 = vunpack.c.l.b16 %v5146
      %v5222 = vunpack.c.h.b16 %v5146
      %v5223 = vunpack.c.l.b16 %v5147
      %v5224 = vunpack.c.l.b16 %v5148
      %v5225 = vunpack.c.h.b16 %v5148
      %v5226 = vunpack.c.l.b16 %v5149
      %v5227 = vunpack.c.l.b16 %v5150
      %v5228 = vunpack.c.h.b16 %v5150
      %v5229 = vunpack.c.l.b16 %v5151
      %v5230 = vunpack.c.l.b16 %v5152
      %v5231 = vunpack.c.h.b16 %v5152
      %v5232 = vunpack.c.l.b16 %v5153
      %v5233 = vunpack.c.l.b16 %v5154
      %v5234 = vunpack.c.h.b16 %v5154
      %v5235 = vunpack.c.l.b16 %v5155
      %v5236 = vpack.c.b16 %v5191, %v5188
      %v5237 = vpack.c.b16 %v5192, %v5189
      %v5238 = vpack.c.b16 %v5193, %v5190
      %v5239 = vpack.c.b16 %v5197, %v5194
      %v5240 = vpack.c.b16 %v5198, %v5195
      %v5241 = vpack.c.b16 %v5199, %v5196
      %v5242 = vpack.c.b16 %v5203, %v5200
      %v5243 = vpack.c.b16 %v5204, %v5201
      %v5244 = vpack.c.b16 %v5205, %v5202
      %v5245 = vpack.c.b16 %v5209, %v5206
      %v5246 = vpack.c.b16 %v5210, %v5207
      %v5247 = vpack.c.b16 %v5211, %v5208
      %v5248 = vpack.c.b16 %v5215, %v5212
      %v5249 = vpack.c.b16 %v5216, %v5213
      %v5250 = vpack.c.b16 %v5217, %v5214
      %v5251 = vpack.c.b16 %v5221, %v5218
      %v5252 = vpack.c.b16 %v5222, %v5219
      %v5253 = vpack.c.b16 %v5223, %v5220
      %v5254 = vpack.c.b16 %v5227, %v5224
      %v5255 = vpack.c.b16 %v5228, %v5225
      %v5256 = vpack.c.b16 %v5229, %v5226
      %v5257 = vpack.c.b16 %v5233, %v5230
      %v5258 = vpack.c.b16 %v5234, %v5231
      %v5259 = vpack.c.b16 %v5235, %v5232
      %5284 = vmatprep.subr.bf16.mxu0 0
      %5285 = vmatpush1.bf16.msra.mxu0 %v5064
      %5286 = vmatprep.subr.bf16.mxu0 0
      %5287 = vmatpush1.bf16.msra.mxu0 %v5063
      %5288 = vmatprep.subr.bf16.mxu0 0
      %5289 = vmatpush1.bf16.msra.mxu0 %v5062
      %5290 = vmatprep.subr.bf16.mxu0 0
      %5291 = vmatpush1.bf16.msra.mxu0 %v5061
      %5292 = vmatprep.subr.bf16.mxu0 0
      %5293 = vmatpush1.bf16.msra.mxu0 %v5060
      %5294 = vmatprep.subr.bf16.mxu0 0
      %5295 = vmatpush1.bf16.msra.mxu0 %v5059
      %5296 = vmatprep.subr.bf16.mxu0 0
      %5297 = vmatpush1.bf16.msra.mxu0 %v5058
      %5298 = vmatprep.subr.bf16.mxu0 0
      %5299 = vmatpush1.bf16.msra.mxu0 %v5057
      %5300 = vmatprep.subr.bf16.mxu0 0
      %5301 = vmatpush2.bf16.msra.mxu0 %v5072
      %5302 = vmatprep.subr.bf16.mxu0 0
      %5303 = vmatpush2.bf16.msra.mxu0 %v5071
      %5304 = vmatprep.subr.bf16.mxu0 0
      %5305 = vmatpush2.bf16.msra.mxu0 %v5070
      %5306 = vmatprep.subr.bf16.mxu0 0
      %5307 = vmatpush2.bf16.msra.mxu0 %v5069
      %5308 = vmatprep.subr.bf16.mxu0 0
      %5309 = vmatpush2.bf16.msra.mxu0 %v5068
      %5310 = vmatprep.subr.bf16.mxu0 0
      %5311 = vmatpush2.bf16.msra.mxu0 %v5067
      %5312 = vmatprep.subr.bf16.mxu0 0
      %5313 = vmatpush2.bf16.msra.mxu0 %v5066
      %5314 = vmatprep.subr.bf16.mxu0 0
      %5315 = vmatpush2.bf16.msra.mxu0 %v5065
      %5316 = vmatprep.mubr.bf16.mxu0 %v5237
      %5317 = vmatmul.mubr.bf16.gmra.mxu0 %v5236
      %v5318 = vpop.f32.mrf.mxu0
      %v5319 = vadd.f32 0.0, %v5318
      %v5320 = vpop.f32.mrf.mxu0
      %v5321 = vpop.f32.mrf.mxu0
      %v5322 = vadd.f32 0.0, %v5321
      %v5323 = vpop.f32.mrf.mxu0
      %5324 = vmatprep.mubr.bf16.mxu0 %v5240
      %5325 = vmatmul.mubr.bf16.gmra.mxu0 %v5239
      %v5326 = vpop.f32.mrf.mxu0
      %v5327 = vadd.f32 0.0, %v5326
      %v5328 = vpop.f32.mrf.mxu0
      %v5329 = vpop.f32.mrf.mxu0
      %v5330 = vadd.f32 0.0, %v5329
      %v5331 = vpop.f32.mrf.mxu0
      %5332 = vmatprep.mubr.bf16.mxu0 %v5243
      %5333 = vmatmul.mubr.bf16.gmra.mxu0 %v5242
      %v5334 = vpop.f32.mrf.mxu0
      %v5335 = vadd.f32 0.0, %v5334
      %v5336 = vpop.f32.mrf.mxu0
      %v5337 = vpop.f32.mrf.mxu0
      %v5338 = vadd.f32 0.0, %v5337
      %v5339 = vpop.f32.mrf.mxu0
      %5340 = vmatprep.mubr.bf16.mxu0 %v5246
      %5341 = vmatmul.mubr.bf16.gmra.mxu0 %v5245
      %v5342 = vpop.f32.mrf.mxu0
      %v5343 = vadd.f32 0.0, %v5342
      %v5344 = vpop.f32.mrf.mxu0
      %v5345 = vpop.f32.mrf.mxu0
      %v5346 = vadd.f32 0.0, %v5345
      %v5347 = vpop.f32.mrf.mxu0
      %5348 = vmatprep.mubr.bf16.mxu0 %v5249
      %5349 = vmatmul.mubr.bf16.gmra.mxu0 %v5248
      %v5350 = vpop.f32.mrf.mxu0
      %v5351 = vadd.f32 0.0, %v5350
      %v5352 = vpop.f32.mrf.mxu0
      %v5353 = vpop.f32.mrf.mxu0
      %v5354 = vadd.f32 0.0, %v5353
      %v5355 = vpop.f32.mrf.mxu0
      %5356 = vmatprep.mubr.bf16.mxu0 %v5252
      %5357 = vmatmul.mubr.bf16.gmra.mxu0 %v5251
      %v5358 = vpop.f32.mrf.mxu0
      %v5359 = vadd.f32 0.0, %v5358
      %v5360 = vpop.f32.mrf.mxu0
      %v5361 = vpop.f32.mrf.mxu0
      %v5362 = vadd.f32 0.0, %v5361
      %v5363 = vpop.f32.mrf.mxu0
      %5364 = vmatprep.mubr.bf16.mxu0 %v5255
      %5365 = vmatmul.mubr.bf16.gmra.mxu0 %v5254
      %v5366 = vpop.f32.mrf.mxu0
      %v5367 = vadd.f32 0.0, %v5366
      %v5368 = vpop.f32.mrf.mxu0
      %v5369 = vpop.f32.mrf.mxu0
      %v5370 = vadd.f32 0.0, %v5369
      %v5371 = vpop.f32.mrf.mxu0
      %5372 = vmatprep.mubr.bf16.mxu0 %v5258
      %5373 = vmatmul.mubr.bf16.gmra.mxu0 %v5257
      %v5374 = vpop.f32.mrf.mxu0
      %v5375 = vadd.f32 0.0, %v5374
      %v5376 = vpop.f32.mrf.mxu0
      %v5377 = vpop.f32.mrf.mxu0
      %v5378 = vadd.f32 0.0, %v5377
      %v5379 = vpop.f32.mrf.mxu0
      %5380 = vdwg.mxu0
      %5381 = vmatprep.subr.bf16.mxu0 0
      %5382 = vmatpush1.bf16.msra.mxu0 %v5080
      %5383 = vmatprep.subr.bf16.mxu0 0
      %5384 = vmatpush1.bf16.msra.mxu0 %v5079
      %5385 = vmatprep.subr.bf16.mxu0 0
      %5386 = vmatpush1.bf16.msra.mxu0 %v5078
      %5387 = vmatprep.subr.bf16.mxu0 0
      %5388 = vmatpush1.bf16.msra.mxu0 %v5077
      %5389 = vmatprep.subr.bf16.mxu0 0
      %5390 = vmatpush1.bf16.msra.mxu0 %v5076
      %5391 = vmatprep.subr.bf16.mxu0 0
      %5392 = vmatpush1.bf16.msra.mxu0 %v5075
      %5393 = vmatprep.subr.bf16.mxu0 0
      %5394 = vmatpush1.bf16.msra.mxu0 %v5074
      %5395 = vmatprep.subr.bf16.mxu0 0
      %5396 = vmatpush1.bf16.msra.mxu0 %v5073
      %5397 = vmatprep.subr.bf16.mxu0 0
      %5398 = vmatpush2.bf16.msra.mxu0 0
      %5399 = vmatprep.subr.bf16.mxu0 0
      %5400 = vmatpush2.bf16.msra.mxu0 0
      %5401 = vmatprep.subr.bf16.mxu0 0
      %5402 = vmatpush2.bf16.msra.mxu0 0
      %5403 = vmatprep.subr.bf16.mxu0 0
      %5404 = vmatpush2.bf16.msra.mxu0 0
      %5405 = vmatprep.subr.bf16.mxu0 0
      %5406 = vmatpush2.bf16.msra.mxu0 0
      %5407 = vmatprep.subr.bf16.mxu0 0
      %5408 = vmatpush2.bf16.msra.mxu0 0
      %5409 = vmatprep.subr.bf16.mxu0 0
      %5410 = vmatpush2.bf16.msra.mxu0 0
      %5411 = vmatprep.subr.bf16.mxu0 0
      %5412 = vmatpush2.bf16.msra.mxu0 0
      %5413 = vmatprep.mubr.bf16.mxu0 0
      %5414 = vmatmul.mubr.bf16.gmra.mxu0 %v5238
      %v5415 = vpop.f32.mrf.mxu0
      %v5416 = vadd.f32 %v5319, %v5415
      %v5417 = vpop.f32.mrf.mxu0
      %v5418 = vpop.f32.mrf.mxu0
      %v5419 = vadd.f32 %v5322, %v5418
      %v5420 = vpop.f32.mrf.mxu0
      %5421 = vmatprep.mubr.bf16.mxu0 0
      %5422 = vmatmul.mubr.bf16.gmra.mxu0 %v5241
      %v5423 = vpop.f32.mrf.mxu0
      %v5424 = vadd.f32 %v5327, %v5423
      %v5425 = vpop.f32.mrf.mxu0
      %v5426 = vpop.f32.mrf.mxu0
      %v5427 = vadd.f32 %v5330, %v5426
      %v5428 = vpop.f32.mrf.mxu0
      %5429 = vmatprep.mubr.bf16.mxu0 0
      %5430 = vmatmul.mubr.bf16.gmra.mxu0 %v5244
      %v5431 = vpop.f32.mrf.mxu0
      %v5432 = vadd.f32 %v5335, %v5431
      %v5433 = vpop.f32.mrf.mxu0
      %v5434 = vpop.f32.mrf.mxu0
      %v5435 = vadd.f32 %v5338, %v5434
      %v5436 = vpop.f32.mrf.mxu0
      %5437 = vmatprep.mubr.bf16.mxu0 0
      %5438 = vmatmul.mubr.bf16.gmra.mxu0 %v5247
      %v5439 = vpop.f32.mrf.mxu0
      %v5440 = vadd.f32 %v5343, %v5439
      %v5441 = vpop.f32.mrf.mxu0
      %v5442 = vpop.f32.mrf.mxu0
      %v5443 = vadd.f32 %v5346, %v5442
      %v5444 = vpop.f32.mrf.mxu0
      %5445 = vmatprep.mubr.bf16.mxu0 0
      %5446 = vmatmul.mubr.bf16.gmra.mxu0 %v5250
      %v5447 = vpop.f32.mrf.mxu0
      %v5448 = vadd.f32 %v5351, %v5447
      %v5449 = vpop.f32.mrf.mxu0
      %v5450 = vpop.f32.mrf.mxu0
      %v5451 = vadd.f32 %v5354, %v5450
      %v5452 = vpop.f32.mrf.mxu0
      %5453 = vmatprep.mubr.bf16.mxu0 0
      %5454 = vmatmul.mubr.bf16.gmra.mxu0 %v5253
      %v5455 = vpop.f32.mrf.mxu0
      %v5456 = vadd.f32 %v5359, %v5455
      %v5457 = vpop.f32.mrf.mxu0
      %v5458 = vpop.f32.mrf.mxu0
      %v5459 = vadd.f32 %v5362, %v5458
      %v5460 = vpop.f32.mrf.mxu0
      %5461 = vmatprep.mubr.bf16.mxu0 0
      %5462 = vmatmul.mubr.bf16.gmra.mxu0 %v5256
      %v5463 = vpop.f32.mrf.mxu0
      %v5464 = vadd.f32 %v5367, %v5463
      %v5465 = vpop.f32.mrf.mxu0
      %v5466 = vpop.f32.mrf.mxu0
      %v5467 = vadd.f32 %v5370, %v5466
      %v5468 = vpop.f32.mrf.mxu0
      %5469 = vmatprep.mubr.bf16.mxu0 0
      %5470 = vmatmul.mubr.bf16.gmra.mxu0 %v5259
      %v5471 = vpop.f32.mrf.mxu0
      %v5472 = vadd.f32 %v5375, %v5471
      %v5473 = vpop.f32.mrf.mxu0
      %v5474 = vpop.f32.mrf.mxu0
      %v5475 = vadd.f32 %v5378, %v5474
      %v5476 = vpop.f32.mrf.mxu0
      %5477 = vdwg.mxu0
      %s5478 = scalar_lea.vmem [#allocation4], %s5088
      %5479 = vst [vmem:[%s5478] sm:$0xff] %v5416
      %5480 = vst [vmem:[%s5478 + $0x8] sm:$0xff] %v5419
      %5481 = vst [vmem:[%s5478 + $0x10] sm:$0xff] %v5424
      %5482 = vst [vmem:[%s5478 + $0x18] sm:$0xff] %v5427
      %5483 = vst [vmem:[%s5478 + $0x20] sm:$0xff] %v5432
      %5484 = vst [vmem:[%s5478 + $0x28] sm:$0xff] %v5435
      %5485 = vst [vmem:[%s5478 + $0x30] sm:$0xff] %v5440
      %5486 = vst [vmem:[%s5478 + $0x38] sm:$0xff] %v5443
      %5487 = vst [vmem:[%s5478 + $0x40] sm:$0xff] %v5448
      %5488 = vst [vmem:[%s5478 + $0x48] sm:$0xff] %v5451
      %5489 = vst [vmem:[%s5478 + $0x50] sm:$0xff] %v5456
      %5490 = vst [vmem:[%s5478 + $0x58] sm:$0xff] %v5459
      %5491 = vst [vmem:[%s5478 + $0x60] sm:$0xff] %v5464
      %5492 = vst [vmem:[%s5478 + $0x68] sm:$0xff] %v5467
      %5493 = vst [vmem:[%s5478 + $0x70] sm:$0xff] %v5472
      %5494 = vst [vmem:[%s5478 + $0x78] sm:$0xff] %v5475
    $region81: #{tpu_custom_call.1} parent=1 // loop_footer
      %s5086 = sadd.s32 1, %s5082
    $region82: #{tpu_custom_call.1} parent=1 // loop_footer_branch
      %5081 = sbr.rel target = $region78
    $region83: #{tpu_custom_call.1} parent=1 // loop_exit
      _
    %s5495 = sld [smem:[#allocation5 + $0x1]]
    %s5496 = sadd.f32 %s5495, 1.0
    %v5497 = vstv %s5496
    %v5498 = vmul.f32 %v5497, %v5009
    %v5499 = vmul.f32 %v5497, %v5010
    %v5500 = vmul.f32 %v5497, %v5011
    %v5501 = vmul.f32 %v5497, %v5012
    %v5502 = vmul.f32 %v5497, %v5013
    %v5503 = vmul.f32 %v5497, %v5014
    %v5504 = vmul.f32 %v5497, %v5015
    %v5505 = vmul.f32 %v5497, %v5016
    %v5506 = vmul.f32 %v5497, %v5017
    %v5507 = vmul.f32 %v5497, %v5018
    %v5508 = vmul.f32 %v5497, %v5019
    %v5509 = vmul.f32 %v5497, %v5020
    %v5510 = vmul.f32 %v5497, %v5021
    %v5511 = vmul.f32 %v5497, %v5022
    %v5512 = vmul.f32 %v5497, %v5023
    %v5513 = vmul.f32 %v5497, %v5024
    %v5514 = vmul.f32 %v5497, %v5025
    %v5515 = vmul.f32 %v5497, %v5026
    %v5516 = vmul.f32 %v5497, %v5027
    %v5517 = vmul.f32 %v5497, %v5028
    %v5518 = vmul.f32 %v5497, %v5029
    %v5519 = vmul.f32 %v5497, %v5030
    %v5520 = vmul.f32 %v5497, %v5031
    %v5521 = vmul.f32 %v5497, %v5032
    %v5522 = vmul.f32 %v5497, %v5033
    %v5523 = vmul.f32 %v5497, %v5034
    %v5524 = vmul.f32 %v5497, %v5035
    %v5525 = vmul.f32 %v5497, %v5036
    %v5526 = vmul.f32 %v5497, %v5037
    %v5527 = vmul.f32 %v5497, %v5038
    %v5528 = vmul.f32 %v5497, %v5039
    %v5529 = vmul.f32 %v5497, %v5040
    %v5530 = vmul.f32 %v5497, %v5041
    %v5531 = vmul.f32 %v5497, %v5042
    %v5532 = vmul.f32 %v5497, %v5043
    %v5533 = vmul.f32 %v5497, %v5044
    %v5534 = vmul.f32 %v5497, %v5045
    %v5535 = vmul.f32 %v5497, %v5046
    %v5536 = vmul.f32 %v5497, %v5047
    %v5537 = vmul.f32 %v5497, %v5048
    %v5538 = vmul.f32 %v5497, %v5049
    %v5539 = vmul.f32 %v5497, %v5050
    %v5540 = vmul.f32 %v5497, %v5051
    %v5541 = vmul.f32 %v5497, %v5052
    %v5542 = vmul.f32 %v5497, %v5053
    %v5543 = vmul.f32 %v5497, %v5054
    %v5544 = vmul.f32 %v5497, %v5055
    %v5545 = vmul.f32 %v5497, %v5056
    %v5546 = vld [vmem:[#allocation4] sm:$0xff]
    %v5547 = vld [vmem:[#allocation4 + $0x8] sm:$0xff]
    %v5548 = vld [vmem:[#allocation4 + $0x10] sm:$0xff]
    %v5549 = vld [vmem:[#allocation4 + $0x18] sm:$0xff]
    %v5550 = vld [vmem:[#allocation4 + $0x20] sm:$0xff]
    %v5551 = vld [vmem:[#allocation4 + $0x28] sm:$0xff]
    %v5552 = vld [vmem:[#allocation4 + $0x30] sm:$0xff]
    %v5553 = vld [vmem:[#allocation4 + $0x38] sm:$0xff]
    %v5554 = vld [vmem:[#allocation4 + $0x40] sm:$0xff]
    %v5555 = vld [vmem:[#allocation4 + $0x48] sm:$0xff]
    %v5556 = vld [vmem:[#allocation4 + $0x50] sm:$0xff]
    %v5557 = vld [vmem:[#allocation4 + $0x58] sm:$0xff]
    %v5558 = vld [vmem:[#allocation4 + $0x60] sm:$0xff]
    %v5559 = vld [vmem:[#allocation4 + $0x68] sm:$0xff]
    %v5560 = vld [vmem:[#allocation4 + $0x70] sm:$0xff]
    %v5561 = vld [vmem:[#allocation4 + $0x78] sm:$0xff]
    %v5562 = vld [vmem:[#allocation4 + $0x80] sm:$0xff]
    %v5563 = vld [vmem:[#allocation4 + $0x88] sm:$0xff]
    %v5564 = vld [vmem:[#allocation4 + $0x90] sm:$0xff]
    %v5565 = vld [vmem:[#allocation4 + $0x98] sm:$0xff]
    %v5566 = vld [vmem:[#allocation4 + $0xa0] sm:$0xff]
    %v5567 = vld [vmem:[#allocation4 + $0xa8] sm:$0xff]
    %v5568 = vld [vmem:[#allocation4 + $0xb0] sm:$0xff]
    %v5569 = vld [vmem:[#allocation4 + $0xb8] sm:$0xff]
    %v5570 = vld [vmem:[#allocation4 + $0xc0] sm:$0xff]
    %v5571 = vld [vmem:[#allocation4 + $0xc8] sm:$0xff]
    %v5572 = vld [vmem:[#allocation4 + $0xd0] sm:$0xff]
    %v5573 = vld [vmem:[#allocation4 + $0xd8] sm:$0xff]
    %v5574 = vld [vmem:[#allocation4 + $0xe0] sm:$0xff]
    %v5575 = vld [vmem:[#allocation4 + $0xe8] sm:$0xff]
    %v5576 = vld [vmem:[#allocation4 + $0xf0] sm:$0xff]
    %v5577 = vld [vmem:[#allocation4 + $0xf8] sm:$0xff]
    %v5578 = vld [vmem:[#allocation4 + $0x100] sm:$0xff]
    %v5579 = vld [vmem:[#allocation4 + $0x108] sm:$0xff]
    %v5580 = vld [vmem:[#allocation4 + $0x110] sm:$0xff]
    %v5581 = vld [vmem:[#allocation4 + $0x118] sm:$0xff]
    %v5582 = vld [vmem:[#allocation4 + $0x120] sm:$0xff]
    %v5583 = vld [vmem:[#allocation4 + $0x128] sm:$0xff]
    %v5584 = vld [vmem:[#allocation4 + $0x130] sm:$0xff]
    %v5585 = vld [vmem:[#allocation4 + $0x138] sm:$0xff]
    %v5586 = vld [vmem:[#allocation4 + $0x140] sm:$0xff]
    %v5587 = vld [vmem:[#allocation4 + $0x148] sm:$0xff]
    %v5588 = vld [vmem:[#allocation4 + $0x150] sm:$0xff]
    %v5589 = vld [vmem:[#allocation4 + $0x158] sm:$0xff]
    %v5590 = vld [vmem:[#allocation4 + $0x160] sm:$0xff]
    %v5591 = vld [vmem:[#allocation4 + $0x168] sm:$0xff]
    %v5592 = vld [vmem:[#allocation4 + $0x170] sm:$0xff]
    %v5593 = vld [vmem:[#allocation4 + $0x178] sm:$0xff]
    %v5594 = vadd.f32 %v5498, %v5546
    %v5595 = vadd.f32 %v5499, %v5547
    %v5596 = vadd.f32 %v5500, %v5548
    %v5597 = vadd.f32 %v5501, %v5549
    %v5598 = vadd.f32 %v5502, %v5550
    %v5599 = vadd.f32 %v5503, %v5551
    %v5600 = vadd.f32 %v5504, %v5552
    %v5601 = vadd.f32 %v5505, %v5553
    %v5602 = vadd.f32 %v5506, %v5554
    %v5603 = vadd.f32 %v5507, %v5555
    %v5604 = vadd.f32 %v5508, %v5556
    %v5605 = vadd.f32 %v5509, %v5557
    %v5606 = vadd.f32 %v5510, %v5558
    %v5607 = vadd.f32 %v5511, %v5559
    %v5608 = vadd.f32 %v5512, %v5560
    %v5609 = vadd.f32 %v5513, %v5561
    %v5610 = vadd.f32 %v5514, %v5562
    %v5611 = vadd.f32 %v5515, %v5563
    %v5612 = vadd.f32 %v5516, %v5564
    %v5613 = vadd.f32 %v5517, %v5565
    %v5614 = vadd.f32 %v5518, %v5566
    %v5615 = vadd.f32 %v5519, %v5567
    %v5616 = vadd.f32 %v5520, %v5568
    %v5617 = vadd.f32 %v5521, %v5569
    %v5618 = vadd.f32 %v5522, %v5570
    %v5619 = vadd.f32 %v5523, %v5571
    %v5620 = vadd.f32 %v5524, %v5572
    %v5621 = vadd.f32 %v5525, %v5573
    %v5622 = vadd.f32 %v5526, %v5574
    %v5623 = vadd.f32 %v5527, %v5575
    %v5624 = vadd.f32 %v5528, %v5576
    %v5625 = vadd.f32 %v5529, %v5577
    %v5626 = vadd.f32 %v5530, %v5578
    %v5627 = vadd.f32 %v5531, %v5579
    %v5628 = vadd.f32 %v5532, %v5580
    %v5629 = vadd.f32 %v5533, %v5581
    %v5630 = vadd.f32 %v5534, %v5582
    %v5631 = vadd.f32 %v5535, %v5583
    %v5632 = vadd.f32 %v5536, %v5584
    %v5633 = vadd.f32 %v5537, %v5585
    %v5634 = vadd.f32 %v5538, %v5586
    %v5635 = vadd.f32 %v5539, %v5587
    %v5636 = vadd.f32 %v5540, %v5588
    %v5637 = vadd.f32 %v5541, %v5589
    %v5638 = vadd.f32 %v5542, %v5590
    %v5639 = vadd.f32 %v5543, %v5591
    %v5640 = vadd.f32 %v5544, %v5592
    %v5641 = vadd.f32 %v5545, %v5593
    %v5642 = vld [vmem:[#allocation13] sm:$0xff]
    %v5643 = vld [vmem:[#allocation13 + $0x8] sm:$0xff]
    %v5644 = vld [vmem:[#allocation13 + $0x10] sm:$0xff]
    %v5645 = vld [vmem:[#allocation13 + $0x18] sm:$0xff]
    %v5646 = vld [vmem:[#allocation13 + $0x20] sm:$0xff]
    %v5647 = vld [vmem:[#allocation13 + $0x28] sm:$0xff]
    %v5648 = vld [vmem:[#allocation13 + $0x30] sm:$0xff]
    %v5649 = vld [vmem:[#allocation13 + $0x38] sm:$0xff]
    %v5650 = vld [vmem:[#allocation13 + $0x40] sm:$0xff]
    %v5651 = vld [vmem:[#allocation13 + $0x48] sm:$0xff]
    %v5652 = vld [vmem:[#allocation13 + $0x50] sm:$0xff]
    %v5653 = vld [vmem:[#allocation13 + $0x58] sm:$0xff]
    %v5654 = vld [vmem:[#allocation13 + $0x60] sm:$0xff]
    %v5655 = vld [vmem:[#allocation13 + $0x68] sm:$0xff]
    %v5656 = vld [vmem:[#allocation13 + $0x70] sm:$0xff]
    %v5657 = vld [vmem:[#allocation13 + $0x78] sm:$0xff]
    %v5658 = vld [vmem:[%s8] sm:$0x1]
    %v5660 = vlaneseq
    %v5661 = vshrl.u32 %v5660, 7
    %v5662 = vsub.s32 0, %v5661
    %v5663 = vrot.slane %v5658, %v5662
    %5665 = vmatprep.subr.mxu0 0.0
    %5666 = vmatpush1.msra.mxu0 %v5657
    %5667 = vmatprep.subr.mxu0 0.0
    %5668 = vmatpush1.msra.mxu0 %v5656
    %5669 = vmatprep.subr.mxu0 0.0
    %5670 = vmatpush1.msra.mxu0 %v5655
    %5671 = vmatprep.subr.mxu0 0.0
    %5672 = vmatpush1.msra.mxu0 %v5654
    %5673 = vmatprep.subr.mxu0 0.0
    %5674 = vmatpush1.msra.mxu0 %v5653
    %5675 = vmatprep.subr.mxu0 0.0
    %5676 = vmatpush1.msra.mxu0 %v5652
    %5677 = vmatprep.subr.mxu0 0.0
    %5678 = vmatpush1.msra.mxu0 %v5651
    %5679 = vmatprep.subr.mxu0 0.0
    %5680 = vmatpush1.msra.mxu0 %v5650
    %5681 = vmatprep.subr.mxu0 0.0
    %5682 = vmatpush1.msra.mxu0 %v5649
    %5683 = vmatprep.subr.mxu0 0.0
    %5684 = vmatpush1.msra.mxu0 %v5648
    %5685 = vmatprep.subr.mxu0 0.0
    %5686 = vmatpush1.msra.mxu0 %v5647
    %5687 = vmatprep.subr.mxu0 0.0
    %5688 = vmatpush1.msra.mxu0 %v5646
    %5689 = vmatprep.subr.mxu0 0.0
    %5690 = vmatpush1.msra.mxu0 %v5645
    %5691 = vmatprep.subr.mxu0 0.0
    %5692 = vmatpush1.msra.mxu0 %v5644
    %5693 = vmatprep.subr.mxu0 0.0
    %5694 = vmatpush1.msra.mxu0 %v5643
    %5695 = vmatprep.subr.mxu0 0.0
    %5696 = vmatpush1.msra.mxu0 %v5642
    %5697 = vmatprep.subr.mxu0 0.0
    %5698 = vmatpush2.msra.mxu0 0.0
    %5699 = vmatprep.subr.mxu0 0.0
    %5700 = vmatpush2.msra.mxu0 0.0
    %5701 = vmatprep.subr.mxu0 0.0
    %5702 = vmatpush2.msra.mxu0 0.0
    %5703 = vmatprep.subr.mxu0 0.0
    %5704 = vmatpush2.msra.mxu0 0.0
    %5705 = vmatprep.subr.mxu0 0.0
    %5706 = vmatpush2.msra.mxu0 0.0
    %5707 = vmatprep.subr.mxu0 0.0
    %5708 = vmatpush2.msra.mxu0 0.0
    %5709 = vmatprep.subr.mxu0 0.0
    %5710 = vmatpush2.msra.mxu0 0.0
    %5711 = vmatprep.subr.mxu0 0.0
    %5712 = vmatpush2.msra.mxu0 0.0
    %5713 = vmatprep.subr.mxu0 0.0
    %5714 = vmatpush2.msra.mxu0 0.0
    %5715 = vmatprep.subr.mxu0 0.0
    %5716 = vmatpush2.msra.mxu0 0.0
    %5717 = vmatprep.subr.mxu0 0.0
    %5718 = vmatpush2.msra.mxu0 0.0
    %5719 = vmatprep.subr.mxu0 0.0
    %5720 = vmatpush2.msra.mxu0 0.0
    %5721 = vmatprep.subr.mxu0 0.0
    %5722 = vmatpush2.msra.mxu0 0.0
    %5723 = vmatprep.subr.mxu0 0.0
    %5724 = vmatpush2.msra.mxu0 0.0
    %5725 = vmatprep.subr.mxu0 0.0
    %5726 = vmatpush2.msra.mxu0 0.0
    %5727 = vmatprep.subr.mxu0 0.0
    %5728 = vmatpush2.msra.mxu0 0.0
    %5729 = vmatprep.mubr.f32.mxu0 0.0
    %5730 = vmatmul.mubr.f32.gmra.mxu0 %v5594
    %v5731 = vpop.f32.mrf.mxu0
    %v5732 = vadd.f32 %v5663, %v5731
    %v5733 = vpop.f32.mrf.mxu0
    %5734 = vmatprep.mubr.f32.mxu0 0.0
    %5735 = vmatmul.mubr.f32.gmra.mxu0 %v5595
    %v5736 = vpop.f32.mrf.mxu0
    %v5737 = vadd.f32 %v5663, %v5736
    %v5738 = vpop.f32.mrf.mxu0
    %5739 = vmatprep.mubr.f32.mxu0 0.0
    %5740 = vmatmul.mubr.f32.gmra.mxu0 %v5596
    %v5741 = vpop.f32.mrf.mxu0
    %v5742 = vadd.f32 %v5663, %v5741
    %v5743 = vpop.f32.mrf.mxu0
    %5744 = vmatprep.mubr.f32.mxu0 0.0
    %5745 = vmatmul.mubr.f32.gmra.mxu0 %v5597
    %v5746 = vpop.f32.mrf.mxu0
    %v5747 = vadd.f32 %v5663, %v5746
    %v5748 = vpop.f32.mrf.mxu0
    %5749 = vmatprep.mubr.f32.mxu0 0.0
    %5750 = vmatmul.mubr.f32.gmra.mxu0 %v5598
    %v5751 = vpop.f32.mrf.mxu0
    %v5752 = vadd.f32 %v5663, %v5751
    %v5753 = vpop.f32.mrf.mxu0
    %5754 = vmatprep.mubr.f32.mxu0 0.0
    %5755 = vmatmul.mubr.f32.gmra.mxu0 %v5599
    %v5756 = vpop.f32.mrf.mxu0
    %v5757 = vadd.f32 %v5663, %v5756
    %v5758 = vpop.f32.mrf.mxu0
    %5759 = vmatprep.mubr.f32.mxu0 0.0
    %5760 = vmatmul.mubr.f32.gmra.mxu0 %v5600
    %v5761 = vpop.f32.mrf.mxu0
    %v5762 = vadd.f32 %v5663, %v5761
    %v5763 = vpop.f32.mrf.mxu0
    %5764 = vmatprep.mubr.f32.mxu0 0.0
    %5765 = vmatmul.mubr.f32.gmra.mxu0 %v5601
    %v5766 = vpop.f32.mrf.mxu0
    %v5767 = vadd.f32 %v5663, %v5766
    %v5768 = vpop.f32.mrf.mxu0
    %5769 = vmatprep.mubr.f32.mxu0 0.0
    %5770 = vmatmul.mubr.f32.gmra.mxu0 %v5602
    %v5771 = vpop.f32.mrf.mxu0
    %v5772 = vadd.f32 %v5663, %v5771
    %v5773 = vpop.f32.mrf.mxu0
    %5774 = vmatprep.mubr.f32.mxu0 0.0
    %5775 = vmatmul.mubr.f32.gmra.mxu0 %v5603
    %v5776 = vpop.f32.mrf.mxu0
    %v5777 = vadd.f32 %v5663, %v5776
    %v5778 = vpop.f32.mrf.mxu0
    %5779 = vmatprep.mubr.f32.mxu0 0.0
    %5780 = vmatmul.mubr.f32.gmra.mxu0 %v5604
    %v5781 = vpop.f32.mrf.mxu0
    %v5782 = vadd.f32 %v5663, %v5781
    %v5783 = vpop.f32.mrf.mxu0
    %5784 = vmatprep.mubr.f32.mxu0 0.0
    %5785 = vmatmul.mubr.f32.gmra.mxu0 %v5605
    %v5786 = vpop.f32.mrf.mxu0
    %v5787 = vadd.f32 %v5663, %v5786
    %v5788 = vpop.f32.mrf.mxu0
    %5789 = vmatprep.mubr.f32.mxu0 0.0
    %5790 = vmatmul.mubr.f32.gmra.mxu0 %v5606
    %v5791 = vpop.f32.mrf.mxu0
    %v5792 = vadd.f32 %v5663, %v5791
    %v5793 = vpop.f32.mrf.mxu0
    %5794 = vmatprep.mubr.f32.mxu0 0.0
    %5795 = vmatmul.mubr.f32.gmra.mxu0 %v5607
    %v5796 = vpop.f32.mrf.mxu0
    %v5797 = vadd.f32 %v5663, %v5796
    %v5798 = vpop.f32.mrf.mxu0
    %5799 = vmatprep.mubr.f32.mxu0 0.0
    %5800 = vmatmul.mubr.f32.gmra.mxu0 %v5608
    %v5801 = vpop.f32.mrf.mxu0
    %v5802 = vadd.f32 %v5663, %v5801
    %v5803 = vpop.f32.mrf.mxu0
    %5804 = vmatprep.mubr.f32.mxu0 0.0
    %5805 = vmatmul.mubr.f32.gmra.mxu0 %v5609
    %v5806 = vpop.f32.mrf.mxu0
    %v5807 = vadd.f32 %v5663, %v5806
    %v5808 = vpop.f32.mrf.mxu0
    %5809 = vmatprep.mubr.f32.mxu0 0.0
    %5810 = vmatmul.mubr.f32.gmra.mxu0 %v5610
    %v5811 = vpop.f32.mrf.mxu0
    %v5812 = vadd.f32 %v5663, %v5811
    %v5813 = vpop.f32.mrf.mxu0
    %5814 = vmatprep.mubr.f32.mxu0 0.0
    %5815 = vmatmul.mubr.f32.gmra.mxu0 %v5611
    %v5816 = vpop.f32.mrf.mxu0
    %v5817 = vadd.f32 %v5663, %v5816
    %v5818 = vpop.f32.mrf.mxu0
    %5819 = vmatprep.mubr.f32.mxu0 0.0
    %5820 = vmatmul.mubr.f32.gmra.mxu0 %v5612
    %v5821 = vpop.f32.mrf.mxu0
    %v5822 = vadd.f32 %v5663, %v5821
    %v5823 = vpop.f32.mrf.mxu0
    %5824 = vmatprep.mubr.f32.mxu0 0.0
    %5825 = vmatmul.mubr.f32.gmra.mxu0 %v5613
    %v5826 = vpop.f32.mrf.mxu0
    %v5827 = vadd.f32 %v5663, %v5826
    %v5828 = vpop.f32.mrf.mxu0
    %5829 = vmatprep.mubr.f32.mxu0 0.0
    %5830 = vmatmul.mubr.f32.gmra.mxu0 %v5614
    %v5831 = vpop.f32.mrf.mxu0
    %v5832 = vadd.f32 %v5663, %v5831
    %v5833 = vpop.f32.mrf.mxu0
    %5834 = vmatprep.mubr.f32.mxu0 0.0
    %5835 = vmatmul.mubr.f32.gmra.mxu0 %v5615
    %v5836 = vpop.f32.mrf.mxu0
    %v5837 = vadd.f32 %v5663, %v5836
    %v5838 = vpop.f32.mrf.mxu0
    %5839 = vmatprep.mubr.f32.mxu0 0.0
    %5840 = vmatmul.mubr.f32.gmra.mxu0 %v5616
    %v5841 = vpop.f32.mrf.mxu0
    %v5842 = vadd.f32 %v5663, %v5841
    %v5843 = vpop.f32.mrf.mxu0
    %5844 = vmatprep.mubr.f32.mxu0 0.0
    %5845 = vmatmul.mubr.f32.gmra.mxu0 %v5617
    %v5846 = vpop.f32.mrf.mxu0
    %v5847 = vadd.f32 %v5663, %v5846
    %v5848 = vpop.f32.mrf.mxu0
    %5849 = vmatprep.mubr.f32.mxu0 0.0
    %5850 = vmatmul.mubr.f32.gmra.mxu0 %v5618
    %v5851 = vpop.f32.mrf.mxu0
    %v5852 = vadd.f32 %v5663, %v5851
    %v5853 = vpop.f32.mrf.mxu0
    %5854 = vmatprep.mubr.f32.mxu0 0.0
    %5855 = vmatmul.mubr.f32.gmra.mxu0 %v5619
    %v5856 = vpop.f32.mrf.mxu0
    %v5857 = vadd.f32 %v5663, %v5856
    %v5858 = vpop.f32.mrf.mxu0
    %5859 = vmatprep.mubr.f32.mxu0 0.0
    %5860 = vmatmul.mubr.f32.gmra.mxu0 %v5620
    %v5861 = vpop.f32.mrf.mxu0
    %v5862 = vadd.f32 %v5663, %v5861
    %v5863 = vpop.f32.mrf.mxu0
    %5864 = vmatprep.mubr.f32.mxu0 0.0
    %5865 = vmatmul.mubr.f32.gmra.mxu0 %v5621
    %v5866 = vpop.f32.mrf.mxu0
    %v5867 = vadd.f32 %v5663, %v5866
    %v5868 = vpop.f32.mrf.mxu0
    %5869 = vmatprep.mubr.f32.mxu0 0.0
    %5870 = vmatmul.mubr.f32.gmra.mxu0 %v5622
    %v5871 = vpop.f32.mrf.mxu0
    %v5872 = vadd.f32 %v5663, %v5871
    %v5873 = vpop.f32.mrf.mxu0
    %5874 = vmatprep.mubr.f32.mxu0 0.0
    %5875 = vmatmul.mubr.f32.gmra.mxu0 %v5623
    %v5876 = vpop.f32.mrf.mxu0
    %v5877 = vadd.f32 %v5663, %v5876
    %v5878 = vpop.f32.mrf.mxu0
    %5879 = vmatprep.mubr.f32.mxu0 0.0
    %5880 = vmatmul.mubr.f32.gmra.mxu0 %v5624
    %v5881 = vpop.f32.mrf.mxu0
    %v5882 = vadd.f32 %v5663, %v5881
    %v5883 = vpop.f32.mrf.mxu0
    %5884 = vmatprep.mubr.f32.mxu0 0.0
    %5885 = vmatmul.mubr.f32.gmra.mxu0 %v5625
    %v5886 = vpop.f32.mrf.mxu0
    %v5887 = vadd.f32 %v5663, %v5886
    %v5888 = vpop.f32.mrf.mxu0
    %5889 = vmatprep.mubr.f32.mxu0 0.0
    %5890 = vmatmul.mubr.f32.gmra.mxu0 %v5626
    %v5891 = vpop.f32.mrf.mxu0
    %v5892 = vadd.f32 %v5663, %v5891
    %v5893 = vpop.f32.mrf.mxu0
    %5894 = vmatprep.mubr.f32.mxu0 0.0
    %5895 = vmatmul.mubr.f32.gmra.mxu0 %v5627
    %v5896 = vpop.f32.mrf.mxu0
    %v5897 = vadd.f32 %v5663, %v5896
    %v5898 = vpop.f32.mrf.mxu0
    %5899 = vmatprep.mubr.f32.mxu0 0.0
    %5900 = vmatmul.mubr.f32.gmra.mxu0 %v5628
    %v5901 = vpop.f32.mrf.mxu0
    %v5902 = vadd.f32 %v5663, %v5901
    %v5903 = vpop.f32.mrf.mxu0
    %5904 = vmatprep.mubr.f32.mxu0 0.0
    %5905 = vmatmul.mubr.f32.gmra.mxu0 %v5629
    %v5906 = vpop.f32.mrf.mxu0
    %v5907 = vadd.f32 %v5663, %v5906
    %v5908 = vpop.f32.mrf.mxu0
    %5909 = vmatprep.mubr.f32.mxu0 0.0
    %5910 = vmatmul.mubr.f32.gmra.mxu0 %v5630
    %v5911 = vpop.f32.mrf.mxu0
    %v5912 = vadd.f32 %v5663, %v5911
    %v5913 = vpop.f32.mrf.mxu0
    %5914 = vmatprep.mubr.f32.mxu0 0.0
    %5915 = vmatmul.mubr.f32.gmra.mxu0 %v5631
    %v5916 = vpop.f32.mrf.mxu0
    %v5917 = vadd.f32 %v5663, %v5916
    %v5918 = vpop.f32.mrf.mxu0
    %5919 = vmatprep.mubr.f32.mxu0 0.0
    %5920 = vmatmul.mubr.f32.gmra.mxu0 %v5632
    %v5921 = vpop.f32.mrf.mxu0
    %v5922 = vadd.f32 %v5663, %v5921
    %v5923 = vpop.f32.mrf.mxu0
    %5924 = vmatprep.mubr.f32.mxu0 0.0
    %5925 = vmatmul.mubr.f32.gmra.mxu0 %v5633
    %v5926 = vpop.f32.mrf.mxu0
    %v5927 = vadd.f32 %v5663, %v5926
    %v5928 = vpop.f32.mrf.mxu0
    %5929 = vmatprep.mubr.f32.mxu0 0.0
    %5930 = vmatmul.mubr.f32.gmra.mxu0 %v5634
    %v5931 = vpop.f32.mrf.mxu0
    %v5932 = vadd.f32 %v5663, %v5931
    %v5933 = vpop.f32.mrf.mxu0
    %5934 = vmatprep.mubr.f32.mxu0 0.0
    %5935 = vmatmul.mubr.f32.gmra.mxu0 %v5635
    %v5936 = vpop.f32.mrf.mxu0
    %v5937 = vadd.f32 %v5663, %v5936
    %v5938 = vpop.f32.mrf.mxu0
    %5939 = vmatprep.mubr.f32.mxu0 0.0
    %5940 = vmatmul.mubr.f32.gmra.mxu0 %v5636
    %v5941 = vpop.f32.mrf.mxu0
    %v5942 = vadd.f32 %v5663, %v5941
    %v5943 = vpop.f32.mrf.mxu0
    %5944 = vmatprep.mubr.f32.mxu0 0.0
    %5945 = vmatmul.mubr.f32.gmra.mxu0 %v5637
    %v5946 = vpop.f32.mrf.mxu0
    %v5947 = vadd.f32 %v5663, %v5946
    %v5948 = vpop.f32.mrf.mxu0
    %5949 = vmatprep.mubr.f32.mxu0 0.0
    %5950 = vmatmul.mubr.f32.gmra.mxu0 %v5638
    %v5951 = vpop.f32.mrf.mxu0
    %v5952 = vadd.f32 %v5663, %v5951
    %v5953 = vpop.f32.mrf.mxu0
    %5954 = vmatprep.mubr.f32.mxu0 0.0
    %5955 = vmatmul.mubr.f32.gmra.mxu0 %v5639
    %v5956 = vpop.f32.mrf.mxu0
    %v5957 = vadd.f32 %v5663, %v5956
    %v5958 = vpop.f32.mrf.mxu0
    %5959 = vmatprep.mubr.f32.mxu0 0.0
    %5960 = vmatmul.mubr.f32.gmra.mxu0 %v5640
    %v5961 = vpop.f32.mrf.mxu0
    %v5962 = vadd.f32 %v5663, %v5961
    %v5963 = vpop.f32.mrf.mxu0
    %5964 = vmatprep.mubr.f32.mxu0 0.0
    %5965 = vmatmul.mubr.f32.gmra.mxu0 %v5641
    %v5966 = vpop.f32.mrf.mxu0
    %v5967 = vadd.f32 %v5663, %v5966
    %v5968 = vpop.f32.mrf.mxu0
    %5969 = vdwg.mxu0
    %5970 = vst [vmem:[#allocation15] sm:$0xff] %v5732
    %5971 = vst [vmem:[#allocation15 + $0x8] sm:$0xff] %v5737
    %5972 = vst [vmem:[#allocation15 + $0x10] sm:$0xff] %v5742
    %5973 = vst [vmem:[#allocation15 + $0x18] sm:$0xff] %v5747
    %5974 = vst [vmem:[#allocation15 + $0x20] sm:$0xff] %v5752
    %5975 = vst [vmem:[#allocation15 + $0x28] sm:$0xff] %v5757
    %5976 = vst [vmem:[#allocation15 + $0x30] sm:$0xff] %v5762
    %5977 = vst [vmem:[#allocation15 + $0x38] sm:$0xff] %v5767
    %5978 = vst [vmem:[#allocation15 + $0x40] sm:$0xff] %v5772
    %5979 = vst [vmem:[#allocation15 + $0x48] sm:$0xff] %v5777
    %5980 = vst [vmem:[#allocation15 + $0x50] sm:$0xff] %v5782
    %5981 = vst [vmem:[#allocation15 + $0x58] sm:$0xff] %v5787
    %5982 = vst [vmem:[#allocation15 + $0x60] sm:$0xff] %v5792
    %5983 = vst [vmem:[#allocation15 + $0x68] sm:$0xff] %v5797
    %5984 = vst [vmem:[#allocation15 + $0x70] sm:$0xff] %v5802
    %5985 = vst [vmem:[#allocation15 + $0x78] sm:$0xff] %v5807
    %5986 = vst [vmem:[#allocation15 + $0x80] sm:$0xff] %v5812
    %5987 = vst [vmem:[#allocation15 + $0x88] sm:$0xff] %v5817
    %5988 = vst [vmem:[#allocation15 + $0x90] sm:$0xff] %v5822
    %5989 = vst [vmem:[#allocation15 + $0x98] sm:$0xff] %v5827
    %5990 = vst [vmem:[#allocation15 + $0xa0] sm:$0xff] %v5832
    %5991 = vst [vmem:[#allocation15 + $0xa8] sm:$0xff] %v5837
    %5992 = vst [vmem:[#allocation15 + $0xb0] sm:$0xff] %v5842
    %5993 = vst [vmem:[#allocation15 + $0xb8] sm:$0xff] %v5847
    %5994 = vst [vmem:[#allocation15 + $0xc0] sm:$0xff] %v5852
    %5995 = vst [vmem:[#allocation15 + $0xc8] sm:$0xff] %v5857
    %5996 = vst [vmem:[#allocation15 + $0xd0] sm:$0xff] %v5862
    %5997 = vst [vmem:[#allocation15 + $0xd8] sm:$0xff] %v5867
    %5998 = vst [vmem:[#allocation15 + $0xe0] sm:$0xff] %v5872
    %5999 = vst [vmem:[#allocation15 + $0xe8] sm:$0xff] %v5877
    %6000 = vst [vmem:[#allocation15 + $0xf0] sm:$0xff] %v5882
    %6001 = vst [vmem:[#allocation15 + $0xf8] sm:$0xff] %v5887
    %6002 = vst [vmem:[#allocation15 + $0x100] sm:$0xff] %v5892
    %6003 = vst [vmem:[#allocation15 + $0x108] sm:$0xff] %v5897
    %6004 = vst [vmem:[#allocation15 + $0x110] sm:$0xff] %v5902
    %6005 = vst [vmem:[#allocation15 + $0x118] sm:$0xff] %v5907
    %6006 = vst [vmem:[#allocation15 + $0x120] sm:$0xff] %v5912
    %6007 = vst [vmem:[#allocation15 + $0x128] sm:$0xff] %v5917
    %6008 = vst [vmem:[#allocation15 + $0x130] sm:$0xff] %v5922
    %6009 = vst [vmem:[#allocation15 + $0x138] sm:$0xff] %v5927
    %6010 = vst [vmem:[#allocation15 + $0x140] sm:$0xff] %v5932
    %6011 = vst [vmem:[#allocation15 + $0x148] sm:$0xff] %v5937
    %6012 = vst [vmem:[#allocation15 + $0x150] sm:$0xff] %v5942
    %6013 = vst [vmem:[#allocation15 + $0x158] sm:$0xff] %v5947
    %6014 = vst [vmem:[#allocation15 + $0x160] sm:$0xff] %v5952
    %6015 = vst [vmem:[#allocation15 + $0x168] sm:$0xff] %v5957
    %6016 = vst [vmem:[#allocation15 + $0x170] sm:$0xff] %v5962
    %6017 = vst [vmem:[#allocation15 + $0x178] sm:$0xff] %v5967
    // Predicated region
    $region92: #{tpu_custom_call.1} parent=1 // pred_check
      _
    $region93: #{tpu_custom_call.1} parent=1 // pred_check_branch
      %6019 = sbr.rel (0) target = $region95
    $region94: #{tpu_custom_call.1} parent=1 // pred_region
      %s6021 = ssub.s32 6144, 6144
      %6022 = vsyncadd [#allocation7], %s6021
      %s6023 = sshll.u32 [#allocation15], 4
      %s6024 = int_to_ptr.vmem [resolvable:$true] %s6023
      %6029 = dma.vmem_to_hbm [thread:$0]  %s6024, 6144, %s9, [#allocation7], 128, 128, 8
    $region95: #{tpu_custom_call.1} parent=1 // pred_fallthru
      _
    // Predicated region
    $region96: #{tpu_custom_call.1} parent=1 // pred_check
      _
    $region97: #{tpu_custom_call.1} parent=1 // pred_check_branch
      %6031 = sbr.rel (0) target = $region99
    $region98: #{tpu_custom_call.1} parent=1 // pred_region
      %6032 = dma.done [#allocation7], 6144
    $region99: #{tpu_custom_call.1} parent=1 // pred_fallthru
      _
    %6033 = vsyncpa [#allocation6], 1
    %6034 = vsyncpa [#allocation11], 1
    %6035 = vsyncpa [#allocation14], 1
    %6036 = vsyncpa [#allocation7], 1
    %6037 = vsyncpa [#allocation8], 1
  %6038 = vsyncmov [#allocation3]
  %s6039 = vpop.sfrf %6038
  %p6040 = scmp.eq.s32.totalorder %s6039, 0
  %p6041 = pneg %p6040
  %6043 = shalt.err (%p6041)
  %s6044 = scalar_lea.sflag [#allocation3], 1
  %6045 = vsyncmov %s6044
  %s6046 = vpop.sfrf %6045
  %p6047 = scmp.eq.s32.totalorder %s6046, 0
  %p6048 = pneg %p6047
  %6050 = shalt.err (%p6048)

</llo_original>
